<compile_context>
chip_gen: v6e
topology: v6e:2x2x1
jax: 0.10.0
libtpu: 0.0.40
codegen_flags: <defaults>
</compile_context>

<pallas_src>
import functools
import math

import jax
import jax.numpy as jnp
import numpy as np
from jax import lax
from jax.experimental import pallas as pl
from jax.experimental.pallas import tpu as pltpu

D_MODEL = 32
NHEAD = 4
HEAD_DIM = D_MODEL // NHEAD
DIM_FF = 64
LN_EPS = 1e-5
_PREC = lax.Precision.HIGHEST   # see note above re: HIGH not lowering in Mosaic
_HI = lax.Precision.HIGHEST     # reference

# Row indices inside the packed bias / LayerNorm array.
_R_BQK, _R_B1, _R_BV, _R_BO, _R_B2, _R_LN1W, _R_LN1B, _R_LN2W, _R_LN2B = range(9)
_N_VEC_ROWS = 9


# --------------------------- fused Pallas kernel ----------------------------
def _encoder_layer_kernel(x_ref, pos_ref, wqk_ref, wv_ref, wo_ref,
                          w1_ref, w2_ref, vec_ref, out_ref,
                          *, batch, d_model, dim_ff, nhead):
    hd = d_model // nhead
    x = x_ref[...]                       # (N, D), rows flattened as (s, b)
    qk_in = x + pos_ref[...]             # q = k = src + pos ; v = src

    bqk  = vec_ref[_R_BQK:_R_BQK + 1, :2 * d_model]
    b1   = vec_ref[_R_B1:_R_B1 + 1, :dim_ff]
    bv   = vec_ref[_R_BV:_R_BV + 1, :d_model]
    bo   = vec_ref[_R_BO:_R_BO + 1, :d_model]
    b2   = vec_ref[_R_B2:_R_B2 + 1, :d_model]
    ln1w = vec_ref[_R_LN1W:_R_LN1W + 1, :d_model]
    ln1b = vec_ref[_R_LN1B:_R_LN1B + 1, :d_model]
    ln2w = vec_ref[_R_LN2W:_R_LN2W + 1, :d_model]
    ln2b = vec_ref[_R_LN2B:_R_LN2B + 1, :d_model]

    def mm(a, w, b):
        return jnp.dot(a, w, preferred_element_type=jnp.float32,
                       precision=_PREC) + b

    # Fused Q|K projection (single MXU chain), separate V projection.
    qk = mm(qk_in, wqk_ref[...], bqk)                         # (N, 2D)
    q = qk[:, :d_model] * (1.0 / math.sqrt(hd))
    k = qk[:, d_model:]
    v = mm(x, wv_ref[...], bv)                                # (N, D)

    # Additive same-batch mask: rows are flattened (s, b), so row i belongs to
    # batch (i % batch).  Hoisted out of the per-head loop.
    n = x.shape[0]
    row_b = lax.broadcasted_iota(jnp.int32, (n, n), 0) % batch
    col_b = lax.broadcasted_iota(jnp.int32, (n, n), 1) % batch
    neg_mask = jnp.where(row_b == col_b, 0.0, -1e30).astype(jnp.float32)

    head_outs = []
    for h in range(nhead):
        sl = slice(h * hd, (h + 1) * hd)
        qh, kh, vh = q[:, sl], k[:, sl], v[:, sl]
        # q @ k^T without an explicit transpose (NT dimension numbers).
        s = lax.dot_general(qh, kh, (((1,), (1,)), ((), ())),
                            preferred_element_type=jnp.float32,
                            precision=_PREC) + neg_mask        # (N, N)
        s = s - jnp.max(s, axis=-1, keepdims=True)
        p = jnp.exp(s)
        p = p * pl.reciprocal(jnp.sum(p, axis=-1, keepdims=True))  # exact
        head_outs.append(jnp.dot(p, vh, preferred_element_type=jnp.float32,
                                 precision=_PREC))             # (N, Hd)

    # Lane-concat the heads once, then a SINGLE output-projection matmul.
    attn = mm(jnp.concatenate(head_outs, axis=-1), wo_ref[...], bo)

    def layer_norm(y, w, b):
        mu = jnp.mean(y, axis=-1, keepdims=True)
        var = jnp.mean((y - mu) ** 2, axis=-1, keepdims=True)
        return (y - mu) * lax.rsqrt(var + LN_EPS) * w + b

    x1 = layer_norm(x + attn, ln1w, ln1b)                 # residual + norm1
    hdn = jnp.maximum(mm(x1, w1_ref[...], b1), 0.0)       # linear1 + ReLU
    ff = mm(hdn, w2_ref[...], b2)                         # linear2
    out_ref[...] = layer_norm(x1 + ff, ln2w, ln2b)        # residual + norm2


# ------------------------ one-time parameter re-layout ----------------------
def prepare_params(params):
    """Re-layout PyTorch params into kernel layout.  Called ONCE, outside the
    jitted hot path (hoisted per perf review)."""
    D, F = D_MODEL, DIM_FF
    in_w, in_b = params["in_proj_weight"], params["in_proj_bias"]
    wq, wk, wv = in_w[:D].T, in_w[D:2 * D].T, in_w[2 * D:].T

    width = max(2 * D, F)

    def pad(v):
        return jnp.pad(v, (0, width - v.shape[0]))

    rows = [None] * _N_VEC_ROWS
    rows[_R_BQK]  = pad(jnp.concatenate([in_b[:D], in_b[D:2 * D]]))
    rows[_R_B1]   = pad(params["linear1_b"])
    rows[_R_BV]   = pad(in_b[2 * D:])
    rows[_R_BO]   = pad(params["out_proj_b"])
    rows[_R_B2]   = pad(params["linear2_b"])
    rows[_R_LN1W] = pad(params["norm1_w"])
    rows[_R_LN1B] = pad(params["norm1_b"])
    rows[_R_LN2W] = pad(params["norm2_w"])
    rows[_R_LN2B] = pad(params["norm2_b"])

    return {
        "wqk": jnp.concatenate([wq, wk], axis=1),   # (D, 2D) fused Q|K weight
        "wv":  wv,                                  # (D, D)
        "wo":  params["out_proj_w"].T,              # (D, D)
        "w1":  params["linear1_w"].T,               # (D, F)
        "w2":  params["linear2_w"].T,               # (F, D)
        "vecs": jnp.stack(rows),                    # (9, max(2D, F))
    }


# --------------------------------- wrapper ----------------------------------
@jax.jit
def transformer_encoder_layer(src, pos, prepped):
    """src, pos: (S, B, D) float32 — PyTorch nn.MultiheadAttention layout."""
    S, B, D = src.shape
    N = S * B
    # (S, B, D) -> (S*B, D) is a free row-major reshape (no transpose, no copy).
    x = src.reshape(N, D)
    p = pos.reshape(N, D)

    vmem = pl.BlockSpec(memory_space=pltpu.MemorySpace.VMEM)  # full array, VMEM
    kernel = functools.partial(_encoder_layer_kernel, batch=B,
                               d_model=D, dim_ff=DIM_FF, nhead=NHEAD)

    out = pl.pallas_call(                 # single invocation, no grid
        kernel,
        out_shape=jax.ShapeDtypeStruct((N, D), jnp.float32),
        in_specs=[vmem] * 8,
        out_specs=vmem,
    )(x, p, prepped["wqk"], prepped["wv"], prepped["wo"],
      prepped["w1"], prepped["w2"], prepped["vecs"])

    return out.reshape(S, B, D)           # back to (S, B, D), free reshape


# ---------------------------- pure-JAX reference ----------------------------
def _ln_ref(x, w, b):
    mu = jnp.mean(x, axis=-1, keepdims=True)
    var = jnp.mean((x - mu) ** 2, axis=-1, keepdims=True)
    return (x - mu) / jnp.sqrt(var + LN_EPS) * w + b


def transformer_encoder_layer_ref(src, pos, params):
    S, B, D = src.shape
    H, Hd = NHEAD, HEAD_DIM
    in_w, in_b = params["in_proj_weight"], params["in_proj_bias"]

    def lin(x, w, b):  # PyTorch Linear: x @ W.T + b, W is (out, in)
        return jnp.einsum("...d,ed->...e", x, w, precision=_HI) + b

    qk_in = src + pos
    q = lin(qk_in, in_w[:D], in_b[:D]).reshape(S, B, H, Hd) / math.sqrt(Hd)
    k = lin(qk_in, in_w[D:2 * D], in_b[D:2 * D]).reshape(S, B, H, Hd)
    v = lin(src, in_w[2 * D:], in_b[2 * D:]).reshape(S, B, H, Hd)

    scores = jnp.einsum("qbhd,kbhd->bhqk", q, k, precision=_HI)
    attnw = jax.nn.softmax(scores, axis=-1)
    attn = jnp.einsum("bhqk,kbhd->qbhd", attnw, v,
                      precision=_HI).reshape(S, B, D)
    attn = lin(attn, params["out_proj_w"], params["out_proj_b"])

    x = _ln_ref(src + attn, params["norm1_w"], params["norm1_b"])
    ff = lin(jnp.maximum(lin(x, params["linear1_w"], params["linear1_b"]), 0.0),
             params["linear2_w"], params["linear2_b"])
    return _ln_ref(x + ff, params["norm2_w"], params["norm2_b"])


# ----------------------------------- main ------------------------------------
if __name__ == "__main__":
    key = jax.random.PRNGKey(0)
    ks = jax.random.split(key, 16)
    D, F, S, B = D_MODEL, DIM_FF, 8, 2
    sc = 0.1

    params = {
        "in_proj_weight": jax.random.normal(ks[0], (3 * D, D), jnp.float32) * sc,
        "in_proj_bias":   jax.random.normal(ks[1], (3 * D,), jnp.float32) * sc,
        "out_proj_w":     jax.random.normal(ks[2], (D, D), jnp.float32) * sc,
        "out_proj_b":     jax.random.normal(ks[3], (D,), jnp.float32) * sc,
        "linear1_w":      jax.random.normal(ks[4], (F, D), jnp.float32) * sc,
        "linear1_b":      jax.random.normal(ks[5], (F,), jnp.float32) * sc,
        "linear2_w":      jax.random.normal(ks[6], (D, F), jnp.float32) * sc,
        "linear2_b":      jax.random.normal(ks[7], (D,), jnp.float32) * sc,
        "norm1_w": jnp.ones((D,), jnp.float32)
                   + 0.1 * jax.random.normal(ks[8], (D,), jnp.float32),
        "norm1_b": 0.1 * jax.random.normal(ks[9], (D,), jnp.float32),
        "norm2_w": jnp.ones((D,), jnp.float32)
                   + 0.1 * jax.random.normal(ks[10], (D,), jnp.float32),
        "norm2_b": 0.1 * jax.random.normal(ks[11], (D,), jnp.float32),
    }

    src = jax.random.normal(ks[12], (S, B, D), jnp.float32)
    pos = jax.random.normal(ks[13], (S, B, D), jnp.float32) * 0.5

    # TODO(synk): attn_mask / key_padding_mask are not implemented (None path
    # only); dropout layers are identity (inference mode).

    prepped = prepare_params(params)   # one-time weight re-layout (not jitted)

    out = jax.block_until_ready(transformer_encoder_layer(src, pos, prepped))
    assert out.shape == (S, B, D), out.shape

    ref = jax.block_until_ready(transformer_encoder_layer_ref(src, pos, params))
    np.testing.assert_allclose(np.asarray(out), np.asarray(ref),
                               rtol=1e-4, atol=1e-4)

    print("KERNEL_OK")
</pallas_src>

<mosaic_0001>
module attributes {stable_mosaic.version = 11 : i64} {
  func.func @_encoder_layer_kernel(%arg0: memref<16x32xf32, #tpu.memory_space<vmem>>, %arg1: memref<16x32xf32, #tpu.memory_space<vmem>>, %arg2: memref<32x64xf32, #tpu.memory_space<vmem>>, %arg3: memref<32x32xf32, #tpu.memory_space<vmem>>, %arg4: memref<32x32xf32, #tpu.memory_space<vmem>>, %arg5: memref<32x64xf32, #tpu.memory_space<vmem>>, %arg6: memref<64x32xf32, #tpu.memory_space<vmem>>, %arg7: memref<9x64xf32, #tpu.memory_space<vmem>>, %arg8: memref<16x32xf32, #tpu.memory_space<vmem>>) attributes {dimension_semantics = [], scalar_prefetch = 0 : i64, scratch_operands = 0 : i64, tpu.core_type = #tpu.core_type<tc>} {
    %c0 = arith.constant 0 : index
    %c0_0 = arith.constant 0 : index
    %0 = vector.load %arg0[%c0, %c0_0] : memref<16x32xf32, #tpu.memory_space<vmem>>, vector<16x32xf32>
    %c0_1 = arith.constant 0 : index
    %c0_2 = arith.constant 0 : index
    %1 = vector.load %arg1[%c0_1, %c0_2] : memref<16x32xf32, #tpu.memory_space<vmem>>, vector<16x32xf32>
    %2 = arith.addf %0, %1 : vector<16x32xf32>
    %c0_3 = arith.constant 0 : index
    %c0_4 = arith.constant 0 : index
    %3 = vector.load %arg7[%c0_3, %c0_4] : memref<9x64xf32, #tpu.memory_space<vmem>>, vector<1x64xf32>
    %c1 = arith.constant 1 : index
    %c0_5 = arith.constant 0 : index
    %4 = vector.load %arg7[%c1, %c0_5] : memref<9x64xf32, #tpu.memory_space<vmem>>, vector<1x64xf32>
    %c2 = arith.constant 2 : index
    %c0_6 = arith.constant 0 : index
    %5 = vector.load %arg7[%c2, %c0_6] : memref<9x64xf32, #tpu.memory_space<vmem>>, vector<1x32xf32>
    %c3 = arith.constant 3 : index
    %c0_7 = arith.constant 0 : index
    %6 = vector.load %arg7[%c3, %c0_7] : memref<9x64xf32, #tpu.memory_space<vmem>>, vector<1x32xf32>
    %c4 = arith.constant 4 : index
    %c0_8 = arith.constant 0 : index
    %7 = vector.load %arg7[%c4, %c0_8] : memref<9x64xf32, #tpu.memory_space<vmem>>, vector<1x32xf32>
    %c5 = arith.constant 5 : index
    %c0_9 = arith.constant 0 : index
    %8 = vector.load %arg7[%c5, %c0_9] : memref<9x64xf32, #tpu.memory_space<vmem>>, vector<1x32xf32>
    %c6 = arith.constant 6 : index
    %c0_10 = arith.constant 0 : index
    %9 = vector.load %arg7[%c6, %c0_10] : memref<9x64xf32, #tpu.memory_space<vmem>>, vector<1x32xf32>
    %c7 = arith.constant 7 : index
    %c0_11 = arith.constant 0 : index
    %10 = vector.load %arg7[%c7, %c0_11] : memref<9x64xf32, #tpu.memory_space<vmem>>, vector<1x32xf32>
    %c8 = arith.constant 8 : index
    %c0_12 = arith.constant 0 : index
    %11 = vector.load %arg7[%c8, %c0_12] : memref<9x64xf32, #tpu.memory_space<vmem>>, vector<1x32xf32>
    %c0_13 = arith.constant 0 : index
    %c0_14 = arith.constant 0 : index
    %12 = vector.load %arg2[%c0_13, %c0_14] : memref<32x64xf32, #tpu.memory_space<vmem>>, vector<32x64xf32>
    %cst = arith.constant dense<0.000000e+00> : vector<16x64xf32>
    %13 = tpu.matmul %2, %12, %cst {dimension_numbers = #tpu.dot_dimension_numbers<[1], [0], [0], [1], [0, 0, 1, 1], [], []>, precision = #tpu.contract_precision<fp32>} : vector<16x32xf32>, vector<32x64xf32>, vector<16x64xf32> -> vector<16x64xf32>
    %14 = vector.broadcast %3 : vector<1x64xf32> to vector<16x64xf32>
    %15 = arith.addf %13, %14 : vector<16x64xf32>
    %16 = vector.extract_strided_slice %15 {offsets = [0, 0], sizes = [16, 32], strides = [1, 1]} : vector<16x64xf32> to vector<16x32xf32>
    %cst_15 = arith.constant 0.353553385 : f32
    %17 = vector.broadcast %cst_15 : f32 to vector<16x32xf32>
    %18 = arith.mulf %16, %17 : vector<16x32xf32>
    %19 = vector.extract_strided_slice %15 {offsets = [0, 32], sizes = [16, 32], strides = [1, 1]} : vector<16x64xf32> to vector<16x32xf32>
    %c0_16 = arith.constant 0 : index
    %c0_17 = arith.constant 0 : index
    %20 = vector.load %arg3[%c0_16, %c0_17] : memref<32x32xf32, #tpu.memory_space<vmem>>, vector<32x32xf32>
    %cst_18 = arith.constant dense<0.000000e+00> : vector<16x32xf32>
    %21 = tpu.matmul %0, %20, %cst_18 {dimension_numbers = #tpu.dot_dimension_numbers<[1], [0], [0], [1], [0, 0, 1, 1], [], []>, precision = #tpu.contract_precision<fp32>} : vector<16x32xf32>, vector<32x32xf32>, vector<16x32xf32> -> vector<16x32xf32>
    %22 = vector.broadcast %5 : vector<1x32xf32> to vector<16x32xf32>
    %23 = arith.addf %21, %22 : vector<16x32xf32>
    %24 = tpu.iota {dimensions = array<i32: 0>} : vector<16x16xi32>
    %c2_i32 = arith.constant 2 : i32
    %c0_i32 = arith.constant 0 : i32
    %25 = arith.cmpi eq, %c2_i32, %c0_i32 : i32
    %c1_i32 = arith.constant 1 : i32
    %26 = arith.select %25, %c1_i32, %c2_i32 : i32
    %27 = vector.broadcast %26 : i32 to vector<16x16xi32>
    %28 = arith.remsi %24, %27 : vector<16x16xi32>
    %c0_i32_19 = arith.constant 0 : i32
    %29 = vector.broadcast %c0_i32_19 : i32 to vector<16x16xi32>
    %30 = arith.cmpi ne, %28, %29 : vector<16x16xi32>
    %c0_i32_20 = arith.constant 0 : i32
    %31 = vector.broadcast %c0_i32_20 : i32 to vector<16x16xi32>
    %32 = arith.cmpi slt, %28, %31 : vector<16x16xi32>
    %c0_i32_21 = arith.constant 0 : i32
    %33 = arith.cmpi slt, %26, %c0_i32_21 : i32
    %34 = vector.broadcast %33 : i1 to vector<16x16xi1>
    %35 = vector.broadcast %34 : vector<16x16xi1> to vector<16x16xi1>
    %36 = arith.xori %32, %35 : vector<16x16xi1>
    %37 = arith.andi %36, %30 : vector<16x16xi1>
    %38 = vector.broadcast %26 : i32 to vector<16x16xi32>
    %39 = arith.addi %28, %38 : vector<16x16xi32>
    %40 = arith.select %37, %39, %28 : vector<16x16xi1>, vector<16x16xi32>
    %41 = tpu.iota {dimensions = array<i32: 1>} : vector<16x16xi32>
    %c2_i32_22 = arith.constant 2 : i32
    %c0_i32_23 = arith.constant 0 : i32
    %42 = arith.cmpi eq, %c2_i32_22, %c0_i32_23 : i32
    %c1_i32_24 = arith.constant 1 : i32
    %43 = arith.select %42, %c1_i32_24, %c2_i32_22 : i32
    %44 = vector.broadcast %43 : i32 to vector<16x16xi32>
    %45 = arith.remsi %41, %44 : vector<16x16xi32>
    %c0_i32_25 = arith.constant 0 : i32
    %46 = vector.broadcast %c0_i32_25 : i32 to vector<16x16xi32>
    %47 = arith.cmpi ne, %45, %46 : vector<16x16xi32>
    %c0_i32_26 = arith.constant 0 : i32
    %48 = vector.broadcast %c0_i32_26 : i32 to vector<16x16xi32>
    %49 = arith.cmpi slt, %45, %48 : vector<16x16xi32>
    %c0_i32_27 = arith.constant 0 : i32
    %50 = arith.cmpi slt, %43, %c0_i32_27 : i32
    %51 = vector.broadcast %50 : i1 to vector<16x16xi1>
    %52 = vector.broadcast %51 : vector<16x16xi1> to vector<16x16xi1>
    %53 = arith.xori %49, %52 : vector<16x16xi1>
    %54 = arith.andi %53, %47 : vector<16x16xi1>
    %55 = vector.broadcast %43 : i32 to vector<16x16xi32>
    %56 = arith.addi %45, %55 : vector<16x16xi32>
    %57 = arith.select %54, %56, %45 : vector<16x16xi1>, vector<16x16xi32>
    %58 = arith.cmpi eq, %40, %57 : vector<16x16xi32>
    %cst_28 = arith.constant 0.000000e+00 : f32
    %cst_29 = arith.constant -1.000000e+30 : f32
    %59 = vector.broadcast %cst_28 : f32 to vector<16x16xf32>
    %60 = vector.broadcast %cst_29 : f32 to vector<16x16xf32>
    %61 = arith.select %58, %59, %60 : vector<16x16xi1>, vector<16x16xf32>
    %62 = vector.extract_strided_slice %18 {offsets = [0, 0], sizes = [16, 8], strides = [1, 1]} : vector<16x32xf32> to vector<16x8xf32>
    %63 = vector.extract_strided_slice %19 {offsets = [0, 0], sizes = [16, 8], strides = [1, 1]} : vector<16x32xf32> to vector<16x8xf32>
    %64 = vector.extract_strided_slice %23 {offsets = [0, 0], sizes = [16, 8], strides = [1, 1]} : vector<16x32xf32> to vector<16x8xf32>
    %cst_30 = arith.constant dense<0.000000e+00> : vector<16x16xf32>
    %65 = tpu.matmul %62, %63, %cst_30 {dimension_numbers = #tpu.dot_dimension_numbers<[1], [1], [0], [0], [0, 0, 1, 0], [], []>, precision = #tpu.contract_precision<fp32>} : vector<16x8xf32>, vector<16x8xf32>, vector<16x16xf32> -> vector<16x16xf32>
    %66 = arith.addf %65, %61 : vector<16x16xf32>
    %cst_31 = arith.constant dense<0xFF800000> : vector<16xf32>
    %67 = vector.multi_reduction <maximumf>, %66, %cst_31 [1] : vector<16x16xf32> to vector<16xf32>
    %68 = vector.shape_cast %67 : vector<16xf32> to vector<16x1xf32>
    %69 = vector.broadcast %68 : vector<16x1xf32> to vector<16x16xf32>
    %70 = arith.subf %66, %69 : vector<16x16xf32>
    %71 = math.exp %70 : vector<16x16xf32>
    %cst_32 = arith.constant dense<0.000000e+00> : vector<16xf32>
    %72 = vector.multi_reduction <add>, %71, %cst_32 [1] : vector<16x16xf32> to vector<16xf32>
    %73 = vector.shape_cast %72 : vector<16xf32> to vector<16x1xf32>
    %74 = tpu.reciprocal %73 : vector<16x1xf32> -> vector<16x1xf32>
    %75 = vector.broadcast %74 : vector<16x1xf32> to vector<16x16xf32>
    %76 = arith.mulf %71, %75 : vector<16x16xf32>
    %cst_33 = arith.constant dense<0.000000e+00> : vector<16x8xf32>
    %77 = tpu.matmul %76, %64, %cst_33 {dimension_numbers = #tpu.dot_dimension_numbers<[1], [0], [0], [1], [0, 0, 1, 1], [], []>, precision = #tpu.contract_precision<fp32>} : vector<16x16xf32>, vector<16x8xf32>, vector<16x8xf32> -> vector<16x8xf32>
    %78 = vector.extract_strided_slice %18 {offsets = [0, 8], sizes = [16, 8], strides = [1, 1]} : vector<16x32xf32> to vector<16x8xf32>
    %79 = vector.extract_strided_slice %19 {offsets = [0, 8], sizes = [16, 8], strides = [1, 1]} : vector<16x32xf32> to vector<16x8xf32>
    %80 = vector.extract_strided_slice %23 {offsets = [0, 8], sizes = [16, 8], strides = [1, 1]} : vector<16x32xf32> to vector<16x8xf32>
    %cst_34 = arith.constant dense<0.000000e+00> : vector<16x16xf32>
    %81 = tpu.matmul %78, %79, %cst_34 {dimension_numbers = #tpu.dot_dimension_numbers<[1], [1], [0], [0], [0, 0, 1, 0], [], []>, precision = #tpu.contract_precision<fp32>} : vector<16x8xf32>, vector<16x8xf32>, vector<16x16xf32> -> vector<16x16xf32>
    %82 = arith.addf %81, %61 : vector<16x16xf32>
    %cst_35 = arith.constant dense<0xFF800000> : vector<16xf32>
    %83 = vector.multi_reduction <maximumf>, %82, %cst_35 [1] : vector<16x16xf32> to vector<16xf32>
    %84 = vector.shape_cast %83 : vector<16xf32> to vector<16x1xf32>
    %85 = vector.broadcast %84 : vector<16x1xf32> to vector<16x16xf32>
    %86 = arith.subf %82, %85 : vector<16x16xf32>
    %87 = math.exp %86 : vector<16x16xf32>
    %cst_36 = arith.constant dense<0.000000e+00> : vector<16xf32>
    %88 = vector.multi_reduction <add>, %87, %cst_36 [1] : vector<16x16xf32> to vector<16xf32>
    %89 = vector.shape_cast %88 : vector<16xf32> to vector<16x1xf32>
    %90 = tpu.reciprocal %89 : vector<16x1xf32> -> vector<16x1xf32>
    %91 = vector.broadcast %90 : vector<16x1xf32> to vector<16x16xf32>
    %92 = arith.mulf %87, %91 : vector<16x16xf32>
    %cst_37 = arith.constant dense<0.000000e+00> : vector<16x8xf32>
    %93 = tpu.matmul %92, %80, %cst_37 {dimension_numbers = #tpu.dot_dimension_numbers<[1], [0], [0], [1], [0, 0, 1, 1], [], []>, precision = #tpu.contract_precision<fp32>} : vector<16x16xf32>, vector<16x8xf32>, vector<16x8xf32> -> vector<16x8xf32>
    %94 = vector.extract_strided_slice %18 {offsets = [0, 16], sizes = [16, 8], strides = [1, 1]} : vector<16x32xf32> to vector<16x8xf32>
    %95 = vector.extract_strided_slice %19 {offsets = [0, 16], sizes = [16, 8], strides = [1, 1]} : vector<16x32xf32> to vector<16x8xf32>
    %96 = vector.extract_strided_slice %23 {offsets = [0, 16], sizes = [16, 8], strides = [1, 1]} : vector<16x32xf32> to vector<16x8xf32>
    %cst_38 = arith.constant dense<0.000000e+00> : vector<16x16xf32>
    %97 = tpu.matmul %94, %95, %cst_38 {dimension_numbers = #tpu.dot_dimension_numbers<[1], [1], [0], [0], [0, 0, 1, 0], [], []>, precision = #tpu.contract_precision<fp32>} : vector<16x8xf32>, vector<16x8xf32>, vector<16x16xf32> -> vector<16x16xf32>
    %98 = arith.addf %97, %61 : vector<16x16xf32>
    %cst_39 = arith.constant dense<0xFF800000> : vector<16xf32>
    %99 = vector.multi_reduction <maximumf>, %98, %cst_39 [1] : vector<16x16xf32> to vector<16xf32>
    %100 = vector.shape_cast %99 : vector<16xf32> to vector<16x1xf32>
    %101 = vector.broadcast %100 : vector<16x1xf32> to vector<16x16xf32>
    %102 = arith.subf %98, %101 : vector<16x16xf32>
    %103 = math.exp %102 : vector<16x16xf32>
    %cst_40 = arith.constant dense<0.000000e+00> : vector<16xf32>
    %104 = vector.multi_reduction <add>, %103, %cst_40 [1] : vector<16x16xf32> to vector<16xf32>
    %105 = vector.shape_cast %104 : vector<16xf32> to vector<16x1xf32>
    %106 = tpu.reciprocal %105 : vector<16x1xf32> -> vector<16x1xf32>
    %107 = vector.broadcast %106 : vector<16x1xf32> to vector<16x16xf32>
    %108 = arith.mulf %103, %107 : vector<16x16xf32>
    %cst_41 = arith.constant dense<0.000000e+00> : vector<16x8xf32>
    %109 = tpu.matmul %108, %96, %cst_41 {dimension_numbers = #tpu.dot_dimension_numbers<[1], [0], [0], [1], [0, 0, 1, 1], [], []>, precision = #tpu.contract_precision<fp32>} : vector<16x16xf32>, vector<16x8xf32>, vector<16x8xf32> -> vector<16x8xf32>
    %110 = vector.extract_strided_slice %18 {offsets = [0, 24], sizes = [16, 8], strides = [1, 1]} : vector<16x32xf32> to vector<16x8xf32>
    %111 = vector.extract_strided_slice %19 {offsets = [0, 24], sizes = [16, 8], strides = [1, 1]} : vector<16x32xf32> to vector<16x8xf32>
    %112 = vector.extract_strided_slice %23 {offsets = [0, 24], sizes = [16, 8], strides = [1, 1]} : vector<16x32xf32> to vector<16x8xf32>
    %cst_42 = arith.constant dense<0.000000e+00> : vector<16x16xf32>
    %113 = tpu.matmul %110, %111, %cst_42 {dimension_numbers = #tpu.dot_dimension_numbers<[1], [1], [0], [0], [0, 0, 1, 0], [], []>, precision = #tpu.contract_precision<fp32>} : vector<16x8xf32>, vector<16x8xf32>, vector<16x16xf32> -> vector<16x16xf32>
    %114 = arith.addf %113, %61 : vector<16x16xf32>
    %cst_43 = arith.constant dense<0xFF800000> : vector<16xf32>
    %115 = vector.multi_reduction <maximumf>, %114, %cst_43 [1] : vector<16x16xf32> to vector<16xf32>
    %116 = vector.shape_cast %115 : vector<16xf32> to vector<16x1xf32>
    %117 = vector.broadcast %116 : vector<16x1xf32> to vector<16x16xf32>
    %118 = arith.subf %114, %117 : vector<16x16xf32>
    %119 = math.exp %118 : vector<16x16xf32>
    %cst_44 = arith.constant dense<0.000000e+00> : vector<16xf32>
    %120 = vector.multi_reduction <add>, %119, %cst_44 [1] : vector<16x16xf32> to vector<16xf32>
    %121 = vector.shape_cast %120 : vector<16xf32> to vector<16x1xf32>
    %122 = tpu.reciprocal %121 : vector<16x1xf32> -> vector<16x1xf32>
    %123 = vector.broadcast %122 : vector<16x1xf32> to vector<16x16xf32>
    %124 = arith.mulf %119, %123 : vector<16x16xf32>
    %cst_45 = arith.constant dense<0.000000e+00> : vector<16x8xf32>
    %125 = tpu.matmul %124, %112, %cst_45 {dimension_numbers = #tpu.dot_dimension_numbers<[1], [0], [0], [1], [0, 0, 1, 1], [], []>, precision = #tpu.contract_precision<fp32>} : vector<16x16xf32>, vector<16x8xf32>, vector<16x8xf32> -> vector<16x8xf32>
    %126 = tpu.concatenate %77, %93, %109, %125 in 1 : vector<16x8xf32>, vector<16x8xf32>, vector<16x8xf32>, vector<16x8xf32> -> vector<16x32xf32>
    %c0_46 = arith.constant 0 : index
    %c0_47 = arith.constant 0 : index
    %127 = vector.load %arg4[%c0_46, %c0_47] : memref<32x32xf32, #tpu.memory_space<vmem>>, vector<32x32xf32>
    %cst_48 = arith.constant dense<0.000000e+00> : vector<16x32xf32>
    %128 = tpu.matmul %126, %127, %cst_48 {dimension_numbers = #tpu.dot_dimension_numbers<[1], [0], [0], [1], [0, 0, 1, 1], [], []>, precision = #tpu.contract_precision<fp32>} : vector<16x32xf32>, vector<32x32xf32>, vector<16x32xf32> -> vector<16x32xf32>
    %129 = vector.broadcast %6 : vector<1x32xf32> to vector<16x32xf32>
    %130 = arith.addf %128, %129 : vector<16x32xf32>
    %131 = arith.addf %0, %130 : vector<16x32xf32>
    %cst_49 = arith.constant dense<0.000000e+00> : vector<16xf32>
    %132 = vector.multi_reduction <add>, %131, %cst_49 [1] : vector<16x32xf32> to vector<16xf32>
    %133 = vector.shape_cast %132 : vector<16xf32> to vector<16x1xf32>
    %cst_50 = arith.constant 3.200000e+01 : f32
    %134 = vector.broadcast %cst_50 : f32 to vector<16x1xf32>
    %135 = arith.divf %133, %134 : vector<16x1xf32>
    %136 = vector.broadcast %135 : vector<16x1xf32> to vector<16x32xf32>
    %137 = arith.subf %131, %136 : vector<16x32xf32>
    %138 = arith.mulf %137, %137 : vector<16x32xf32>
    %cst_51 = arith.constant dense<0.000000e+00> : vector<16xf32>
    %139 = vector.multi_reduction <add>, %138, %cst_51 [1] : vector<16x32xf32> to vector<16xf32>
    %140 = vector.shape_cast %139 : vector<16xf32> to vector<16x1xf32>
    %cst_52 = arith.constant 3.200000e+01 : f32
    %141 = vector.broadcast %cst_52 : f32 to vector<16x1xf32>
    %142 = arith.divf %140, %141 : vector<16x1xf32>
    %143 = vector.broadcast %135 : vector<16x1xf32> to vector<16x32xf32>
    %144 = arith.subf %131, %143 : vector<16x32xf32>
    %cst_53 = arith.constant 9.99999974E-6 : f32
    %145 = vector.broadcast %cst_53 : f32 to vector<16x1xf32>
    %146 = arith.addf %142, %145 : vector<16x1xf32>
    %147 = math.rsqrt %146 : vector<16x1xf32>
    %148 = vector.broadcast %147 : vector<16x1xf32> to vector<16x32xf32>
    %149 = arith.mulf %144, %148 : vector<16x32xf32>
    %150 = vector.broadcast %8 : vector<1x32xf32> to vector<16x32xf32>
    %151 = arith.mulf %149, %150 : vector<16x32xf32>
    %152 = vector.broadcast %9 : vector<1x32xf32> to vector<16x32xf32>
    %153 = arith.addf %151, %152 : vector<16x32xf32>
    %c0_54 = arith.constant 0 : index
    %c0_55 = arith.constant 0 : index
    %154 = vector.load %arg5[%c0_54, %c0_55] : memref<32x64xf32, #tpu.memory_space<vmem>>, vector<32x64xf32>
    %cst_56 = arith.constant dense<0.000000e+00> : vector<16x64xf32>
    %155 = tpu.matmul %153, %154, %cst_56 {dimension_numbers = #tpu.dot_dimension_numbers<[1], [0], [0], [1], [0, 0, 1, 1], [], []>, precision = #tpu.contract_precision<fp32>} : vector<16x32xf32>, vector<32x64xf32>, vector<16x64xf32> -> vector<16x64xf32>
    %156 = vector.broadcast %4 : vector<1x64xf32> to vector<16x64xf32>
    %157 = arith.addf %155, %156 : vector<16x64xf32>
    %cst_57 = arith.constant 0.000000e+00 : f32
    %158 = vector.broadcast %cst_57 : f32 to vector<16x64xf32>
    %159 = arith.maximumf %157, %158 : vector<16x64xf32>
    %c0_58 = arith.constant 0 : index
    %c0_59 = arith.constant 0 : index
    %160 = vector.load %arg6[%c0_58, %c0_59] : memref<64x32xf32, #tpu.memory_space<vmem>>, vector<64x32xf32>
    %cst_60 = arith.constant dense<0.000000e+00> : vector<16x32xf32>
    %161 = tpu.matmul %159, %160, %cst_60 {dimension_numbers = #tpu.dot_dimension_numbers<[1], [0], [0], [1], [0, 0, 1, 1], [], []>, precision = #tpu.contract_precision<fp32>} : vector<16x64xf32>, vector<64x32xf32>, vector<16x32xf32> -> vector<16x32xf32>
    %162 = vector.broadcast %7 : vector<1x32xf32> to vector<16x32xf32>
    %163 = arith.addf %161, %162 : vector<16x32xf32>
    %164 = arith.addf %153, %163 : vector<16x32xf32>
    %cst_61 = arith.constant dense<0.000000e+00> : vector<16xf32>
    %165 = vector.multi_reduction <add>, %164, %cst_61 [1] : vector<16x32xf32> to vector<16xf32>
    %166 = vector.shape_cast %165 : vector<16xf32> to vector<16x1xf32>
    %cst_62 = arith.constant 3.200000e+01 : f32
    %167 = vector.broadcast %cst_62 : f32 to vector<16x1xf32>
    %168 = arith.divf %166, %167 : vector<16x1xf32>
    %169 = vector.broadcast %168 : vector<16x1xf32> to vector<16x32xf32>
    %170 = arith.subf %164, %169 : vector<16x32xf32>
    %171 = arith.mulf %170, %170 : vector<16x32xf32>
    %cst_63 = arith.constant dense<0.000000e+00> : vector<16xf32>
    %172 = vector.multi_reduction <add>, %171, %cst_63 [1] : vector<16x32xf32> to vector<16xf32>
    %173 = vector.shape_cast %172 : vector<16xf32> to vector<16x1xf32>
    %cst_64 = arith.constant 3.200000e+01 : f32
    %174 = vector.broadcast %cst_64 : f32 to vector<16x1xf32>
    %175 = arith.divf %173, %174 : vector<16x1xf32>
    %176 = vector.broadcast %168 : vector<16x1xf32> to vector<16x32xf32>
    %177 = arith.subf %164, %176 : vector<16x32xf32>
    %cst_65 = arith.constant 9.99999974E-6 : f32
    %178 = vector.broadcast %cst_65 : f32 to vector<16x1xf32>
    %179 = arith.addf %175, %178 : vector<16x1xf32>
    %180 = math.rsqrt %179 : vector<16x1xf32>
    %181 = vector.broadcast %180 : vector<16x1xf32> to vector<16x32xf32>
    %182 = arith.mulf %177, %181 : vector<16x32xf32>
    %183 = vector.broadcast %10 : vector<1x32xf32> to vector<16x32xf32>
    %184 = arith.mulf %182, %183 : vector<16x32xf32>
    %185 = vector.broadcast %11 : vector<1x32xf32> to vector<16x32xf32>
    %186 = arith.addf %184, %185 : vector<16x32xf32>
    %c0_66 = arith.constant 0 : index
    %c0_67 = arith.constant 0 : index
    %187 = vector.load %arg8[%c0_66, %c0_67] : memref<16x32xf32, #tpu.memory_space<vmem>>, vector<16x32xf32>
    tpu.vector_store %arg8[%c0_66, %c0_67], %186 {strides = array<i32>} : memref<16x32xf32, #tpu.memory_space<vmem>>, vector<16x32xf32>,
    return
  }
}

</mosaic_0001>

<llo_original>
// kernel: transformer_encoder_layer.1
$region0: #{transformer_encoder_layer.1}
  #allocation0 [shape = 'u32[]', space=smem, size = 0x4, offset = 0x4, fixed_abs, tag = 'smem constant byte address 0x4 - core index']
  #allocation1 [shape = 'u32[144,128]{1,0:T(1,128)}', space=vmem, size = 0x12000, scoped, tag = 'internal scratch']
  %s0 = inlined_call_operand.hbm [shape: f32[16,32], index: 0, kind: input, shape index: {}]
  %s1 = inlined_call_operand.hbm [shape: f32[16,32], index: 1, kind: input, shape index: {}]
  %s2 = inlined_call_operand.vmem [shape: f32[32,64], index: 2, kind: input, shape index: {}]
  %s3 = inlined_call_operand.vmem [shape: f32[32,32], index: 3, kind: input, shape index: {}]
  %s4 = inlined_call_operand.vmem [shape: f32[32,32], index: 4, kind: input, shape index: {}]
  %s5 = inlined_call_operand.hbm [shape: f32[32,64], index: 5, kind: input, shape index: {}]
  %s6 = inlined_call_operand.vmem [shape: f32[64,32], index: 6, kind: input, shape index: {}]
  %s7 = inlined_call_operand.hbm [shape: f32[9,64], index: 7, kind: input, shape index: {}]
  %s8 = inlined_call_operand.hbm [shape: f32[16,32], index: 8, kind: output, shape index: {}]
  %s9 = sld [smem:[#allocation0]]
  $region58: #{transformer_encoder_layer.1} parent=0
    _
  %s11 = ssub.s32 1, %s9
  %s12 = scalar_select 0, %s11, %s9
  $region1: #{transformer_encoder_layer.1} parent=0
    #allocation2 [shape = 'u8[8192]{0}', space=vmem, size = 0x2000, scoped, tag = 'input window, operand 0, single buffered']
    #allocation3 [shape = 's32[1]{0}', space=sflag, size = 0x4, scoped, tag = 'scoped memory for transformer_encoder_layer.1']
    #allocation4 [shape = 's32[1]{0}', space=sflag, size = 0x4, scoped, tag = 'scoped memory for transformer_encoder_layer.1']
    #allocation5 [shape = 'u8[8192]{0}', space=vmem, size = 0x2000, scoped, tag = 'input window, operand 1, single buffered']
    #allocation6 [shape = 's32[1]{0}', space=sflag, size = 0x4, scoped, tag = 'scoped memory for transformer_encoder_layer.1']
    #allocation7 [shape = 'u8[16384]{0}', space=vmem, size = 0x4000, scoped, tag = 'input window, operand 5, single buffered']
    #allocation8 [shape = 'u8[8192]{0}', space=vmem, size = 0x2000, scoped, tag = 'input window, operand 7, single buffered']
    #allocation9 [shape = 's32[1]{0}', space=sflag, size = 0x4, scoped, tag = 'scoped memory for transformer_encoder_layer.1']
    #allocation10 [shape = 'u8[8192]{0}', space=vmem, size = 0x2000, scoped, tag = 'output window, operand 0, single buffered']
    %13 = vsyncpa [#allocation3], 0
    %14 = vsyncpa [#allocation6], 0
    %15 = vsyncpa [#allocation9], 0
    %16 = vsyncpa [#allocation4], 0
    // Predicated region
    $region2: #{transformer_encoder_layer.1} parent=1 // pred_check
      _
    $region3: #{transformer_encoder_layer.1} parent=1 // pred_check_branch
      %18 = sbr.rel (0) target = $region5
    $region4: #{transformer_encoder_layer.1} parent=1 // pred_region
      %s20 = ssub.s32 256, 256
      %21 = vsyncadd [#allocation3], %s20
      %s22 = sshll.u32 [#allocation2], 4
      %s23 = int_to_ptr.vmem [resolvable:$true] %s22
      %28 = dma.hbm_to_vmem [thread:$0]  %s0, 256, %s23, [#allocation3], 128, 128, 8
    $region5: #{transformer_encoder_layer.1} parent=1 // pred_fallthru
      _
    // Predicated region
    $region6: #{transformer_encoder_layer.1} parent=1 // pred_check
      _
    $region7: #{transformer_encoder_layer.1} parent=1 // pred_check_branch
      %30 = sbr.rel (0) target = $region9
    $region8: #{transformer_encoder_layer.1} parent=1 // pred_region
      %s32 = ssub.s32 256, 256
      %33 = vsyncadd [#allocation6], %s32
      %s34 = sshll.u32 [#allocation5], 4
      %s35 = int_to_ptr.vmem [resolvable:$true] %s34
      %40 = dma.hbm_to_vmem [thread:$0]  %s1, 256, %s35, [#allocation6], 128, 128, 8
    $region9: #{transformer_encoder_layer.1} parent=1 // pred_fallthru
      _
    // Predicated region
    $region10: #{transformer_encoder_layer.1} parent=1 // pred_check
      _
    $region11: #{transformer_encoder_layer.1} parent=1 // pred_check_branch
      %42 = sbr.rel (0) target = $region13
    $region12: #{transformer_encoder_layer.1} parent=1 // pred_region
      _
    $region13: #{transformer_encoder_layer.1} parent=1 // pred_fallthru
      _
    // Predicated region
    $region14: #{transformer_encoder_layer.1} parent=1 // pred_check
      _
    $region15: #{transformer_encoder_layer.1} parent=1 // pred_check_branch
      %44 = sbr.rel (0) target = $region17
    $region16: #{transformer_encoder_layer.1} parent=1 // pred_region
      _
    $region17: #{transformer_encoder_layer.1} parent=1 // pred_fallthru
      _
    // Predicated region
    $region18: #{transformer_encoder_layer.1} parent=1 // pred_check
      _
    $region19: #{transformer_encoder_layer.1} parent=1 // pred_check_branch
      %46 = sbr.rel (0) target = $region21
    $region20: #{transformer_encoder_layer.1} parent=1 // pred_region
      _
    $region21: #{transformer_encoder_layer.1} parent=1 // pred_fallthru
      _
    // Predicated region
    $region22: #{transformer_encoder_layer.1} parent=1 // pred_check
      _
    $region23: #{transformer_encoder_layer.1} parent=1 // pred_check_branch
      %48 = sbr.rel (0) target = $region25
    $region24: #{transformer_encoder_layer.1} parent=1 // pred_region
      %s50 = ssub.s32 512, 512
      %51 = vsyncadd [#allocation6], %s50
      %s52 = sshll.u32 [#allocation7], 4
      %s53 = int_to_ptr.vmem [resolvable:$true] %s52
      %58 = dma.hbm_to_vmem [thread:$0]  %s5, 512, %s53, [#allocation6], 128, 128, 8
    $region25: #{transformer_encoder_layer.1} parent=1 // pred_fallthru
      _
    // Predicated region
    $region26: #{transformer_encoder_layer.1} parent=1 // pred_check
      _
    $region27: #{transformer_encoder_layer.1} parent=1 // pred_check_branch
      %60 = sbr.rel (0) target = $region29
    $region28: #{transformer_encoder_layer.1} parent=1 // pred_region
      _
    $region29: #{transformer_encoder_layer.1} parent=1 // pred_fallthru
      _
    // Predicated region
    $region30: #{transformer_encoder_layer.1} parent=1 // pred_check
      _
    $region31: #{transformer_encoder_layer.1} parent=1 // pred_check_branch
      %62 = sbr.rel (0) target = $region33
    $region32: #{transformer_encoder_layer.1} parent=1 // pred_region
      %s64 = ssub.s32 256, 256
      %65 = vsyncadd [#allocation9], %s64
      %s66 = sshll.u32 [#allocation8], 4
      %s67 = int_to_ptr.vmem [resolvable:$true] %s66
      %72 = dma.hbm_to_vmem [thread:$0]  %s7, 256, %s67, [#allocation9], 128, 128, 8
    $region33: #{transformer_encoder_layer.1} parent=1 // pred_fallthru
      _
    // Predicated region
    $region34: #{transformer_encoder_layer.1} parent=1 // pred_check
      _
    $region35: #{transformer_encoder_layer.1} parent=1 // pred_check_branch
      %74 = sbr.rel (0) target = $region37
    $region36: #{transformer_encoder_layer.1} parent=1 // pred_region
      %75 = dma.done [#allocation3], 256
    $region37: #{transformer_encoder_layer.1} parent=1 // pred_fallthru
      _
    // Predicated region
    $region38: #{transformer_encoder_layer.1} parent=1 // pred_check
      _
    $region39: #{transformer_encoder_layer.1} parent=1 // pred_check_branch
      %77 = sbr.rel (0) target = $region41
    $region40: #{transformer_encoder_layer.1} parent=1 // pred_region
      %78 = dma.done [#allocation6], 256
    $region41: #{transformer_encoder_layer.1} parent=1 // pred_fallthru
      _
    // Predicated region
    $region42: #{transformer_encoder_layer.1} parent=1 // pred_check
      _
    $region43: #{transformer_encoder_layer.1} parent=1 // pred_check_branch
      %80 = sbr.rel (0) target = $region45
    $region44: #{transformer_encoder_layer.1} parent=1 // pred_region
      %81 = dma.done [#allocation6], 512
    $region45: #{transformer_encoder_layer.1} parent=1 // pred_fallthru
      _
    // Predicated region
    $region46: #{transformer_encoder_layer.1} parent=1 // pred_check
      _
    $region47: #{transformer_encoder_layer.1} parent=1 // pred_check_branch
      %83 = sbr.rel (0) target = $region49
    $region48: #{transformer_encoder_layer.1} parent=1 // pred_region
      %84 = dma.done [#allocation9], 256
    $region49: #{transformer_encoder_layer.1} parent=1 // pred_fallthru
      _
    %v85 = vld [vmem:[#allocation2] sm:$0xff]
    %v86 = vld [vmem:[#allocation2 + $0x8] sm:$0xff]
    %v87 = vld [vmem:[#allocation5] sm:$0xff]
    %v88 = vld [vmem:[#allocation5 + $0x8] sm:$0xff]
    %v89 = vadd.f32 %v85, %v87
    %v90 = vadd.f32 %v86, %v88
    %v91 = vld [vmem:[#allocation8] sm:$0x1]
    %v92 = vld [vmem:[#allocation8 + $0x1] sm:$0x1]
    %v93 = vld [vmem:[#allocation8 + $0x2] sm:$0x1]
    %v94 = vld [vmem:[#allocation8 + $0x3] sm:$0x1]
    %v95 = vld [vmem:[#allocation8 + $0x4] sm:$0x1]
    %v96 = vld [vmem:[#allocation8 + $0x5] sm:$0x1]
    %v97 = vld [vmem:[#allocation8 + $0x6] sm:$0x1]
    %v98 = vld [vmem:[#allocation8 + $0x7] sm:$0x1]
    %v99 = vld [vmem:[#allocation8 + $0x8] sm:$0x1]
    %v100 = vld [vmem:[%s2] sm:$0xff]
    %v101 = vld [vmem:[%s2 + $0x8] sm:$0xff]
    %v102 = vld [vmem:[%s2 + $0x10] sm:$0xff]
    %v103 = vld [vmem:[%s2 + $0x18] sm:$0xff]
    %v104 = vlaneseq
    %v105 = vshrl.u32 %v104, 7
    %v106 = vsub.s32 0, %v105
    %v107 = vrot.slane %v91, %v106
    %vm108 = vcmask 261120
    %v110 = vsel %vm108, %v89, 0
    %v113 = vsel %vm108, %v90, 0
    %115 = vmatprep.subr.mxu0 0.0
    %116 = vmatpush1.msra.mxu0 0.0
    %117 = vmatprep.subr.mxu0 0.0
    %118 = vmatpush1.msra.mxu0 0.0
    %119 = vmatprep.subr.mxu0 0.0
    %120 = vmatpush1.msra.mxu0 0.0
    %121 = vmatprep.subr.mxu0 0.0
    %122 = vmatpush1.msra.mxu0 0.0
    %123 = vmatprep.subr.mxu0 0.0
    %124 = vmatpush1.msra.mxu0 0.0
    %125 = vmatprep.subr.mxu0 0.0
    %126 = vmatpush1.msra.mxu0 0.0
    %127 = vmatprep.subr.mxu0 0.0
    %128 = vmatpush1.msra.mxu0 0.0
    %129 = vmatprep.subr.mxu0 0.0
    %130 = vmatpush1.msra.mxu0 0.0
    %131 = vmatprep.subr.mxu0 0.0
    %132 = vmatpush1.msra.mxu0 0.0
    %133 = vmatprep.subr.mxu0 0.0
    %134 = vmatpush1.msra.mxu0 0.0
    %135 = vmatprep.subr.mxu0 0.0
    %136 = vmatpush1.msra.mxu0 0.0
    %137 = vmatprep.subr.mxu0 0.0
    %138 = vmatpush1.msra.mxu0 0.0
    %139 = vmatprep.subr.mxu0 0.0
    %v140 = vand.u32 %v103, 4294901760
    %141 = vmatpush1.msra.mxu0 %v140
    %142 = vmatprep.subr.mxu0 0.0
    %v143 = vand.u32 %v102, 4294901760
    %144 = vmatpush1.msra.mxu0 %v143
    %145 = vmatprep.subr.mxu0 0.0
    %v146 = vand.u32 %v101, 4294901760
    %147 = vmatpush1.msra.mxu0 %v146
    %148 = vmatprep.subr.mxu0 0.0
    %v149 = vand.u32 %v100, 4294901760
    %150 = vmatpush1.msra.mxu0 %v149
    %151 = vmatprep.subr.mxu0 0.0
    %152 = vmatpush2.msra.mxu0 0.0
    %153 = vmatprep.subr.mxu0 0.0
    %154 = vmatpush2.msra.mxu0 0.0
    %155 = vmatprep.subr.mxu0 0.0
    %156 = vmatpush2.msra.mxu0 0.0
    %157 = vmatprep.subr.mxu0 0.0
    %158 = vmatpush2.msra.mxu0 0.0
    %159 = vmatprep.subr.mxu0 0.0
    %160 = vmatpush2.msra.mxu0 0.0
    %161 = vmatprep.subr.mxu0 0.0
    %162 = vmatpush2.msra.mxu0 0.0
    %163 = vmatprep.subr.mxu0 0.0
    %164 = vmatpush2.msra.mxu0 0.0
    %165 = vmatprep.subr.mxu0 0.0
    %166 = vmatpush2.msra.mxu0 0.0
    %167 = vmatprep.subr.mxu0 0.0
    %168 = vmatpush2.msra.mxu0 0.0
    %169 = vmatprep.subr.mxu0 0.0
    %170 = vmatpush2.msra.mxu0 0.0
    %171 = vmatprep.subr.mxu0 0.0
    %172 = vmatpush2.msra.mxu0 0.0
    %173 = vmatprep.subr.mxu0 0.0
    %174 = vmatpush2.msra.mxu0 0.0
    %175 = vmatprep.subr.mxu0 0.0
    %176 = vmatpush2.msra.mxu0 0.0
    %177 = vmatprep.subr.mxu0 0.0
    %178 = vmatpush2.msra.mxu0 0.0
    %179 = vmatprep.subr.mxu0 0.0
    %180 = vmatpush2.msra.mxu0 0.0
    %181 = vmatprep.subr.mxu0 0.0
    %182 = vmatpush2.msra.mxu0 0.0
    %183 = vmatprep.mubr.f32.mxu0 0.0
    %v184 = vand.u32 %v110, 4294901760
    %v185 = vsub.f32 %v110, %v184
    %v186 = vand.u32 %v185, 4294901760
    %v187 = vsub.f32 %v185, %v186
    %v188 = vand.u32 %v187, 4294901760
    %189 = vmatmul.mubr.f32.gmra.mxu0 %v188
    %v190 = vpop.f32.mrf.mxu0
    %v191 = vadd.f32 %v107, %v190
    %v192 = vpop.f32.mrf.mxu0
    %193 = vmatprep.mubr.f32.mxu0 0.0
    %v194 = vand.u32 %v113, 4294901760
    %v195 = vsub.f32 %v113, %v194
    %v196 = vand.u32 %v195, 4294901760
    %v197 = vsub.f32 %v195, %v196
    %v198 = vand.u32 %v197, 4294901760
    %199 = vmatmul.mubr.f32.gmra.mxu0 %v198
    %v200 = vpop.f32.mrf.mxu0
    %v201 = vadd.f32 %v107, %v200
    %v202 = vpop.f32.mrf.mxu0
    %203 = vdwg.mxu0
    %204 = vmatprep.subr.mxu0 0.0
    %205 = vmatpush1.msra.mxu0 0.0
    %206 = vmatprep.subr.mxu0 0.0
    %207 = vmatpush1.msra.mxu0 0.0
    %208 = vmatprep.subr.mxu0 0.0
    %209 = vmatpush1.msra.mxu0 0.0
    %210 = vmatprep.subr.mxu0 0.0
    %211 = vmatpush1.msra.mxu0 0.0
    %212 = vmatprep.subr.mxu0 0.0
    %213 = vmatpush1.msra.mxu0 0.0
    %214 = vmatprep.subr.mxu0 0.0
    %215 = vmatpush1.msra.mxu0 0.0
    %216 = vmatprep.subr.mxu0 0.0
    %217 = vmatpush1.msra.mxu0 0.0
    %218 = vmatprep.subr.mxu0 0.0
    %219 = vmatpush1.msra.mxu0 0.0
    %220 = vmatprep.subr.mxu0 0.0
    %221 = vmatpush1.msra.mxu0 0.0
    %222 = vmatprep.subr.mxu0 0.0
    %223 = vmatpush1.msra.mxu0 0.0
    %224 = vmatprep.subr.mxu0 0.0
    %225 = vmatpush1.msra.mxu0 0.0
    %226 = vmatprep.subr.mxu0 0.0
    %227 = vmatpush1.msra.mxu0 0.0
    %228 = vmatprep.subr.mxu0 0.0
    %v229 = vand.u32 %v103, 4294901760
    %v230 = vsub.f32 %v103, %v229
    %v231 = vand.u32 %v230, 4294901760
    %v232 = vsub.f32 %v230, %v231
    %v233 = vand.u32 %v232, 4294901760
    %234 = vmatpush1.msra.mxu0 %v233
    %235 = vmatprep.subr.mxu0 0.0
    %v236 = vand.u32 %v102, 4294901760
    %v237 = vsub.f32 %v102, %v236
    %v238 = vand.u32 %v237, 4294901760
    %v239 = vsub.f32 %v237, %v238
    %v240 = vand.u32 %v239, 4294901760
    %241 = vmatpush1.msra.mxu0 %v240
    %242 = vmatprep.subr.mxu0 0.0
    %v243 = vand.u32 %v101, 4294901760
    %v244 = vsub.f32 %v101, %v243
    %v245 = vand.u32 %v244, 4294901760
    %v246 = vsub.f32 %v244, %v245
    %v247 = vand.u32 %v246, 4294901760
    %248 = vmatpush1.msra.mxu0 %v247
    %249 = vmatprep.subr.mxu0 0.0
    %v250 = vand.u32 %v100, 4294901760
    %v251 = vsub.f32 %v100, %v250
    %v252 = vand.u32 %v251, 4294901760
    %v253 = vsub.f32 %v251, %v252
    %v254 = vand.u32 %v253, 4294901760
    %255 = vmatpush1.msra.mxu0 %v254
    %256 = vmatprep.subr.mxu0 0.0
    %257 = vmatpush2.msra.mxu0 0.0
    %258 = vmatprep.subr.mxu0 0.0
    %259 = vmatpush2.msra.mxu0 0.0
    %260 = vmatprep.subr.mxu0 0.0
    %261 = vmatpush2.msra.mxu0 0.0
    %262 = vmatprep.subr.mxu0 0.0
    %263 = vmatpush2.msra.mxu0 0.0
    %264 = vmatprep.subr.mxu0 0.0
    %265 = vmatpush2.msra.mxu0 0.0
    %266 = vmatprep.subr.mxu0 0.0
    %267 = vmatpush2.msra.mxu0 0.0
    %268 = vmatprep.subr.mxu0 0.0
    %269 = vmatpush2.msra.mxu0 0.0
    %270 = vmatprep.subr.mxu0 0.0
    %271 = vmatpush2.msra.mxu0 0.0
    %272 = vmatprep.subr.mxu0 0.0
    %273 = vmatpush2.msra.mxu0 0.0
    %274 = vmatprep.subr.mxu0 0.0
    %275 = vmatpush2.msra.mxu0 0.0
    %276 = vmatprep.subr.mxu0 0.0
    %277 = vmatpush2.msra.mxu0 0.0
    %278 = vmatprep.subr.mxu0 0.0
    %279 = vmatpush2.msra.mxu0 0.0
    %280 = vmatprep.subr.mxu0 0.0
    %281 = vmatpush2.msra.mxu0 0.0
    %282 = vmatprep.subr.mxu0 0.0
    %283 = vmatpush2.msra.mxu0 0.0
    %284 = vmatprep.subr.mxu0 0.0
    %285 = vmatpush2.msra.mxu0 0.0
    %286 = vmatprep.subr.mxu0 0.0
    %287 = vmatpush2.msra.mxu0 0.0
    %288 = vmatprep.mubr.f32.mxu0 0.0
    %v289 = vand.u32 %v110, 4294901760
    %290 = vmatmul.mubr.f32.gmra.mxu0 %v289
    %v291 = vpop.f32.mrf.mxu0
    %v292 = vadd.f32 %v191, %v291
    %v293 = vpop.f32.mrf.mxu0
    %294 = vmatprep.mubr.f32.mxu0 0.0
    %v295 = vand.u32 %v113, 4294901760
    %296 = vmatmul.mubr.f32.gmra.mxu0 %v295
    %v297 = vpop.f32.mrf.mxu0
    %v298 = vadd.f32 %v201, %v297
    %v299 = vpop.f32.mrf.mxu0
    %300 = vdwg.mxu0
    %301 = vmatprep.subr.mxu0 0.0
    %302 = vmatpush1.msra.mxu0 0.0
    %303 = vmatprep.subr.mxu0 0.0
    %304 = vmatpush1.msra.mxu0 0.0
    %305 = vmatprep.subr.mxu0 0.0
    %306 = vmatpush1.msra.mxu0 0.0
    %307 = vmatprep.subr.mxu0 0.0
    %308 = vmatpush1.msra.mxu0 0.0
    %309 = vmatprep.subr.mxu0 0.0
    %310 = vmatpush1.msra.mxu0 0.0
    %311 = vmatprep.subr.mxu0 0.0
    %312 = vmatpush1.msra.mxu0 0.0
    %313 = vmatprep.subr.mxu0 0.0
    %314 = vmatpush1.msra.mxu0 0.0
    %315 = vmatprep.subr.mxu0 0.0
    %316 = vmatpush1.msra.mxu0 0.0
    %317 = vmatprep.subr.mxu0 0.0
    %318 = vmatpush1.msra.mxu0 0.0
    %319 = vmatprep.subr.mxu0 0.0
    %320 = vmatpush1.msra.mxu0 0.0
    %321 = vmatprep.subr.mxu0 0.0
    %322 = vmatpush1.msra.mxu0 0.0
    %323 = vmatprep.subr.mxu0 0.0
    %324 = vmatpush1.msra.mxu0 0.0
    %325 = vmatprep.subr.mxu0 0.0
    %v326 = vand.u32 %v103, 4294901760
    %v327 = vsub.f32 %v103, %v326
    %328 = vmatpush1.msra.mxu0 %v327
    %329 = vmatprep.subr.mxu0 0.0
    %v330 = vand.u32 %v102, 4294901760
    %v331 = vsub.f32 %v102, %v330
    %332 = vmatpush1.msra.mxu0 %v331
    %333 = vmatprep.subr.mxu0 0.0
    %v334 = vand.u32 %v101, 4294901760
    %v335 = vsub.f32 %v101, %v334
    %336 = vmatpush1.msra.mxu0 %v335
    %337 = vmatprep.subr.mxu0 0.0
    %v338 = vand.u32 %v100, 4294901760
    %v339 = vsub.f32 %v100, %v338
    %340 = vmatpush1.msra.mxu0 %v339
    %341 = vmatprep.subr.mxu0 0.0
    %342 = vmatpush2.msra.mxu0 0.0
    %343 = vmatprep.subr.mxu0 0.0
    %344 = vmatpush2.msra.mxu0 0.0
    %345 = vmatprep.subr.mxu0 0.0
    %346 = vmatpush2.msra.mxu0 0.0
    %347 = vmatprep.subr.mxu0 0.0
    %348 = vmatpush2.msra.mxu0 0.0
    %349 = vmatprep.subr.mxu0 0.0
    %350 = vmatpush2.msra.mxu0 0.0
    %351 = vmatprep.subr.mxu0 0.0
    %352 = vmatpush2.msra.mxu0 0.0
    %353 = vmatprep.subr.mxu0 0.0
    %354 = vmatpush2.msra.mxu0 0.0
    %355 = vmatprep.subr.mxu0 0.0
    %356 = vmatpush2.msra.mxu0 0.0
    %357 = vmatprep.subr.mxu0 0.0
    %358 = vmatpush2.msra.mxu0 0.0
    %359 = vmatprep.subr.mxu0 0.0
    %360 = vmatpush2.msra.mxu0 0.0
    %361 = vmatprep.subr.mxu0 0.0
    %362 = vmatpush2.msra.mxu0 0.0
    %363 = vmatprep.subr.mxu0 0.0
    %364 = vmatpush2.msra.mxu0 0.0
    %365 = vmatprep.subr.mxu0 0.0
    %366 = vmatpush2.msra.mxu0 0.0
    %367 = vmatprep.subr.mxu0 0.0
    %368 = vmatpush2.msra.mxu0 0.0
    %369 = vmatprep.subr.mxu0 0.0
    %370 = vmatpush2.msra.mxu0 0.0
    %371 = vmatprep.subr.mxu0 0.0
    %372 = vmatpush2.msra.mxu0 0.0
    %373 = vmatprep.mubr.f32.mxu0 0.0
    %v374 = vand.u32 %v110, 4294901760
    %v375 = vsub.f32 %v110, %v374
    %376 = vmatmul.mubr.f32.gmra.mxu0 %v375
    %v377 = vpop.f32.mrf.mxu0
    %v378 = vadd.f32 %v292, %v377
    %v379 = vpop.f32.mrf.mxu0
    %380 = vmatprep.mubr.f32.mxu0 0.0
    %v381 = vand.u32 %v113, 4294901760
    %v382 = vsub.f32 %v113, %v381
    %383 = vmatmul.mubr.f32.gmra.mxu0 %v382
    %v384 = vpop.f32.mrf.mxu0
    %v385 = vadd.f32 %v298, %v384
    %v386 = vpop.f32.mrf.mxu0
    %387 = vdwg.mxu0
    %388 = vmatprep.subr.mxu0 0.0
    %389 = vmatpush1.msra.mxu0 0.0
    %390 = vmatprep.subr.mxu0 0.0
    %391 = vmatpush1.msra.mxu0 0.0
    %392 = vmatprep.subr.mxu0 0.0
    %393 = vmatpush1.msra.mxu0 0.0
    %394 = vmatprep.subr.mxu0 0.0
    %395 = vmatpush1.msra.mxu0 0.0
    %396 = vmatprep.subr.mxu0 0.0
    %397 = vmatpush1.msra.mxu0 0.0
    %398 = vmatprep.subr.mxu0 0.0
    %399 = vmatpush1.msra.mxu0 0.0
    %400 = vmatprep.subr.mxu0 0.0
    %401 = vmatpush1.msra.mxu0 0.0
    %402 = vmatprep.subr.mxu0 0.0
    %403 = vmatpush1.msra.mxu0 0.0
    %404 = vmatprep.subr.mxu0 0.0
    %405 = vmatpush1.msra.mxu0 0.0
    %406 = vmatprep.subr.mxu0 0.0
    %407 = vmatpush1.msra.mxu0 0.0
    %408 = vmatprep.subr.mxu0 0.0
    %409 = vmatpush1.msra.mxu0 0.0
    %410 = vmatprep.subr.mxu0 0.0
    %411 = vmatpush1.msra.mxu0 0.0
    %412 = vmatprep.subr.mxu0 0.0
    %v413 = vand.u32 %v103, 4294901760
    %414 = vmatpush1.msra.mxu0 %v413
    %415 = vmatprep.subr.mxu0 0.0
    %v416 = vand.u32 %v102, 4294901760
    %417 = vmatpush1.msra.mxu0 %v416
    %418 = vmatprep.subr.mxu0 0.0
    %v419 = vand.u32 %v101, 4294901760
    %420 = vmatpush1.msra.mxu0 %v419
    %421 = vmatprep.subr.mxu0 0.0
    %v422 = vand.u32 %v100, 4294901760
    %423 = vmatpush1.msra.mxu0 %v422
    %424 = vmatprep.subr.mxu0 0.0
    %425 = vmatpush2.msra.mxu0 0.0
    %426 = vmatprep.subr.mxu0 0.0
    %427 = vmatpush2.msra.mxu0 0.0
    %428 = vmatprep.subr.mxu0 0.0
    %429 = vmatpush2.msra.mxu0 0.0
    %430 = vmatprep.subr.mxu0 0.0
    %431 = vmatpush2.msra.mxu0 0.0
    %432 = vmatprep.subr.mxu0 0.0
    %433 = vmatpush2.msra.mxu0 0.0
    %434 = vmatprep.subr.mxu0 0.0
    %435 = vmatpush2.msra.mxu0 0.0
    %436 = vmatprep.subr.mxu0 0.0
    %437 = vmatpush2.msra.mxu0 0.0
    %438 = vmatprep.subr.mxu0 0.0
    %439 = vmatpush2.msra.mxu0 0.0
    %440 = vmatprep.subr.mxu0 0.0
    %441 = vmatpush2.msra.mxu0 0.0
    %442 = vmatprep.subr.mxu0 0.0
    %443 = vmatpush2.msra.mxu0 0.0
    %444 = vmatprep.subr.mxu0 0.0
    %445 = vmatpush2.msra.mxu0 0.0
    %446 = vmatprep.subr.mxu0 0.0
    %447 = vmatpush2.msra.mxu0 0.0
    %448 = vmatprep.subr.mxu0 0.0
    %449 = vmatpush2.msra.mxu0 0.0
    %450 = vmatprep.subr.mxu0 0.0
    %451 = vmatpush2.msra.mxu0 0.0
    %452 = vmatprep.subr.mxu0 0.0
    %453 = vmatpush2.msra.mxu0 0.0
    %454 = vmatprep.subr.mxu0 0.0
    %455 = vmatpush2.msra.mxu0 0.0
    %456 = vmatprep.mubr.f32.mxu0 0.0
    %v457 = vand.u32 %v110, 4294901760
    %v458 = vsub.f32 %v110, %v457
    %v459 = vand.u32 %v458, 4294901760
    %460 = vmatmul.mubr.f32.gmra.mxu0 %v459
    %v461 = vpop.f32.mrf.mxu0
    %v462 = vadd.f32 %v378, %v461
    %v463 = vpop.f32.mrf.mxu0
    %464 = vmatprep.mubr.f32.mxu0 0.0
    %v465 = vand.u32 %v113, 4294901760
    %v466 = vsub.f32 %v113, %v465
    %v467 = vand.u32 %v466, 4294901760
    %468 = vmatmul.mubr.f32.gmra.mxu0 %v467
    %v469 = vpop.f32.mrf.mxu0
    %v470 = vadd.f32 %v385, %v469
    %v471 = vpop.f32.mrf.mxu0
    %472 = vdwg.mxu0
    %473 = vmatprep.subr.mxu0 0.0
    %474 = vmatpush1.msra.mxu0 0.0
    %475 = vmatprep.subr.mxu0 0.0
    %476 = vmatpush1.msra.mxu0 0.0
    %477 = vmatprep.subr.mxu0 0.0
    %478 = vmatpush1.msra.mxu0 0.0
    %479 = vmatprep.subr.mxu0 0.0
    %480 = vmatpush1.msra.mxu0 0.0
    %481 = vmatprep.subr.mxu0 0.0
    %482 = vmatpush1.msra.mxu0 0.0
    %483 = vmatprep.subr.mxu0 0.0
    %484 = vmatpush1.msra.mxu0 0.0
    %485 = vmatprep.subr.mxu0 0.0
    %486 = vmatpush1.msra.mxu0 0.0
    %487 = vmatprep.subr.mxu0 0.0
    %488 = vmatpush1.msra.mxu0 0.0
    %489 = vmatprep.subr.mxu0 0.0
    %490 = vmatpush1.msra.mxu0 0.0
    %491 = vmatprep.subr.mxu0 0.0
    %492 = vmatpush1.msra.mxu0 0.0
    %493 = vmatprep.subr.mxu0 0.0
    %494 = vmatpush1.msra.mxu0 0.0
    %495 = vmatprep.subr.mxu0 0.0
    %496 = vmatpush1.msra.mxu0 0.0
    %497 = vmatprep.subr.mxu0 0.0
    %v498 = vand.u32 %v103, 4294901760
    %v499 = vsub.f32 %v103, %v498
    %v500 = vand.u32 %v499, 4294901760
    %501 = vmatpush1.msra.mxu0 %v500
    %502 = vmatprep.subr.mxu0 0.0
    %v503 = vand.u32 %v102, 4294901760
    %v504 = vsub.f32 %v102, %v503
    %v505 = vand.u32 %v504, 4294901760
    %506 = vmatpush1.msra.mxu0 %v505
    %507 = vmatprep.subr.mxu0 0.0
    %v508 = vand.u32 %v101, 4294901760
    %v509 = vsub.f32 %v101, %v508
    %v510 = vand.u32 %v509, 4294901760
    %511 = vmatpush1.msra.mxu0 %v510
    %512 = vmatprep.subr.mxu0 0.0
    %v513 = vand.u32 %v100, 4294901760
    %v514 = vsub.f32 %v100, %v513
    %v515 = vand.u32 %v514, 4294901760
    %516 = vmatpush1.msra.mxu0 %v515
    %517 = vmatprep.subr.mxu0 0.0
    %518 = vmatpush2.msra.mxu0 0.0
    %519 = vmatprep.subr.mxu0 0.0
    %520 = vmatpush2.msra.mxu0 0.0
    %521 = vmatprep.subr.mxu0 0.0
    %522 = vmatpush2.msra.mxu0 0.0
    %523 = vmatprep.subr.mxu0 0.0
    %524 = vmatpush2.msra.mxu0 0.0
    %525 = vmatprep.subr.mxu0 0.0
    %526 = vmatpush2.msra.mxu0 0.0
    %527 = vmatprep.subr.mxu0 0.0
    %528 = vmatpush2.msra.mxu0 0.0
    %529 = vmatprep.subr.mxu0 0.0
    %530 = vmatpush2.msra.mxu0 0.0
    %531 = vmatprep.subr.mxu0 0.0
    %532 = vmatpush2.msra.mxu0 0.0
    %533 = vmatprep.subr.mxu0 0.0
    %534 = vmatpush2.msra.mxu0 0.0
    %535 = vmatprep.subr.mxu0 0.0
    %536 = vmatpush2.msra.mxu0 0.0
    %537 = vmatprep.subr.mxu0 0.0
    %538 = vmatpush2.msra.mxu0 0.0
    %539 = vmatprep.subr.mxu0 0.0
    %540 = vmatpush2.msra.mxu0 0.0
    %541 = vmatprep.subr.mxu0 0.0
    %542 = vmatpush2.msra.mxu0 0.0
    %543 = vmatprep.subr.mxu0 0.0
    %544 = vmatpush2.msra.mxu0 0.0
    %545 = vmatprep.subr.mxu0 0.0
    %546 = vmatpush2.msra.mxu0 0.0
    %547 = vmatprep.subr.mxu0 0.0
    %548 = vmatpush2.msra.mxu0 0.0
    %549 = vmatprep.mubr.f32.mxu0 0.0
    %v550 = vand.u32 %v110, 4294901760
    %551 = vmatmul.mubr.f32.gmra.mxu0 %v550
    %v552 = vpop.f32.mrf.mxu0
    %v553 = vadd.f32 %v462, %v552
    %v554 = vpop.f32.mrf.mxu0
    %555 = vmatprep.mubr.f32.mxu0 0.0
    %v556 = vand.u32 %v113, 4294901760
    %557 = vmatmul.mubr.f32.gmra.mxu0 %v556
    %v558 = vpop.f32.mrf.mxu0
    %v559 = vadd.f32 %v470, %v558
    %v560 = vpop.f32.mrf.mxu0
    %561 = vdwg.mxu0
    %562 = vmatprep.subr.mxu0 0.0
    %563 = vmatpush1.msra.mxu0 0.0
    %564 = vmatprep.subr.mxu0 0.0
    %565 = vmatpush1.msra.mxu0 0.0
    %566 = vmatprep.subr.mxu0 0.0
    %567 = vmatpush1.msra.mxu0 0.0
    %568 = vmatprep.subr.mxu0 0.0
    %569 = vmatpush1.msra.mxu0 0.0
    %570 = vmatprep.subr.mxu0 0.0
    %571 = vmatpush1.msra.mxu0 0.0
    %572 = vmatprep.subr.mxu0 0.0
    %573 = vmatpush1.msra.mxu0 0.0
    %574 = vmatprep.subr.mxu0 0.0
    %575 = vmatpush1.msra.mxu0 0.0
    %576 = vmatprep.subr.mxu0 0.0
    %577 = vmatpush1.msra.mxu0 0.0
    %578 = vmatprep.subr.mxu0 0.0
    %579 = vmatpush1.msra.mxu0 0.0
    %580 = vmatprep.subr.mxu0 0.0
    %581 = vmatpush1.msra.mxu0 0.0
    %582 = vmatprep.subr.mxu0 0.0
    %583 = vmatpush1.msra.mxu0 0.0
    %584 = vmatprep.subr.mxu0 0.0
    %585 = vmatpush1.msra.mxu0 0.0
    %586 = vmatprep.subr.mxu0 0.0
    %v587 = vand.u32 %v103, 4294901760
    %588 = vmatpush1.msra.mxu0 %v587
    %589 = vmatprep.subr.mxu0 0.0
    %v590 = vand.u32 %v102, 4294901760
    %591 = vmatpush1.msra.mxu0 %v590
    %592 = vmatprep.subr.mxu0 0.0
    %v593 = vand.u32 %v101, 4294901760
    %594 = vmatpush1.msra.mxu0 %v593
    %595 = vmatprep.subr.mxu0 0.0
    %v596 = vand.u32 %v100, 4294901760
    %597 = vmatpush1.msra.mxu0 %v596
    %598 = vmatprep.subr.mxu0 0.0
    %599 = vmatpush2.msra.mxu0 0.0
    %600 = vmatprep.subr.mxu0 0.0
    %601 = vmatpush2.msra.mxu0 0.0
    %602 = vmatprep.subr.mxu0 0.0
    %603 = vmatpush2.msra.mxu0 0.0
    %604 = vmatprep.subr.mxu0 0.0
    %605 = vmatpush2.msra.mxu0 0.0
    %606 = vmatprep.subr.mxu0 0.0
    %607 = vmatpush2.msra.mxu0 0.0
    %608 = vmatprep.subr.mxu0 0.0
    %609 = vmatpush2.msra.mxu0 0.0
    %610 = vmatprep.subr.mxu0 0.0
    %611 = vmatpush2.msra.mxu0 0.0
    %612 = vmatprep.subr.mxu0 0.0
    %613 = vmatpush2.msra.mxu0 0.0
    %614 = vmatprep.subr.mxu0 0.0
    %615 = vmatpush2.msra.mxu0 0.0
    %616 = vmatprep.subr.mxu0 0.0
    %617 = vmatpush2.msra.mxu0 0.0
    %618 = vmatprep.subr.mxu0 0.0
    %619 = vmatpush2.msra.mxu0 0.0
    %620 = vmatprep.subr.mxu0 0.0
    %621 = vmatpush2.msra.mxu0 0.0
    %622 = vmatprep.subr.mxu0 0.0
    %623 = vmatpush2.msra.mxu0 0.0
    %624 = vmatprep.subr.mxu0 0.0
    %625 = vmatpush2.msra.mxu0 0.0
    %626 = vmatprep.subr.mxu0 0.0
    %627 = vmatpush2.msra.mxu0 0.0
    %628 = vmatprep.subr.mxu0 0.0
    %629 = vmatpush2.msra.mxu0 0.0
    %630 = vmatprep.mubr.f32.mxu0 0.0
    %v631 = vand.u32 %v110, 4294901760
    %632 = vmatmul.mubr.f32.gmra.mxu0 %v631
    %v633 = vpop.f32.mrf.mxu0
    %v634 = vadd.f32 %v553, %v633
    %v635 = vpop.f32.mrf.mxu0
    %636 = vmatprep.mubr.f32.mxu0 0.0
    %v637 = vand.u32 %v113, 4294901760
    %638 = vmatmul.mubr.f32.gmra.mxu0 %v637
    %v639 = vpop.f32.mrf.mxu0
    %v640 = vadd.f32 %v559, %v639
    %v641 = vpop.f32.mrf.mxu0
    %642 = vdwg.mxu0
    %v643 = vmul.f32 %v634, 0.35355338
    %v644 = vmul.f32 %v640, 0.35355338
    %v645 = vld [vmem:[%s3] sm:$0xff]
    %v646 = vld [vmem:[%s3 + $0x8] sm:$0xff]
    %v647 = vld [vmem:[%s3 + $0x10] sm:$0xff]
    %v648 = vld [vmem:[%s3 + $0x18] sm:$0xff]
    %v649 = vlaneseq
    %v650 = vshrl.u32 %v649, 7
    %v651 = vsub.s32 0, %v650
    %v652 = vrot.slane %v93, %v651
    %v654 = vsel %vm108, %v85, 0
    %v657 = vsel %vm108, %v86, 0
    %659 = vmatprep.subr.mxu0 0.0
    %660 = vmatpush1.msra.mxu0 0.0
    %661 = vmatprep.subr.mxu0 0.0
    %662 = vmatpush1.msra.mxu0 0.0
    %663 = vmatprep.subr.mxu0 0.0
    %664 = vmatpush1.msra.mxu0 0.0
    %665 = vmatprep.subr.mxu0 0.0
    %666 = vmatpush1.msra.mxu0 0.0
    %667 = vmatprep.subr.mxu0 0.0
    %668 = vmatpush1.msra.mxu0 0.0
    %669 = vmatprep.subr.mxu0 0.0
    %670 = vmatpush1.msra.mxu0 0.0
    %671 = vmatprep.subr.mxu0 0.0
    %672 = vmatpush1.msra.mxu0 0.0
    %673 = vmatprep.subr.mxu0 0.0
    %674 = vmatpush1.msra.mxu0 0.0
    %675 = vmatprep.subr.mxu0 0.0
    %676 = vmatpush1.msra.mxu0 0.0
    %677 = vmatprep.subr.mxu0 0.0
    %678 = vmatpush1.msra.mxu0 0.0
    %679 = vmatprep.subr.mxu0 0.0
    %680 = vmatpush1.msra.mxu0 0.0
    %681 = vmatprep.subr.mxu0 0.0
    %682 = vmatpush1.msra.mxu0 0.0
    %683 = vmatprep.subr.mxu0 0.0
    %v684 = vand.u32 %v648, 4294901760
    %685 = vmatpush1.msra.mxu0 %v684
    %686 = vmatprep.subr.mxu0 0.0
    %v687 = vand.u32 %v647, 4294901760
    %688 = vmatpush1.msra.mxu0 %v687
    %689 = vmatprep.subr.mxu0 0.0
    %v690 = vand.u32 %v646, 4294901760
    %691 = vmatpush1.msra.mxu0 %v690
    %692 = vmatprep.subr.mxu0 0.0
    %v693 = vand.u32 %v645, 4294901760
    %694 = vmatpush1.msra.mxu0 %v693
    %695 = vmatprep.subr.mxu0 0.0
    %696 = vmatpush2.msra.mxu0 0.0
    %697 = vmatprep.subr.mxu0 0.0
    %698 = vmatpush2.msra.mxu0 0.0
    %699 = vmatprep.subr.mxu0 0.0
    %700 = vmatpush2.msra.mxu0 0.0
    %701 = vmatprep.subr.mxu0 0.0
    %702 = vmatpush2.msra.mxu0 0.0
    %703 = vmatprep.subr.mxu0 0.0
    %704 = vmatpush2.msra.mxu0 0.0
    %705 = vmatprep.subr.mxu0 0.0
    %706 = vmatpush2.msra.mxu0 0.0
    %707 = vmatprep.subr.mxu0 0.0
    %708 = vmatpush2.msra.mxu0 0.0
    %709 = vmatprep.subr.mxu0 0.0
    %710 = vmatpush2.msra.mxu0 0.0
    %711 = vmatprep.subr.mxu0 0.0
    %712 = vmatpush2.msra.mxu0 0.0
    %713 = vmatprep.subr.mxu0 0.0
    %714 = vmatpush2.msra.mxu0 0.0
    %715 = vmatprep.subr.mxu0 0.0
    %716 = vmatpush2.msra.mxu0 0.0
    %717 = vmatprep.subr.mxu0 0.0
    %718 = vmatpush2.msra.mxu0 0.0
    %719 = vmatprep.subr.mxu0 0.0
    %720 = vmatpush2.msra.mxu0 0.0
    %721 = vmatprep.subr.mxu0 0.0
    %722 = vmatpush2.msra.mxu0 0.0
    %723 = vmatprep.subr.mxu0 0.0
    %724 = vmatpush2.msra.mxu0 0.0
    %725 = vmatprep.subr.mxu0 0.0
    %726 = vmatpush2.msra.mxu0 0.0
    %727 = vmatprep.mubr.f32.mxu0 0.0
    %v728 = vand.u32 %v654, 4294901760
    %v729 = vsub.f32 %v654, %v728
    %v730 = vand.u32 %v729, 4294901760
    %v731 = vsub.f32 %v729, %v730
    %v732 = vand.u32 %v731, 4294901760
    %733 = vmatmul.mubr.f32.gmra.mxu0 %v732
    %v734 = vpop.f32.mrf.mxu0
    %v735 = vadd.f32 %v652, %v734
    %v736 = vpop.f32.mrf.mxu0
    %737 = vmatprep.mubr.f32.mxu0 0.0
    %v738 = vand.u32 %v657, 4294901760
    %v739 = vsub.f32 %v657, %v738
    %v740 = vand.u32 %v739, 4294901760
    %v741 = vsub.f32 %v739, %v740
    %v742 = vand.u32 %v741, 4294901760
    %743 = vmatmul.mubr.f32.gmra.mxu0 %v742
    %v744 = vpop.f32.mrf.mxu0
    %v745 = vadd.f32 %v652, %v744
    %v746 = vpop.f32.mrf.mxu0
    %747 = vdwg.mxu0
    %748 = vmatprep.subr.mxu0 0.0
    %749 = vmatpush1.msra.mxu0 0.0
    %750 = vmatprep.subr.mxu0 0.0
    %751 = vmatpush1.msra.mxu0 0.0
    %752 = vmatprep.subr.mxu0 0.0
    %753 = vmatpush1.msra.mxu0 0.0
    %754 = vmatprep.subr.mxu0 0.0
    %755 = vmatpush1.msra.mxu0 0.0
    %756 = vmatprep.subr.mxu0 0.0
    %757 = vmatpush1.msra.mxu0 0.0
    %758 = vmatprep.subr.mxu0 0.0
    %759 = vmatpush1.msra.mxu0 0.0
    %760 = vmatprep.subr.mxu0 0.0
    %761 = vmatpush1.msra.mxu0 0.0
    %762 = vmatprep.subr.mxu0 0.0
    %763 = vmatpush1.msra.mxu0 0.0
    %764 = vmatprep.subr.mxu0 0.0
    %765 = vmatpush1.msra.mxu0 0.0
    %766 = vmatprep.subr.mxu0 0.0
    %767 = vmatpush1.msra.mxu0 0.0
    %768 = vmatprep.subr.mxu0 0.0
    %769 = vmatpush1.msra.mxu0 0.0
    %770 = vmatprep.subr.mxu0 0.0
    %771 = vmatpush1.msra.mxu0 0.0
    %772 = vmatprep.subr.mxu0 0.0
    %v773 = vand.u32 %v648, 4294901760
    %v774 = vsub.f32 %v648, %v773
    %v775 = vand.u32 %v774, 4294901760
    %v776 = vsub.f32 %v774, %v775
    %v777 = vand.u32 %v776, 4294901760
    %778 = vmatpush1.msra.mxu0 %v777
    %779 = vmatprep.subr.mxu0 0.0
    %v780 = vand.u32 %v647, 4294901760
    %v781 = vsub.f32 %v647, %v780
    %v782 = vand.u32 %v781, 4294901760
    %v783 = vsub.f32 %v781, %v782
    %v784 = vand.u32 %v783, 4294901760
    %785 = vmatpush1.msra.mxu0 %v784
    %786 = vmatprep.subr.mxu0 0.0
    %v787 = vand.u32 %v646, 4294901760
    %v788 = vsub.f32 %v646, %v787
    %v789 = vand.u32 %v788, 4294901760
    %v790 = vsub.f32 %v788, %v789
    %v791 = vand.u32 %v790, 4294901760
    %792 = vmatpush1.msra.mxu0 %v791
    %793 = vmatprep.subr.mxu0 0.0
    %v794 = vand.u32 %v645, 4294901760
    %v795 = vsub.f32 %v645, %v794
    %v796 = vand.u32 %v795, 4294901760
    %v797 = vsub.f32 %v795, %v796
    %v798 = vand.u32 %v797, 4294901760
    %799 = vmatpush1.msra.mxu0 %v798
    %800 = vmatprep.subr.mxu0 0.0
    %801 = vmatpush2.msra.mxu0 0.0
    %802 = vmatprep.subr.mxu0 0.0
    %803 = vmatpush2.msra.mxu0 0.0
    %804 = vmatprep.subr.mxu0 0.0
    %805 = vmatpush2.msra.mxu0 0.0
    %806 = vmatprep.subr.mxu0 0.0
    %807 = vmatpush2.msra.mxu0 0.0
    %808 = vmatprep.subr.mxu0 0.0
    %809 = vmatpush2.msra.mxu0 0.0
    %810 = vmatprep.subr.mxu0 0.0
    %811 = vmatpush2.msra.mxu0 0.0
    %812 = vmatprep.subr.mxu0 0.0
    %813 = vmatpush2.msra.mxu0 0.0
    %814 = vmatprep.subr.mxu0 0.0
    %815 = vmatpush2.msra.mxu0 0.0
    %816 = vmatprep.subr.mxu0 0.0
    %817 = vmatpush2.msra.mxu0 0.0
    %818 = vmatprep.subr.mxu0 0.0
    %819 = vmatpush2.msra.mxu0 0.0
    %820 = vmatprep.subr.mxu0 0.0
    %821 = vmatpush2.msra.mxu0 0.0
    %822 = vmatprep.subr.mxu0 0.0
    %823 = vmatpush2.msra.mxu0 0.0
    %824 = vmatprep.subr.mxu0 0.0
    %825 = vmatpush2.msra.mxu0 0.0
    %826 = vmatprep.subr.mxu0 0.0
    %827 = vmatpush2.msra.mxu0 0.0
    %828 = vmatprep.subr.mxu0 0.0
    %829 = vmatpush2.msra.mxu0 0.0
    %830 = vmatprep.subr.mxu0 0.0
    %831 = vmatpush2.msra.mxu0 0.0
    %832 = vmatprep.mubr.f32.mxu0 0.0
    %v833 = vand.u32 %v654, 4294901760
    %834 = vmatmul.mubr.f32.gmra.mxu0 %v833
    %v835 = vpop.f32.mrf.mxu0
    %v836 = vadd.f32 %v735, %v835
    %v837 = vpop.f32.mrf.mxu0
    %838 = vmatprep.mubr.f32.mxu0 0.0
    %v839 = vand.u32 %v657, 4294901760
    %840 = vmatmul.mubr.f32.gmra.mxu0 %v839
    %v841 = vpop.f32.mrf.mxu0
    %v842 = vadd.f32 %v745, %v841
    %v843 = vpop.f32.mrf.mxu0
    %844 = vdwg.mxu0
    %845 = vmatprep.subr.mxu0 0.0
    %846 = vmatpush1.msra.mxu0 0.0
    %847 = vmatprep.subr.mxu0 0.0
    %848 = vmatpush1.msra.mxu0 0.0
    %849 = vmatprep.subr.mxu0 0.0
    %850 = vmatpush1.msra.mxu0 0.0
    %851 = vmatprep.subr.mxu0 0.0
    %852 = vmatpush1.msra.mxu0 0.0
    %853 = vmatprep.subr.mxu0 0.0
    %854 = vmatpush1.msra.mxu0 0.0
    %855 = vmatprep.subr.mxu0 0.0
    %856 = vmatpush1.msra.mxu0 0.0
    %857 = vmatprep.subr.mxu0 0.0
    %858 = vmatpush1.msra.mxu0 0.0
    %859 = vmatprep.subr.mxu0 0.0
    %860 = vmatpush1.msra.mxu0 0.0
    %861 = vmatprep.subr.mxu0 0.0
    %862 = vmatpush1.msra.mxu0 0.0
    %863 = vmatprep.subr.mxu0 0.0
    %864 = vmatpush1.msra.mxu0 0.0
    %865 = vmatprep.subr.mxu0 0.0
    %866 = vmatpush1.msra.mxu0 0.0
    %867 = vmatprep.subr.mxu0 0.0
    %868 = vmatpush1.msra.mxu0 0.0
    %869 = vmatprep.subr.mxu0 0.0
    %v870 = vand.u32 %v648, 4294901760
    %v871 = vsub.f32 %v648, %v870
    %872 = vmatpush1.msra.mxu0 %v871
    %873 = vmatprep.subr.mxu0 0.0
    %v874 = vand.u32 %v647, 4294901760
    %v875 = vsub.f32 %v647, %v874
    %876 = vmatpush1.msra.mxu0 %v875
    %877 = vmatprep.subr.mxu0 0.0
    %v878 = vand.u32 %v646, 4294901760
    %v879 = vsub.f32 %v646, %v878
    %880 = vmatpush1.msra.mxu0 %v879
    %881 = vmatprep.subr.mxu0 0.0
    %v882 = vand.u32 %v645, 4294901760
    %v883 = vsub.f32 %v645, %v882
    %884 = vmatpush1.msra.mxu0 %v883
    %885 = vmatprep.subr.mxu0 0.0
    %886 = vmatpush2.msra.mxu0 0.0
    %887 = vmatprep.subr.mxu0 0.0
    %888 = vmatpush2.msra.mxu0 0.0
    %889 = vmatprep.subr.mxu0 0.0
    %890 = vmatpush2.msra.mxu0 0.0
    %891 = vmatprep.subr.mxu0 0.0
    %892 = vmatpush2.msra.mxu0 0.0
    %893 = vmatprep.subr.mxu0 0.0
    %894 = vmatpush2.msra.mxu0 0.0
    %895 = vmatprep.subr.mxu0 0.0
    %896 = vmatpush2.msra.mxu0 0.0
    %897 = vmatprep.subr.mxu0 0.0
    %898 = vmatpush2.msra.mxu0 0.0
    %899 = vmatprep.subr.mxu0 0.0
    %900 = vmatpush2.msra.mxu0 0.0
    %901 = vmatprep.subr.mxu0 0.0
    %902 = vmatpush2.msra.mxu0 0.0
    %903 = vmatprep.subr.mxu0 0.0
    %904 = vmatpush2.msra.mxu0 0.0
    %905 = vmatprep.subr.mxu0 0.0
    %906 = vmatpush2.msra.mxu0 0.0
    %907 = vmatprep.subr.mxu0 0.0
    %908 = vmatpush2.msra.mxu0 0.0
    %909 = vmatprep.subr.mxu0 0.0
    %910 = vmatpush2.msra.mxu0 0.0
    %911 = vmatprep.subr.mxu0 0.0
    %912 = vmatpush2.msra.mxu0 0.0
    %913 = vmatprep.subr.mxu0 0.0
    %914 = vmatpush2.msra.mxu0 0.0
    %915 = vmatprep.subr.mxu0 0.0
    %916 = vmatpush2.msra.mxu0 0.0
    %917 = vmatprep.mubr.f32.mxu0 0.0
    %v918 = vand.u32 %v654, 4294901760
    %v919 = vsub.f32 %v654, %v918
    %920 = vmatmul.mubr.f32.gmra.mxu0 %v919
    %v921 = vpop.f32.mrf.mxu0
    %v922 = vadd.f32 %v836, %v921
    %v923 = vpop.f32.mrf.mxu0
    %924 = vmatprep.mubr.f32.mxu0 0.0
    %v925 = vand.u32 %v657, 4294901760
    %v926 = vsub.f32 %v657, %v925
    %927 = vmatmul.mubr.f32.gmra.mxu0 %v926
    %v928 = vpop.f32.mrf.mxu0
    %v929 = vadd.f32 %v842, %v928
    %v930 = vpop.f32.mrf.mxu0
    %931 = vdwg.mxu0
    %932 = vmatprep.subr.mxu0 0.0
    %933 = vmatpush1.msra.mxu0 0.0
    %934 = vmatprep.subr.mxu0 0.0
    %935 = vmatpush1.msra.mxu0 0.0
    %936 = vmatprep.subr.mxu0 0.0
    %937 = vmatpush1.msra.mxu0 0.0
    %938 = vmatprep.subr.mxu0 0.0
    %939 = vmatpush1.msra.mxu0 0.0
    %940 = vmatprep.subr.mxu0 0.0
    %941 = vmatpush1.msra.mxu0 0.0
    %942 = vmatprep.subr.mxu0 0.0
    %943 = vmatpush1.msra.mxu0 0.0
    %944 = vmatprep.subr.mxu0 0.0
    %945 = vmatpush1.msra.mxu0 0.0
    %946 = vmatprep.subr.mxu0 0.0
    %947 = vmatpush1.msra.mxu0 0.0
    %948 = vmatprep.subr.mxu0 0.0
    %949 = vmatpush1.msra.mxu0 0.0
    %950 = vmatprep.subr.mxu0 0.0
    %951 = vmatpush1.msra.mxu0 0.0
    %952 = vmatprep.subr.mxu0 0.0
    %953 = vmatpush1.msra.mxu0 0.0
    %954 = vmatprep.subr.mxu0 0.0
    %955 = vmatpush1.msra.mxu0 0.0
    %956 = vmatprep.subr.mxu0 0.0
    %v957 = vand.u32 %v648, 4294901760
    %958 = vmatpush1.msra.mxu0 %v957
    %959 = vmatprep.subr.mxu0 0.0
    %v960 = vand.u32 %v647, 4294901760
    %961 = vmatpush1.msra.mxu0 %v960
    %962 = vmatprep.subr.mxu0 0.0
    %v963 = vand.u32 %v646, 4294901760
    %964 = vmatpush1.msra.mxu0 %v963
    %965 = vmatprep.subr.mxu0 0.0
    %v966 = vand.u32 %v645, 4294901760
    %967 = vmatpush1.msra.mxu0 %v966
    %968 = vmatprep.subr.mxu0 0.0
    %969 = vmatpush2.msra.mxu0 0.0
    %970 = vmatprep.subr.mxu0 0.0
    %971 = vmatpush2.msra.mxu0 0.0
    %972 = vmatprep.subr.mxu0 0.0
    %973 = vmatpush2.msra.mxu0 0.0
    %974 = vmatprep.subr.mxu0 0.0
    %975 = vmatpush2.msra.mxu0 0.0
    %976 = vmatprep.subr.mxu0 0.0
    %977 = vmatpush2.msra.mxu0 0.0
    %978 = vmatprep.subr.mxu0 0.0
    %979 = vmatpush2.msra.mxu0 0.0
    %980 = vmatprep.subr.mxu0 0.0
    %981 = vmatpush2.msra.mxu0 0.0
    %982 = vmatprep.subr.mxu0 0.0
    %983 = vmatpush2.msra.mxu0 0.0
    %984 = vmatprep.subr.mxu0 0.0
    %985 = vmatpush2.msra.mxu0 0.0
    %986 = vmatprep.subr.mxu0 0.0
    %987 = vmatpush2.msra.mxu0 0.0
    %988 = vmatprep.subr.mxu0 0.0
    %989 = vmatpush2.msra.mxu0 0.0
    %990 = vmatprep.subr.mxu0 0.0
    %991 = vmatpush2.msra.mxu0 0.0
    %992 = vmatprep.subr.mxu0 0.0
    %993 = vmatpush2.msra.mxu0 0.0
    %994 = vmatprep.subr.mxu0 0.0
    %995 = vmatpush2.msra.mxu0 0.0
    %996 = vmatprep.subr.mxu0 0.0
    %997 = vmatpush2.msra.mxu0 0.0
    %998 = vmatprep.subr.mxu0 0.0
    %999 = vmatpush2.msra.mxu0 0.0
    %1000 = vmatprep.mubr.f32.mxu0 0.0
    %v1001 = vand.u32 %v654, 4294901760
    %v1002 = vsub.f32 %v654, %v1001
    %v1003 = vand.u32 %v1002, 4294901760
    %1004 = vmatmul.mubr.f32.gmra.mxu0 %v1003
    %v1005 = vpop.f32.mrf.mxu0
    %v1006 = vadd.f32 %v922, %v1005
    %v1007 = vpop.f32.mrf.mxu0
    %1008 = vmatprep.mubr.f32.mxu0 0.0
    %v1009 = vand.u32 %v657, 4294901760
    %v1010 = vsub.f32 %v657, %v1009
    %v1011 = vand.u32 %v1010, 4294901760
    %1012 = vmatmul.mubr.f32.gmra.mxu0 %v1011
    %v1013 = vpop.f32.mrf.mxu0
    %v1014 = vadd.f32 %v929, %v1013
    %v1015 = vpop.f32.mrf.mxu0
    %1016 = vdwg.mxu0
    %1017 = vmatprep.subr.mxu0 0.0
    %1018 = vmatpush1.msra.mxu0 0.0
    %1019 = vmatprep.subr.mxu0 0.0
    %1020 = vmatpush1.msra.mxu0 0.0
    %1021 = vmatprep.subr.mxu0 0.0
    %1022 = vmatpush1.msra.mxu0 0.0
    %1023 = vmatprep.subr.mxu0 0.0
    %1024 = vmatpush1.msra.mxu0 0.0
    %1025 = vmatprep.subr.mxu0 0.0
    %1026 = vmatpush1.msra.mxu0 0.0
    %1027 = vmatprep.subr.mxu0 0.0
    %1028 = vmatpush1.msra.mxu0 0.0
    %1029 = vmatprep.subr.mxu0 0.0
    %1030 = vmatpush1.msra.mxu0 0.0
    %1031 = vmatprep.subr.mxu0 0.0
    %1032 = vmatpush1.msra.mxu0 0.0
    %1033 = vmatprep.subr.mxu0 0.0
    %1034 = vmatpush1.msra.mxu0 0.0
    %1035 = vmatprep.subr.mxu0 0.0
    %1036 = vmatpush1.msra.mxu0 0.0
    %1037 = vmatprep.subr.mxu0 0.0
    %1038 = vmatpush1.msra.mxu0 0.0
    %1039 = vmatprep.subr.mxu0 0.0
    %1040 = vmatpush1.msra.mxu0 0.0
    %1041 = vmatprep.subr.mxu0 0.0
    %v1042 = vand.u32 %v648, 4294901760
    %v1043 = vsub.f32 %v648, %v1042
    %v1044 = vand.u32 %v1043, 4294901760
    %1045 = vmatpush1.msra.mxu0 %v1044
    %1046 = vmatprep.subr.mxu0 0.0
    %v1047 = vand.u32 %v647, 4294901760
    %v1048 = vsub.f32 %v647, %v1047
    %v1049 = vand.u32 %v1048, 4294901760
    %1050 = vmatpush1.msra.mxu0 %v1049
    %1051 = vmatprep.subr.mxu0 0.0
    %v1052 = vand.u32 %v646, 4294901760
    %v1053 = vsub.f32 %v646, %v1052
    %v1054 = vand.u32 %v1053, 4294901760
    %1055 = vmatpush1.msra.mxu0 %v1054
    %1056 = vmatprep.subr.mxu0 0.0
    %v1057 = vand.u32 %v645, 4294901760
    %v1058 = vsub.f32 %v645, %v1057
    %v1059 = vand.u32 %v1058, 4294901760
    %1060 = vmatpush1.msra.mxu0 %v1059
    %1061 = vmatprep.subr.mxu0 0.0
    %1062 = vmatpush2.msra.mxu0 0.0
    %1063 = vmatprep.subr.mxu0 0.0
    %1064 = vmatpush2.msra.mxu0 0.0
    %1065 = vmatprep.subr.mxu0 0.0
    %1066 = vmatpush2.msra.mxu0 0.0
    %1067 = vmatprep.subr.mxu0 0.0
    %1068 = vmatpush2.msra.mxu0 0.0
    %1069 = vmatprep.subr.mxu0 0.0
    %1070 = vmatpush2.msra.mxu0 0.0
    %1071 = vmatprep.subr.mxu0 0.0
    %1072 = vmatpush2.msra.mxu0 0.0
    %1073 = vmatprep.subr.mxu0 0.0
    %1074 = vmatpush2.msra.mxu0 0.0
    %1075 = vmatprep.subr.mxu0 0.0
    %1076 = vmatpush2.msra.mxu0 0.0
    %1077 = vmatprep.subr.mxu0 0.0
    %1078 = vmatpush2.msra.mxu0 0.0
    %1079 = vmatprep.subr.mxu0 0.0
    %1080 = vmatpush2.msra.mxu0 0.0
    %1081 = vmatprep.subr.mxu0 0.0
    %1082 = vmatpush2.msra.mxu0 0.0
    %1083 = vmatprep.subr.mxu0 0.0
    %1084 = vmatpush2.msra.mxu0 0.0
    %1085 = vmatprep.subr.mxu0 0.0
    %1086 = vmatpush2.msra.mxu0 0.0
    %1087 = vmatprep.subr.mxu0 0.0
    %1088 = vmatpush2.msra.mxu0 0.0
    %1089 = vmatprep.subr.mxu0 0.0
    %1090 = vmatpush2.msra.mxu0 0.0
    %1091 = vmatprep.subr.mxu0 0.0
    %1092 = vmatpush2.msra.mxu0 0.0
    %1093 = vmatprep.mubr.f32.mxu0 0.0
    %v1094 = vand.u32 %v654, 4294901760
    %1095 = vmatmul.mubr.f32.gmra.mxu0 %v1094
    %v1096 = vpop.f32.mrf.mxu0
    %v1097 = vadd.f32 %v1006, %v1096
    %v1098 = vpop.f32.mrf.mxu0
    %1099 = vmatprep.mubr.f32.mxu0 0.0
    %v1100 = vand.u32 %v657, 4294901760
    %1101 = vmatmul.mubr.f32.gmra.mxu0 %v1100
    %v1102 = vpop.f32.mrf.mxu0
    %v1103 = vadd.f32 %v1014, %v1102
    %v1104 = vpop.f32.mrf.mxu0
    %1105 = vdwg.mxu0
    %1106 = vmatprep.subr.mxu0 0.0
    %1107 = vmatpush1.msra.mxu0 0.0
    %1108 = vmatprep.subr.mxu0 0.0
    %1109 = vmatpush1.msra.mxu0 0.0
    %1110 = vmatprep.subr.mxu0 0.0
    %1111 = vmatpush1.msra.mxu0 0.0
    %1112 = vmatprep.subr.mxu0 0.0
    %1113 = vmatpush1.msra.mxu0 0.0
    %1114 = vmatprep.subr.mxu0 0.0
    %1115 = vmatpush1.msra.mxu0 0.0
    %1116 = vmatprep.subr.mxu0 0.0
    %1117 = vmatpush1.msra.mxu0 0.0
    %1118 = vmatprep.subr.mxu0 0.0
    %1119 = vmatpush1.msra.mxu0 0.0
    %1120 = vmatprep.subr.mxu0 0.0
    %1121 = vmatpush1.msra.mxu0 0.0
    %1122 = vmatprep.subr.mxu0 0.0
    %1123 = vmatpush1.msra.mxu0 0.0
    %1124 = vmatprep.subr.mxu0 0.0
    %1125 = vmatpush1.msra.mxu0 0.0
    %1126 = vmatprep.subr.mxu0 0.0
    %1127 = vmatpush1.msra.mxu0 0.0
    %1128 = vmatprep.subr.mxu0 0.0
    %1129 = vmatpush1.msra.mxu0 0.0
    %1130 = vmatprep.subr.mxu0 0.0
    %v1131 = vand.u32 %v648, 4294901760
    %1132 = vmatpush1.msra.mxu0 %v1131
    %1133 = vmatprep.subr.mxu0 0.0
    %v1134 = vand.u32 %v647, 4294901760
    %1135 = vmatpush1.msra.mxu0 %v1134
    %1136 = vmatprep.subr.mxu0 0.0
    %v1137 = vand.u32 %v646, 4294901760
    %1138 = vmatpush1.msra.mxu0 %v1137
    %1139 = vmatprep.subr.mxu0 0.0
    %v1140 = vand.u32 %v645, 4294901760
    %1141 = vmatpush1.msra.mxu0 %v1140
    %1142 = vmatprep.subr.mxu0 0.0
    %1143 = vmatpush2.msra.mxu0 0.0
    %1144 = vmatprep.subr.mxu0 0.0
    %1145 = vmatpush2.msra.mxu0 0.0
    %1146 = vmatprep.subr.mxu0 0.0
    %1147 = vmatpush2.msra.mxu0 0.0
    %1148 = vmatprep.subr.mxu0 0.0
    %1149 = vmatpush2.msra.mxu0 0.0
    %1150 = vmatprep.subr.mxu0 0.0
    %1151 = vmatpush2.msra.mxu0 0.0
    %1152 = vmatprep.subr.mxu0 0.0
    %1153 = vmatpush2.msra.mxu0 0.0
    %1154 = vmatprep.subr.mxu0 0.0
    %1155 = vmatpush2.msra.mxu0 0.0
    %1156 = vmatprep.subr.mxu0 0.0
    %1157 = vmatpush2.msra.mxu0 0.0
    %1158 = vmatprep.subr.mxu0 0.0
    %1159 = vmatpush2.msra.mxu0 0.0
    %1160 = vmatprep.subr.mxu0 0.0
    %1161 = vmatpush2.msra.mxu0 0.0
    %1162 = vmatprep.subr.mxu0 0.0
    %1163 = vmatpush2.msra.mxu0 0.0
    %1164 = vmatprep.subr.mxu0 0.0
    %1165 = vmatpush2.msra.mxu0 0.0
    %1166 = vmatprep.subr.mxu0 0.0
    %1167 = vmatpush2.msra.mxu0 0.0
    %1168 = vmatprep.subr.mxu0 0.0
    %1169 = vmatpush2.msra.mxu0 0.0
    %1170 = vmatprep.subr.mxu0 0.0
    %1171 = vmatpush2.msra.mxu0 0.0
    %1172 = vmatprep.subr.mxu0 0.0
    %1173 = vmatpush2.msra.mxu0 0.0
    %1174 = vmatprep.mubr.f32.mxu0 0.0
    %v1175 = vand.u32 %v654, 4294901760
    %1176 = vmatmul.mubr.f32.gmra.mxu0 %v1175
    %v1177 = vpop.f32.mrf.mxu0
    %v1178 = vadd.f32 %v1097, %v1177
    %v1179 = vpop.f32.mrf.mxu0
    %1180 = vmatprep.mubr.f32.mxu0 0.0
    %v1181 = vand.u32 %v657, 4294901760
    %1182 = vmatmul.mubr.f32.gmra.mxu0 %v1181
    %v1183 = vpop.f32.mrf.mxu0
    %v1184 = vadd.f32 %v1103, %v1183
    %v1185 = vpop.f32.mrf.mxu0
    %1186 = vdwg.mxu0
    %v1187 = vlaneseq
    %v1188 = vshrl.u32 %v1187, 7
    %v1189 = vadd.s32 %v1188, 8
    %vm1190 = vcmp.lt.s32.totalorder %v1188, 0
    %v1191 = vsub.s32 0, %v1188
    %v1192 = vsel %vm1190, %v1191, %v1188
    %v1193 = vshrl.u32 %v1192, 1
    %v1194 = vand.u32 %v1192, 1
    %v1195 = vsub.s32 0, %v1194
    %v1196 = vsel %vm1190, %v1195, %v1194
    %vm1197 = vcmp.lt.s32.totalorder %v1189, 0
    %v1198 = vsub.s32 0, %v1189
    %v1199 = vsel %vm1197, %v1198, %v1189
    %v1200 = vshrl.u32 %v1199, 1
    %v1201 = vand.u32 %v1199, 1
    %v1202 = vsub.s32 0, %v1201
    %v1203 = vsel %vm1197, %v1202, %v1201
    %vm1204 = vcmp.ne.s32.totalorder %v1196, 0
    %vm1205 = vcmp.ne.s32.totalorder %v1203, 0
    %vm1206 = vcmp.lt.s32.totalorder %v1196, 0
    %vm1207 = vcmp.lt.s32.totalorder %v1203, 0
    %vm1208 = vmand %vm1206, %vm1204
    %vm1209 = vmand %vm1207, %vm1205
    %v1210 = vadd.s32 %v1196, 2
    %v1211 = vadd.s32 %v1203, 2
    %v1212 = vsel %vm1208, %v1210, %v1196
    %v1213 = vsel %vm1209, %v1211, %v1203
    %v1214 = vlaneseq
    %v1215 = vand.u32 %v1214, 127
    %vm1216 = vcmp.lt.s32.totalorder %v1215, 0
    %v1217 = vsub.s32 0, %v1215
    %v1218 = vsel %vm1216, %v1217, %v1215
    %v1219 = vshrl.u32 %v1218, 1
    %v1220 = vand.u32 %v1218, 1
    %v1221 = vsub.s32 0, %v1220
    %v1222 = vsel %vm1216, %v1221, %v1220
    %vm1223 = vcmp.ne.s32.totalorder %v1222, 0
    %vm1224 = vcmp.lt.s32.totalorder %v1222, 0
    %vm1225 = vmand %vm1224, %vm1223
    %v1226 = vadd.s32 %v1222, 2
    %v1227 = vsel %vm1225, %v1226, %v1222
    %vm1228 = vcmp.eq.s32.totalorder %v1212, %v1227
    %vm1229 = vcmp.eq.s32.totalorder %v1213, %v1227
    %v1230 = vsel %vm1228, 0.0, -1e+30
    %v1231 = vsel %vm1229, 0.0, -1e+30
    %1234 = vrot.lane.b32.xlu0 %v634, 96
    %v1235 = vpop.permute.xlu0 %1234
    %1236 = vrot.lane.b32.xlu0 %v640, 96
    %v1237 = vpop.permute.xlu0 %1236
    %vm1238 = vcmask 64512
    %v1240 = vsel %vm1238, %v643, 0
    %v1243 = vsel %vm1238, %v644, 0
    %v1245 = vsel %vm1238, %v1235, 0
    %v1247 = vsel %vm1238, %v1237, 0
    %1249 = vmatprep.subr.mxu0 0.0
    %1250 = vmatpush1.xpose.msra.mxu0 0.0
    %1251 = vmatprep.subr.mxu0 0.0
    %1252 = vmatpush1.xpose.msra.mxu0 0.0
    %1253 = vmatprep.subr.mxu0 0.0
    %1254 = vmatpush1.xpose.msra.mxu0 0.0
    %1255 = vmatprep.subr.mxu0 0.0
    %1256 = vmatpush1.xpose.msra.mxu0 0.0
    %1257 = vmatprep.subr.mxu0 0.0
    %1258 = vmatpush1.xpose.msra.mxu0 0.0
    %1259 = vmatprep.subr.mxu0 0.0
    %1260 = vmatpush1.xpose.msra.mxu0 0.0
    %1261 = vmatprep.subr.mxu0 0.0
    %1262 = vmatpush1.xpose.msra.mxu0 0.0
    %1263 = vmatprep.subr.mxu0 0.0
    %1264 = vmatpush1.xpose.msra.mxu0 0.0
    %1265 = vmatprep.subr.mxu0 0.0
    %1266 = vmatpush1.xpose.msra.mxu0 0.0
    %1267 = vmatprep.subr.mxu0 0.0
    %1268 = vmatpush1.xpose.msra.mxu0 0.0
    %1269 = vmatprep.subr.mxu0 0.0
    %1270 = vmatpush1.xpose.msra.mxu0 0.0
    %1271 = vmatprep.subr.mxu0 0.0
    %1272 = vmatpush1.xpose.msra.mxu0 0.0
    %1273 = vmatprep.subr.mxu0 0.0
    %1274 = vmatpush1.xpose.msra.mxu0 0.0
    %1275 = vmatprep.subr.mxu0 0.0
    %1276 = vmatpush1.xpose.msra.mxu0 0.0
    %1277 = vmatprep.subr.mxu0 0.0
    %v1278 = vand.u32 %v1247, 4294901760
    %1279 = vmatpush1.xpose.msra.mxu0 %v1278
    %1280 = vmatprep.subr.mxu0 0.0
    %v1281 = vand.u32 %v1245, 4294901760
    %1282 = vmatpush1.xpose.msra.mxu0 %v1281
    %1283 = vmatprep.subr.mxu0 0.0
    %1284 = vmatpush2.xpose.msra.mxu0 0.0
    %1285 = vmatprep.subr.mxu0 0.0
    %1286 = vmatpush2.xpose.msra.mxu0 0.0
    %1287 = vmatprep.subr.mxu0 0.0
    %1288 = vmatpush2.xpose.msra.mxu0 0.0
    %1289 = vmatprep.subr.mxu0 0.0
    %1290 = vmatpush2.xpose.msra.mxu0 0.0
    %1291 = vmatprep.subr.mxu0 0.0
    %1292 = vmatpush2.xpose.msra.mxu0 0.0
    %1293 = vmatprep.subr.mxu0 0.0
    %1294 = vmatpush2.xpose.msra.mxu0 0.0
    %1295 = vmatprep.subr.mxu0 0.0
    %1296 = vmatpush2.xpose.msra.mxu0 0.0
    %1297 = vmatprep.subr.mxu0 0.0
    %1298 = vmatpush2.xpose.msra.mxu0 0.0
    %1299 = vmatprep.subr.mxu0 0.0
    %1300 = vmatpush2.xpose.msra.mxu0 0.0
    %1301 = vmatprep.subr.mxu0 0.0
    %1302 = vmatpush2.xpose.msra.mxu0 0.0
    %1303 = vmatprep.subr.mxu0 0.0
    %1304 = vmatpush2.xpose.msra.mxu0 0.0
    %1305 = vmatprep.subr.mxu0 0.0
    %1306 = vmatpush2.xpose.msra.mxu0 0.0
    %1307 = vmatprep.subr.mxu0 0.0
    %1308 = vmatpush2.xpose.msra.mxu0 0.0
    %1309 = vmatprep.subr.mxu0 0.0
    %1310 = vmatpush2.xpose.msra.mxu0 0.0
    %1311 = vmatprep.subr.mxu0 0.0
    %1312 = vmatpush2.xpose.msra.mxu0 0.0
    %1313 = vmatprep.subr.mxu0 0.0
    %1314 = vmatpush2.xpose.msra.mxu0 0.0
    %1315 = vmatprep.mubr.f32.mxu0 0.0
    %v1316 = vand.u32 %v1240, 4294901760
    %v1317 = vsub.f32 %v1240, %v1316
    %v1318 = vand.u32 %v1317, 4294901760
    %v1319 = vsub.f32 %v1317, %v1318
    %v1320 = vand.u32 %v1319, 4294901760
    %1321 = vmatmul.mubr.f32.gmra.mxu0 %v1320
    %v1322 = vpop.f32.mrf.mxu0
    %v1323 = vadd.f32 %v1230, %v1322
    %v1324 = vpop.f32.mrf.mxu0
    %1325 = vmatprep.mubr.f32.mxu0 0.0
    %v1326 = vand.u32 %v1243, 4294901760
    %v1327 = vsub.f32 %v1243, %v1326
    %v1328 = vand.u32 %v1327, 4294901760
    %v1329 = vsub.f32 %v1327, %v1328
    %v1330 = vand.u32 %v1329, 4294901760
    %1331 = vmatmul.mubr.f32.gmra.mxu0 %v1330
    %v1332 = vpop.f32.mrf.mxu0
    %v1333 = vadd.f32 %v1231, %v1332
    %v1334 = vpop.f32.mrf.mxu0
    %1335 = vdwg.mxu0
    %1336 = vmatprep.subr.mxu0 0.0
    %1337 = vmatpush1.xpose.msra.mxu0 0.0
    %1338 = vmatprep.subr.mxu0 0.0
    %1339 = vmatpush1.xpose.msra.mxu0 0.0
    %1340 = vmatprep.subr.mxu0 0.0
    %1341 = vmatpush1.xpose.msra.mxu0 0.0
    %1342 = vmatprep.subr.mxu0 0.0
    %1343 = vmatpush1.xpose.msra.mxu0 0.0
    %1344 = vmatprep.subr.mxu0 0.0
    %1345 = vmatpush1.xpose.msra.mxu0 0.0
    %1346 = vmatprep.subr.mxu0 0.0
    %1347 = vmatpush1.xpose.msra.mxu0 0.0
    %1348 = vmatprep.subr.mxu0 0.0
    %1349 = vmatpush1.xpose.msra.mxu0 0.0
    %1350 = vmatprep.subr.mxu0 0.0
    %1351 = vmatpush1.xpose.msra.mxu0 0.0
    %1352 = vmatprep.subr.mxu0 0.0
    %1353 = vmatpush1.xpose.msra.mxu0 0.0
    %1354 = vmatprep.subr.mxu0 0.0
    %1355 = vmatpush1.xpose.msra.mxu0 0.0
    %1356 = vmatprep.subr.mxu0 0.0
    %1357 = vmatpush1.xpose.msra.mxu0 0.0
    %1358 = vmatprep.subr.mxu0 0.0
    %1359 = vmatpush1.xpose.msra.mxu0 0.0
    %1360 = vmatprep.subr.mxu0 0.0
    %1361 = vmatpush1.xpose.msra.mxu0 0.0
    %1362 = vmatprep.subr.mxu0 0.0
    %1363 = vmatpush1.xpose.msra.mxu0 0.0
    %1364 = vmatprep.subr.mxu0 0.0
    %v1365 = vand.u32 %v1247, 4294901760
    %v1366 = vsub.f32 %v1247, %v1365
    %v1367 = vand.u32 %v1366, 4294901760
    %v1368 = vsub.f32 %v1366, %v1367
    %v1369 = vand.u32 %v1368, 4294901760
    %1370 = vmatpush1.xpose.msra.mxu0 %v1369
    %1371 = vmatprep.subr.mxu0 0.0
    %v1372 = vand.u32 %v1245, 4294901760
    %v1373 = vsub.f32 %v1245, %v1372
    %v1374 = vand.u32 %v1373, 4294901760
    %v1375 = vsub.f32 %v1373, %v1374
    %v1376 = vand.u32 %v1375, 4294901760
    %1377 = vmatpush1.xpose.msra.mxu0 %v1376
    %1378 = vmatprep.subr.mxu0 0.0
    %1379 = vmatpush2.xpose.msra.mxu0 0.0
    %1380 = vmatprep.subr.mxu0 0.0
    %1381 = vmatpush2.xpose.msra.mxu0 0.0
    %1382 = vmatprep.subr.mxu0 0.0
    %1383 = vmatpush2.xpose.msra.mxu0 0.0
    %1384 = vmatprep.subr.mxu0 0.0
    %1385 = vmatpush2.xpose.msra.mxu0 0.0
    %1386 = vmatprep.subr.mxu0 0.0
    %1387 = vmatpush2.xpose.msra.mxu0 0.0
    %1388 = vmatprep.subr.mxu0 0.0
    %1389 = vmatpush2.xpose.msra.mxu0 0.0
    %1390 = vmatprep.subr.mxu0 0.0
    %1391 = vmatpush2.xpose.msra.mxu0 0.0
    %1392 = vmatprep.subr.mxu0 0.0
    %1393 = vmatpush2.xpose.msra.mxu0 0.0
    %1394 = vmatprep.subr.mxu0 0.0
    %1395 = vmatpush2.xpose.msra.mxu0 0.0
    %1396 = vmatprep.subr.mxu0 0.0
    %1397 = vmatpush2.xpose.msra.mxu0 0.0
    %1398 = vmatprep.subr.mxu0 0.0
    %1399 = vmatpush2.xpose.msra.mxu0 0.0
    %1400 = vmatprep.subr.mxu0 0.0
    %1401 = vmatpush2.xpose.msra.mxu0 0.0
    %1402 = vmatprep.subr.mxu0 0.0
    %1403 = vmatpush2.xpose.msra.mxu0 0.0
    %1404 = vmatprep.subr.mxu0 0.0
    %1405 = vmatpush2.xpose.msra.mxu0 0.0
    %1406 = vmatprep.subr.mxu0 0.0
    %1407 = vmatpush2.xpose.msra.mxu0 0.0
    %1408 = vmatprep.subr.mxu0 0.0
    %1409 = vmatpush2.xpose.msra.mxu0 0.0
    %1410 = vmatprep.mubr.f32.mxu0 0.0
    %v1411 = vand.u32 %v1240, 4294901760
    %1412 = vmatmul.mubr.f32.gmra.mxu0 %v1411
    %v1413 = vpop.f32.mrf.mxu0
    %v1414 = vadd.f32 %v1323, %v1413
    %v1415 = vpop.f32.mrf.mxu0
    %1416 = vmatprep.mubr.f32.mxu0 0.0
    %v1417 = vand.u32 %v1243, 4294901760
    %1418 = vmatmul.mubr.f32.gmra.mxu0 %v1417
    %v1419 = vpop.f32.mrf.mxu0
    %v1420 = vadd.f32 %v1333, %v1419
    %v1421 = vpop.f32.mrf.mxu0
    %1422 = vdwg.mxu0
    %1423 = vmatprep.subr.mxu0 0.0
    %1424 = vmatpush1.xpose.msra.mxu0 0.0
    %1425 = vmatprep.subr.mxu0 0.0
    %1426 = vmatpush1.xpose.msra.mxu0 0.0
    %1427 = vmatprep.subr.mxu0 0.0
    %1428 = vmatpush1.xpose.msra.mxu0 0.0
    %1429 = vmatprep.subr.mxu0 0.0
    %1430 = vmatpush1.xpose.msra.mxu0 0.0
    %1431 = vmatprep.subr.mxu0 0.0
    %1432 = vmatpush1.xpose.msra.mxu0 0.0
    %1433 = vmatprep.subr.mxu0 0.0
    %1434 = vmatpush1.xpose.msra.mxu0 0.0
    %1435 = vmatprep.subr.mxu0 0.0
    %1436 = vmatpush1.xpose.msra.mxu0 0.0
    %1437 = vmatprep.subr.mxu0 0.0
    %1438 = vmatpush1.xpose.msra.mxu0 0.0
    %1439 = vmatprep.subr.mxu0 0.0
    %1440 = vmatpush1.xpose.msra.mxu0 0.0
    %1441 = vmatprep.subr.mxu0 0.0
    %1442 = vmatpush1.xpose.msra.mxu0 0.0
    %1443 = vmatprep.subr.mxu0 0.0
    %1444 = vmatpush1.xpose.msra.mxu0 0.0
    %1445 = vmatprep.subr.mxu0 0.0
    %1446 = vmatpush1.xpose.msra.mxu0 0.0
    %1447 = vmatprep.subr.mxu0 0.0
    %1448 = vmatpush1.xpose.msra.mxu0 0.0
    %1449 = vmatprep.subr.mxu0 0.0
    %1450 = vmatpush1.xpose.msra.mxu0 0.0
    %1451 = vmatprep.subr.mxu0 0.0
    %v1452 = vand.u32 %v1247, 4294901760
    %v1453 = vsub.f32 %v1247, %v1452
    %1454 = vmatpush1.xpose.msra.mxu0 %v1453
    %1455 = vmatprep.subr.mxu0 0.0
    %v1456 = vand.u32 %v1245, 4294901760
    %v1457 = vsub.f32 %v1245, %v1456
    %1458 = vmatpush1.xpose.msra.mxu0 %v1457
    %1459 = vmatprep.subr.mxu0 0.0
    %1460 = vmatpush2.xpose.msra.mxu0 0.0
    %1461 = vmatprep.subr.mxu0 0.0
    %1462 = vmatpush2.xpose.msra.mxu0 0.0
    %1463 = vmatprep.subr.mxu0 0.0
    %1464 = vmatpush2.xpose.msra.mxu0 0.0
    %1465 = vmatprep.subr.mxu0 0.0
    %1466 = vmatpush2.xpose.msra.mxu0 0.0
    %1467 = vmatprep.subr.mxu0 0.0
    %1468 = vmatpush2.xpose.msra.mxu0 0.0
    %1469 = vmatprep.subr.mxu0 0.0
    %1470 = vmatpush2.xpose.msra.mxu0 0.0
    %1471 = vmatprep.subr.mxu0 0.0
    %1472 = vmatpush2.xpose.msra.mxu0 0.0
    %1473 = vmatprep.subr.mxu0 0.0
    %1474 = vmatpush2.xpose.msra.mxu0 0.0
    %1475 = vmatprep.subr.mxu0 0.0
    %1476 = vmatpush2.xpose.msra.mxu0 0.0
    %1477 = vmatprep.subr.mxu0 0.0
    %1478 = vmatpush2.xpose.msra.mxu0 0.0
    %1479 = vmatprep.subr.mxu0 0.0
    %1480 = vmatpush2.xpose.msra.mxu0 0.0
    %1481 = vmatprep.subr.mxu0 0.0
    %1482 = vmatpush2.xpose.msra.mxu0 0.0
    %1483 = vmatprep.subr.mxu0 0.0
    %1484 = vmatpush2.xpose.msra.mxu0 0.0
    %1485 = vmatprep.subr.mxu0 0.0
    %1486 = vmatpush2.xpose.msra.mxu0 0.0
    %1487 = vmatprep.subr.mxu0 0.0
    %1488 = vmatpush2.xpose.msra.mxu0 0.0
    %1489 = vmatprep.subr.mxu0 0.0
    %1490 = vmatpush2.xpose.msra.mxu0 0.0
    %1491 = vmatprep.mubr.f32.mxu0 0.0
    %v1492 = vand.u32 %v1240, 4294901760
    %v1493 = vsub.f32 %v1240, %v1492
    %1494 = vmatmul.mubr.f32.gmra.mxu0 %v1493
    %v1495 = vpop.f32.mrf.mxu0
    %v1496 = vadd.f32 %v1414, %v1495
    %v1497 = vpop.f32.mrf.mxu0
    %1498 = vmatprep.mubr.f32.mxu0 0.0
    %v1499 = vand.u32 %v1243, 4294901760
    %v1500 = vsub.f32 %v1243, %v1499
    %1501 = vmatmul.mubr.f32.gmra.mxu0 %v1500
    %v1502 = vpop.f32.mrf.mxu0
    %v1503 = vadd.f32 %v1420, %v1502
    %v1504 = vpop.f32.mrf.mxu0
    %1505 = vdwg.mxu0
    %1506 = vmatprep.subr.mxu0 0.0
    %1507 = vmatpush1.xpose.msra.mxu0 0.0
    %1508 = vmatprep.subr.mxu0 0.0
    %1509 = vmatpush1.xpose.msra.mxu0 0.0
    %1510 = vmatprep.subr.mxu0 0.0
    %1511 = vmatpush1.xpose.msra.mxu0 0.0
    %1512 = vmatprep.subr.mxu0 0.0
    %1513 = vmatpush1.xpose.msra.mxu0 0.0
    %1514 = vmatprep.subr.mxu0 0.0
    %1515 = vmatpush1.xpose.msra.mxu0 0.0
    %1516 = vmatprep.subr.mxu0 0.0
    %1517 = vmatpush1.xpose.msra.mxu0 0.0
    %1518 = vmatprep.subr.mxu0 0.0
    %1519 = vmatpush1.xpose.msra.mxu0 0.0
    %1520 = vmatprep.subr.mxu0 0.0
    %1521 = vmatpush1.xpose.msra.mxu0 0.0
    %1522 = vmatprep.subr.mxu0 0.0
    %1523 = vmatpush1.xpose.msra.mxu0 0.0
    %1524 = vmatprep.subr.mxu0 0.0
    %1525 = vmatpush1.xpose.msra.mxu0 0.0
    %1526 = vmatprep.subr.mxu0 0.0
    %1527 = vmatpush1.xpose.msra.mxu0 0.0
    %1528 = vmatprep.subr.mxu0 0.0
    %1529 = vmatpush1.xpose.msra.mxu0 0.0
    %1530 = vmatprep.subr.mxu0 0.0
    %1531 = vmatpush1.xpose.msra.mxu0 0.0
    %1532 = vmatprep.subr.mxu0 0.0
    %1533 = vmatpush1.xpose.msra.mxu0 0.0
    %1534 = vmatprep.subr.mxu0 0.0
    %v1535 = vand.u32 %v1247, 4294901760
    %1536 = vmatpush1.xpose.msra.mxu0 %v1535
    %1537 = vmatprep.subr.mxu0 0.0
    %v1538 = vand.u32 %v1245, 4294901760
    %1539 = vmatpush1.xpose.msra.mxu0 %v1538
    %1540 = vmatprep.subr.mxu0 0.0
    %1541 = vmatpush2.xpose.msra.mxu0 0.0
    %1542 = vmatprep.subr.mxu0 0.0
    %1543 = vmatpush2.xpose.msra.mxu0 0.0
    %1544 = vmatprep.subr.mxu0 0.0
    %1545 = vmatpush2.xpose.msra.mxu0 0.0
    %1546 = vmatprep.subr.mxu0 0.0
    %1547 = vmatpush2.xpose.msra.mxu0 0.0
    %1548 = vmatprep.subr.mxu0 0.0
    %1549 = vmatpush2.xpose.msra.mxu0 0.0
    %1550 = vmatprep.subr.mxu0 0.0
    %1551 = vmatpush2.xpose.msra.mxu0 0.0
    %1552 = vmatprep.subr.mxu0 0.0
    %1553 = vmatpush2.xpose.msra.mxu0 0.0
    %1554 = vmatprep.subr.mxu0 0.0
    %1555 = vmatpush2.xpose.msra.mxu0 0.0
    %1556 = vmatprep.subr.mxu0 0.0
    %1557 = vmatpush2.xpose.msra.mxu0 0.0
    %1558 = vmatprep.subr.mxu0 0.0
    %1559 = vmatpush2.xpose.msra.mxu0 0.0
    %1560 = vmatprep.subr.mxu0 0.0
    %1561 = vmatpush2.xpose.msra.mxu0 0.0
    %1562 = vmatprep.subr.mxu0 0.0
    %1563 = vmatpush2.xpose.msra.mxu0 0.0
    %1564 = vmatprep.subr.mxu0 0.0
    %1565 = vmatpush2.xpose.msra.mxu0 0.0
    %1566 = vmatprep.subr.mxu0 0.0
    %1567 = vmatpush2.xpose.msra.mxu0 0.0
    %1568 = vmatprep.subr.mxu0 0.0
    %1569 = vmatpush2.xpose.msra.mxu0 0.0
    %1570 = vmatprep.subr.mxu0 0.0
    %1571 = vmatpush2.xpose.msra.mxu0 0.0
    %1572 = vmatprep.mubr.f32.mxu0 0.0
    %v1573 = vand.u32 %v1240, 4294901760
    %v1574 = vsub.f32 %v1240, %v1573
    %v1575 = vand.u32 %v1574, 4294901760
    %1576 = vmatmul.mubr.f32.gmra.mxu0 %v1575
    %v1577 = vpop.f32.mrf.mxu0
    %v1578 = vadd.f32 %v1496, %v1577
    %v1579 = vpop.f32.mrf.mxu0
    %1580 = vmatprep.mubr.f32.mxu0 0.0
    %v1581 = vand.u32 %v1243, 4294901760
    %v1582 = vsub.f32 %v1243, %v1581
    %v1583 = vand.u32 %v1582, 4294901760
    %1584 = vmatmul.mubr.f32.gmra.mxu0 %v1583
    %v1585 = vpop.f32.mrf.mxu0
    %v1586 = vadd.f32 %v1503, %v1585
    %v1587 = vpop.f32.mrf.mxu0
    %1588 = vdwg.mxu0
    %1589 = vmatprep.subr.mxu0 0.0
    %1590 = vmatpush1.xpose.msra.mxu0 0.0
    %1591 = vmatprep.subr.mxu0 0.0
    %1592 = vmatpush1.xpose.msra.mxu0 0.0
    %1593 = vmatprep.subr.mxu0 0.0
    %1594 = vmatpush1.xpose.msra.mxu0 0.0
    %1595 = vmatprep.subr.mxu0 0.0
    %1596 = vmatpush1.xpose.msra.mxu0 0.0
    %1597 = vmatprep.subr.mxu0 0.0
    %1598 = vmatpush1.xpose.msra.mxu0 0.0
    %1599 = vmatprep.subr.mxu0 0.0
    %1600 = vmatpush1.xpose.msra.mxu0 0.0
    %1601 = vmatprep.subr.mxu0 0.0
    %1602 = vmatpush1.xpose.msra.mxu0 0.0
    %1603 = vmatprep.subr.mxu0 0.0
    %1604 = vmatpush1.xpose.msra.mxu0 0.0
    %1605 = vmatprep.subr.mxu0 0.0
    %1606 = vmatpush1.xpose.msra.mxu0 0.0
    %1607 = vmatprep.subr.mxu0 0.0
    %1608 = vmatpush1.xpose.msra.mxu0 0.0
    %1609 = vmatprep.subr.mxu0 0.0
    %1610 = vmatpush1.xpose.msra.mxu0 0.0
    %1611 = vmatprep.subr.mxu0 0.0
    %1612 = vmatpush1.xpose.msra.mxu0 0.0
    %1613 = vmatprep.subr.mxu0 0.0
    %1614 = vmatpush1.xpose.msra.mxu0 0.0
    %1615 = vmatprep.subr.mxu0 0.0
    %1616 = vmatpush1.xpose.msra.mxu0 0.0
    %1617 = vmatprep.subr.mxu0 0.0
    %v1618 = vand.u32 %v1247, 4294901760
    %v1619 = vsub.f32 %v1247, %v1618
    %v1620 = vand.u32 %v1619, 4294901760
    %1621 = vmatpush1.xpose.msra.mxu0 %v1620
    %1622 = vmatprep.subr.mxu0 0.0
    %v1623 = vand.u32 %v1245, 4294901760
    %v1624 = vsub.f32 %v1245, %v1623
    %v1625 = vand.u32 %v1624, 4294901760
    %1626 = vmatpush1.xpose.msra.mxu0 %v1625
    %1627 = vmatprep.subr.mxu0 0.0
    %1628 = vmatpush2.xpose.msra.mxu0 0.0
    %1629 = vmatprep.subr.mxu0 0.0
    %1630 = vmatpush2.xpose.msra.mxu0 0.0
    %1631 = vmatprep.subr.mxu0 0.0
    %1632 = vmatpush2.xpose.msra.mxu0 0.0
    %1633 = vmatprep.subr.mxu0 0.0
    %1634 = vmatpush2.xpose.msra.mxu0 0.0
    %1635 = vmatprep.subr.mxu0 0.0
    %1636 = vmatpush2.xpose.msra.mxu0 0.0
    %1637 = vmatprep.subr.mxu0 0.0
    %1638 = vmatpush2.xpose.msra.mxu0 0.0
    %1639 = vmatprep.subr.mxu0 0.0
    %1640 = vmatpush2.xpose.msra.mxu0 0.0
    %1641 = vmatprep.subr.mxu0 0.0
    %1642 = vmatpush2.xpose.msra.mxu0 0.0
    %1643 = vmatprep.subr.mxu0 0.0
    %1644 = vmatpush2.xpose.msra.mxu0 0.0
    %1645 = vmatprep.subr.mxu0 0.0
    %1646 = vmatpush2.xpose.msra.mxu0 0.0
    %1647 = vmatprep.subr.mxu0 0.0
    %1648 = vmatpush2.xpose.msra.mxu0 0.0
    %1649 = vmatprep.subr.mxu0 0.0
    %1650 = vmatpush2.xpose.msra.mxu0 0.0
    %1651 = vmatprep.subr.mxu0 0.0
    %1652 = vmatpush2.xpose.msra.mxu0 0.0
    %1653 = vmatprep.subr.mxu0 0.0
    %1654 = vmatpush2.xpose.msra.mxu0 0.0
    %1655 = vmatprep.subr.mxu0 0.0
    %1656 = vmatpush2.xpose.msra.mxu0 0.0
    %1657 = vmatprep.subr.mxu0 0.0
    %1658 = vmatpush2.xpose.msra.mxu0 0.0
    %1659 = vmatprep.mubr.f32.mxu0 0.0
    %v1660 = vand.u32 %v1240, 4294901760
    %1661 = vmatmul.mubr.f32.gmra.mxu0 %v1660
    %v1662 = vpop.f32.mrf.mxu0
    %v1663 = vadd.f32 %v1578, %v1662
    %v1664 = vpop.f32.mrf.mxu0
    %1665 = vmatprep.mubr.f32.mxu0 0.0
    %v1666 = vand.u32 %v1243, 4294901760
    %1667 = vmatmul.mubr.f32.gmra.mxu0 %v1666
    %v1668 = vpop.f32.mrf.mxu0
    %v1669 = vadd.f32 %v1586, %v1668
    %v1670 = vpop.f32.mrf.mxu0
    %1671 = vdwg.mxu0
    %1672 = vmatprep.subr.mxu0 0.0
    %1673 = vmatpush1.xpose.msra.mxu0 0.0
    %1674 = vmatprep.subr.mxu0 0.0
    %1675 = vmatpush1.xpose.msra.mxu0 0.0
    %1676 = vmatprep.subr.mxu0 0.0
    %1677 = vmatpush1.xpose.msra.mxu0 0.0
    %1678 = vmatprep.subr.mxu0 0.0
    %1679 = vmatpush1.xpose.msra.mxu0 0.0
    %1680 = vmatprep.subr.mxu0 0.0
    %1681 = vmatpush1.xpose.msra.mxu0 0.0
    %1682 = vmatprep.subr.mxu0 0.0
    %1683 = vmatpush1.xpose.msra.mxu0 0.0
    %1684 = vmatprep.subr.mxu0 0.0
    %1685 = vmatpush1.xpose.msra.mxu0 0.0
    %1686 = vmatprep.subr.mxu0 0.0
    %1687 = vmatpush1.xpose.msra.mxu0 0.0
    %1688 = vmatprep.subr.mxu0 0.0
    %1689 = vmatpush1.xpose.msra.mxu0 0.0
    %1690 = vmatprep.subr.mxu0 0.0
    %1691 = vmatpush1.xpose.msra.mxu0 0.0
    %1692 = vmatprep.subr.mxu0 0.0
    %1693 = vmatpush1.xpose.msra.mxu0 0.0
    %1694 = vmatprep.subr.mxu0 0.0
    %1695 = vmatpush1.xpose.msra.mxu0 0.0
    %1696 = vmatprep.subr.mxu0 0.0
    %1697 = vmatpush1.xpose.msra.mxu0 0.0
    %1698 = vmatprep.subr.mxu0 0.0
    %1699 = vmatpush1.xpose.msra.mxu0 0.0
    %1700 = vmatprep.subr.mxu0 0.0
    %v1701 = vand.u32 %v1247, 4294901760
    %1702 = vmatpush1.xpose.msra.mxu0 %v1701
    %1703 = vmatprep.subr.mxu0 0.0
    %v1704 = vand.u32 %v1245, 4294901760
    %1705 = vmatpush1.xpose.msra.mxu0 %v1704
    %1706 = vmatprep.subr.mxu0 0.0
    %1707 = vmatpush2.xpose.msra.mxu0 0.0
    %1708 = vmatprep.subr.mxu0 0.0
    %1709 = vmatpush2.xpose.msra.mxu0 0.0
    %1710 = vmatprep.subr.mxu0 0.0
    %1711 = vmatpush2.xpose.msra.mxu0 0.0
    %1712 = vmatprep.subr.mxu0 0.0
    %1713 = vmatpush2.xpose.msra.mxu0 0.0
    %1714 = vmatprep.subr.mxu0 0.0
    %1715 = vmatpush2.xpose.msra.mxu0 0.0
    %1716 = vmatprep.subr.mxu0 0.0
    %1717 = vmatpush2.xpose.msra.mxu0 0.0
    %1718 = vmatprep.subr.mxu0 0.0
    %1719 = vmatpush2.xpose.msra.mxu0 0.0
    %1720 = vmatprep.subr.mxu0 0.0
    %1721 = vmatpush2.xpose.msra.mxu0 0.0
    %1722 = vmatprep.subr.mxu0 0.0
    %1723 = vmatpush2.xpose.msra.mxu0 0.0
    %1724 = vmatprep.subr.mxu0 0.0
    %1725 = vmatpush2.xpose.msra.mxu0 0.0
    %1726 = vmatprep.subr.mxu0 0.0
    %1727 = vmatpush2.xpose.msra.mxu0 0.0
    %1728 = vmatprep.subr.mxu0 0.0
    %1729 = vmatpush2.xpose.msra.mxu0 0.0
    %1730 = vmatprep.subr.mxu0 0.0
    %1731 = vmatpush2.xpose.msra.mxu0 0.0
    %1732 = vmatprep.subr.mxu0 0.0
    %1733 = vmatpush2.xpose.msra.mxu0 0.0
    %1734 = vmatprep.subr.mxu0 0.0
    %1735 = vmatpush2.xpose.msra.mxu0 0.0
    %1736 = vmatprep.subr.mxu0 0.0
    %1737 = vmatpush2.xpose.msra.mxu0 0.0
    %1738 = vmatprep.mubr.f32.mxu0 0.0
    %v1739 = vand.u32 %v1240, 4294901760
    %1740 = vmatmul.mubr.f32.gmra.mxu0 %v1739
    %v1741 = vpop.f32.mrf.mxu0
    %v1742 = vadd.f32 %v1663, %v1741
    %v1743 = vpop.f32.mrf.mxu0
    %1744 = vmatprep.mubr.f32.mxu0 0.0
    %v1745 = vand.u32 %v1243, 4294901760
    %1746 = vmatmul.mubr.f32.gmra.mxu0 %v1745
    %v1747 = vpop.f32.mrf.mxu0
    %v1748 = vadd.f32 %v1669, %v1747
    %v1749 = vpop.f32.mrf.mxu0
    %1750 = vdwg.mxu0
    %vm1751 = vcmask 130048
    %v1752 = vsel %vm1751, %v1742, -inf
    %1753 = vmax.xlane.f32.xlu0 %v1752
    %v1754 = vpop.xlane.xlu0 %1753
    %v1755 = vsel %vm1751, %v1748, -inf
    %1756 = vmax.xlane.f32.xlu0 %v1755
    %v1757 = vpop.xlane.xlu0 %1756
    %v1758 = vsub.f32 %v1742, %v1754
    %v1759 = vsub.f32 %v1748, %v1757
    %v1760 = vmul.f32 %v1758, 1.442695
    %v1761 = vpow.pop %v1760
    %v1762 = vmul.f32 %v1759, 1.442695
    %v1763 = vpow.pop %v1762
    %v1764 = vsel %vm1751, %v1761, 0.0
    %1765 = vadd.xlane.f32.xlu0 %v1764
    %v1766 = vpop.xlane.xlu0 %1765
    %v1767 = vsel %vm1751, %v1763, 0.0
    %1768 = vadd.xlane.f32.xlu0 %v1767
    %v1769 = vpop.xlane.xlu0 %1768
    %v1770 = vrcp.pop %v1766
    %v1771 = vrcp.pop %v1769
    %v1772 = vmul.f32 %v1761, %v1770
    %v1773 = vmul.f32 %v1763, %v1771
    %v1775 = vsel %vm1751, %v1772, 0
    %v1778 = vsel %vm1751, %v1773, 0
    %1780 = vmatprep.subr.mxu0 0.0
    %1781 = vmatpush1.msra.mxu0 0.0
    %1782 = vmatprep.subr.mxu0 0.0
    %1783 = vmatpush1.msra.mxu0 0.0
    %1784 = vmatprep.subr.mxu0 0.0
    %1785 = vmatpush1.msra.mxu0 0.0
    %1786 = vmatprep.subr.mxu0 0.0
    %1787 = vmatpush1.msra.mxu0 0.0
    %1788 = vmatprep.subr.mxu0 0.0
    %1789 = vmatpush1.msra.mxu0 0.0
    %1790 = vmatprep.subr.mxu0 0.0
    %1791 = vmatpush1.msra.mxu0 0.0
    %1792 = vmatprep.subr.mxu0 0.0
    %1793 = vmatpush1.msra.mxu0 0.0
    %1794 = vmatprep.subr.mxu0 0.0
    %1795 = vmatpush1.msra.mxu0 0.0
    %1796 = vmatprep.subr.mxu0 0.0
    %1797 = vmatpush1.msra.mxu0 0.0
    %1798 = vmatprep.subr.mxu0 0.0
    %1799 = vmatpush1.msra.mxu0 0.0
    %1800 = vmatprep.subr.mxu0 0.0
    %1801 = vmatpush1.msra.mxu0 0.0
    %1802 = vmatprep.subr.mxu0 0.0
    %1803 = vmatpush1.msra.mxu0 0.0
    %1804 = vmatprep.subr.mxu0 0.0
    %1805 = vmatpush1.msra.mxu0 0.0
    %1806 = vmatprep.subr.mxu0 0.0
    %1807 = vmatpush1.msra.mxu0 0.0
    %1808 = vmatprep.subr.mxu0 0.0
    %v1809 = vand.u32 %v1184, 4294901760
    %1810 = vmatpush1.msra.mxu0 %v1809
    %1811 = vmatprep.subr.mxu0 0.0
    %v1812 = vand.u32 %v1178, 4294901760
    %1813 = vmatpush1.msra.mxu0 %v1812
    %1814 = vmatprep.subr.mxu0 0.0
    %1815 = vmatpush2.msra.mxu0 0.0
    %1816 = vmatprep.subr.mxu0 0.0
    %1817 = vmatpush2.msra.mxu0 0.0
    %1818 = vmatprep.subr.mxu0 0.0
    %1819 = vmatpush2.msra.mxu0 0.0
    %1820 = vmatprep.subr.mxu0 0.0
    %1821 = vmatpush2.msra.mxu0 0.0
    %1822 = vmatprep.subr.mxu0 0.0
    %1823 = vmatpush2.msra.mxu0 0.0
    %1824 = vmatprep.subr.mxu0 0.0
    %1825 = vmatpush2.msra.mxu0 0.0
    %1826 = vmatprep.subr.mxu0 0.0
    %1827 = vmatpush2.msra.mxu0 0.0
    %1828 = vmatprep.subr.mxu0 0.0
    %1829 = vmatpush2.msra.mxu0 0.0
    %1830 = vmatprep.subr.mxu0 0.0
    %1831 = vmatpush2.msra.mxu0 0.0
    %1832 = vmatprep.subr.mxu0 0.0
    %1833 = vmatpush2.msra.mxu0 0.0
    %1834 = vmatprep.subr.mxu0 0.0
    %1835 = vmatpush2.msra.mxu0 0.0
    %1836 = vmatprep.subr.mxu0 0.0
    %1837 = vmatpush2.msra.mxu0 0.0
    %1838 = vmatprep.subr.mxu0 0.0
    %1839 = vmatpush2.msra.mxu0 0.0
    %1840 = vmatprep.subr.mxu0 0.0
    %1841 = vmatpush2.msra.mxu0 0.0
    %1842 = vmatprep.subr.mxu0 0.0
    %1843 = vmatpush2.msra.mxu0 0.0
    %1844 = vmatprep.subr.mxu0 0.0
    %1845 = vmatpush2.msra.mxu0 0.0
    %1846 = vmatprep.mubr.f32.mxu0 0.0
    %v1847 = vand.u32 %v1775, 4294901760
    %v1848 = vsub.f32 %v1775, %v1847
    %v1849 = vand.u32 %v1848, 4294901760
    %v1850 = vsub.f32 %v1848, %v1849
    %v1851 = vand.u32 %v1850, 4294901760
    %1852 = vmatmul.mubr.f32.gmra.mxu0 %v1851
    %v1853 = vpop.f32.mrf.mxu0
    %v1854 = vadd.f32 0.0, %v1853
    %v1855 = vpop.f32.mrf.mxu0
    %1856 = vmatprep.mubr.f32.mxu0 0.0
    %v1857 = vand.u32 %v1778, 4294901760
    %v1858 = vsub.f32 %v1778, %v1857
    %v1859 = vand.u32 %v1858, 4294901760
    %v1860 = vsub.f32 %v1858, %v1859
    %v1861 = vand.u32 %v1860, 4294901760
    %1862 = vmatmul.mubr.f32.gmra.mxu0 %v1861
    %v1863 = vpop.f32.mrf.mxu0
    %v1864 = vadd.f32 0.0, %v1863
    %v1865 = vpop.f32.mrf.mxu0
    %1866 = vdwg.mxu0
    %1867 = vmatprep.subr.mxu0 0.0
    %1868 = vmatpush1.msra.mxu0 0.0
    %1869 = vmatprep.subr.mxu0 0.0
    %1870 = vmatpush1.msra.mxu0 0.0
    %1871 = vmatprep.subr.mxu0 0.0
    %1872 = vmatpush1.msra.mxu0 0.0
    %1873 = vmatprep.subr.mxu0 0.0
    %1874 = vmatpush1.msra.mxu0 0.0
    %1875 = vmatprep.subr.mxu0 0.0
    %1876 = vmatpush1.msra.mxu0 0.0
    %1877 = vmatprep.subr.mxu0 0.0
    %1878 = vmatpush1.msra.mxu0 0.0
    %1879 = vmatprep.subr.mxu0 0.0
    %1880 = vmatpush1.msra.mxu0 0.0
    %1881 = vmatprep.subr.mxu0 0.0
    %1882 = vmatpush1.msra.mxu0 0.0
    %1883 = vmatprep.subr.mxu0 0.0
    %1884 = vmatpush1.msra.mxu0 0.0
    %1885 = vmatprep.subr.mxu0 0.0
    %1886 = vmatpush1.msra.mxu0 0.0
    %1887 = vmatprep.subr.mxu0 0.0
    %1888 = vmatpush1.msra.mxu0 0.0
    %1889 = vmatprep.subr.mxu0 0.0
    %1890 = vmatpush1.msra.mxu0 0.0
    %1891 = vmatprep.subr.mxu0 0.0
    %1892 = vmatpush1.msra.mxu0 0.0
    %1893 = vmatprep.subr.mxu0 0.0
    %1894 = vmatpush1.msra.mxu0 0.0
    %1895 = vmatprep.subr.mxu0 0.0
    %v1896 = vand.u32 %v1184, 4294901760
    %v1897 = vsub.f32 %v1184, %v1896
    %v1898 = vand.u32 %v1897, 4294901760
    %v1899 = vsub.f32 %v1897, %v1898
    %v1900 = vand.u32 %v1899, 4294901760
    %1901 = vmatpush1.msra.mxu0 %v1900
    %1902 = vmatprep.subr.mxu0 0.0
    %v1903 = vand.u32 %v1178, 4294901760
    %v1904 = vsub.f32 %v1178, %v1903
    %v1905 = vand.u32 %v1904, 4294901760
    %v1906 = vsub.f32 %v1904, %v1905
    %v1907 = vand.u32 %v1906, 4294901760
    %1908 = vmatpush1.msra.mxu0 %v1907
    %1909 = vmatprep.subr.mxu0 0.0
    %1910 = vmatpush2.msra.mxu0 0.0
    %1911 = vmatprep.subr.mxu0 0.0
    %1912 = vmatpush2.msra.mxu0 0.0
    %1913 = vmatprep.subr.mxu0 0.0
    %1914 = vmatpush2.msra.mxu0 0.0
    %1915 = vmatprep.subr.mxu0 0.0
    %1916 = vmatpush2.msra.mxu0 0.0
    %1917 = vmatprep.subr.mxu0 0.0
    %1918 = vmatpush2.msra.mxu0 0.0
    %1919 = vmatprep.subr.mxu0 0.0
    %1920 = vmatpush2.msra.mxu0 0.0
    %1921 = vmatprep.subr.mxu0 0.0
    %1922 = vmatpush2.msra.mxu0 0.0
    %1923 = vmatprep.subr.mxu0 0.0
    %1924 = vmatpush2.msra.mxu0 0.0
    %1925 = vmatprep.subr.mxu0 0.0
    %1926 = vmatpush2.msra.mxu0 0.0
    %1927 = vmatprep.subr.mxu0 0.0
    %1928 = vmatpush2.msra.mxu0 0.0
    %1929 = vmatprep.subr.mxu0 0.0
    %1930 = vmatpush2.msra.mxu0 0.0
    %1931 = vmatprep.subr.mxu0 0.0
    %1932 = vmatpush2.msra.mxu0 0.0
    %1933 = vmatprep.subr.mxu0 0.0
    %1934 = vmatpush2.msra.mxu0 0.0
    %1935 = vmatprep.subr.mxu0 0.0
    %1936 = vmatpush2.msra.mxu0 0.0
    %1937 = vmatprep.subr.mxu0 0.0
    %1938 = vmatpush2.msra.mxu0 0.0
    %1939 = vmatprep.subr.mxu0 0.0
    %1940 = vmatpush2.msra.mxu0 0.0
    %1941 = vmatprep.mubr.f32.mxu0 0.0
    %v1942 = vand.u32 %v1775, 4294901760
    %1943 = vmatmul.mubr.f32.gmra.mxu0 %v1942
    %v1944 = vpop.f32.mrf.mxu0
    %v1945 = vadd.f32 %v1854, %v1944
    %v1946 = vpop.f32.mrf.mxu0
    %1947 = vmatprep.mubr.f32.mxu0 0.0
    %v1948 = vand.u32 %v1778, 4294901760
    %1949 = vmatmul.mubr.f32.gmra.mxu0 %v1948
    %v1950 = vpop.f32.mrf.mxu0
    %v1951 = vadd.f32 %v1864, %v1950
    %v1952 = vpop.f32.mrf.mxu0
    %1953 = vdwg.mxu0
    %1954 = vmatprep.subr.mxu0 0.0
    %1955 = vmatpush1.msra.mxu0 0.0
    %1956 = vmatprep.subr.mxu0 0.0
    %1957 = vmatpush1.msra.mxu0 0.0
    %1958 = vmatprep.subr.mxu0 0.0
    %1959 = vmatpush1.msra.mxu0 0.0
    %1960 = vmatprep.subr.mxu0 0.0
    %1961 = vmatpush1.msra.mxu0 0.0
    %1962 = vmatprep.subr.mxu0 0.0
    %1963 = vmatpush1.msra.mxu0 0.0
    %1964 = vmatprep.subr.mxu0 0.0
    %1965 = vmatpush1.msra.mxu0 0.0
    %1966 = vmatprep.subr.mxu0 0.0
    %1967 = vmatpush1.msra.mxu0 0.0
    %1968 = vmatprep.subr.mxu0 0.0
    %1969 = vmatpush1.msra.mxu0 0.0
    %1970 = vmatprep.subr.mxu0 0.0
    %1971 = vmatpush1.msra.mxu0 0.0
    %1972 = vmatprep.subr.mxu0 0.0
    %1973 = vmatpush1.msra.mxu0 0.0
    %1974 = vmatprep.subr.mxu0 0.0
    %1975 = vmatpush1.msra.mxu0 0.0
    %1976 = vmatprep.subr.mxu0 0.0
    %1977 = vmatpush1.msra.mxu0 0.0
    %1978 = vmatprep.subr.mxu0 0.0
    %1979 = vmatpush1.msra.mxu0 0.0
    %1980 = vmatprep.subr.mxu0 0.0
    %1981 = vmatpush1.msra.mxu0 0.0
    %1982 = vmatprep.subr.mxu0 0.0
    %v1983 = vand.u32 %v1184, 4294901760
    %v1984 = vsub.f32 %v1184, %v1983
    %1985 = vmatpush1.msra.mxu0 %v1984
    %1986 = vmatprep.subr.mxu0 0.0
    %v1987 = vand.u32 %v1178, 4294901760
    %v1988 = vsub.f32 %v1178, %v1987
    %1989 = vmatpush1.msra.mxu0 %v1988
    %1990 = vmatprep.subr.mxu0 0.0
    %1991 = vmatpush2.msra.mxu0 0.0
    %1992 = vmatprep.subr.mxu0 0.0
    %1993 = vmatpush2.msra.mxu0 0.0
    %1994 = vmatprep.subr.mxu0 0.0
    %1995 = vmatpush2.msra.mxu0 0.0
    %1996 = vmatprep.subr.mxu0 0.0
    %1997 = vmatpush2.msra.mxu0 0.0
    %1998 = vmatprep.subr.mxu0 0.0
    %1999 = vmatpush2.msra.mxu0 0.0
    %2000 = vmatprep.subr.mxu0 0.0
    %2001 = vmatpush2.msra.mxu0 0.0
    %2002 = vmatprep.subr.mxu0 0.0
    %2003 = vmatpush2.msra.mxu0 0.0
    %2004 = vmatprep.subr.mxu0 0.0
    %2005 = vmatpush2.msra.mxu0 0.0
    %2006 = vmatprep.subr.mxu0 0.0
    %2007 = vmatpush2.msra.mxu0 0.0
    %2008 = vmatprep.subr.mxu0 0.0
    %2009 = vmatpush2.msra.mxu0 0.0
    %2010 = vmatprep.subr.mxu0 0.0
    %2011 = vmatpush2.msra.mxu0 0.0
    %2012 = vmatprep.subr.mxu0 0.0
    %2013 = vmatpush2.msra.mxu0 0.0
    %2014 = vmatprep.subr.mxu0 0.0
    %2015 = vmatpush2.msra.mxu0 0.0
    %2016 = vmatprep.subr.mxu0 0.0
    %2017 = vmatpush2.msra.mxu0 0.0
    %2018 = vmatprep.subr.mxu0 0.0
    %2019 = vmatpush2.msra.mxu0 0.0
    %2020 = vmatprep.subr.mxu0 0.0
    %2021 = vmatpush2.msra.mxu0 0.0
    %2022 = vmatprep.mubr.f32.mxu0 0.0
    %v2023 = vand.u32 %v1775, 4294901760
    %v2024 = vsub.f32 %v1775, %v2023
    %2025 = vmatmul.mubr.f32.gmra.mxu0 %v2024
    %v2026 = vpop.f32.mrf.mxu0
    %v2027 = vadd.f32 %v1945, %v2026
    %v2028 = vpop.f32.mrf.mxu0
    %2029 = vmatprep.mubr.f32.mxu0 0.0
    %v2030 = vand.u32 %v1778, 4294901760
    %v2031 = vsub.f32 %v1778, %v2030
    %2032 = vmatmul.mubr.f32.gmra.mxu0 %v2031
    %v2033 = vpop.f32.mrf.mxu0
    %v2034 = vadd.f32 %v1951, %v2033
    %v2035 = vpop.f32.mrf.mxu0
    %2036 = vdwg.mxu0
    %2037 = vmatprep.subr.mxu0 0.0
    %2038 = vmatpush1.msra.mxu0 0.0
    %2039 = vmatprep.subr.mxu0 0.0
    %2040 = vmatpush1.msra.mxu0 0.0
    %2041 = vmatprep.subr.mxu0 0.0
    %2042 = vmatpush1.msra.mxu0 0.0
    %2043 = vmatprep.subr.mxu0 0.0
    %2044 = vmatpush1.msra.mxu0 0.0
    %2045 = vmatprep.subr.mxu0 0.0
    %2046 = vmatpush1.msra.mxu0 0.0
    %2047 = vmatprep.subr.mxu0 0.0
    %2048 = vmatpush1.msra.mxu0 0.0
    %2049 = vmatprep.subr.mxu0 0.0
    %2050 = vmatpush1.msra.mxu0 0.0
    %2051 = vmatprep.subr.mxu0 0.0
    %2052 = vmatpush1.msra.mxu0 0.0
    %2053 = vmatprep.subr.mxu0 0.0
    %2054 = vmatpush1.msra.mxu0 0.0
    %2055 = vmatprep.subr.mxu0 0.0
    %2056 = vmatpush1.msra.mxu0 0.0
    %2057 = vmatprep.subr.mxu0 0.0
    %2058 = vmatpush1.msra.mxu0 0.0
    %2059 = vmatprep.subr.mxu0 0.0
    %2060 = vmatpush1.msra.mxu0 0.0
    %2061 = vmatprep.subr.mxu0 0.0
    %2062 = vmatpush1.msra.mxu0 0.0
    %2063 = vmatprep.subr.mxu0 0.0
    %2064 = vmatpush1.msra.mxu0 0.0
    %2065 = vmatprep.subr.mxu0 0.0
    %v2066 = vand.u32 %v1184, 4294901760
    %2067 = vmatpush1.msra.mxu0 %v2066
    %2068 = vmatprep.subr.mxu0 0.0
    %v2069 = vand.u32 %v1178, 4294901760
    %2070 = vmatpush1.msra.mxu0 %v2069
    %2071 = vmatprep.subr.mxu0 0.0
    %2072 = vmatpush2.msra.mxu0 0.0
    %2073 = vmatprep.subr.mxu0 0.0
    %2074 = vmatpush2.msra.mxu0 0.0
    %2075 = vmatprep.subr.mxu0 0.0
    %2076 = vmatpush2.msra.mxu0 0.0
    %2077 = vmatprep.subr.mxu0 0.0
    %2078 = vmatpush2.msra.mxu0 0.0
    %2079 = vmatprep.subr.mxu0 0.0
    %2080 = vmatpush2.msra.mxu0 0.0
    %2081 = vmatprep.subr.mxu0 0.0
    %2082 = vmatpush2.msra.mxu0 0.0
    %2083 = vmatprep.subr.mxu0 0.0
    %2084 = vmatpush2.msra.mxu0 0.0
    %2085 = vmatprep.subr.mxu0 0.0
    %2086 = vmatpush2.msra.mxu0 0.0
    %2087 = vmatprep.subr.mxu0 0.0
    %2088 = vmatpush2.msra.mxu0 0.0
    %2089 = vmatprep.subr.mxu0 0.0
    %2090 = vmatpush2.msra.mxu0 0.0
    %2091 = vmatprep.subr.mxu0 0.0
    %2092 = vmatpush2.msra.mxu0 0.0
    %2093 = vmatprep.subr.mxu0 0.0
    %2094 = vmatpush2.msra.mxu0 0.0
    %2095 = vmatprep.subr.mxu0 0.0
    %2096 = vmatpush2.msra.mxu0 0.0
    %2097 = vmatprep.subr.mxu0 0.0
    %2098 = vmatpush2.msra.mxu0 0.0
    %2099 = vmatprep.subr.mxu0 0.0
    %2100 = vmatpush2.msra.mxu0 0.0
    %2101 = vmatprep.subr.mxu0 0.0
    %2102 = vmatpush2.msra.mxu0 0.0
    %2103 = vmatprep.mubr.f32.mxu0 0.0
    %v2104 = vand.u32 %v1775, 4294901760
    %v2105 = vsub.f32 %v1775, %v2104
    %v2106 = vand.u32 %v2105, 4294901760
    %2107 = vmatmul.mubr.f32.gmra.mxu0 %v2106
    %v2108 = vpop.f32.mrf.mxu0
    %v2109 = vadd.f32 %v2027, %v2108
    %v2110 = vpop.f32.mrf.mxu0
    %2111 = vmatprep.mubr.f32.mxu0 0.0
    %v2112 = vand.u32 %v1778, 4294901760
    %v2113 = vsub.f32 %v1778, %v2112
    %v2114 = vand.u32 %v2113, 4294901760
    %2115 = vmatmul.mubr.f32.gmra.mxu0 %v2114
    %v2116 = vpop.f32.mrf.mxu0
    %v2117 = vadd.f32 %v2034, %v2116
    %v2118 = vpop.f32.mrf.mxu0
    %2119 = vdwg.mxu0
    %2120 = vmatprep.subr.mxu0 0.0
    %2121 = vmatpush1.msra.mxu0 0.0
    %2122 = vmatprep.subr.mxu0 0.0
    %2123 = vmatpush1.msra.mxu0 0.0
    %2124 = vmatprep.subr.mxu0 0.0
    %2125 = vmatpush1.msra.mxu0 0.0
    %2126 = vmatprep.subr.mxu0 0.0
    %2127 = vmatpush1.msra.mxu0 0.0
    %2128 = vmatprep.subr.mxu0 0.0
    %2129 = vmatpush1.msra.mxu0 0.0
    %2130 = vmatprep.subr.mxu0 0.0
    %2131 = vmatpush1.msra.mxu0 0.0
    %2132 = vmatprep.subr.mxu0 0.0
    %2133 = vmatpush1.msra.mxu0 0.0
    %2134 = vmatprep.subr.mxu0 0.0
    %2135 = vmatpush1.msra.mxu0 0.0
    %2136 = vmatprep.subr.mxu0 0.0
    %2137 = vmatpush1.msra.mxu0 0.0
    %2138 = vmatprep.subr.mxu0 0.0
    %2139 = vmatpush1.msra.mxu0 0.0
    %2140 = vmatprep.subr.mxu0 0.0
    %2141 = vmatpush1.msra.mxu0 0.0
    %2142 = vmatprep.subr.mxu0 0.0
    %2143 = vmatpush1.msra.mxu0 0.0
    %2144 = vmatprep.subr.mxu0 0.0
    %2145 = vmatpush1.msra.mxu0 0.0
    %2146 = vmatprep.subr.mxu0 0.0
    %2147 = vmatpush1.msra.mxu0 0.0
    %2148 = vmatprep.subr.mxu0 0.0
    %v2149 = vand.u32 %v1184, 4294901760
    %v2150 = vsub.f32 %v1184, %v2149
    %v2151 = vand.u32 %v2150, 4294901760
    %2152 = vmatpush1.msra.mxu0 %v2151
    %2153 = vmatprep.subr.mxu0 0.0
    %v2154 = vand.u32 %v1178, 4294901760
    %v2155 = vsub.f32 %v1178, %v2154
    %v2156 = vand.u32 %v2155, 4294901760
    %2157 = vmatpush1.msra.mxu0 %v2156
    %2158 = vmatprep.subr.mxu0 0.0
    %2159 = vmatpush2.msra.mxu0 0.0
    %2160 = vmatprep.subr.mxu0 0.0
    %2161 = vmatpush2.msra.mxu0 0.0
    %2162 = vmatprep.subr.mxu0 0.0
    %2163 = vmatpush2.msra.mxu0 0.0
    %2164 = vmatprep.subr.mxu0 0.0
    %2165 = vmatpush2.msra.mxu0 0.0
    %2166 = vmatprep.subr.mxu0 0.0
    %2167 = vmatpush2.msra.mxu0 0.0
    %2168 = vmatprep.subr.mxu0 0.0
    %2169 = vmatpush2.msra.mxu0 0.0
    %2170 = vmatprep.subr.mxu0 0.0
    %2171 = vmatpush2.msra.mxu0 0.0
    %2172 = vmatprep.subr.mxu0 0.0
    %2173 = vmatpush2.msra.mxu0 0.0
    %2174 = vmatprep.subr.mxu0 0.0
    %2175 = vmatpush2.msra.mxu0 0.0
    %2176 = vmatprep.subr.mxu0 0.0
    %2177 = vmatpush2.msra.mxu0 0.0
    %2178 = vmatprep.subr.mxu0 0.0
    %2179 = vmatpush2.msra.mxu0 0.0
    %2180 = vmatprep.subr.mxu0 0.0
    %2181 = vmatpush2.msra.mxu0 0.0
    %2182 = vmatprep.subr.mxu0 0.0
    %2183 = vmatpush2.msra.mxu0 0.0
    %2184 = vmatprep.subr.mxu0 0.0
    %2185 = vmatpush2.msra.mxu0 0.0
    %2186 = vmatprep.subr.mxu0 0.0
    %2187 = vmatpush2.msra.mxu0 0.0
    %2188 = vmatprep.subr.mxu0 0.0
    %2189 = vmatpush2.msra.mxu0 0.0
    %2190 = vmatprep.mubr.f32.mxu0 0.0
    %v2191 = vand.u32 %v1775, 4294901760
    %2192 = vmatmul.mubr.f32.gmra.mxu0 %v2191
    %v2193 = vpop.f32.mrf.mxu0
    %v2194 = vadd.f32 %v2109, %v2193
    %v2195 = vpop.f32.mrf.mxu0
    %2196 = vmatprep.mubr.f32.mxu0 0.0
    %v2197 = vand.u32 %v1778, 4294901760
    %2198 = vmatmul.mubr.f32.gmra.mxu0 %v2197
    %v2199 = vpop.f32.mrf.mxu0
    %v2200 = vadd.f32 %v2117, %v2199
    %v2201 = vpop.f32.mrf.mxu0
    %2202 = vdwg.mxu0
    %2203 = vmatprep.subr.mxu0 0.0
    %2204 = vmatpush1.msra.mxu0 0.0
    %2205 = vmatprep.subr.mxu0 0.0
    %2206 = vmatpush1.msra.mxu0 0.0
    %2207 = vmatprep.subr.mxu0 0.0
    %2208 = vmatpush1.msra.mxu0 0.0
    %2209 = vmatprep.subr.mxu0 0.0
    %2210 = vmatpush1.msra.mxu0 0.0
    %2211 = vmatprep.subr.mxu0 0.0
    %2212 = vmatpush1.msra.mxu0 0.0
    %2213 = vmatprep.subr.mxu0 0.0
    %2214 = vmatpush1.msra.mxu0 0.0
    %2215 = vmatprep.subr.mxu0 0.0
    %2216 = vmatpush1.msra.mxu0 0.0
    %2217 = vmatprep.subr.mxu0 0.0
    %2218 = vmatpush1.msra.mxu0 0.0
    %2219 = vmatprep.subr.mxu0 0.0
    %2220 = vmatpush1.msra.mxu0 0.0
    %2221 = vmatprep.subr.mxu0 0.0
    %2222 = vmatpush1.msra.mxu0 0.0
    %2223 = vmatprep.subr.mxu0 0.0
    %2224 = vmatpush1.msra.mxu0 0.0
    %2225 = vmatprep.subr.mxu0 0.0
    %2226 = vmatpush1.msra.mxu0 0.0
    %2227 = vmatprep.subr.mxu0 0.0
    %2228 = vmatpush1.msra.mxu0 0.0
    %2229 = vmatprep.subr.mxu0 0.0
    %2230 = vmatpush1.msra.mxu0 0.0
    %2231 = vmatprep.subr.mxu0 0.0
    %v2232 = vand.u32 %v1184, 4294901760
    %2233 = vmatpush1.msra.mxu0 %v2232
    %2234 = vmatprep.subr.mxu0 0.0
    %v2235 = vand.u32 %v1178, 4294901760
    %2236 = vmatpush1.msra.mxu0 %v2235
    %2237 = vmatprep.subr.mxu0 0.0
    %2238 = vmatpush2.msra.mxu0 0.0
    %2239 = vmatprep.subr.mxu0 0.0
    %2240 = vmatpush2.msra.mxu0 0.0
    %2241 = vmatprep.subr.mxu0 0.0
    %2242 = vmatpush2.msra.mxu0 0.0
    %2243 = vmatprep.subr.mxu0 0.0
    %2244 = vmatpush2.msra.mxu0 0.0
    %2245 = vmatprep.subr.mxu0 0.0
    %2246 = vmatpush2.msra.mxu0 0.0
    %2247 = vmatprep.subr.mxu0 0.0
    %2248 = vmatpush2.msra.mxu0 0.0
    %2249 = vmatprep.subr.mxu0 0.0
    %2250 = vmatpush2.msra.mxu0 0.0
    %2251 = vmatprep.subr.mxu0 0.0
    %2252 = vmatpush2.msra.mxu0 0.0
    %2253 = vmatprep.subr.mxu0 0.0
    %2254 = vmatpush2.msra.mxu0 0.0
    %2255 = vmatprep.subr.mxu0 0.0
    %2256 = vmatpush2.msra.mxu0 0.0
    %2257 = vmatprep.subr.mxu0 0.0
    %2258 = vmatpush2.msra.mxu0 0.0
    %2259 = vmatprep.subr.mxu0 0.0
    %2260 = vmatpush2.msra.mxu0 0.0
    %2261 = vmatprep.subr.mxu0 0.0
    %2262 = vmatpush2.msra.mxu0 0.0
    %2263 = vmatprep.subr.mxu0 0.0
    %2264 = vmatpush2.msra.mxu0 0.0
    %2265 = vmatprep.subr.mxu0 0.0
    %2266 = vmatpush2.msra.mxu0 0.0
    %2267 = vmatprep.subr.mxu0 0.0
    %2268 = vmatpush2.msra.mxu0 0.0
    %2269 = vmatprep.mubr.f32.mxu0 0.0
    %v2270 = vand.u32 %v1775, 4294901760
    %2271 = vmatmul.mubr.f32.gmra.mxu0 %v2270
    %v2272 = vpop.f32.mrf.mxu0
    %v2273 = vadd.f32 %v2194, %v2272
    %v2274 = vpop.f32.mrf.mxu0
    %2275 = vmatprep.mubr.f32.mxu0 0.0
    %v2276 = vand.u32 %v1778, 4294901760
    %2277 = vmatmul.mubr.f32.gmra.mxu0 %v2276
    %v2278 = vpop.f32.mrf.mxu0
    %v2279 = vadd.f32 %v2200, %v2278
    %v2280 = vpop.f32.mrf.mxu0
    %2281 = vdwg.mxu0
    %2282 = vrot.lane.b32.xlu0 %v643, 120
    %v2283 = vpop.permute.xlu0 %2282
    %2284 = vrot.lane.b32.xlu0 %v644, 120
    %v2285 = vpop.permute.xlu0 %2284
    %2286 = vrot.lane.b32.xlu0 %v634, 88
    %v2287 = vpop.permute.xlu0 %2286
    %2288 = vrot.lane.b32.xlu0 %v640, 88
    %v2289 = vpop.permute.xlu0 %2288
    %v2290 = vsel %vm1238, %v2283, 0
    %v2292 = vsel %vm1238, %v2285, 0
    %v2294 = vsel %vm1238, %v2287, 0
    %v2296 = vsel %vm1238, %v2289, 0
    %2298 = vmatprep.subr.mxu0 0.0
    %2299 = vmatpush1.xpose.msra.mxu0 0.0
    %2300 = vmatprep.subr.mxu0 0.0
    %2301 = vmatpush1.xpose.msra.mxu0 0.0
    %2302 = vmatprep.subr.mxu0 0.0
    %2303 = vmatpush1.xpose.msra.mxu0 0.0
    %2304 = vmatprep.subr.mxu0 0.0
    %2305 = vmatpush1.xpose.msra.mxu0 0.0
    %2306 = vmatprep.subr.mxu0 0.0
    %2307 = vmatpush1.xpose.msra.mxu0 0.0
    %2308 = vmatprep.subr.mxu0 0.0
    %2309 = vmatpush1.xpose.msra.mxu0 0.0
    %2310 = vmatprep.subr.mxu0 0.0
    %2311 = vmatpush1.xpose.msra.mxu0 0.0
    %2312 = vmatprep.subr.mxu0 0.0
    %2313 = vmatpush1.xpose.msra.mxu0 0.0
    %2314 = vmatprep.subr.mxu0 0.0
    %2315 = vmatpush1.xpose.msra.mxu0 0.0
    %2316 = vmatprep.subr.mxu0 0.0
    %2317 = vmatpush1.xpose.msra.mxu0 0.0
    %2318 = vmatprep.subr.mxu0 0.0
    %2319 = vmatpush1.xpose.msra.mxu0 0.0
    %2320 = vmatprep.subr.mxu0 0.0
    %2321 = vmatpush1.xpose.msra.mxu0 0.0
    %2322 = vmatprep.subr.mxu0 0.0
    %2323 = vmatpush1.xpose.msra.mxu0 0.0
    %2324 = vmatprep.subr.mxu0 0.0
    %2325 = vmatpush1.xpose.msra.mxu0 0.0
    %2326 = vmatprep.subr.mxu0 0.0
    %v2327 = vand.u32 %v2296, 4294901760
    %2328 = vmatpush1.xpose.msra.mxu0 %v2327
    %2329 = vmatprep.subr.mxu0 0.0
    %v2330 = vand.u32 %v2294, 4294901760
    %2331 = vmatpush1.xpose.msra.mxu0 %v2330
    %2332 = vmatprep.subr.mxu0 0.0
    %2333 = vmatpush2.xpose.msra.mxu0 0.0
    %2334 = vmatprep.subr.mxu0 0.0
    %2335 = vmatpush2.xpose.msra.mxu0 0.0
    %2336 = vmatprep.subr.mxu0 0.0
    %2337 = vmatpush2.xpose.msra.mxu0 0.0
    %2338 = vmatprep.subr.mxu0 0.0
    %2339 = vmatpush2.xpose.msra.mxu0 0.0
    %2340 = vmatprep.subr.mxu0 0.0
    %2341 = vmatpush2.xpose.msra.mxu0 0.0
    %2342 = vmatprep.subr.mxu0 0.0
    %2343 = vmatpush2.xpose.msra.mxu0 0.0
    %2344 = vmatprep.subr.mxu0 0.0
    %2345 = vmatpush2.xpose.msra.mxu0 0.0
    %2346 = vmatprep.subr.mxu0 0.0
    %2347 = vmatpush2.xpose.msra.mxu0 0.0
    %2348 = vmatprep.subr.mxu0 0.0
    %2349 = vmatpush2.xpose.msra.mxu0 0.0
    %2350 = vmatprep.subr.mxu0 0.0
    %2351 = vmatpush2.xpose.msra.mxu0 0.0
    %2352 = vmatprep.subr.mxu0 0.0
    %2353 = vmatpush2.xpose.msra.mxu0 0.0
    %2354 = vmatprep.subr.mxu0 0.0
    %2355 = vmatpush2.xpose.msra.mxu0 0.0
    %2356 = vmatprep.subr.mxu0 0.0
    %2357 = vmatpush2.xpose.msra.mxu0 0.0
    %2358 = vmatprep.subr.mxu0 0.0
    %2359 = vmatpush2.xpose.msra.mxu0 0.0
    %2360 = vmatprep.subr.mxu0 0.0
    %2361 = vmatpush2.xpose.msra.mxu0 0.0
    %2362 = vmatprep.subr.mxu0 0.0
    %2363 = vmatpush2.xpose.msra.mxu0 0.0
    %2364 = vmatprep.mubr.f32.mxu0 0.0
    %v2365 = vand.u32 %v2290, 4294901760
    %v2366 = vsub.f32 %v2290, %v2365
    %v2367 = vand.u32 %v2366, 4294901760
    %v2368 = vsub.f32 %v2366, %v2367
    %v2369 = vand.u32 %v2368, 4294901760
    %2370 = vmatmul.mubr.f32.gmra.mxu0 %v2369
    %v2371 = vpop.f32.mrf.mxu0
    %v2372 = vadd.f32 %v1230, %v2371
    %v2373 = vpop.f32.mrf.mxu0
    %2374 = vmatprep.mubr.f32.mxu0 0.0
    %v2375 = vand.u32 %v2292, 4294901760
    %v2376 = vsub.f32 %v2292, %v2375
    %v2377 = vand.u32 %v2376, 4294901760
    %v2378 = vsub.f32 %v2376, %v2377
    %v2379 = vand.u32 %v2378, 4294901760
    %2380 = vmatmul.mubr.f32.gmra.mxu0 %v2379
    %v2381 = vpop.f32.mrf.mxu0
    %v2382 = vadd.f32 %v1231, %v2381
    %v2383 = vpop.f32.mrf.mxu0
    %2384 = vdwg.mxu0
    %2385 = vmatprep.subr.mxu0 0.0
    %2386 = vmatpush1.xpose.msra.mxu0 0.0
    %2387 = vmatprep.subr.mxu0 0.0
    %2388 = vmatpush1.xpose.msra.mxu0 0.0
    %2389 = vmatprep.subr.mxu0 0.0
    %2390 = vmatpush1.xpose.msra.mxu0 0.0
    %2391 = vmatprep.subr.mxu0 0.0
    %2392 = vmatpush1.xpose.msra.mxu0 0.0
    %2393 = vmatprep.subr.mxu0 0.0
    %2394 = vmatpush1.xpose.msra.mxu0 0.0
    %2395 = vmatprep.subr.mxu0 0.0
    %2396 = vmatpush1.xpose.msra.mxu0 0.0
    %2397 = vmatprep.subr.mxu0 0.0
    %2398 = vmatpush1.xpose.msra.mxu0 0.0
    %2399 = vmatprep.subr.mxu0 0.0
    %2400 = vmatpush1.xpose.msra.mxu0 0.0
    %2401 = vmatprep.subr.mxu0 0.0
    %2402 = vmatpush1.xpose.msra.mxu0 0.0
    %2403 = vmatprep.subr.mxu0 0.0
    %2404 = vmatpush1.xpose.msra.mxu0 0.0
    %2405 = vmatprep.subr.mxu0 0.0
    %2406 = vmatpush1.xpose.msra.mxu0 0.0
    %2407 = vmatprep.subr.mxu0 0.0
    %2408 = vmatpush1.xpose.msra.mxu0 0.0
    %2409 = vmatprep.subr.mxu0 0.0
    %2410 = vmatpush1.xpose.msra.mxu0 0.0
    %2411 = vmatprep.subr.mxu0 0.0
    %2412 = vmatpush1.xpose.msra.mxu0 0.0
    %2413 = vmatprep.subr.mxu0 0.0
    %v2414 = vand.u32 %v2296, 4294901760
    %v2415 = vsub.f32 %v2296, %v2414
    %v2416 = vand.u32 %v2415, 4294901760
    %v2417 = vsub.f32 %v2415, %v2416
    %v2418 = vand.u32 %v2417, 4294901760
    %2419 = vmatpush1.xpose.msra.mxu0 %v2418
    %2420 = vmatprep.subr.mxu0 0.0
    %v2421 = vand.u32 %v2294, 4294901760
    %v2422 = vsub.f32 %v2294, %v2421
    %v2423 = vand.u32 %v2422, 4294901760
    %v2424 = vsub.f32 %v2422, %v2423
    %v2425 = vand.u32 %v2424, 4294901760
    %2426 = vmatpush1.xpose.msra.mxu0 %v2425
    %2427 = vmatprep.subr.mxu0 0.0
    %2428 = vmatpush2.xpose.msra.mxu0 0.0
    %2429 = vmatprep.subr.mxu0 0.0
    %2430 = vmatpush2.xpose.msra.mxu0 0.0
    %2431 = vmatprep.subr.mxu0 0.0
    %2432 = vmatpush2.xpose.msra.mxu0 0.0
    %2433 = vmatprep.subr.mxu0 0.0
    %2434 = vmatpush2.xpose.msra.mxu0 0.0
    %2435 = vmatprep.subr.mxu0 0.0
    %2436 = vmatpush2.xpose.msra.mxu0 0.0
    %2437 = vmatprep.subr.mxu0 0.0
    %2438 = vmatpush2.xpose.msra.mxu0 0.0
    %2439 = vmatprep.subr.mxu0 0.0
    %2440 = vmatpush2.xpose.msra.mxu0 0.0
    %2441 = vmatprep.subr.mxu0 0.0
    %2442 = vmatpush2.xpose.msra.mxu0 0.0
    %2443 = vmatprep.subr.mxu0 0.0
    %2444 = vmatpush2.xpose.msra.mxu0 0.0
    %2445 = vmatprep.subr.mxu0 0.0
    %2446 = vmatpush2.xpose.msra.mxu0 0.0
    %2447 = vmatprep.subr.mxu0 0.0
    %2448 = vmatpush2.xpose.msra.mxu0 0.0
    %2449 = vmatprep.subr.mxu0 0.0
    %2450 = vmatpush2.xpose.msra.mxu0 0.0
    %2451 = vmatprep.subr.mxu0 0.0
    %2452 = vmatpush2.xpose.msra.mxu0 0.0
    %2453 = vmatprep.subr.mxu0 0.0
    %2454 = vmatpush2.xpose.msra.mxu0 0.0
    %2455 = vmatprep.subr.mxu0 0.0
    %2456 = vmatpush2.xpose.msra.mxu0 0.0
    %2457 = vmatprep.subr.mxu0 0.0
    %2458 = vmatpush2.xpose.msra.mxu0 0.0
    %2459 = vmatprep.mubr.f32.mxu0 0.0
    %v2460 = vand.u32 %v2290, 4294901760
    %2461 = vmatmul.mubr.f32.gmra.mxu0 %v2460
    %v2462 = vpop.f32.mrf.mxu0
    %v2463 = vadd.f32 %v2372, %v2462
    %v2464 = vpop.f32.mrf.mxu0
    %2465 = vmatprep.mubr.f32.mxu0 0.0
    %v2466 = vand.u32 %v2292, 4294901760
    %2467 = vmatmul.mubr.f32.gmra.mxu0 %v2466
    %v2468 = vpop.f32.mrf.mxu0
    %v2469 = vadd.f32 %v2382, %v2468
    %v2470 = vpop.f32.mrf.mxu0
    %2471 = vdwg.mxu0
    %2472 = vmatprep.subr.mxu0 0.0
    %2473 = vmatpush1.xpose.msra.mxu0 0.0
    %2474 = vmatprep.subr.mxu0 0.0
    %2475 = vmatpush1.xpose.msra.mxu0 0.0
    %2476 = vmatprep.subr.mxu0 0.0
    %2477 = vmatpush1.xpose.msra.mxu0 0.0
    %2478 = vmatprep.subr.mxu0 0.0
    %2479 = vmatpush1.xpose.msra.mxu0 0.0
    %2480 = vmatprep.subr.mxu0 0.0
    %2481 = vmatpush1.xpose.msra.mxu0 0.0
    %2482 = vmatprep.subr.mxu0 0.0
    %2483 = vmatpush1.xpose.msra.mxu0 0.0
    %2484 = vmatprep.subr.mxu0 0.0
    %2485 = vmatpush1.xpose.msra.mxu0 0.0
    %2486 = vmatprep.subr.mxu0 0.0
    %2487 = vmatpush1.xpose.msra.mxu0 0.0
    %2488 = vmatprep.subr.mxu0 0.0
    %2489 = vmatpush1.xpose.msra.mxu0 0.0
    %2490 = vmatprep.subr.mxu0 0.0
    %2491 = vmatpush1.xpose.msra.mxu0 0.0
    %2492 = vmatprep.subr.mxu0 0.0
    %2493 = vmatpush1.xpose.msra.mxu0 0.0
    %2494 = vmatprep.subr.mxu0 0.0
    %2495 = vmatpush1.xpose.msra.mxu0 0.0
    %2496 = vmatprep.subr.mxu0 0.0
    %2497 = vmatpush1.xpose.msra.mxu0 0.0
    %2498 = vmatprep.subr.mxu0 0.0
    %2499 = vmatpush1.xpose.msra.mxu0 0.0
    %2500 = vmatprep.subr.mxu0 0.0
    %v2501 = vand.u32 %v2296, 4294901760
    %v2502 = vsub.f32 %v2296, %v2501
    %2503 = vmatpush1.xpose.msra.mxu0 %v2502
    %2504 = vmatprep.subr.mxu0 0.0
    %v2505 = vand.u32 %v2294, 4294901760
    %v2506 = vsub.f32 %v2294, %v2505
    %2507 = vmatpush1.xpose.msra.mxu0 %v2506
    %2508 = vmatprep.subr.mxu0 0.0
    %2509 = vmatpush2.xpose.msra.mxu0 0.0
    %2510 = vmatprep.subr.mxu0 0.0
    %2511 = vmatpush2.xpose.msra.mxu0 0.0
    %2512 = vmatprep.subr.mxu0 0.0
    %2513 = vmatpush2.xpose.msra.mxu0 0.0
    %2514 = vmatprep.subr.mxu0 0.0
    %2515 = vmatpush2.xpose.msra.mxu0 0.0
    %2516 = vmatprep.subr.mxu0 0.0
    %2517 = vmatpush2.xpose.msra.mxu0 0.0
    %2518 = vmatprep.subr.mxu0 0.0
    %2519 = vmatpush2.xpose.msra.mxu0 0.0
    %2520 = vmatprep.subr.mxu0 0.0
    %2521 = vmatpush2.xpose.msra.mxu0 0.0
    %2522 = vmatprep.subr.mxu0 0.0
    %2523 = vmatpush2.xpose.msra.mxu0 0.0
    %2524 = vmatprep.subr.mxu0 0.0
    %2525 = vmatpush2.xpose.msra.mxu0 0.0
    %2526 = vmatprep.subr.mxu0 0.0
    %2527 = vmatpush2.xpose.msra.mxu0 0.0
    %2528 = vmatprep.subr.mxu0 0.0
    %2529 = vmatpush2.xpose.msra.mxu0 0.0
    %2530 = vmatprep.subr.mxu0 0.0
    %2531 = vmatpush2.xpose.msra.mxu0 0.0
    %2532 = vmatprep.subr.mxu0 0.0
    %2533 = vmatpush2.xpose.msra.mxu0 0.0
    %2534 = vmatprep.subr.mxu0 0.0
    %2535 = vmatpush2.xpose.msra.mxu0 0.0
    %2536 = vmatprep.subr.mxu0 0.0
    %2537 = vmatpush2.xpose.msra.mxu0 0.0
    %2538 = vmatprep.subr.mxu0 0.0
    %2539 = vmatpush2.xpose.msra.mxu0 0.0
    %2540 = vmatprep.mubr.f32.mxu0 0.0
    %v2541 = vand.u32 %v2290, 4294901760
    %v2542 = vsub.f32 %v2290, %v2541
    %2543 = vmatmul.mubr.f32.gmra.mxu0 %v2542
    %v2544 = vpop.f32.mrf.mxu0
    %v2545 = vadd.f32 %v2463, %v2544
    %v2546 = vpop.f32.mrf.mxu0
    %2547 = vmatprep.mubr.f32.mxu0 0.0
    %v2548 = vand.u32 %v2292, 4294901760
    %v2549 = vsub.f32 %v2292, %v2548
    %2550 = vmatmul.mubr.f32.gmra.mxu0 %v2549
    %v2551 = vpop.f32.mrf.mxu0
    %v2552 = vadd.f32 %v2469, %v2551
    %v2553 = vpop.f32.mrf.mxu0
    %2554 = vdwg.mxu0
    %2555 = vmatprep.subr.mxu0 0.0
    %2556 = vmatpush1.xpose.msra.mxu0 0.0
    %2557 = vmatprep.subr.mxu0 0.0
    %2558 = vmatpush1.xpose.msra.mxu0 0.0
    %2559 = vmatprep.subr.mxu0 0.0
    %2560 = vmatpush1.xpose.msra.mxu0 0.0
    %2561 = vmatprep.subr.mxu0 0.0
    %2562 = vmatpush1.xpose.msra.mxu0 0.0
    %2563 = vmatprep.subr.mxu0 0.0
    %2564 = vmatpush1.xpose.msra.mxu0 0.0
    %2565 = vmatprep.subr.mxu0 0.0
    %2566 = vmatpush1.xpose.msra.mxu0 0.0
    %2567 = vmatprep.subr.mxu0 0.0
    %2568 = vmatpush1.xpose.msra.mxu0 0.0
    %2569 = vmatprep.subr.mxu0 0.0
    %2570 = vmatpush1.xpose.msra.mxu0 0.0
    %2571 = vmatprep.subr.mxu0 0.0
    %2572 = vmatpush1.xpose.msra.mxu0 0.0
    %2573 = vmatprep.subr.mxu0 0.0
    %2574 = vmatpush1.xpose.msra.mxu0 0.0
    %2575 = vmatprep.subr.mxu0 0.0
    %2576 = vmatpush1.xpose.msra.mxu0 0.0
    %2577 = vmatprep.subr.mxu0 0.0
    %2578 = vmatpush1.xpose.msra.mxu0 0.0
    %2579 = vmatprep.subr.mxu0 0.0
    %2580 = vmatpush1.xpose.msra.mxu0 0.0
    %2581 = vmatprep.subr.mxu0 0.0
    %2582 = vmatpush1.xpose.msra.mxu0 0.0
    %2583 = vmatprep.subr.mxu0 0.0
    %v2584 = vand.u32 %v2296, 4294901760
    %2585 = vmatpush1.xpose.msra.mxu0 %v2584
    %2586 = vmatprep.subr.mxu0 0.0
    %v2587 = vand.u32 %v2294, 4294901760
    %2588 = vmatpush1.xpose.msra.mxu0 %v2587
    %2589 = vmatprep.subr.mxu0 0.0
    %2590 = vmatpush2.xpose.msra.mxu0 0.0
    %2591 = vmatprep.subr.mxu0 0.0
    %2592 = vmatpush2.xpose.msra.mxu0 0.0
    %2593 = vmatprep.subr.mxu0 0.0
    %2594 = vmatpush2.xpose.msra.mxu0 0.0
    %2595 = vmatprep.subr.mxu0 0.0
    %2596 = vmatpush2.xpose.msra.mxu0 0.0
    %2597 = vmatprep.subr.mxu0 0.0
    %2598 = vmatpush2.xpose.msra.mxu0 0.0
    %2599 = vmatprep.subr.mxu0 0.0
    %2600 = vmatpush2.xpose.msra.mxu0 0.0
    %2601 = vmatprep.subr.mxu0 0.0
    %2602 = vmatpush2.xpose.msra.mxu0 0.0
    %2603 = vmatprep.subr.mxu0 0.0
    %2604 = vmatpush2.xpose.msra.mxu0 0.0
    %2605 = vmatprep.subr.mxu0 0.0
    %2606 = vmatpush2.xpose.msra.mxu0 0.0
    %2607 = vmatprep.subr.mxu0 0.0
    %2608 = vmatpush2.xpose.msra.mxu0 0.0
    %2609 = vmatprep.subr.mxu0 0.0
    %2610 = vmatpush2.xpose.msra.mxu0 0.0
    %2611 = vmatprep.subr.mxu0 0.0
    %2612 = vmatpush2.xpose.msra.mxu0 0.0
    %2613 = vmatprep.subr.mxu0 0.0
    %2614 = vmatpush2.xpose.msra.mxu0 0.0
    %2615 = vmatprep.subr.mxu0 0.0
    %2616 = vmatpush2.xpose.msra.mxu0 0.0
    %2617 = vmatprep.subr.mxu0 0.0
    %2618 = vmatpush2.xpose.msra.mxu0 0.0
    %2619 = vmatprep.subr.mxu0 0.0
    %2620 = vmatpush2.xpose.msra.mxu0 0.0
    %2621 = vmatprep.mubr.f32.mxu0 0.0
    %v2622 = vand.u32 %v2290, 4294901760
    %v2623 = vsub.f32 %v2290, %v2622
    %v2624 = vand.u32 %v2623, 4294901760
    %2625 = vmatmul.mubr.f32.gmra.mxu0 %v2624
    %v2626 = vpop.f32.mrf.mxu0
    %v2627 = vadd.f32 %v2545, %v2626
    %v2628 = vpop.f32.mrf.mxu0
    %2629 = vmatprep.mubr.f32.mxu0 0.0
    %v2630 = vand.u32 %v2292, 4294901760
    %v2631 = vsub.f32 %v2292, %v2630
    %v2632 = vand.u32 %v2631, 4294901760
    %2633 = vmatmul.mubr.f32.gmra.mxu0 %v2632
    %v2634 = vpop.f32.mrf.mxu0
    %v2635 = vadd.f32 %v2552, %v2634
    %v2636 = vpop.f32.mrf.mxu0
    %2637 = vdwg.mxu0
    %2638 = vmatprep.subr.mxu0 0.0
    %2639 = vmatpush1.xpose.msra.mxu0 0.0
    %2640 = vmatprep.subr.mxu0 0.0
    %2641 = vmatpush1.xpose.msra.mxu0 0.0
    %2642 = vmatprep.subr.mxu0 0.0
    %2643 = vmatpush1.xpose.msra.mxu0 0.0
    %2644 = vmatprep.subr.mxu0 0.0
    %2645 = vmatpush1.xpose.msra.mxu0 0.0
    %2646 = vmatprep.subr.mxu0 0.0
    %2647 = vmatpush1.xpose.msra.mxu0 0.0
    %2648 = vmatprep.subr.mxu0 0.0
    %2649 = vmatpush1.xpose.msra.mxu0 0.0
    %2650 = vmatprep.subr.mxu0 0.0
    %2651 = vmatpush1.xpose.msra.mxu0 0.0
    %2652 = vmatprep.subr.mxu0 0.0
    %2653 = vmatpush1.xpose.msra.mxu0 0.0
    %2654 = vmatprep.subr.mxu0 0.0
    %2655 = vmatpush1.xpose.msra.mxu0 0.0
    %2656 = vmatprep.subr.mxu0 0.0
    %2657 = vmatpush1.xpose.msra.mxu0 0.0
    %2658 = vmatprep.subr.mxu0 0.0
    %2659 = vmatpush1.xpose.msra.mxu0 0.0
    %2660 = vmatprep.subr.mxu0 0.0
    %2661 = vmatpush1.xpose.msra.mxu0 0.0
    %2662 = vmatprep.subr.mxu0 0.0
    %2663 = vmatpush1.xpose.msra.mxu0 0.0
    %2664 = vmatprep.subr.mxu0 0.0
    %2665 = vmatpush1.xpose.msra.mxu0 0.0
    %2666 = vmatprep.subr.mxu0 0.0
    %v2667 = vand.u32 %v2296, 4294901760
    %v2668 = vsub.f32 %v2296, %v2667
    %v2669 = vand.u32 %v2668, 4294901760
    %2670 = vmatpush1.xpose.msra.mxu0 %v2669
    %2671 = vmatprep.subr.mxu0 0.0
    %v2672 = vand.u32 %v2294, 4294901760
    %v2673 = vsub.f32 %v2294, %v2672
    %v2674 = vand.u32 %v2673, 4294901760
    %2675 = vmatpush1.xpose.msra.mxu0 %v2674
    %2676 = vmatprep.subr.mxu0 0.0
    %2677 = vmatpush2.xpose.msra.mxu0 0.0
    %2678 = vmatprep.subr.mxu0 0.0
    %2679 = vmatpush2.xpose.msra.mxu0 0.0
    %2680 = vmatprep.subr.mxu0 0.0
    %2681 = vmatpush2.xpose.msra.mxu0 0.0
    %2682 = vmatprep.subr.mxu0 0.0
    %2683 = vmatpush2.xpose.msra.mxu0 0.0
    %2684 = vmatprep.subr.mxu0 0.0
    %2685 = vmatpush2.xpose.msra.mxu0 0.0
    %2686 = vmatprep.subr.mxu0 0.0
    %2687 = vmatpush2.xpose.msra.mxu0 0.0
    %2688 = vmatprep.subr.mxu0 0.0
    %2689 = vmatpush2.xpose.msra.mxu0 0.0
    %2690 = vmatprep.subr.mxu0 0.0
    %2691 = vmatpush2.xpose.msra.mxu0 0.0
    %2692 = vmatprep.subr.mxu0 0.0
    %2693 = vmatpush2.xpose.msra.mxu0 0.0
    %2694 = vmatprep.subr.mxu0 0.0
    %2695 = vmatpush2.xpose.msra.mxu0 0.0
    %2696 = vmatprep.subr.mxu0 0.0
    %2697 = vmatpush2.xpose.msra.mxu0 0.0
    %2698 = vmatprep.subr.mxu0 0.0
    %2699 = vmatpush2.xpose.msra.mxu0 0.0
    %2700 = vmatprep.subr.mxu0 0.0
    %2701 = vmatpush2.xpose.msra.mxu0 0.0
    %2702 = vmatprep.subr.mxu0 0.0
    %2703 = vmatpush2.xpose.msra.mxu0 0.0
    %2704 = vmatprep.subr.mxu0 0.0
    %2705 = vmatpush2.xpose.msra.mxu0 0.0
    %2706 = vmatprep.subr.mxu0 0.0
    %2707 = vmatpush2.xpose.msra.mxu0 0.0
    %2708 = vmatprep.mubr.f32.mxu0 0.0
    %v2709 = vand.u32 %v2290, 4294901760
    %2710 = vmatmul.mubr.f32.gmra.mxu0 %v2709
    %v2711 = vpop.f32.mrf.mxu0
    %v2712 = vadd.f32 %v2627, %v2711
    %v2713 = vpop.f32.mrf.mxu0
    %2714 = vmatprep.mubr.f32.mxu0 0.0
    %v2715 = vand.u32 %v2292, 4294901760
    %2716 = vmatmul.mubr.f32.gmra.mxu0 %v2715
    %v2717 = vpop.f32.mrf.mxu0
    %v2718 = vadd.f32 %v2635, %v2717
    %v2719 = vpop.f32.mrf.mxu0
    %2720 = vdwg.mxu0
    %2721 = vmatprep.subr.mxu0 0.0
    %2722 = vmatpush1.xpose.msra.mxu0 0.0
    %2723 = vmatprep.subr.mxu0 0.0
    %2724 = vmatpush1.xpose.msra.mxu0 0.0
    %2725 = vmatprep.subr.mxu0 0.0
    %2726 = vmatpush1.xpose.msra.mxu0 0.0
    %2727 = vmatprep.subr.mxu0 0.0
    %2728 = vmatpush1.xpose.msra.mxu0 0.0
    %2729 = vmatprep.subr.mxu0 0.0
    %2730 = vmatpush1.xpose.msra.mxu0 0.0
    %2731 = vmatprep.subr.mxu0 0.0
    %2732 = vmatpush1.xpose.msra.mxu0 0.0
    %2733 = vmatprep.subr.mxu0 0.0
    %2734 = vmatpush1.xpose.msra.mxu0 0.0
    %2735 = vmatprep.subr.mxu0 0.0
    %2736 = vmatpush1.xpose.msra.mxu0 0.0
    %2737 = vmatprep.subr.mxu0 0.0
    %2738 = vmatpush1.xpose.msra.mxu0 0.0
    %2739 = vmatprep.subr.mxu0 0.0
    %2740 = vmatpush1.xpose.msra.mxu0 0.0
    %2741 = vmatprep.subr.mxu0 0.0
    %2742 = vmatpush1.xpose.msra.mxu0 0.0
    %2743 = vmatprep.subr.mxu0 0.0
    %2744 = vmatpush1.xpose.msra.mxu0 0.0
    %2745 = vmatprep.subr.mxu0 0.0
    %2746 = vmatpush1.xpose.msra.mxu0 0.0
    %2747 = vmatprep.subr.mxu0 0.0
    %2748 = vmatpush1.xpose.msra.mxu0 0.0
    %2749 = vmatprep.subr.mxu0 0.0
    %v2750 = vand.u32 %v2296, 4294901760
    %2751 = vmatpush1.xpose.msra.mxu0 %v2750
    %2752 = vmatprep.subr.mxu0 0.0
    %v2753 = vand.u32 %v2294, 4294901760
    %2754 = vmatpush1.xpose.msra.mxu0 %v2753
    %2755 = vmatprep.subr.mxu0 0.0
    %2756 = vmatpush2.xpose.msra.mxu0 0.0
    %2757 = vmatprep.subr.mxu0 0.0
    %2758 = vmatpush2.xpose.msra.mxu0 0.0
    %2759 = vmatprep.subr.mxu0 0.0
    %2760 = vmatpush2.xpose.msra.mxu0 0.0
    %2761 = vmatprep.subr.mxu0 0.0
    %2762 = vmatpush2.xpose.msra.mxu0 0.0
    %2763 = vmatprep.subr.mxu0 0.0
    %2764 = vmatpush2.xpose.msra.mxu0 0.0
    %2765 = vmatprep.subr.mxu0 0.0
    %2766 = vmatpush2.xpose.msra.mxu0 0.0
    %2767 = vmatprep.subr.mxu0 0.0
    %2768 = vmatpush2.xpose.msra.mxu0 0.0
    %2769 = vmatprep.subr.mxu0 0.0
    %2770 = vmatpush2.xpose.msra.mxu0 0.0
    %2771 = vmatprep.subr.mxu0 0.0
    %2772 = vmatpush2.xpose.msra.mxu0 0.0
    %2773 = vmatprep.subr.mxu0 0.0
    %2774 = vmatpush2.xpose.msra.mxu0 0.0
    %2775 = vmatprep.subr.mxu0 0.0
    %2776 = vmatpush2.xpose.msra.mxu0 0.0
    %2777 = vmatprep.subr.mxu0 0.0
    %2778 = vmatpush2.xpose.msra.mxu0 0.0
    %2779 = vmatprep.subr.mxu0 0.0
    %2780 = vmatpush2.xpose.msra.mxu0 0.0
    %2781 = vmatprep.subr.mxu0 0.0
    %2782 = vmatpush2.xpose.msra.mxu0 0.0
    %2783 = vmatprep.subr.mxu0 0.0
    %2784 = vmatpush2.xpose.msra.mxu0 0.0
    %2785 = vmatprep.subr.mxu0 0.0
    %2786 = vmatpush2.xpose.msra.mxu0 0.0
    %2787 = vmatprep.mubr.f32.mxu0 0.0
    %v2788 = vand.u32 %v2290, 4294901760
    %2789 = vmatmul.mubr.f32.gmra.mxu0 %v2788
    %v2790 = vpop.f32.mrf.mxu0
    %v2791 = vadd.f32 %v2712, %v2790
    %v2792 = vpop.f32.mrf.mxu0
    %2793 = vmatprep.mubr.f32.mxu0 0.0
    %v2794 = vand.u32 %v2292, 4294901760
    %2795 = vmatmul.mubr.f32.gmra.mxu0 %v2794
    %v2796 = vpop.f32.mrf.mxu0
    %v2797 = vadd.f32 %v2718, %v2796
    %v2798 = vpop.f32.mrf.mxu0
    %2799 = vdwg.mxu0
    %v2800 = vsel %vm1751, %v2791, -inf
    %2801 = vmax.xlane.f32.xlu0 %v2800
    %v2802 = vpop.xlane.xlu0 %2801
    %v2803 = vsel %vm1751, %v2797, -inf
    %2804 = vmax.xlane.f32.xlu0 %v2803
    %v2805 = vpop.xlane.xlu0 %2804
    %v2806 = vsub.f32 %v2791, %v2802
    %v2807 = vsub.f32 %v2797, %v2805
    %v2808 = vmul.f32 %v2806, 1.442695
    %v2809 = vpow.pop %v2808
    %v2810 = vmul.f32 %v2807, 1.442695
    %v2811 = vpow.pop %v2810
    %v2812 = vsel %vm1751, %v2809, 0.0
    %2813 = vadd.xlane.f32.xlu0 %v2812
    %v2814 = vpop.xlane.xlu0 %2813
    %v2815 = vsel %vm1751, %v2811, 0.0
    %2816 = vadd.xlane.f32.xlu0 %v2815
    %v2817 = vpop.xlane.xlu0 %2816
    %v2818 = vrcp.pop %v2814
    %v2819 = vrcp.pop %v2817
    %v2820 = vmul.f32 %v2809, %v2818
    %v2821 = vmul.f32 %v2811, %v2819
    %2824 = vrot.lane.b32.xlu0 %v1178, 120
    %v2825 = vpop.permute.xlu0 %2824
    %2826 = vrot.lane.b32.xlu0 %v1184, 120
    %v2827 = vpop.permute.xlu0 %2826
    %v2831 = vsel %vm1751, %v2820, 0
    %v2834 = vsel %vm1751, %v2821, 0
    %2836 = vmatprep.subr.mxu0 0.0
    %2837 = vmatpush1.msra.mxu0 0.0
    %2838 = vmatprep.subr.mxu0 0.0
    %2839 = vmatpush1.msra.mxu0 0.0
    %2840 = vmatprep.subr.mxu0 0.0
    %2841 = vmatpush1.msra.mxu0 0.0
    %2842 = vmatprep.subr.mxu0 0.0
    %2843 = vmatpush1.msra.mxu0 0.0
    %2844 = vmatprep.subr.mxu0 0.0
    %2845 = vmatpush1.msra.mxu0 0.0
    %2846 = vmatprep.subr.mxu0 0.0
    %2847 = vmatpush1.msra.mxu0 0.0
    %2848 = vmatprep.subr.mxu0 0.0
    %2849 = vmatpush1.msra.mxu0 0.0
    %2850 = vmatprep.subr.mxu0 0.0
    %2851 = vmatpush1.msra.mxu0 0.0
    %2852 = vmatprep.subr.mxu0 0.0
    %2853 = vmatpush1.msra.mxu0 0.0
    %2854 = vmatprep.subr.mxu0 0.0
    %2855 = vmatpush1.msra.mxu0 0.0
    %2856 = vmatprep.subr.mxu0 0.0
    %2857 = vmatpush1.msra.mxu0 0.0
    %2858 = vmatprep.subr.mxu0 0.0
    %2859 = vmatpush1.msra.mxu0 0.0
    %2860 = vmatprep.subr.mxu0 0.0
    %2861 = vmatpush1.msra.mxu0 0.0
    %2862 = vmatprep.subr.mxu0 0.0
    %2863 = vmatpush1.msra.mxu0 0.0
    %2864 = vmatprep.subr.mxu0 0.0
    %v2865 = vand.u32 %v2827, 4294901760
    %2866 = vmatpush1.msra.mxu0 %v2865
    %2867 = vmatprep.subr.mxu0 0.0
    %v2868 = vand.u32 %v2825, 4294901760
    %2869 = vmatpush1.msra.mxu0 %v2868
    %2870 = vmatprep.subr.mxu0 0.0
    %2871 = vmatpush2.msra.mxu0 0.0
    %2872 = vmatprep.subr.mxu0 0.0
    %2873 = vmatpush2.msra.mxu0 0.0
    %2874 = vmatprep.subr.mxu0 0.0
    %2875 = vmatpush2.msra.mxu0 0.0
    %2876 = vmatprep.subr.mxu0 0.0
    %2877 = vmatpush2.msra.mxu0 0.0
    %2878 = vmatprep.subr.mxu0 0.0
    %2879 = vmatpush2.msra.mxu0 0.0
    %2880 = vmatprep.subr.mxu0 0.0
    %2881 = vmatpush2.msra.mxu0 0.0
    %2882 = vmatprep.subr.mxu0 0.0
    %2883 = vmatpush2.msra.mxu0 0.0
    %2884 = vmatprep.subr.mxu0 0.0
    %2885 = vmatpush2.msra.mxu0 0.0
    %2886 = vmatprep.subr.mxu0 0.0
    %2887 = vmatpush2.msra.mxu0 0.0
    %2888 = vmatprep.subr.mxu0 0.0
    %2889 = vmatpush2.msra.mxu0 0.0
    %2890 = vmatprep.subr.mxu0 0.0
    %2891 = vmatpush2.msra.mxu0 0.0
    %2892 = vmatprep.subr.mxu0 0.0
    %2893 = vmatpush2.msra.mxu0 0.0
    %2894 = vmatprep.subr.mxu0 0.0
    %2895 = vmatpush2.msra.mxu0 0.0
    %2896 = vmatprep.subr.mxu0 0.0
    %2897 = vmatpush2.msra.mxu0 0.0
    %2898 = vmatprep.subr.mxu0 0.0
    %2899 = vmatpush2.msra.mxu0 0.0
    %2900 = vmatprep.subr.mxu0 0.0
    %2901 = vmatpush2.msra.mxu0 0.0
    %2902 = vmatprep.mubr.f32.mxu0 0.0
    %v2903 = vand.u32 %v2831, 4294901760
    %v2904 = vsub.f32 %v2831, %v2903
    %v2905 = vand.u32 %v2904, 4294901760
    %v2906 = vsub.f32 %v2904, %v2905
    %v2907 = vand.u32 %v2906, 4294901760
    %2908 = vmatmul.mubr.f32.gmra.mxu0 %v2907
    %v2909 = vpop.f32.mrf.mxu0
    %v2910 = vadd.f32 0.0, %v2909
    %v2911 = vpop.f32.mrf.mxu0
    %2912 = vmatprep.mubr.f32.mxu0 0.0
    %v2913 = vand.u32 %v2834, 4294901760
    %v2914 = vsub.f32 %v2834, %v2913
    %v2915 = vand.u32 %v2914, 4294901760
    %v2916 = vsub.f32 %v2914, %v2915
    %v2917 = vand.u32 %v2916, 4294901760
    %2918 = vmatmul.mubr.f32.gmra.mxu0 %v2917
    %v2919 = vpop.f32.mrf.mxu0
    %v2920 = vadd.f32 0.0, %v2919
    %v2921 = vpop.f32.mrf.mxu0
    %2922 = vdwg.mxu0
    %2923 = vmatprep.subr.mxu0 0.0
    %2924 = vmatpush1.msra.mxu0 0.0
    %2925 = vmatprep.subr.mxu0 0.0
    %2926 = vmatpush1.msra.mxu0 0.0
    %2927 = vmatprep.subr.mxu0 0.0
    %2928 = vmatpush1.msra.mxu0 0.0
    %2929 = vmatprep.subr.mxu0 0.0
    %2930 = vmatpush1.msra.mxu0 0.0
    %2931 = vmatprep.subr.mxu0 0.0
    %2932 = vmatpush1.msra.mxu0 0.0
    %2933 = vmatprep.subr.mxu0 0.0
    %2934 = vmatpush1.msra.mxu0 0.0
    %2935 = vmatprep.subr.mxu0 0.0
    %2936 = vmatpush1.msra.mxu0 0.0
    %2937 = vmatprep.subr.mxu0 0.0
    %2938 = vmatpush1.msra.mxu0 0.0
    %2939 = vmatprep.subr.mxu0 0.0
    %2940 = vmatpush1.msra.mxu0 0.0
    %2941 = vmatprep.subr.mxu0 0.0
    %2942 = vmatpush1.msra.mxu0 0.0
    %2943 = vmatprep.subr.mxu0 0.0
    %2944 = vmatpush1.msra.mxu0 0.0
    %2945 = vmatprep.subr.mxu0 0.0
    %2946 = vmatpush1.msra.mxu0 0.0
    %2947 = vmatprep.subr.mxu0 0.0
    %2948 = vmatpush1.msra.mxu0 0.0
    %2949 = vmatprep.subr.mxu0 0.0
    %2950 = vmatpush1.msra.mxu0 0.0
    %2951 = vmatprep.subr.mxu0 0.0
    %v2952 = vand.u32 %v2827, 4294901760
    %v2953 = vsub.f32 %v2827, %v2952
    %v2954 = vand.u32 %v2953, 4294901760
    %v2955 = vsub.f32 %v2953, %v2954
    %v2956 = vand.u32 %v2955, 4294901760
    %2957 = vmatpush1.msra.mxu0 %v2956
    %2958 = vmatprep.subr.mxu0 0.0
    %v2959 = vand.u32 %v2825, 4294901760
    %v2960 = vsub.f32 %v2825, %v2959
    %v2961 = vand.u32 %v2960, 4294901760
    %v2962 = vsub.f32 %v2960, %v2961
    %v2963 = vand.u32 %v2962, 4294901760
    %2964 = vmatpush1.msra.mxu0 %v2963
    %2965 = vmatprep.subr.mxu0 0.0
    %2966 = vmatpush2.msra.mxu0 0.0
    %2967 = vmatprep.subr.mxu0 0.0
    %2968 = vmatpush2.msra.mxu0 0.0
    %2969 = vmatprep.subr.mxu0 0.0
    %2970 = vmatpush2.msra.mxu0 0.0
    %2971 = vmatprep.subr.mxu0 0.0
    %2972 = vmatpush2.msra.mxu0 0.0
    %2973 = vmatprep.subr.mxu0 0.0
    %2974 = vmatpush2.msra.mxu0 0.0
    %2975 = vmatprep.subr.mxu0 0.0
    %2976 = vmatpush2.msra.mxu0 0.0
    %2977 = vmatprep.subr.mxu0 0.0
    %2978 = vmatpush2.msra.mxu0 0.0
    %2979 = vmatprep.subr.mxu0 0.0
    %2980 = vmatpush2.msra.mxu0 0.0
    %2981 = vmatprep.subr.mxu0 0.0
    %2982 = vmatpush2.msra.mxu0 0.0
    %2983 = vmatprep.subr.mxu0 0.0
    %2984 = vmatpush2.msra.mxu0 0.0
    %2985 = vmatprep.subr.mxu0 0.0
    %2986 = vmatpush2.msra.mxu0 0.0
    %2987 = vmatprep.subr.mxu0 0.0
    %2988 = vmatpush2.msra.mxu0 0.0
    %2989 = vmatprep.subr.mxu0 0.0
    %2990 = vmatpush2.msra.mxu0 0.0
    %2991 = vmatprep.subr.mxu0 0.0
    %2992 = vmatpush2.msra.mxu0 0.0
    %2993 = vmatprep.subr.mxu0 0.0
    %2994 = vmatpush2.msra.mxu0 0.0
    %2995 = vmatprep.subr.mxu0 0.0
    %2996 = vmatpush2.msra.mxu0 0.0
    %2997 = vmatprep.mubr.f32.mxu0 0.0
    %v2998 = vand.u32 %v2831, 4294901760
    %2999 = vmatmul.mubr.f32.gmra.mxu0 %v2998
    %v3000 = vpop.f32.mrf.mxu0
    %v3001 = vadd.f32 %v2910, %v3000
    %v3002 = vpop.f32.mrf.mxu0
    %3003 = vmatprep.mubr.f32.mxu0 0.0
    %v3004 = vand.u32 %v2834, 4294901760
    %3005 = vmatmul.mubr.f32.gmra.mxu0 %v3004
    %v3006 = vpop.f32.mrf.mxu0
    %v3007 = vadd.f32 %v2920, %v3006
    %v3008 = vpop.f32.mrf.mxu0
    %3009 = vdwg.mxu0
    %3010 = vmatprep.subr.mxu0 0.0
    %3011 = vmatpush1.msra.mxu0 0.0
    %3012 = vmatprep.subr.mxu0 0.0
    %3013 = vmatpush1.msra.mxu0 0.0
    %3014 = vmatprep.subr.mxu0 0.0
    %3015 = vmatpush1.msra.mxu0 0.0
    %3016 = vmatprep.subr.mxu0 0.0
    %3017 = vmatpush1.msra.mxu0 0.0
    %3018 = vmatprep.subr.mxu0 0.0
    %3019 = vmatpush1.msra.mxu0 0.0
    %3020 = vmatprep.subr.mxu0 0.0
    %3021 = vmatpush1.msra.mxu0 0.0
    %3022 = vmatprep.subr.mxu0 0.0
    %3023 = vmatpush1.msra.mxu0 0.0
    %3024 = vmatprep.subr.mxu0 0.0
    %3025 = vmatpush1.msra.mxu0 0.0
    %3026 = vmatprep.subr.mxu0 0.0
    %3027 = vmatpush1.msra.mxu0 0.0
    %3028 = vmatprep.subr.mxu0 0.0
    %3029 = vmatpush1.msra.mxu0 0.0
    %3030 = vmatprep.subr.mxu0 0.0
    %3031 = vmatpush1.msra.mxu0 0.0
    %3032 = vmatprep.subr.mxu0 0.0
    %3033 = vmatpush1.msra.mxu0 0.0
    %3034 = vmatprep.subr.mxu0 0.0
    %3035 = vmatpush1.msra.mxu0 0.0
    %3036 = vmatprep.subr.mxu0 0.0
    %3037 = vmatpush1.msra.mxu0 0.0
    %3038 = vmatprep.subr.mxu0 0.0
    %v3039 = vand.u32 %v2827, 4294901760
    %v3040 = vsub.f32 %v2827, %v3039
    %3041 = vmatpush1.msra.mxu0 %v3040
    %3042 = vmatprep.subr.mxu0 0.0
    %v3043 = vand.u32 %v2825, 4294901760
    %v3044 = vsub.f32 %v2825, %v3043
    %3045 = vmatpush1.msra.mxu0 %v3044
    %3046 = vmatprep.subr.mxu0 0.0
    %3047 = vmatpush2.msra.mxu0 0.0
    %3048 = vmatprep.subr.mxu0 0.0
    %3049 = vmatpush2.msra.mxu0 0.0
    %3050 = vmatprep.subr.mxu0 0.0
    %3051 = vmatpush2.msra.mxu0 0.0
    %3052 = vmatprep.subr.mxu0 0.0
    %3053 = vmatpush2.msra.mxu0 0.0
    %3054 = vmatprep.subr.mxu0 0.0
    %3055 = vmatpush2.msra.mxu0 0.0
    %3056 = vmatprep.subr.mxu0 0.0
    %3057 = vmatpush2.msra.mxu0 0.0
    %3058 = vmatprep.subr.mxu0 0.0
    %3059 = vmatpush2.msra.mxu0 0.0
    %3060 = vmatprep.subr.mxu0 0.0
    %3061 = vmatpush2.msra.mxu0 0.0
    %3062 = vmatprep.subr.mxu0 0.0
    %3063 = vmatpush2.msra.mxu0 0.0
    %3064 = vmatprep.subr.mxu0 0.0
    %3065 = vmatpush2.msra.mxu0 0.0
    %3066 = vmatprep.subr.mxu0 0.0
    %3067 = vmatpush2.msra.mxu0 0.0
    %3068 = vmatprep.subr.mxu0 0.0
    %3069 = vmatpush2.msra.mxu0 0.0
    %3070 = vmatprep.subr.mxu0 0.0
    %3071 = vmatpush2.msra.mxu0 0.0
    %3072 = vmatprep.subr.mxu0 0.0
    %3073 = vmatpush2.msra.mxu0 0.0
    %3074 = vmatprep.subr.mxu0 0.0
    %3075 = vmatpush2.msra.mxu0 0.0
    %3076 = vmatprep.subr.mxu0 0.0
    %3077 = vmatpush2.msra.mxu0 0.0
    %3078 = vmatprep.mubr.f32.mxu0 0.0
    %v3079 = vand.u32 %v2831, 4294901760
    %v3080 = vsub.f32 %v2831, %v3079
    %3081 = vmatmul.mubr.f32.gmra.mxu0 %v3080
    %v3082 = vpop.f32.mrf.mxu0
    %v3083 = vadd.f32 %v3001, %v3082
    %v3084 = vpop.f32.mrf.mxu0
    %3085 = vmatprep.mubr.f32.mxu0 0.0
    %v3086 = vand.u32 %v2834, 4294901760
    %v3087 = vsub.f32 %v2834, %v3086
    %3088 = vmatmul.mubr.f32.gmra.mxu0 %v3087
    %v3089 = vpop.f32.mrf.mxu0
    %v3090 = vadd.f32 %v3007, %v3089
    %v3091 = vpop.f32.mrf.mxu0
    %3092 = vdwg.mxu0
    %3093 = vmatprep.subr.mxu0 0.0
    %3094 = vmatpush1.msra.mxu0 0.0
    %3095 = vmatprep.subr.mxu0 0.0
    %3096 = vmatpush1.msra.mxu0 0.0
    %3097 = vmatprep.subr.mxu0 0.0
    %3098 = vmatpush1.msra.mxu0 0.0
    %3099 = vmatprep.subr.mxu0 0.0
    %3100 = vmatpush1.msra.mxu0 0.0
    %3101 = vmatprep.subr.mxu0 0.0
    %3102 = vmatpush1.msra.mxu0 0.0
    %3103 = vmatprep.subr.mxu0 0.0
    %3104 = vmatpush1.msra.mxu0 0.0
    %3105 = vmatprep.subr.mxu0 0.0
    %3106 = vmatpush1.msra.mxu0 0.0
    %3107 = vmatprep.subr.mxu0 0.0
    %3108 = vmatpush1.msra.mxu0 0.0
    %3109 = vmatprep.subr.mxu0 0.0
    %3110 = vmatpush1.msra.mxu0 0.0
    %3111 = vmatprep.subr.mxu0 0.0
    %3112 = vmatpush1.msra.mxu0 0.0
    %3113 = vmatprep.subr.mxu0 0.0
    %3114 = vmatpush1.msra.mxu0 0.0
    %3115 = vmatprep.subr.mxu0 0.0
    %3116 = vmatpush1.msra.mxu0 0.0
    %3117 = vmatprep.subr.mxu0 0.0
    %3118 = vmatpush1.msra.mxu0 0.0
    %3119 = vmatprep.subr.mxu0 0.0
    %3120 = vmatpush1.msra.mxu0 0.0
    %3121 = vmatprep.subr.mxu0 0.0
    %v3122 = vand.u32 %v2827, 4294901760
    %3123 = vmatpush1.msra.mxu0 %v3122
    %3124 = vmatprep.subr.mxu0 0.0
    %v3125 = vand.u32 %v2825, 4294901760
    %3126 = vmatpush1.msra.mxu0 %v3125
    %3127 = vmatprep.subr.mxu0 0.0
    %3128 = vmatpush2.msra.mxu0 0.0
    %3129 = vmatprep.subr.mxu0 0.0
    %3130 = vmatpush2.msra.mxu0 0.0
    %3131 = vmatprep.subr.mxu0 0.0
    %3132 = vmatpush2.msra.mxu0 0.0
    %3133 = vmatprep.subr.mxu0 0.0
    %3134 = vmatpush2.msra.mxu0 0.0
    %3135 = vmatprep.subr.mxu0 0.0
    %3136 = vmatpush2.msra.mxu0 0.0
    %3137 = vmatprep.subr.mxu0 0.0
    %3138 = vmatpush2.msra.mxu0 0.0
    %3139 = vmatprep.subr.mxu0 0.0
    %3140 = vmatpush2.msra.mxu0 0.0
    %3141 = vmatprep.subr.mxu0 0.0
    %3142 = vmatpush2.msra.mxu0 0.0
    %3143 = vmatprep.subr.mxu0 0.0
    %3144 = vmatpush2.msra.mxu0 0.0
    %3145 = vmatprep.subr.mxu0 0.0
    %3146 = vmatpush2.msra.mxu0 0.0
    %3147 = vmatprep.subr.mxu0 0.0
    %3148 = vmatpush2.msra.mxu0 0.0
    %3149 = vmatprep.subr.mxu0 0.0
    %3150 = vmatpush2.msra.mxu0 0.0
    %3151 = vmatprep.subr.mxu0 0.0
    %3152 = vmatpush2.msra.mxu0 0.0
    %3153 = vmatprep.subr.mxu0 0.0
    %3154 = vmatpush2.msra.mxu0 0.0
    %3155 = vmatprep.subr.mxu0 0.0
    %3156 = vmatpush2.msra.mxu0 0.0
    %3157 = vmatprep.subr.mxu0 0.0
    %3158 = vmatpush2.msra.mxu0 0.0
    %3159 = vmatprep.mubr.f32.mxu0 0.0
    %v3160 = vand.u32 %v2831, 4294901760
    %v3161 = vsub.f32 %v2831, %v3160
    %v3162 = vand.u32 %v3161, 4294901760
    %3163 = vmatmul.mubr.f32.gmra.mxu0 %v3162
    %v3164 = vpop.f32.mrf.mxu0
    %v3165 = vadd.f32 %v3083, %v3164
    %v3166 = vpop.f32.mrf.mxu0
    %3167 = vmatprep.mubr.f32.mxu0 0.0
    %v3168 = vand.u32 %v2834, 4294901760
    %v3169 = vsub.f32 %v2834, %v3168
    %v3170 = vand.u32 %v3169, 4294901760
    %3171 = vmatmul.mubr.f32.gmra.mxu0 %v3170
    %v3172 = vpop.f32.mrf.mxu0
    %v3173 = vadd.f32 %v3090, %v3172
    %v3174 = vpop.f32.mrf.mxu0
    %3175 = vdwg.mxu0
    %3176 = vmatprep.subr.mxu0 0.0
    %3177 = vmatpush1.msra.mxu0 0.0
    %3178 = vmatprep.subr.mxu0 0.0
    %3179 = vmatpush1.msra.mxu0 0.0
    %3180 = vmatprep.subr.mxu0 0.0
    %3181 = vmatpush1.msra.mxu0 0.0
    %3182 = vmatprep.subr.mxu0 0.0
    %3183 = vmatpush1.msra.mxu0 0.0
    %3184 = vmatprep.subr.mxu0 0.0
    %3185 = vmatpush1.msra.mxu0 0.0
    %3186 = vmatprep.subr.mxu0 0.0
    %3187 = vmatpush1.msra.mxu0 0.0
    %3188 = vmatprep.subr.mxu0 0.0
    %3189 = vmatpush1.msra.mxu0 0.0
    %3190 = vmatprep.subr.mxu0 0.0
    %3191 = vmatpush1.msra.mxu0 0.0
    %3192 = vmatprep.subr.mxu0 0.0
    %3193 = vmatpush1.msra.mxu0 0.0
    %3194 = vmatprep.subr.mxu0 0.0
    %3195 = vmatpush1.msra.mxu0 0.0
    %3196 = vmatprep.subr.mxu0 0.0
    %3197 = vmatpush1.msra.mxu0 0.0
    %3198 = vmatprep.subr.mxu0 0.0
    %3199 = vmatpush1.msra.mxu0 0.0
    %3200 = vmatprep.subr.mxu0 0.0
    %3201 = vmatpush1.msra.mxu0 0.0
    %3202 = vmatprep.subr.mxu0 0.0
    %3203 = vmatpush1.msra.mxu0 0.0
    %3204 = vmatprep.subr.mxu0 0.0
    %v3205 = vand.u32 %v2827, 4294901760
    %v3206 = vsub.f32 %v2827, %v3205
    %v3207 = vand.u32 %v3206, 4294901760
    %3208 = vmatpush1.msra.mxu0 %v3207
    %3209 = vmatprep.subr.mxu0 0.0
    %v3210 = vand.u32 %v2825, 4294901760
    %v3211 = vsub.f32 %v2825, %v3210
    %v3212 = vand.u32 %v3211, 4294901760
    %3213 = vmatpush1.msra.mxu0 %v3212
    %3214 = vmatprep.subr.mxu0 0.0
    %3215 = vmatpush2.msra.mxu0 0.0
    %3216 = vmatprep.subr.mxu0 0.0
    %3217 = vmatpush2.msra.mxu0 0.0
    %3218 = vmatprep.subr.mxu0 0.0
    %3219 = vmatpush2.msra.mxu0 0.0
    %3220 = vmatprep.subr.mxu0 0.0
    %3221 = vmatpush2.msra.mxu0 0.0
    %3222 = vmatprep.subr.mxu0 0.0
    %3223 = vmatpush2.msra.mxu0 0.0
    %3224 = vmatprep.subr.mxu0 0.0
    %3225 = vmatpush2.msra.mxu0 0.0
    %3226 = vmatprep.subr.mxu0 0.0
    %3227 = vmatpush2.msra.mxu0 0.0
    %3228 = vmatprep.subr.mxu0 0.0
    %3229 = vmatpush2.msra.mxu0 0.0
    %3230 = vmatprep.subr.mxu0 0.0
    %3231 = vmatpush2.msra.mxu0 0.0
    %3232 = vmatprep.subr.mxu0 0.0
    %3233 = vmatpush2.msra.mxu0 0.0
    %3234 = vmatprep.subr.mxu0 0.0
    %3235 = vmatpush2.msra.mxu0 0.0
    %3236 = vmatprep.subr.mxu0 0.0
    %3237 = vmatpush2.msra.mxu0 0.0
    %3238 = vmatprep.subr.mxu0 0.0
    %3239 = vmatpush2.msra.mxu0 0.0
    %3240 = vmatprep.subr.mxu0 0.0
    %3241 = vmatpush2.msra.mxu0 0.0
    %3242 = vmatprep.subr.mxu0 0.0
    %3243 = vmatpush2.msra.mxu0 0.0
    %3244 = vmatprep.subr.mxu0 0.0
    %3245 = vmatpush2.msra.mxu0 0.0
    %3246 = vmatprep.mubr.f32.mxu0 0.0
    %v3247 = vand.u32 %v2831, 4294901760
    %3248 = vmatmul.mubr.f32.gmra.mxu0 %v3247
    %v3249 = vpop.f32.mrf.mxu0
    %v3250 = vadd.f32 %v3165, %v3249
    %v3251 = vpop.f32.mrf.mxu0
    %3252 = vmatprep.mubr.f32.mxu0 0.0
    %v3253 = vand.u32 %v2834, 4294901760
    %3254 = vmatmul.mubr.f32.gmra.mxu0 %v3253
    %v3255 = vpop.f32.mrf.mxu0
    %v3256 = vadd.f32 %v3173, %v3255
    %v3257 = vpop.f32.mrf.mxu0
    %3258 = vdwg.mxu0
    %3259 = vmatprep.subr.mxu0 0.0
    %3260 = vmatpush1.msra.mxu0 0.0
    %3261 = vmatprep.subr.mxu0 0.0
    %3262 = vmatpush1.msra.mxu0 0.0
    %3263 = vmatprep.subr.mxu0 0.0
    %3264 = vmatpush1.msra.mxu0 0.0
    %3265 = vmatprep.subr.mxu0 0.0
    %3266 = vmatpush1.msra.mxu0 0.0
    %3267 = vmatprep.subr.mxu0 0.0
    %3268 = vmatpush1.msra.mxu0 0.0
    %3269 = vmatprep.subr.mxu0 0.0
    %3270 = vmatpush1.msra.mxu0 0.0
    %3271 = vmatprep.subr.mxu0 0.0
    %3272 = vmatpush1.msra.mxu0 0.0
    %3273 = vmatprep.subr.mxu0 0.0
    %3274 = vmatpush1.msra.mxu0 0.0
    %3275 = vmatprep.subr.mxu0 0.0
    %3276 = vmatpush1.msra.mxu0 0.0
    %3277 = vmatprep.subr.mxu0 0.0
    %3278 = vmatpush1.msra.mxu0 0.0
    %3279 = vmatprep.subr.mxu0 0.0
    %3280 = vmatpush1.msra.mxu0 0.0
    %3281 = vmatprep.subr.mxu0 0.0
    %3282 = vmatpush1.msra.mxu0 0.0
    %3283 = vmatprep.subr.mxu0 0.0
    %3284 = vmatpush1.msra.mxu0 0.0
    %3285 = vmatprep.subr.mxu0 0.0
    %3286 = vmatpush1.msra.mxu0 0.0
    %3287 = vmatprep.subr.mxu0 0.0
    %v3288 = vand.u32 %v2827, 4294901760
    %3289 = vmatpush1.msra.mxu0 %v3288
    %3290 = vmatprep.subr.mxu0 0.0
    %v3291 = vand.u32 %v2825, 4294901760
    %3292 = vmatpush1.msra.mxu0 %v3291
    %3293 = vmatprep.subr.mxu0 0.0
    %3294 = vmatpush2.msra.mxu0 0.0
    %3295 = vmatprep.subr.mxu0 0.0
    %3296 = vmatpush2.msra.mxu0 0.0
    %3297 = vmatprep.subr.mxu0 0.0
    %3298 = vmatpush2.msra.mxu0 0.0
    %3299 = vmatprep.subr.mxu0 0.0
    %3300 = vmatpush2.msra.mxu0 0.0
    %3301 = vmatprep.subr.mxu0 0.0
    %3302 = vmatpush2.msra.mxu0 0.0
    %3303 = vmatprep.subr.mxu0 0.0
    %3304 = vmatpush2.msra.mxu0 0.0
    %3305 = vmatprep.subr.mxu0 0.0
    %3306 = vmatpush2.msra.mxu0 0.0
    %3307 = vmatprep.subr.mxu0 0.0
    %3308 = vmatpush2.msra.mxu0 0.0
    %3309 = vmatprep.subr.mxu0 0.0
    %3310 = vmatpush2.msra.mxu0 0.0
    %3311 = vmatprep.subr.mxu0 0.0
    %3312 = vmatpush2.msra.mxu0 0.0
    %3313 = vmatprep.subr.mxu0 0.0
    %3314 = vmatpush2.msra.mxu0 0.0
    %3315 = vmatprep.subr.mxu0 0.0
    %3316 = vmatpush2.msra.mxu0 0.0
    %3317 = vmatprep.subr.mxu0 0.0
    %3318 = vmatpush2.msra.mxu0 0.0
    %3319 = vmatprep.subr.mxu0 0.0
    %3320 = vmatpush2.msra.mxu0 0.0
    %3321 = vmatprep.subr.mxu0 0.0
    %3322 = vmatpush2.msra.mxu0 0.0
    %3323 = vmatprep.subr.mxu0 0.0
    %3324 = vmatpush2.msra.mxu0 0.0
    %3325 = vmatprep.mubr.f32.mxu0 0.0
    %v3326 = vand.u32 %v2831, 4294901760
    %3327 = vmatmul.mubr.f32.gmra.mxu0 %v3326
    %v3328 = vpop.f32.mrf.mxu0
    %v3329 = vadd.f32 %v3250, %v3328
    %v3330 = vpop.f32.mrf.mxu0
    %3331 = vmatprep.mubr.f32.mxu0 0.0
    %v3332 = vand.u32 %v2834, 4294901760
    %3333 = vmatmul.mubr.f32.gmra.mxu0 %v3332
    %v3334 = vpop.f32.mrf.mxu0
    %v3335 = vadd.f32 %v3256, %v3334
    %v3336 = vpop.f32.mrf.mxu0
    %3337 = vdwg.mxu0
    %3338 = vrot.lane.b32.xlu0 %v643, 112
    %v3339 = vpop.permute.xlu0 %3338
    %3340 = vrot.lane.b32.xlu0 %v644, 112
    %v3341 = vpop.permute.xlu0 %3340
    %3342 = vrot.lane.b32.xlu0 %v634, 80
    %v3343 = vpop.permute.xlu0 %3342
    %3344 = vrot.lane.b32.xlu0 %v640, 80
    %v3345 = vpop.permute.xlu0 %3344
    %v3346 = vsel %vm1238, %v3339, 0
    %v3348 = vsel %vm1238, %v3341, 0
    %v3350 = vsel %vm1238, %v3343, 0
    %v3352 = vsel %vm1238, %v3345, 0
    %3354 = vmatprep.subr.mxu0 0.0
    %3355 = vmatpush1.xpose.msra.mxu0 0.0
    %3356 = vmatprep.subr.mxu0 0.0
    %3357 = vmatpush1.xpose.msra.mxu0 0.0
    %3358 = vmatprep.subr.mxu0 0.0
    %3359 = vmatpush1.xpose.msra.mxu0 0.0
    %3360 = vmatprep.subr.mxu0 0.0
    %3361 = vmatpush1.xpose.msra.mxu0 0.0
    %3362 = vmatprep.subr.mxu0 0.0
    %3363 = vmatpush1.xpose.msra.mxu0 0.0
    %3364 = vmatprep.subr.mxu0 0.0
    %3365 = vmatpush1.xpose.msra.mxu0 0.0
    %3366 = vmatprep.subr.mxu0 0.0
    %3367 = vmatpush1.xpose.msra.mxu0 0.0
    %3368 = vmatprep.subr.mxu0 0.0
    %3369 = vmatpush1.xpose.msra.mxu0 0.0
    %3370 = vmatprep.subr.mxu0 0.0
    %3371 = vmatpush1.xpose.msra.mxu0 0.0
    %3372 = vmatprep.subr.mxu0 0.0
    %3373 = vmatpush1.xpose.msra.mxu0 0.0
    %3374 = vmatprep.subr.mxu0 0.0
    %3375 = vmatpush1.xpose.msra.mxu0 0.0
    %3376 = vmatprep.subr.mxu0 0.0
    %3377 = vmatpush1.xpose.msra.mxu0 0.0
    %3378 = vmatprep.subr.mxu0 0.0
    %3379 = vmatpush1.xpose.msra.mxu0 0.0
    %3380 = vmatprep.subr.mxu0 0.0
    %3381 = vmatpush1.xpose.msra.mxu0 0.0
    %3382 = vmatprep.subr.mxu0 0.0
    %v3383 = vand.u32 %v3352, 4294901760
    %3384 = vmatpush1.xpose.msra.mxu0 %v3383
    %3385 = vmatprep.subr.mxu0 0.0
    %v3386 = vand.u32 %v3350, 4294901760
    %3387 = vmatpush1.xpose.msra.mxu0 %v3386
    %3388 = vmatprep.subr.mxu0 0.0
    %3389 = vmatpush2.xpose.msra.mxu0 0.0
    %3390 = vmatprep.subr.mxu0 0.0
    %3391 = vmatpush2.xpose.msra.mxu0 0.0
    %3392 = vmatprep.subr.mxu0 0.0
    %3393 = vmatpush2.xpose.msra.mxu0 0.0
    %3394 = vmatprep.subr.mxu0 0.0
    %3395 = vmatpush2.xpose.msra.mxu0 0.0
    %3396 = vmatprep.subr.mxu0 0.0
    %3397 = vmatpush2.xpose.msra.mxu0 0.0
    %3398 = vmatprep.subr.mxu0 0.0
    %3399 = vmatpush2.xpose.msra.mxu0 0.0
    %3400 = vmatprep.subr.mxu0 0.0
    %3401 = vmatpush2.xpose.msra.mxu0 0.0
    %3402 = vmatprep.subr.mxu0 0.0
    %3403 = vmatpush2.xpose.msra.mxu0 0.0
    %3404 = vmatprep.subr.mxu0 0.0
    %3405 = vmatpush2.xpose.msra.mxu0 0.0
    %3406 = vmatprep.subr.mxu0 0.0
    %3407 = vmatpush2.xpose.msra.mxu0 0.0
    %3408 = vmatprep.subr.mxu0 0.0
    %3409 = vmatpush2.xpose.msra.mxu0 0.0
    %3410 = vmatprep.subr.mxu0 0.0
    %3411 = vmatpush2.xpose.msra.mxu0 0.0
    %3412 = vmatprep.subr.mxu0 0.0
    %3413 = vmatpush2.xpose.msra.mxu0 0.0
    %3414 = vmatprep.subr.mxu0 0.0
    %3415 = vmatpush2.xpose.msra.mxu0 0.0
    %3416 = vmatprep.subr.mxu0 0.0
    %3417 = vmatpush2.xpose.msra.mxu0 0.0
    %3418 = vmatprep.subr.mxu0 0.0
    %3419 = vmatpush2.xpose.msra.mxu0 0.0
    %3420 = vmatprep.mubr.f32.mxu0 0.0
    %v3421 = vand.u32 %v3346, 4294901760
    %v3422 = vsub.f32 %v3346, %v3421
    %v3423 = vand.u32 %v3422, 4294901760
    %v3424 = vsub.f32 %v3422, %v3423
    %v3425 = vand.u32 %v3424, 4294901760
    %3426 = vmatmul.mubr.f32.gmra.mxu0 %v3425
    %v3427 = vpop.f32.mrf.mxu0
    %v3428 = vadd.f32 %v1230, %v3427
    %v3429 = vpop.f32.mrf.mxu0
    %3430 = vmatprep.mubr.f32.mxu0 0.0
    %v3431 = vand.u32 %v3348, 4294901760
    %v3432 = vsub.f32 %v3348, %v3431
    %v3433 = vand.u32 %v3432, 4294901760
    %v3434 = vsub.f32 %v3432, %v3433
    %v3435 = vand.u32 %v3434, 4294901760
    %3436 = vmatmul.mubr.f32.gmra.mxu0 %v3435
    %v3437 = vpop.f32.mrf.mxu0
    %v3438 = vadd.f32 %v1231, %v3437
    %v3439 = vpop.f32.mrf.mxu0
    %3440 = vdwg.mxu0
    %3441 = vmatprep.subr.mxu0 0.0
    %3442 = vmatpush1.xpose.msra.mxu0 0.0
    %3443 = vmatprep.subr.mxu0 0.0
    %3444 = vmatpush1.xpose.msra.mxu0 0.0
    %3445 = vmatprep.subr.mxu0 0.0
    %3446 = vmatpush1.xpose.msra.mxu0 0.0
    %3447 = vmatprep.subr.mxu0 0.0
    %3448 = vmatpush1.xpose.msra.mxu0 0.0
    %3449 = vmatprep.subr.mxu0 0.0
    %3450 = vmatpush1.xpose.msra.mxu0 0.0
    %3451 = vmatprep.subr.mxu0 0.0
    %3452 = vmatpush1.xpose.msra.mxu0 0.0
    %3453 = vmatprep.subr.mxu0 0.0
    %3454 = vmatpush1.xpose.msra.mxu0 0.0
    %3455 = vmatprep.subr.mxu0 0.0
    %3456 = vmatpush1.xpose.msra.mxu0 0.0
    %3457 = vmatprep.subr.mxu0 0.0
    %3458 = vmatpush1.xpose.msra.mxu0 0.0
    %3459 = vmatprep.subr.mxu0 0.0
    %3460 = vmatpush1.xpose.msra.mxu0 0.0
    %3461 = vmatprep.subr.mxu0 0.0
    %3462 = vmatpush1.xpose.msra.mxu0 0.0
    %3463 = vmatprep.subr.mxu0 0.0
    %3464 = vmatpush1.xpose.msra.mxu0 0.0
    %3465 = vmatprep.subr.mxu0 0.0
    %3466 = vmatpush1.xpose.msra.mxu0 0.0
    %3467 = vmatprep.subr.mxu0 0.0
    %3468 = vmatpush1.xpose.msra.mxu0 0.0
    %3469 = vmatprep.subr.mxu0 0.0
    %v3470 = vand.u32 %v3352, 4294901760
    %v3471 = vsub.f32 %v3352, %v3470
    %v3472 = vand.u32 %v3471, 4294901760
    %v3473 = vsub.f32 %v3471, %v3472
    %v3474 = vand.u32 %v3473, 4294901760
    %3475 = vmatpush1.xpose.msra.mxu0 %v3474
    %3476 = vmatprep.subr.mxu0 0.0
    %v3477 = vand.u32 %v3350, 4294901760
    %v3478 = vsub.f32 %v3350, %v3477
    %v3479 = vand.u32 %v3478, 4294901760
    %v3480 = vsub.f32 %v3478, %v3479
    %v3481 = vand.u32 %v3480, 4294901760
    %3482 = vmatpush1.xpose.msra.mxu0 %v3481
    %3483 = vmatprep.subr.mxu0 0.0
    %3484 = vmatpush2.xpose.msra.mxu0 0.0
    %3485 = vmatprep.subr.mxu0 0.0
    %3486 = vmatpush2.xpose.msra.mxu0 0.0
    %3487 = vmatprep.subr.mxu0 0.0
    %3488 = vmatpush2.xpose.msra.mxu0 0.0
    %3489 = vmatprep.subr.mxu0 0.0
    %3490 = vmatpush2.xpose.msra.mxu0 0.0
    %3491 = vmatprep.subr.mxu0 0.0
    %3492 = vmatpush2.xpose.msra.mxu0 0.0
    %3493 = vmatprep.subr.mxu0 0.0
    %3494 = vmatpush2.xpose.msra.mxu0 0.0
    %3495 = vmatprep.subr.mxu0 0.0
    %3496 = vmatpush2.xpose.msra.mxu0 0.0
    %3497 = vmatprep.subr.mxu0 0.0
    %3498 = vmatpush2.xpose.msra.mxu0 0.0
    %3499 = vmatprep.subr.mxu0 0.0
    %3500 = vmatpush2.xpose.msra.mxu0 0.0
    %3501 = vmatprep.subr.mxu0 0.0
    %3502 = vmatpush2.xpose.msra.mxu0 0.0
    %3503 = vmatprep.subr.mxu0 0.0
    %3504 = vmatpush2.xpose.msra.mxu0 0.0
    %3505 = vmatprep.subr.mxu0 0.0
    %3506 = vmatpush2.xpose.msra.mxu0 0.0
    %3507 = vmatprep.subr.mxu0 0.0
    %3508 = vmatpush2.xpose.msra.mxu0 0.0
    %3509 = vmatprep.subr.mxu0 0.0
    %3510 = vmatpush2.xpose.msra.mxu0 0.0
    %3511 = vmatprep.subr.mxu0 0.0
    %3512 = vmatpush2.xpose.msra.mxu0 0.0
    %3513 = vmatprep.subr.mxu0 0.0
    %3514 = vmatpush2.xpose.msra.mxu0 0.0
    %3515 = vmatprep.mubr.f32.mxu0 0.0
    %v3516 = vand.u32 %v3346, 4294901760
    %3517 = vmatmul.mubr.f32.gmra.mxu0 %v3516
    %v3518 = vpop.f32.mrf.mxu0
    %v3519 = vadd.f32 %v3428, %v3518
    %v3520 = vpop.f32.mrf.mxu0
    %3521 = vmatprep.mubr.f32.mxu0 0.0
    %v3522 = vand.u32 %v3348, 4294901760
    %3523 = vmatmul.mubr.f32.gmra.mxu0 %v3522
    %v3524 = vpop.f32.mrf.mxu0
    %v3525 = vadd.f32 %v3438, %v3524
    %v3526 = vpop.f32.mrf.mxu0
    %3527 = vdwg.mxu0
    %3528 = vmatprep.subr.mxu0 0.0
    %3529 = vmatpush1.xpose.msra.mxu0 0.0
    %3530 = vmatprep.subr.mxu0 0.0
    %3531 = vmatpush1.xpose.msra.mxu0 0.0
    %3532 = vmatprep.subr.mxu0 0.0
    %3533 = vmatpush1.xpose.msra.mxu0 0.0
    %3534 = vmatprep.subr.mxu0 0.0
    %3535 = vmatpush1.xpose.msra.mxu0 0.0
    %3536 = vmatprep.subr.mxu0 0.0
    %3537 = vmatpush1.xpose.msra.mxu0 0.0
    %3538 = vmatprep.subr.mxu0 0.0
    %3539 = vmatpush1.xpose.msra.mxu0 0.0
    %3540 = vmatprep.subr.mxu0 0.0
    %3541 = vmatpush1.xpose.msra.mxu0 0.0
    %3542 = vmatprep.subr.mxu0 0.0
    %3543 = vmatpush1.xpose.msra.mxu0 0.0
    %3544 = vmatprep.subr.mxu0 0.0
    %3545 = vmatpush1.xpose.msra.mxu0 0.0
    %3546 = vmatprep.subr.mxu0 0.0
    %3547 = vmatpush1.xpose.msra.mxu0 0.0
    %3548 = vmatprep.subr.mxu0 0.0
    %3549 = vmatpush1.xpose.msra.mxu0 0.0
    %3550 = vmatprep.subr.mxu0 0.0
    %3551 = vmatpush1.xpose.msra.mxu0 0.0
    %3552 = vmatprep.subr.mxu0 0.0
    %3553 = vmatpush1.xpose.msra.mxu0 0.0
    %3554 = vmatprep.subr.mxu0 0.0
    %3555 = vmatpush1.xpose.msra.mxu0 0.0
    %3556 = vmatprep.subr.mxu0 0.0
    %v3557 = vand.u32 %v3352, 4294901760
    %v3558 = vsub.f32 %v3352, %v3557
    %3559 = vmatpush1.xpose.msra.mxu0 %v3558
    %3560 = vmatprep.subr.mxu0 0.0
    %v3561 = vand.u32 %v3350, 4294901760
    %v3562 = vsub.f32 %v3350, %v3561
    %3563 = vmatpush1.xpose.msra.mxu0 %v3562
    %3564 = vmatprep.subr.mxu0 0.0
    %3565 = vmatpush2.xpose.msra.mxu0 0.0
    %3566 = vmatprep.subr.mxu0 0.0
    %3567 = vmatpush2.xpose.msra.mxu0 0.0
    %3568 = vmatprep.subr.mxu0 0.0
    %3569 = vmatpush2.xpose.msra.mxu0 0.0
    %3570 = vmatprep.subr.mxu0 0.0
    %3571 = vmatpush2.xpose.msra.mxu0 0.0
    %3572 = vmatprep.subr.mxu0 0.0
    %3573 = vmatpush2.xpose.msra.mxu0 0.0
    %3574 = vmatprep.subr.mxu0 0.0
    %3575 = vmatpush2.xpose.msra.mxu0 0.0
    %3576 = vmatprep.subr.mxu0 0.0
    %3577 = vmatpush2.xpose.msra.mxu0 0.0
    %3578 = vmatprep.subr.mxu0 0.0
    %3579 = vmatpush2.xpose.msra.mxu0 0.0
    %3580 = vmatprep.subr.mxu0 0.0
    %3581 = vmatpush2.xpose.msra.mxu0 0.0
    %3582 = vmatprep.subr.mxu0 0.0
    %3583 = vmatpush2.xpose.msra.mxu0 0.0
    %3584 = vmatprep.subr.mxu0 0.0
    %3585 = vmatpush2.xpose.msra.mxu0 0.0
    %3586 = vmatprep.subr.mxu0 0.0
    %3587 = vmatpush2.xpose.msra.mxu0 0.0
    %3588 = vmatprep.subr.mxu0 0.0
    %3589 = vmatpush2.xpose.msra.mxu0 0.0
    %3590 = vmatprep.subr.mxu0 0.0
    %3591 = vmatpush2.xpose.msra.mxu0 0.0
    %3592 = vmatprep.subr.mxu0 0.0
    %3593 = vmatpush2.xpose.msra.mxu0 0.0
    %3594 = vmatprep.subr.mxu0 0.0
    %3595 = vmatpush2.xpose.msra.mxu0 0.0
    %3596 = vmatprep.mubr.f32.mxu0 0.0
    %v3597 = vand.u32 %v3346, 4294901760
    %v3598 = vsub.f32 %v3346, %v3597
    %3599 = vmatmul.mubr.f32.gmra.mxu0 %v3598
    %v3600 = vpop.f32.mrf.mxu0
    %v3601 = vadd.f32 %v3519, %v3600
    %v3602 = vpop.f32.mrf.mxu0
    %3603 = vmatprep.mubr.f32.mxu0 0.0
    %v3604 = vand.u32 %v3348, 4294901760
    %v3605 = vsub.f32 %v3348, %v3604
    %3606 = vmatmul.mubr.f32.gmra.mxu0 %v3605
    %v3607 = vpop.f32.mrf.mxu0
    %v3608 = vadd.f32 %v3525, %v3607
    %v3609 = vpop.f32.mrf.mxu0
    %3610 = vdwg.mxu0
    %3611 = vmatprep.subr.mxu0 0.0
    %3612 = vmatpush1.xpose.msra.mxu0 0.0
    %3613 = vmatprep.subr.mxu0 0.0
    %3614 = vmatpush1.xpose.msra.mxu0 0.0
    %3615 = vmatprep.subr.mxu0 0.0
    %3616 = vmatpush1.xpose.msra.mxu0 0.0
    %3617 = vmatprep.subr.mxu0 0.0
    %3618 = vmatpush1.xpose.msra.mxu0 0.0
    %3619 = vmatprep.subr.mxu0 0.0
    %3620 = vmatpush1.xpose.msra.mxu0 0.0
    %3621 = vmatprep.subr.mxu0 0.0
    %3622 = vmatpush1.xpose.msra.mxu0 0.0
    %3623 = vmatprep.subr.mxu0 0.0
    %3624 = vmatpush1.xpose.msra.mxu0 0.0
    %3625 = vmatprep.subr.mxu0 0.0
    %3626 = vmatpush1.xpose.msra.mxu0 0.0
    %3627 = vmatprep.subr.mxu0 0.0
    %3628 = vmatpush1.xpose.msra.mxu0 0.0
    %3629 = vmatprep.subr.mxu0 0.0
    %3630 = vmatpush1.xpose.msra.mxu0 0.0
    %3631 = vmatprep.subr.mxu0 0.0
    %3632 = vmatpush1.xpose.msra.mxu0 0.0
    %3633 = vmatprep.subr.mxu0 0.0
    %3634 = vmatpush1.xpose.msra.mxu0 0.0
    %3635 = vmatprep.subr.mxu0 0.0
    %3636 = vmatpush1.xpose.msra.mxu0 0.0
    %3637 = vmatprep.subr.mxu0 0.0
    %3638 = vmatpush1.xpose.msra.mxu0 0.0
    %3639 = vmatprep.subr.mxu0 0.0
    %v3640 = vand.u32 %v3352, 4294901760
    %3641 = vmatpush1.xpose.msra.mxu0 %v3640
    %3642 = vmatprep.subr.mxu0 0.0
    %v3643 = vand.u32 %v3350, 4294901760
    %3644 = vmatpush1.xpose.msra.mxu0 %v3643
    %3645 = vmatprep.subr.mxu0 0.0
    %3646 = vmatpush2.xpose.msra.mxu0 0.0
    %3647 = vmatprep.subr.mxu0 0.0
    %3648 = vmatpush2.xpose.msra.mxu0 0.0
    %3649 = vmatprep.subr.mxu0 0.0
    %3650 = vmatpush2.xpose.msra.mxu0 0.0
    %3651 = vmatprep.subr.mxu0 0.0
    %3652 = vmatpush2.xpose.msra.mxu0 0.0
    %3653 = vmatprep.subr.mxu0 0.0
    %3654 = vmatpush2.xpose.msra.mxu0 0.0
    %3655 = vmatprep.subr.mxu0 0.0
    %3656 = vmatpush2.xpose.msra.mxu0 0.0
    %3657 = vmatprep.subr.mxu0 0.0
    %3658 = vmatpush2.xpose.msra.mxu0 0.0
    %3659 = vmatprep.subr.mxu0 0.0
    %3660 = vmatpush2.xpose.msra.mxu0 0.0
    %3661 = vmatprep.subr.mxu0 0.0
    %3662 = vmatpush2.xpose.msra.mxu0 0.0
    %3663 = vmatprep.subr.mxu0 0.0
    %3664 = vmatpush2.xpose.msra.mxu0 0.0
    %3665 = vmatprep.subr.mxu0 0.0
    %3666 = vmatpush2.xpose.msra.mxu0 0.0
    %3667 = vmatprep.subr.mxu0 0.0
    %3668 = vmatpush2.xpose.msra.mxu0 0.0
    %3669 = vmatprep.subr.mxu0 0.0
    %3670 = vmatpush2.xpose.msra.mxu0 0.0
    %3671 = vmatprep.subr.mxu0 0.0
    %3672 = vmatpush2.xpose.msra.mxu0 0.0
    %3673 = vmatprep.subr.mxu0 0.0
    %3674 = vmatpush2.xpose.msra.mxu0 0.0
    %3675 = vmatprep.subr.mxu0 0.0
    %3676 = vmatpush2.xpose.msra.mxu0 0.0
    %3677 = vmatprep.mubr.f32.mxu0 0.0
    %v3678 = vand.u32 %v3346, 4294901760
    %v3679 = vsub.f32 %v3346, %v3678
    %v3680 = vand.u32 %v3679, 4294901760
    %3681 = vmatmul.mubr.f32.gmra.mxu0 %v3680
    %v3682 = vpop.f32.mrf.mxu0
    %v3683 = vadd.f32 %v3601, %v3682
    %v3684 = vpop.f32.mrf.mxu0
    %3685 = vmatprep.mubr.f32.mxu0 0.0
    %v3686 = vand.u32 %v3348, 4294901760
    %v3687 = vsub.f32 %v3348, %v3686
    %v3688 = vand.u32 %v3687, 4294901760
    %3689 = vmatmul.mubr.f32.gmra.mxu0 %v3688
    %v3690 = vpop.f32.mrf.mxu0
    %v3691 = vadd.f32 %v3608, %v3690
    %v3692 = vpop.f32.mrf.mxu0
    %3693 = vdwg.mxu0
    %3694 = vmatprep.subr.mxu0 0.0
    %3695 = vmatpush1.xpose.msra.mxu0 0.0
    %3696 = vmatprep.subr.mxu0 0.0
    %3697 = vmatpush1.xpose.msra.mxu0 0.0
    %3698 = vmatprep.subr.mxu0 0.0
    %3699 = vmatpush1.xpose.msra.mxu0 0.0
    %3700 = vmatprep.subr.mxu0 0.0
    %3701 = vmatpush1.xpose.msra.mxu0 0.0
    %3702 = vmatprep.subr.mxu0 0.0
    %3703 = vmatpush1.xpose.msra.mxu0 0.0
    %3704 = vmatprep.subr.mxu0 0.0
    %3705 = vmatpush1.xpose.msra.mxu0 0.0
    %3706 = vmatprep.subr.mxu0 0.0
    %3707 = vmatpush1.xpose.msra.mxu0 0.0
    %3708 = vmatprep.subr.mxu0 0.0
    %3709 = vmatpush1.xpose.msra.mxu0 0.0
    %3710 = vmatprep.subr.mxu0 0.0
    %3711 = vmatpush1.xpose.msra.mxu0 0.0
    %3712 = vmatprep.subr.mxu0 0.0
    %3713 = vmatpush1.xpose.msra.mxu0 0.0
    %3714 = vmatprep.subr.mxu0 0.0
    %3715 = vmatpush1.xpose.msra.mxu0 0.0
    %3716 = vmatprep.subr.mxu0 0.0
    %3717 = vmatpush1.xpose.msra.mxu0 0.0
    %3718 = vmatprep.subr.mxu0 0.0
    %3719 = vmatpush1.xpose.msra.mxu0 0.0
    %3720 = vmatprep.subr.mxu0 0.0
    %3721 = vmatpush1.xpose.msra.mxu0 0.0
    %3722 = vmatprep.subr.mxu0 0.0
    %v3723 = vand.u32 %v3352, 4294901760
    %v3724 = vsub.f32 %v3352, %v3723
    %v3725 = vand.u32 %v3724, 4294901760
    %3726 = vmatpush1.xpose.msra.mxu0 %v3725
    %3727 = vmatprep.subr.mxu0 0.0
    %v3728 = vand.u32 %v3350, 4294901760
    %v3729 = vsub.f32 %v3350, %v3728
    %v3730 = vand.u32 %v3729, 4294901760
    %3731 = vmatpush1.xpose.msra.mxu0 %v3730
    %3732 = vmatprep.subr.mxu0 0.0
    %3733 = vmatpush2.xpose.msra.mxu0 0.0
    %3734 = vmatprep.subr.mxu0 0.0
    %3735 = vmatpush2.xpose.msra.mxu0 0.0
    %3736 = vmatprep.subr.mxu0 0.0
    %3737 = vmatpush2.xpose.msra.mxu0 0.0
    %3738 = vmatprep.subr.mxu0 0.0
    %3739 = vmatpush2.xpose.msra.mxu0 0.0
    %3740 = vmatprep.subr.mxu0 0.0
    %3741 = vmatpush2.xpose.msra.mxu0 0.0
    %3742 = vmatprep.subr.mxu0 0.0
    %3743 = vmatpush2.xpose.msra.mxu0 0.0
    %3744 = vmatprep.subr.mxu0 0.0
    %3745 = vmatpush2.xpose.msra.mxu0 0.0
    %3746 = vmatprep.subr.mxu0 0.0
    %3747 = vmatpush2.xpose.msra.mxu0 0.0
    %3748 = vmatprep.subr.mxu0 0.0
    %3749 = vmatpush2.xpose.msra.mxu0 0.0
    %3750 = vmatprep.subr.mxu0 0.0
    %3751 = vmatpush2.xpose.msra.mxu0 0.0
    %3752 = vmatprep.subr.mxu0 0.0
    %3753 = vmatpush2.xpose.msra.mxu0 0.0
    %3754 = vmatprep.subr.mxu0 0.0
    %3755 = vmatpush2.xpose.msra.mxu0 0.0
    %3756 = vmatprep.subr.mxu0 0.0
    %3757 = vmatpush2.xpose.msra.mxu0 0.0
    %3758 = vmatprep.subr.mxu0 0.0
    %3759 = vmatpush2.xpose.msra.mxu0 0.0
    %3760 = vmatprep.subr.mxu0 0.0
    %3761 = vmatpush2.xpose.msra.mxu0 0.0
    %3762 = vmatprep.subr.mxu0 0.0
    %3763 = vmatpush2.xpose.msra.mxu0 0.0
    %3764 = vmatprep.mubr.f32.mxu0 0.0
    %v3765 = vand.u32 %v3346, 4294901760
    %3766 = vmatmul.mubr.f32.gmra.mxu0 %v3765
    %v3767 = vpop.f32.mrf.mxu0
    %v3768 = vadd.f32 %v3683, %v3767
    %v3769 = vpop.f32.mrf.mxu0
    %3770 = vmatprep.mubr.f32.mxu0 0.0
    %v3771 = vand.u32 %v3348, 4294901760
    %3772 = vmatmul.mubr.f32.gmra.mxu0 %v3771
    %v3773 = vpop.f32.mrf.mxu0
    %v3774 = vadd.f32 %v3691, %v3773
    %v3775 = vpop.f32.mrf.mxu0
    %3776 = vdwg.mxu0
    %3777 = vmatprep.subr.mxu0 0.0
    %3778 = vmatpush1.xpose.msra.mxu0 0.0
    %3779 = vmatprep.subr.mxu0 0.0
    %3780 = vmatpush1.xpose.msra.mxu0 0.0
    %3781 = vmatprep.subr.mxu0 0.0
    %3782 = vmatpush1.xpose.msra.mxu0 0.0
    %3783 = vmatprep.subr.mxu0 0.0
    %3784 = vmatpush1.xpose.msra.mxu0 0.0
    %3785 = vmatprep.subr.mxu0 0.0
    %3786 = vmatpush1.xpose.msra.mxu0 0.0
    %3787 = vmatprep.subr.mxu0 0.0
    %3788 = vmatpush1.xpose.msra.mxu0 0.0
    %3789 = vmatprep.subr.mxu0 0.0
    %3790 = vmatpush1.xpose.msra.mxu0 0.0
    %3791 = vmatprep.subr.mxu0 0.0
    %3792 = vmatpush1.xpose.msra.mxu0 0.0
    %3793 = vmatprep.subr.mxu0 0.0
    %3794 = vmatpush1.xpose.msra.mxu0 0.0
    %3795 = vmatprep.subr.mxu0 0.0
    %3796 = vmatpush1.xpose.msra.mxu0 0.0
    %3797 = vmatprep.subr.mxu0 0.0
    %3798 = vmatpush1.xpose.msra.mxu0 0.0
    %3799 = vmatprep.subr.mxu0 0.0
    %3800 = vmatpush1.xpose.msra.mxu0 0.0
    %3801 = vmatprep.subr.mxu0 0.0
    %3802 = vmatpush1.xpose.msra.mxu0 0.0
    %3803 = vmatprep.subr.mxu0 0.0
    %3804 = vmatpush1.xpose.msra.mxu0 0.0
    %3805 = vmatprep.subr.mxu0 0.0
    %v3806 = vand.u32 %v3352, 4294901760
    %3807 = vmatpush1.xpose.msra.mxu0 %v3806
    %3808 = vmatprep.subr.mxu0 0.0
    %v3809 = vand.u32 %v3350, 4294901760
    %3810 = vmatpush1.xpose.msra.mxu0 %v3809
    %3811 = vmatprep.subr.mxu0 0.0
    %3812 = vmatpush2.xpose.msra.mxu0 0.0
    %3813 = vmatprep.subr.mxu0 0.0
    %3814 = vmatpush2.xpose.msra.mxu0 0.0
    %3815 = vmatprep.subr.mxu0 0.0
    %3816 = vmatpush2.xpose.msra.mxu0 0.0
    %3817 = vmatprep.subr.mxu0 0.0
    %3818 = vmatpush2.xpose.msra.mxu0 0.0
    %3819 = vmatprep.subr.mxu0 0.0
    %3820 = vmatpush2.xpose.msra.mxu0 0.0
    %3821 = vmatprep.subr.mxu0 0.0
    %3822 = vmatpush2.xpose.msra.mxu0 0.0
    %3823 = vmatprep.subr.mxu0 0.0
    %3824 = vmatpush2.xpose.msra.mxu0 0.0
    %3825 = vmatprep.subr.mxu0 0.0
    %3826 = vmatpush2.xpose.msra.mxu0 0.0
    %3827 = vmatprep.subr.mxu0 0.0
    %3828 = vmatpush2.xpose.msra.mxu0 0.0
    %3829 = vmatprep.subr.mxu0 0.0
    %3830 = vmatpush2.xpose.msra.mxu0 0.0
    %3831 = vmatprep.subr.mxu0 0.0
    %3832 = vmatpush2.xpose.msra.mxu0 0.0
    %3833 = vmatprep.subr.mxu0 0.0
    %3834 = vmatpush2.xpose.msra.mxu0 0.0
    %3835 = vmatprep.subr.mxu0 0.0
    %3836 = vmatpush2.xpose.msra.mxu0 0.0
    %3837 = vmatprep.subr.mxu0 0.0
    %3838 = vmatpush2.xpose.msra.mxu0 0.0
    %3839 = vmatprep.subr.mxu0 0.0
    %3840 = vmatpush2.xpose.msra.mxu0 0.0
    %3841 = vmatprep.subr.mxu0 0.0
    %3842 = vmatpush2.xpose.msra.mxu0 0.0
    %3843 = vmatprep.mubr.f32.mxu0 0.0
    %v3844 = vand.u32 %v3346, 4294901760
    %3845 = vmatmul.mubr.f32.gmra.mxu0 %v3844
    %v3846 = vpop.f32.mrf.mxu0
    %v3847 = vadd.f32 %v3768, %v3846
    %v3848 = vpop.f32.mrf.mxu0
    %3849 = vmatprep.mubr.f32.mxu0 0.0
    %v3850 = vand.u32 %v3348, 4294901760
    %3851 = vmatmul.mubr.f32.gmra.mxu0 %v3850
    %v3852 = vpop.f32.mrf.mxu0
    %v3853 = vadd.f32 %v3774, %v3852
    %v3854 = vpop.f32.mrf.mxu0
    %3855 = vdwg.mxu0
    %v3856 = vsel %vm1751, %v3847, -inf
    %3857 = vmax.xlane.f32.xlu0 %v3856
    %v3858 = vpop.xlane.xlu0 %3857
    %v3859 = vsel %vm1751, %v3853, -inf
    %3860 = vmax.xlane.f32.xlu0 %v3859
    %v3861 = vpop.xlane.xlu0 %3860
    %v3862 = vsub.f32 %v3847, %v3858
    %v3863 = vsub.f32 %v3853, %v3861
    %v3864 = vmul.f32 %v3862, 1.442695
    %v3865 = vpow.pop %v3864
    %v3866 = vmul.f32 %v3863, 1.442695
    %v3867 = vpow.pop %v3866
    %v3868 = vsel %vm1751, %v3865, 0.0
    %3869 = vadd.xlane.f32.xlu0 %v3868
    %v3870 = vpop.xlane.xlu0 %3869
    %v3871 = vsel %vm1751, %v3867, 0.0
    %3872 = vadd.xlane.f32.xlu0 %v3871
    %v3873 = vpop.xlane.xlu0 %3872
    %v3874 = vrcp.pop %v3870
    %v3875 = vrcp.pop %v3873
    %v3876 = vmul.f32 %v3865, %v3874
    %v3877 = vmul.f32 %v3867, %v3875
    %3878 = vrot.lane.b32.xlu0 %v1178, 112
    %v3879 = vpop.permute.xlu0 %3878
    %3880 = vrot.lane.b32.xlu0 %v1184, 112
    %v3881 = vpop.permute.xlu0 %3880
    %v3885 = vsel %vm1751, %v3876, 0
    %v3888 = vsel %vm1751, %v3877, 0
    %3890 = vmatprep.subr.mxu0 0.0
    %3891 = vmatpush1.msra.mxu0 0.0
    %3892 = vmatprep.subr.mxu0 0.0
    %3893 = vmatpush1.msra.mxu0 0.0
    %3894 = vmatprep.subr.mxu0 0.0
    %3895 = vmatpush1.msra.mxu0 0.0
    %3896 = vmatprep.subr.mxu0 0.0
    %3897 = vmatpush1.msra.mxu0 0.0
    %3898 = vmatprep.subr.mxu0 0.0
    %3899 = vmatpush1.msra.mxu0 0.0
    %3900 = vmatprep.subr.mxu0 0.0
    %3901 = vmatpush1.msra.mxu0 0.0
    %3902 = vmatprep.subr.mxu0 0.0
    %3903 = vmatpush1.msra.mxu0 0.0
    %3904 = vmatprep.subr.mxu0 0.0
    %3905 = vmatpush1.msra.mxu0 0.0
    %3906 = vmatprep.subr.mxu0 0.0
    %3907 = vmatpush1.msra.mxu0 0.0
    %3908 = vmatprep.subr.mxu0 0.0
    %3909 = vmatpush1.msra.mxu0 0.0
    %3910 = vmatprep.subr.mxu0 0.0
    %3911 = vmatpush1.msra.mxu0 0.0
    %3912 = vmatprep.subr.mxu0 0.0
    %3913 = vmatpush1.msra.mxu0 0.0
    %3914 = vmatprep.subr.mxu0 0.0
    %3915 = vmatpush1.msra.mxu0 0.0
    %3916 = vmatprep.subr.mxu0 0.0
    %3917 = vmatpush1.msra.mxu0 0.0
    %3918 = vmatprep.subr.mxu0 0.0
    %v3919 = vand.u32 %v3881, 4294901760
    %3920 = vmatpush1.msra.mxu0 %v3919
    %3921 = vmatprep.subr.mxu0 0.0
    %v3922 = vand.u32 %v3879, 4294901760
    %3923 = vmatpush1.msra.mxu0 %v3922
    %3924 = vmatprep.subr.mxu0 0.0
    %3925 = vmatpush2.msra.mxu0 0.0
    %3926 = vmatprep.subr.mxu0 0.0
    %3927 = vmatpush2.msra.mxu0 0.0
    %3928 = vmatprep.subr.mxu0 0.0
    %3929 = vmatpush2.msra.mxu0 0.0
    %3930 = vmatprep.subr.mxu0 0.0
    %3931 = vmatpush2.msra.mxu0 0.0
    %3932 = vmatprep.subr.mxu0 0.0
    %3933 = vmatpush2.msra.mxu0 0.0
    %3934 = vmatprep.subr.mxu0 0.0
    %3935 = vmatpush2.msra.mxu0 0.0
    %3936 = vmatprep.subr.mxu0 0.0
    %3937 = vmatpush2.msra.mxu0 0.0
    %3938 = vmatprep.subr.mxu0 0.0
    %3939 = vmatpush2.msra.mxu0 0.0
    %3940 = vmatprep.subr.mxu0 0.0
    %3941 = vmatpush2.msra.mxu0 0.0
    %3942 = vmatprep.subr.mxu0 0.0
    %3943 = vmatpush2.msra.mxu0 0.0
    %3944 = vmatprep.subr.mxu0 0.0
    %3945 = vmatpush2.msra.mxu0 0.0
    %3946 = vmatprep.subr.mxu0 0.0
    %3947 = vmatpush2.msra.mxu0 0.0
    %3948 = vmatprep.subr.mxu0 0.0
    %3949 = vmatpush2.msra.mxu0 0.0
    %3950 = vmatprep.subr.mxu0 0.0
    %3951 = vmatpush2.msra.mxu0 0.0
    %3952 = vmatprep.subr.mxu0 0.0
    %3953 = vmatpush2.msra.mxu0 0.0
    %3954 = vmatprep.subr.mxu0 0.0
    %3955 = vmatpush2.msra.mxu0 0.0
    %3956 = vmatprep.mubr.f32.mxu0 0.0
    %v3957 = vand.u32 %v3885, 4294901760
    %v3958 = vsub.f32 %v3885, %v3957
    %v3959 = vand.u32 %v3958, 4294901760
    %v3960 = vsub.f32 %v3958, %v3959
    %v3961 = vand.u32 %v3960, 4294901760
    %3962 = vmatmul.mubr.f32.gmra.mxu0 %v3961
    %v3963 = vpop.f32.mrf.mxu0
    %v3964 = vadd.f32 0.0, %v3963
    %v3965 = vpop.f32.mrf.mxu0
    %3966 = vmatprep.mubr.f32.mxu0 0.0
    %v3967 = vand.u32 %v3888, 4294901760
    %v3968 = vsub.f32 %v3888, %v3967
    %v3969 = vand.u32 %v3968, 4294901760
    %v3970 = vsub.f32 %v3968, %v3969
    %v3971 = vand.u32 %v3970, 4294901760
    %3972 = vmatmul.mubr.f32.gmra.mxu0 %v3971
    %v3973 = vpop.f32.mrf.mxu0
    %v3974 = vadd.f32 0.0, %v3973
    %v3975 = vpop.f32.mrf.mxu0
    %3976 = vdwg.mxu0
    %3977 = vmatprep.subr.mxu0 0.0
    %3978 = vmatpush1.msra.mxu0 0.0
    %3979 = vmatprep.subr.mxu0 0.0
    %3980 = vmatpush1.msra.mxu0 0.0
    %3981 = vmatprep.subr.mxu0 0.0
    %3982 = vmatpush1.msra.mxu0 0.0
    %3983 = vmatprep.subr.mxu0 0.0
    %3984 = vmatpush1.msra.mxu0 0.0
    %3985 = vmatprep.subr.mxu0 0.0
    %3986 = vmatpush1.msra.mxu0 0.0
    %3987 = vmatprep.subr.mxu0 0.0
    %3988 = vmatpush1.msra.mxu0 0.0
    %3989 = vmatprep.subr.mxu0 0.0
    %3990 = vmatpush1.msra.mxu0 0.0
    %3991 = vmatprep.subr.mxu0 0.0
    %3992 = vmatpush1.msra.mxu0 0.0
    %3993 = vmatprep.subr.mxu0 0.0
    %3994 = vmatpush1.msra.mxu0 0.0
    %3995 = vmatprep.subr.mxu0 0.0
    %3996 = vmatpush1.msra.mxu0 0.0
    %3997 = vmatprep.subr.mxu0 0.0
    %3998 = vmatpush1.msra.mxu0 0.0
    %3999 = vmatprep.subr.mxu0 0.0
    %4000 = vmatpush1.msra.mxu0 0.0
    %4001 = vmatprep.subr.mxu0 0.0
    %4002 = vmatpush1.msra.mxu0 0.0
    %4003 = vmatprep.subr.mxu0 0.0
    %4004 = vmatpush1.msra.mxu0 0.0
    %4005 = vmatprep.subr.mxu0 0.0
    %v4006 = vand.u32 %v3881, 4294901760
    %v4007 = vsub.f32 %v3881, %v4006
    %v4008 = vand.u32 %v4007, 4294901760
    %v4009 = vsub.f32 %v4007, %v4008
    %v4010 = vand.u32 %v4009, 4294901760
    %4011 = vmatpush1.msra.mxu0 %v4010
    %4012 = vmatprep.subr.mxu0 0.0
    %v4013 = vand.u32 %v3879, 4294901760
    %v4014 = vsub.f32 %v3879, %v4013
    %v4015 = vand.u32 %v4014, 4294901760
    %v4016 = vsub.f32 %v4014, %v4015
    %v4017 = vand.u32 %v4016, 4294901760
    %4018 = vmatpush1.msra.mxu0 %v4017
    %4019 = vmatprep.subr.mxu0 0.0
    %4020 = vmatpush2.msra.mxu0 0.0
    %4021 = vmatprep.subr.mxu0 0.0
    %4022 = vmatpush2.msra.mxu0 0.0
    %4023 = vmatprep.subr.mxu0 0.0
    %4024 = vmatpush2.msra.mxu0 0.0
    %4025 = vmatprep.subr.mxu0 0.0
    %4026 = vmatpush2.msra.mxu0 0.0
    %4027 = vmatprep.subr.mxu0 0.0
    %4028 = vmatpush2.msra.mxu0 0.0
    %4029 = vmatprep.subr.mxu0 0.0
    %4030 = vmatpush2.msra.mxu0 0.0
    %4031 = vmatprep.subr.mxu0 0.0
    %4032 = vmatpush2.msra.mxu0 0.0
    %4033 = vmatprep.subr.mxu0 0.0
    %4034 = vmatpush2.msra.mxu0 0.0
    %4035 = vmatprep.subr.mxu0 0.0
    %4036 = vmatpush2.msra.mxu0 0.0
    %4037 = vmatprep.subr.mxu0 0.0
    %4038 = vmatpush2.msra.mxu0 0.0
    %4039 = vmatprep.subr.mxu0 0.0
    %4040 = vmatpush2.msra.mxu0 0.0
    %4041 = vmatprep.subr.mxu0 0.0
    %4042 = vmatpush2.msra.mxu0 0.0
    %4043 = vmatprep.subr.mxu0 0.0
    %4044 = vmatpush2.msra.mxu0 0.0
    %4045 = vmatprep.subr.mxu0 0.0
    %4046 = vmatpush2.msra.mxu0 0.0
    %4047 = vmatprep.subr.mxu0 0.0
    %4048 = vmatpush2.msra.mxu0 0.0
    %4049 = vmatprep.subr.mxu0 0.0
    %4050 = vmatpush2.msra.mxu0 0.0
    %4051 = vmatprep.mubr.f32.mxu0 0.0
    %v4052 = vand.u32 %v3885, 4294901760
    %4053 = vmatmul.mubr.f32.gmra.mxu0 %v4052
    %v4054 = vpop.f32.mrf.mxu0
    %v4055 = vadd.f32 %v3964, %v4054
    %v4056 = vpop.f32.mrf.mxu0
    %4057 = vmatprep.mubr.f32.mxu0 0.0
    %v4058 = vand.u32 %v3888, 4294901760
    %4059 = vmatmul.mubr.f32.gmra.mxu0 %v4058
    %v4060 = vpop.f32.mrf.mxu0
    %v4061 = vadd.f32 %v3974, %v4060
    %v4062 = vpop.f32.mrf.mxu0
    %4063 = vdwg.mxu0
    %4064 = vmatprep.subr.mxu0 0.0
    %4065 = vmatpush1.msra.mxu0 0.0
    %4066 = vmatprep.subr.mxu0 0.0
    %4067 = vmatpush1.msra.mxu0 0.0
    %4068 = vmatprep.subr.mxu0 0.0
    %4069 = vmatpush1.msra.mxu0 0.0
    %4070 = vmatprep.subr.mxu0 0.0
    %4071 = vmatpush1.msra.mxu0 0.0
    %4072 = vmatprep.subr.mxu0 0.0
    %4073 = vmatpush1.msra.mxu0 0.0
    %4074 = vmatprep.subr.mxu0 0.0
    %4075 = vmatpush1.msra.mxu0 0.0
    %4076 = vmatprep.subr.mxu0 0.0
    %4077 = vmatpush1.msra.mxu0 0.0
    %4078 = vmatprep.subr.mxu0 0.0
    %4079 = vmatpush1.msra.mxu0 0.0
    %4080 = vmatprep.subr.mxu0 0.0
    %4081 = vmatpush1.msra.mxu0 0.0
    %4082 = vmatprep.subr.mxu0 0.0
    %4083 = vmatpush1.msra.mxu0 0.0
    %4084 = vmatprep.subr.mxu0 0.0
    %4085 = vmatpush1.msra.mxu0 0.0
    %4086 = vmatprep.subr.mxu0 0.0
    %4087 = vmatpush1.msra.mxu0 0.0
    %4088 = vmatprep.subr.mxu0 0.0
    %4089 = vmatpush1.msra.mxu0 0.0
    %4090 = vmatprep.subr.mxu0 0.0
    %4091 = vmatpush1.msra.mxu0 0.0
    %4092 = vmatprep.subr.mxu0 0.0
    %v4093 = vand.u32 %v3881, 4294901760
    %v4094 = vsub.f32 %v3881, %v4093
    %4095 = vmatpush1.msra.mxu0 %v4094
    %4096 = vmatprep.subr.mxu0 0.0
    %v4097 = vand.u32 %v3879, 4294901760
    %v4098 = vsub.f32 %v3879, %v4097
    %4099 = vmatpush1.msra.mxu0 %v4098
    %4100 = vmatprep.subr.mxu0 0.0
    %4101 = vmatpush2.msra.mxu0 0.0
    %4102 = vmatprep.subr.mxu0 0.0
    %4103 = vmatpush2.msra.mxu0 0.0
    %4104 = vmatprep.subr.mxu0 0.0
    %4105 = vmatpush2.msra.mxu0 0.0
    %4106 = vmatprep.subr.mxu0 0.0
    %4107 = vmatpush2.msra.mxu0 0.0
    %4108 = vmatprep.subr.mxu0 0.0
    %4109 = vmatpush2.msra.mxu0 0.0
    %4110 = vmatprep.subr.mxu0 0.0
    %4111 = vmatpush2.msra.mxu0 0.0
    %4112 = vmatprep.subr.mxu0 0.0
    %4113 = vmatpush2.msra.mxu0 0.0
    %4114 = vmatprep.subr.mxu0 0.0
    %4115 = vmatpush2.msra.mxu0 0.0
    %4116 = vmatprep.subr.mxu0 0.0
    %4117 = vmatpush2.msra.mxu0 0.0
    %4118 = vmatprep.subr.mxu0 0.0
    %4119 = vmatpush2.msra.mxu0 0.0
    %4120 = vmatprep.subr.mxu0 0.0
    %4121 = vmatpush2.msra.mxu0 0.0
    %4122 = vmatprep.subr.mxu0 0.0
    %4123 = vmatpush2.msra.mxu0 0.0
    %4124 = vmatprep.subr.mxu0 0.0
    %4125 = vmatpush2.msra.mxu0 0.0
    %4126 = vmatprep.subr.mxu0 0.0
    %4127 = vmatpush2.msra.mxu0 0.0
    %4128 = vmatprep.subr.mxu0 0.0
    %4129 = vmatpush2.msra.mxu0 0.0
    %4130 = vmatprep.subr.mxu0 0.0
    %4131 = vmatpush2.msra.mxu0 0.0
    %4132 = vmatprep.mubr.f32.mxu0 0.0
    %v4133 = vand.u32 %v3885, 4294901760
    %v4134 = vsub.f32 %v3885, %v4133
    %4135 = vmatmul.mubr.f32.gmra.mxu0 %v4134
    %v4136 = vpop.f32.mrf.mxu0
    %v4137 = vadd.f32 %v4055, %v4136
    %v4138 = vpop.f32.mrf.mxu0
    %4139 = vmatprep.mubr.f32.mxu0 0.0
    %v4140 = vand.u32 %v3888, 4294901760
    %v4141 = vsub.f32 %v3888, %v4140
    %4142 = vmatmul.mubr.f32.gmra.mxu0 %v4141
    %v4143 = vpop.f32.mrf.mxu0
    %v4144 = vadd.f32 %v4061, %v4143
    %v4145 = vpop.f32.mrf.mxu0
    %4146 = vdwg.mxu0
    %4147 = vmatprep.subr.mxu0 0.0
    %4148 = vmatpush1.msra.mxu0 0.0
    %4149 = vmatprep.subr.mxu0 0.0
    %4150 = vmatpush1.msra.mxu0 0.0
    %4151 = vmatprep.subr.mxu0 0.0
    %4152 = vmatpush1.msra.mxu0 0.0
    %4153 = vmatprep.subr.mxu0 0.0
    %4154 = vmatpush1.msra.mxu0 0.0
    %4155 = vmatprep.subr.mxu0 0.0
    %4156 = vmatpush1.msra.mxu0 0.0
    %4157 = vmatprep.subr.mxu0 0.0
    %4158 = vmatpush1.msra.mxu0 0.0
    %4159 = vmatprep.subr.mxu0 0.0
    %4160 = vmatpush1.msra.mxu0 0.0
    %4161 = vmatprep.subr.mxu0 0.0
    %4162 = vmatpush1.msra.mxu0 0.0
    %4163 = vmatprep.subr.mxu0 0.0
    %4164 = vmatpush1.msra.mxu0 0.0
    %4165 = vmatprep.subr.mxu0 0.0
    %4166 = vmatpush1.msra.mxu0 0.0
    %4167 = vmatprep.subr.mxu0 0.0
    %4168 = vmatpush1.msra.mxu0 0.0
    %4169 = vmatprep.subr.mxu0 0.0
    %4170 = vmatpush1.msra.mxu0 0.0
    %4171 = vmatprep.subr.mxu0 0.0
    %4172 = vmatpush1.msra.mxu0 0.0
    %4173 = vmatprep.subr.mxu0 0.0
    %4174 = vmatpush1.msra.mxu0 0.0
    %4175 = vmatprep.subr.mxu0 0.0
    %v4176 = vand.u32 %v3881, 4294901760
    %4177 = vmatpush1.msra.mxu0 %v4176
    %4178 = vmatprep.subr.mxu0 0.0
    %v4179 = vand.u32 %v3879, 4294901760
    %4180 = vmatpush1.msra.mxu0 %v4179
    %4181 = vmatprep.subr.mxu0 0.0
    %4182 = vmatpush2.msra.mxu0 0.0
    %4183 = vmatprep.subr.mxu0 0.0
    %4184 = vmatpush2.msra.mxu0 0.0
    %4185 = vmatprep.subr.mxu0 0.0
    %4186 = vmatpush2.msra.mxu0 0.0
    %4187 = vmatprep.subr.mxu0 0.0
    %4188 = vmatpush2.msra.mxu0 0.0
    %4189 = vmatprep.subr.mxu0 0.0
    %4190 = vmatpush2.msra.mxu0 0.0
    %4191 = vmatprep.subr.mxu0 0.0
    %4192 = vmatpush2.msra.mxu0 0.0
    %4193 = vmatprep.subr.mxu0 0.0
    %4194 = vmatpush2.msra.mxu0 0.0
    %4195 = vmatprep.subr.mxu0 0.0
    %4196 = vmatpush2.msra.mxu0 0.0
    %4197 = vmatprep.subr.mxu0 0.0
    %4198 = vmatpush2.msra.mxu0 0.0
    %4199 = vmatprep.subr.mxu0 0.0
    %4200 = vmatpush2.msra.mxu0 0.0
    %4201 = vmatprep.subr.mxu0 0.0
    %4202 = vmatpush2.msra.mxu0 0.0
    %4203 = vmatprep.subr.mxu0 0.0
    %4204 = vmatpush2.msra.mxu0 0.0
    %4205 = vmatprep.subr.mxu0 0.0
    %4206 = vmatpush2.msra.mxu0 0.0
    %4207 = vmatprep.subr.mxu0 0.0
    %4208 = vmatpush2.msra.mxu0 0.0
    %4209 = vmatprep.subr.mxu0 0.0
    %4210 = vmatpush2.msra.mxu0 0.0
    %4211 = vmatprep.subr.mxu0 0.0
    %4212 = vmatpush2.msra.mxu0 0.0
    %4213 = vmatprep.mubr.f32.mxu0 0.0
    %v4214 = vand.u32 %v3885, 4294901760
    %v4215 = vsub.f32 %v3885, %v4214
    %v4216 = vand.u32 %v4215, 4294901760
    %4217 = vmatmul.mubr.f32.gmra.mxu0 %v4216
    %v4218 = vpop.f32.mrf.mxu0
    %v4219 = vadd.f32 %v4137, %v4218
    %v4220 = vpop.f32.mrf.mxu0
    %4221 = vmatprep.mubr.f32.mxu0 0.0
    %v4222 = vand.u32 %v3888, 4294901760
    %v4223 = vsub.f32 %v3888, %v4222
    %v4224 = vand.u32 %v4223, 4294901760
    %4225 = vmatmul.mubr.f32.gmra.mxu0 %v4224
    %v4226 = vpop.f32.mrf.mxu0
    %v4227 = vadd.f32 %v4144, %v4226
    %v4228 = vpop.f32.mrf.mxu0
    %4229 = vdwg.mxu0
    %4230 = vmatprep.subr.mxu0 0.0
    %4231 = vmatpush1.msra.mxu0 0.0
    %4232 = vmatprep.subr.mxu0 0.0
    %4233 = vmatpush1.msra.mxu0 0.0
    %4234 = vmatprep.subr.mxu0 0.0
    %4235 = vmatpush1.msra.mxu0 0.0
    %4236 = vmatprep.subr.mxu0 0.0
    %4237 = vmatpush1.msra.mxu0 0.0
    %4238 = vmatprep.subr.mxu0 0.0
    %4239 = vmatpush1.msra.mxu0 0.0
    %4240 = vmatprep.subr.mxu0 0.0
    %4241 = vmatpush1.msra.mxu0 0.0
    %4242 = vmatprep.subr.mxu0 0.0
    %4243 = vmatpush1.msra.mxu0 0.0
    %4244 = vmatprep.subr.mxu0 0.0
    %4245 = vmatpush1.msra.mxu0 0.0
    %4246 = vmatprep.subr.mxu0 0.0
    %4247 = vmatpush1.msra.mxu0 0.0
    %4248 = vmatprep.subr.mxu0 0.0
    %4249 = vmatpush1.msra.mxu0 0.0
    %4250 = vmatprep.subr.mxu0 0.0
    %4251 = vmatpush1.msra.mxu0 0.0
    %4252 = vmatprep.subr.mxu0 0.0
    %4253 = vmatpush1.msra.mxu0 0.0
    %4254 = vmatprep.subr.mxu0 0.0
    %4255 = vmatpush1.msra.mxu0 0.0
    %4256 = vmatprep.subr.mxu0 0.0
    %4257 = vmatpush1.msra.mxu0 0.0
    %4258 = vmatprep.subr.mxu0 0.0
    %v4259 = vand.u32 %v3881, 4294901760
    %v4260 = vsub.f32 %v3881, %v4259
    %v4261 = vand.u32 %v4260, 4294901760
    %4262 = vmatpush1.msra.mxu0 %v4261
    %4263 = vmatprep.subr.mxu0 0.0
    %v4264 = vand.u32 %v3879, 4294901760
    %v4265 = vsub.f32 %v3879, %v4264
    %v4266 = vand.u32 %v4265, 4294901760
    %4267 = vmatpush1.msra.mxu0 %v4266
    %4268 = vmatprep.subr.mxu0 0.0
    %4269 = vmatpush2.msra.mxu0 0.0
    %4270 = vmatprep.subr.mxu0 0.0
    %4271 = vmatpush2.msra.mxu0 0.0
    %4272 = vmatprep.subr.mxu0 0.0
    %4273 = vmatpush2.msra.mxu0 0.0
    %4274 = vmatprep.subr.mxu0 0.0
    %4275 = vmatpush2.msra.mxu0 0.0
    %4276 = vmatprep.subr.mxu0 0.0
    %4277 = vmatpush2.msra.mxu0 0.0
    %4278 = vmatprep.subr.mxu0 0.0
    %4279 = vmatpush2.msra.mxu0 0.0
    %4280 = vmatprep.subr.mxu0 0.0
    %4281 = vmatpush2.msra.mxu0 0.0
    %4282 = vmatprep.subr.mxu0 0.0
    %4283 = vmatpush2.msra.mxu0 0.0
    %4284 = vmatprep.subr.mxu0 0.0
    %4285 = vmatpush2.msra.mxu0 0.0
    %4286 = vmatprep.subr.mxu0 0.0
    %4287 = vmatpush2.msra.mxu0 0.0
    %4288 = vmatprep.subr.mxu0 0.0
    %4289 = vmatpush2.msra.mxu0 0.0
    %4290 = vmatprep.subr.mxu0 0.0
    %4291 = vmatpush2.msra.mxu0 0.0
    %4292 = vmatprep.subr.mxu0 0.0
    %4293 = vmatpush2.msra.mxu0 0.0
    %4294 = vmatprep.subr.mxu0 0.0
    %4295 = vmatpush2.msra.mxu0 0.0
    %4296 = vmatprep.subr.mxu0 0.0
    %4297 = vmatpush2.msra.mxu0 0.0
    %4298 = vmatprep.subr.mxu0 0.0
    %4299 = vmatpush2.msra.mxu0 0.0
    %4300 = vmatprep.mubr.f32.mxu0 0.0
    %v4301 = vand.u32 %v3885, 4294901760
    %4302 = vmatmul.mubr.f32.gmra.mxu0 %v4301
    %v4303 = vpop.f32.mrf.mxu0
    %v4304 = vadd.f32 %v4219, %v4303
    %v4305 = vpop.f32.mrf.mxu0
    %4306 = vmatprep.mubr.f32.mxu0 0.0
    %v4307 = vand.u32 %v3888, 4294901760
    %4308 = vmatmul.mubr.f32.gmra.mxu0 %v4307
    %v4309 = vpop.f32.mrf.mxu0
    %v4310 = vadd.f32 %v4227, %v4309
    %v4311 = vpop.f32.mrf.mxu0
    %4312 = vdwg.mxu0
    %4313 = vmatprep.subr.mxu0 0.0
    %4314 = vmatpush1.msra.mxu0 0.0
    %4315 = vmatprep.subr.mxu0 0.0
    %4316 = vmatpush1.msra.mxu0 0.0
    %4317 = vmatprep.subr.mxu0 0.0
    %4318 = vmatpush1.msra.mxu0 0.0
    %4319 = vmatprep.subr.mxu0 0.0
    %4320 = vmatpush1.msra.mxu0 0.0
    %4321 = vmatprep.subr.mxu0 0.0
    %4322 = vmatpush1.msra.mxu0 0.0
    %4323 = vmatprep.subr.mxu0 0.0
    %4324 = vmatpush1.msra.mxu0 0.0
    %4325 = vmatprep.subr.mxu0 0.0
    %4326 = vmatpush1.msra.mxu0 0.0
    %4327 = vmatprep.subr.mxu0 0.0
    %4328 = vmatpush1.msra.mxu0 0.0
    %4329 = vmatprep.subr.mxu0 0.0
    %4330 = vmatpush1.msra.mxu0 0.0
    %4331 = vmatprep.subr.mxu0 0.0
    %4332 = vmatpush1.msra.mxu0 0.0
    %4333 = vmatprep.subr.mxu0 0.0
    %4334 = vmatpush1.msra.mxu0 0.0
    %4335 = vmatprep.subr.mxu0 0.0
    %4336 = vmatpush1.msra.mxu0 0.0
    %4337 = vmatprep.subr.mxu0 0.0
    %4338 = vmatpush1.msra.mxu0 0.0
    %4339 = vmatprep.subr.mxu0 0.0
    %4340 = vmatpush1.msra.mxu0 0.0
    %4341 = vmatprep.subr.mxu0 0.0
    %v4342 = vand.u32 %v3881, 4294901760
    %4343 = vmatpush1.msra.mxu0 %v4342
    %4344 = vmatprep.subr.mxu0 0.0
    %v4345 = vand.u32 %v3879, 4294901760
    %4346 = vmatpush1.msra.mxu0 %v4345
    %4347 = vmatprep.subr.mxu0 0.0
    %4348 = vmatpush2.msra.mxu0 0.0
    %4349 = vmatprep.subr.mxu0 0.0
    %4350 = vmatpush2.msra.mxu0 0.0
    %4351 = vmatprep.subr.mxu0 0.0
    %4352 = vmatpush2.msra.mxu0 0.0
    %4353 = vmatprep.subr.mxu0 0.0
    %4354 = vmatpush2.msra.mxu0 0.0
    %4355 = vmatprep.subr.mxu0 0.0
    %4356 = vmatpush2.msra.mxu0 0.0
    %4357 = vmatprep.subr.mxu0 0.0
    %4358 = vmatpush2.msra.mxu0 0.0
    %4359 = vmatprep.subr.mxu0 0.0
    %4360 = vmatpush2.msra.mxu0 0.0
    %4361 = vmatprep.subr.mxu0 0.0
    %4362 = vmatpush2.msra.mxu0 0.0
    %4363 = vmatprep.subr.mxu0 0.0
    %4364 = vmatpush2.msra.mxu0 0.0
    %4365 = vmatprep.subr.mxu0 0.0
    %4366 = vmatpush2.msra.mxu0 0.0
    %4367 = vmatprep.subr.mxu0 0.0
    %4368 = vmatpush2.msra.mxu0 0.0
    %4369 = vmatprep.subr.mxu0 0.0
    %4370 = vmatpush2.msra.mxu0 0.0
    %4371 = vmatprep.subr.mxu0 0.0
    %4372 = vmatpush2.msra.mxu0 0.0
    %4373 = vmatprep.subr.mxu0 0.0
    %4374 = vmatpush2.msra.mxu0 0.0
    %4375 = vmatprep.subr.mxu0 0.0
    %4376 = vmatpush2.msra.mxu0 0.0
    %4377 = vmatprep.subr.mxu0 0.0
    %4378 = vmatpush2.msra.mxu0 0.0
    %4379 = vmatprep.mubr.f32.mxu0 0.0
    %v4380 = vand.u32 %v3885, 4294901760
    %4381 = vmatmul.mubr.f32.gmra.mxu0 %v4380
    %v4382 = vpop.f32.mrf.mxu0
    %v4383 = vadd.f32 %v4304, %v4382
    %v4384 = vpop.f32.mrf.mxu0
    %4385 = vmatprep.mubr.f32.mxu0 0.0
    %v4386 = vand.u32 %v3888, 4294901760
    %4387 = vmatmul.mubr.f32.gmra.mxu0 %v4386
    %v4388 = vpop.f32.mrf.mxu0
    %v4389 = vadd.f32 %v4310, %v4388
    %v4390 = vpop.f32.mrf.mxu0
    %4391 = vdwg.mxu0
    %4392 = vrot.lane.b32.xlu0 %v643, 104
    %v4393 = vpop.permute.xlu0 %4392
    %4394 = vrot.lane.b32.xlu0 %v644, 104
    %v4395 = vpop.permute.xlu0 %4394
    %4396 = vrot.lane.b32.xlu0 %v634, 72
    %v4397 = vpop.permute.xlu0 %4396
    %4398 = vrot.lane.b32.xlu0 %v640, 72
    %v4399 = vpop.permute.xlu0 %4398
    %v4400 = vsel %vm1238, %v4393, 0
    %v4402 = vsel %vm1238, %v4395, 0
    %v4404 = vsel %vm1238, %v4397, 0
    %v4406 = vsel %vm1238, %v4399, 0
    %4408 = vmatprep.subr.mxu0 0.0
    %4409 = vmatpush1.xpose.msra.mxu0 0.0
    %4410 = vmatprep.subr.mxu0 0.0
    %4411 = vmatpush1.xpose.msra.mxu0 0.0
    %4412 = vmatprep.subr.mxu0 0.0
    %4413 = vmatpush1.xpose.msra.mxu0 0.0
    %4414 = vmatprep.subr.mxu0 0.0
    %4415 = vmatpush1.xpose.msra.mxu0 0.0
    %4416 = vmatprep.subr.mxu0 0.0
    %4417 = vmatpush1.xpose.msra.mxu0 0.0
    %4418 = vmatprep.subr.mxu0 0.0
    %4419 = vmatpush1.xpose.msra.mxu0 0.0
    %4420 = vmatprep.subr.mxu0 0.0
    %4421 = vmatpush1.xpose.msra.mxu0 0.0
    %4422 = vmatprep.subr.mxu0 0.0
    %4423 = vmatpush1.xpose.msra.mxu0 0.0
    %4424 = vmatprep.subr.mxu0 0.0
    %4425 = vmatpush1.xpose.msra.mxu0 0.0
    %4426 = vmatprep.subr.mxu0 0.0
    %4427 = vmatpush1.xpose.msra.mxu0 0.0
    %4428 = vmatprep.subr.mxu0 0.0
    %4429 = vmatpush1.xpose.msra.mxu0 0.0
    %4430 = vmatprep.subr.mxu0 0.0
    %4431 = vmatpush1.xpose.msra.mxu0 0.0
    %4432 = vmatprep.subr.mxu0 0.0
    %4433 = vmatpush1.xpose.msra.mxu0 0.0
    %4434 = vmatprep.subr.mxu0 0.0
    %4435 = vmatpush1.xpose.msra.mxu0 0.0
    %4436 = vmatprep.subr.mxu0 0.0
    %v4437 = vand.u32 %v4406, 4294901760
    %4438 = vmatpush1.xpose.msra.mxu0 %v4437
    %4439 = vmatprep.subr.mxu0 0.0
    %v4440 = vand.u32 %v4404, 4294901760
    %4441 = vmatpush1.xpose.msra.mxu0 %v4440
    %4442 = vmatprep.subr.mxu0 0.0
    %4443 = vmatpush2.xpose.msra.mxu0 0.0
    %4444 = vmatprep.subr.mxu0 0.0
    %4445 = vmatpush2.xpose.msra.mxu0 0.0
    %4446 = vmatprep.subr.mxu0 0.0
    %4447 = vmatpush2.xpose.msra.mxu0 0.0
    %4448 = vmatprep.subr.mxu0 0.0
    %4449 = vmatpush2.xpose.msra.mxu0 0.0
    %4450 = vmatprep.subr.mxu0 0.0
    %4451 = vmatpush2.xpose.msra.mxu0 0.0
    %4452 = vmatprep.subr.mxu0 0.0
    %4453 = vmatpush2.xpose.msra.mxu0 0.0
    %4454 = vmatprep.subr.mxu0 0.0
    %4455 = vmatpush2.xpose.msra.mxu0 0.0
    %4456 = vmatprep.subr.mxu0 0.0
    %4457 = vmatpush2.xpose.msra.mxu0 0.0
    %4458 = vmatprep.subr.mxu0 0.0
    %4459 = vmatpush2.xpose.msra.mxu0 0.0
    %4460 = vmatprep.subr.mxu0 0.0
    %4461 = vmatpush2.xpose.msra.mxu0 0.0
    %4462 = vmatprep.subr.mxu0 0.0
    %4463 = vmatpush2.xpose.msra.mxu0 0.0
    %4464 = vmatprep.subr.mxu0 0.0
    %4465 = vmatpush2.xpose.msra.mxu0 0.0
    %4466 = vmatprep.subr.mxu0 0.0
    %4467 = vmatpush2.xpose.msra.mxu0 0.0
    %4468 = vmatprep.subr.mxu0 0.0
    %4469 = vmatpush2.xpose.msra.mxu0 0.0
    %4470 = vmatprep.subr.mxu0 0.0
    %4471 = vmatpush2.xpose.msra.mxu0 0.0
    %4472 = vmatprep.subr.mxu0 0.0
    %4473 = vmatpush2.xpose.msra.mxu0 0.0
    %4474 = vmatprep.mubr.f32.mxu0 0.0
    %v4475 = vand.u32 %v4400, 4294901760
    %v4476 = vsub.f32 %v4400, %v4475
    %v4477 = vand.u32 %v4476, 4294901760
    %v4478 = vsub.f32 %v4476, %v4477
    %v4479 = vand.u32 %v4478, 4294901760
    %4480 = vmatmul.mubr.f32.gmra.mxu0 %v4479
    %v4481 = vpop.f32.mrf.mxu0
    %v4482 = vadd.f32 %v1230, %v4481
    %v4483 = vpop.f32.mrf.mxu0
    %4484 = vmatprep.mubr.f32.mxu0 0.0
    %v4485 = vand.u32 %v4402, 4294901760
    %v4486 = vsub.f32 %v4402, %v4485
    %v4487 = vand.u32 %v4486, 4294901760
    %v4488 = vsub.f32 %v4486, %v4487
    %v4489 = vand.u32 %v4488, 4294901760
    %4490 = vmatmul.mubr.f32.gmra.mxu0 %v4489
    %v4491 = vpop.f32.mrf.mxu0
    %v4492 = vadd.f32 %v1231, %v4491
    %v4493 = vpop.f32.mrf.mxu0
    %4494 = vdwg.mxu0
    %4495 = vmatprep.subr.mxu0 0.0
    %4496 = vmatpush1.xpose.msra.mxu0 0.0
    %4497 = vmatprep.subr.mxu0 0.0
    %4498 = vmatpush1.xpose.msra.mxu0 0.0
    %4499 = vmatprep.subr.mxu0 0.0
    %4500 = vmatpush1.xpose.msra.mxu0 0.0
    %4501 = vmatprep.subr.mxu0 0.0
    %4502 = vmatpush1.xpose.msra.mxu0 0.0
    %4503 = vmatprep.subr.mxu0 0.0
    %4504 = vmatpush1.xpose.msra.mxu0 0.0
    %4505 = vmatprep.subr.mxu0 0.0
    %4506 = vmatpush1.xpose.msra.mxu0 0.0
    %4507 = vmatprep.subr.mxu0 0.0
    %4508 = vmatpush1.xpose.msra.mxu0 0.0
    %4509 = vmatprep.subr.mxu0 0.0
    %4510 = vmatpush1.xpose.msra.mxu0 0.0
    %4511 = vmatprep.subr.mxu0 0.0
    %4512 = vmatpush1.xpose.msra.mxu0 0.0
    %4513 = vmatprep.subr.mxu0 0.0
    %4514 = vmatpush1.xpose.msra.mxu0 0.0
    %4515 = vmatprep.subr.mxu0 0.0
    %4516 = vmatpush1.xpose.msra.mxu0 0.0
    %4517 = vmatprep.subr.mxu0 0.0
    %4518 = vmatpush1.xpose.msra.mxu0 0.0
    %4519 = vmatprep.subr.mxu0 0.0
    %4520 = vmatpush1.xpose.msra.mxu0 0.0
    %4521 = vmatprep.subr.mxu0 0.0
    %4522 = vmatpush1.xpose.msra.mxu0 0.0
    %4523 = vmatprep.subr.mxu0 0.0
    %v4524 = vand.u32 %v4406, 4294901760
    %v4525 = vsub.f32 %v4406, %v4524
    %v4526 = vand.u32 %v4525, 4294901760
    %v4527 = vsub.f32 %v4525, %v4526
    %v4528 = vand.u32 %v4527, 4294901760
    %4529 = vmatpush1.xpose.msra.mxu0 %v4528
    %4530 = vmatprep.subr.mxu0 0.0
    %v4531 = vand.u32 %v4404, 4294901760
    %v4532 = vsub.f32 %v4404, %v4531
    %v4533 = vand.u32 %v4532, 4294901760
    %v4534 = vsub.f32 %v4532, %v4533
    %v4535 = vand.u32 %v4534, 4294901760
    %4536 = vmatpush1.xpose.msra.mxu0 %v4535
    %4537 = vmatprep.subr.mxu0 0.0
    %4538 = vmatpush2.xpose.msra.mxu0 0.0
    %4539 = vmatprep.subr.mxu0 0.0
    %4540 = vmatpush2.xpose.msra.mxu0 0.0
    %4541 = vmatprep.subr.mxu0 0.0
    %4542 = vmatpush2.xpose.msra.mxu0 0.0
    %4543 = vmatprep.subr.mxu0 0.0
    %4544 = vmatpush2.xpose.msra.mxu0 0.0
    %4545 = vmatprep.subr.mxu0 0.0
    %4546 = vmatpush2.xpose.msra.mxu0 0.0
    %4547 = vmatprep.subr.mxu0 0.0
    %4548 = vmatpush2.xpose.msra.mxu0 0.0
    %4549 = vmatprep.subr.mxu0 0.0
    %4550 = vmatpush2.xpose.msra.mxu0 0.0
    %4551 = vmatprep.subr.mxu0 0.0
    %4552 = vmatpush2.xpose.msra.mxu0 0.0
    %4553 = vmatprep.subr.mxu0 0.0
    %4554 = vmatpush2.xpose.msra.mxu0 0.0
    %4555 = vmatprep.subr.mxu0 0.0
    %4556 = vmatpush2.xpose.msra.mxu0 0.0
    %4557 = vmatprep.subr.mxu0 0.0
    %4558 = vmatpush2.xpose.msra.mxu0 0.0
    %4559 = vmatprep.subr.mxu0 0.0
    %4560 = vmatpush2.xpose.msra.mxu0 0.0
    %4561 = vmatprep.subr.mxu0 0.0
    %4562 = vmatpush2.xpose.msra.mxu0 0.0
    %4563 = vmatprep.subr.mxu0 0.0
    %4564 = vmatpush2.xpose.msra.mxu0 0.0
    %4565 = vmatprep.subr.mxu0 0.0
    %4566 = vmatpush2.xpose.msra.mxu0 0.0
    %4567 = vmatprep.subr.mxu0 0.0
    %4568 = vmatpush2.xpose.msra.mxu0 0.0
    %4569 = vmatprep.mubr.f32.mxu0 0.0
    %v4570 = vand.u32 %v4400, 4294901760
    %4571 = vmatmul.mubr.f32.gmra.mxu0 %v4570
    %v4572 = vpop.f32.mrf.mxu0
    %v4573 = vadd.f32 %v4482, %v4572
    %v4574 = vpop.f32.mrf.mxu0
    %4575 = vmatprep.mubr.f32.mxu0 0.0
    %v4576 = vand.u32 %v4402, 4294901760
    %4577 = vmatmul.mubr.f32.gmra.mxu0 %v4576
    %v4578 = vpop.f32.mrf.mxu0
    %v4579 = vadd.f32 %v4492, %v4578
    %v4580 = vpop.f32.mrf.mxu0
    %4581 = vdwg.mxu0
    %4582 = vmatprep.subr.mxu0 0.0
    %4583 = vmatpush1.xpose.msra.mxu0 0.0
    %4584 = vmatprep.subr.mxu0 0.0
    %4585 = vmatpush1.xpose.msra.mxu0 0.0
    %4586 = vmatprep.subr.mxu0 0.0
    %4587 = vmatpush1.xpose.msra.mxu0 0.0
    %4588 = vmatprep.subr.mxu0 0.0
    %4589 = vmatpush1.xpose.msra.mxu0 0.0
    %4590 = vmatprep.subr.mxu0 0.0
    %4591 = vmatpush1.xpose.msra.mxu0 0.0
    %4592 = vmatprep.subr.mxu0 0.0
    %4593 = vmatpush1.xpose.msra.mxu0 0.0
    %4594 = vmatprep.subr.mxu0 0.0
    %4595 = vmatpush1.xpose.msra.mxu0 0.0
    %4596 = vmatprep.subr.mxu0 0.0
    %4597 = vmatpush1.xpose.msra.mxu0 0.0
    %4598 = vmatprep.subr.mxu0 0.0
    %4599 = vmatpush1.xpose.msra.mxu0 0.0
    %4600 = vmatprep.subr.mxu0 0.0
    %4601 = vmatpush1.xpose.msra.mxu0 0.0
    %4602 = vmatprep.subr.mxu0 0.0
    %4603 = vmatpush1.xpose.msra.mxu0 0.0
    %4604 = vmatprep.subr.mxu0 0.0
    %4605 = vmatpush1.xpose.msra.mxu0 0.0
    %4606 = vmatprep.subr.mxu0 0.0
    %4607 = vmatpush1.xpose.msra.mxu0 0.0
    %4608 = vmatprep.subr.mxu0 0.0
    %4609 = vmatpush1.xpose.msra.mxu0 0.0
    %4610 = vmatprep.subr.mxu0 0.0
    %v4611 = vand.u32 %v4406, 4294901760
    %v4612 = vsub.f32 %v4406, %v4611
    %4613 = vmatpush1.xpose.msra.mxu0 %v4612
    %4614 = vmatprep.subr.mxu0 0.0
    %v4615 = vand.u32 %v4404, 4294901760
    %v4616 = vsub.f32 %v4404, %v4615
    %4617 = vmatpush1.xpose.msra.mxu0 %v4616
    %4618 = vmatprep.subr.mxu0 0.0
    %4619 = vmatpush2.xpose.msra.mxu0 0.0
    %4620 = vmatprep.subr.mxu0 0.0
    %4621 = vmatpush2.xpose.msra.mxu0 0.0
    %4622 = vmatprep.subr.mxu0 0.0
    %4623 = vmatpush2.xpose.msra.mxu0 0.0
    %4624 = vmatprep.subr.mxu0 0.0
    %4625 = vmatpush2.xpose.msra.mxu0 0.0
    %4626 = vmatprep.subr.mxu0 0.0
    %4627 = vmatpush2.xpose.msra.mxu0 0.0
    %4628 = vmatprep.subr.mxu0 0.0
    %4629 = vmatpush2.xpose.msra.mxu0 0.0
    %4630 = vmatprep.subr.mxu0 0.0
    %4631 = vmatpush2.xpose.msra.mxu0 0.0
    %4632 = vmatprep.subr.mxu0 0.0
    %4633 = vmatpush2.xpose.msra.mxu0 0.0
    %4634 = vmatprep.subr.mxu0 0.0
    %4635 = vmatpush2.xpose.msra.mxu0 0.0
    %4636 = vmatprep.subr.mxu0 0.0
    %4637 = vmatpush2.xpose.msra.mxu0 0.0
    %4638 = vmatprep.subr.mxu0 0.0
    %4639 = vmatpush2.xpose.msra.mxu0 0.0
    %4640 = vmatprep.subr.mxu0 0.0
    %4641 = vmatpush2.xpose.msra.mxu0 0.0
    %4642 = vmatprep.subr.mxu0 0.0
    %4643 = vmatpush2.xpose.msra.mxu0 0.0
    %4644 = vmatprep.subr.mxu0 0.0
    %4645 = vmatpush2.xpose.msra.mxu0 0.0
    %4646 = vmatprep.subr.mxu0 0.0
    %4647 = vmatpush2.xpose.msra.mxu0 0.0
    %4648 = vmatprep.subr.mxu0 0.0
    %4649 = vmatpush2.xpose.msra.mxu0 0.0
    %4650 = vmatprep.mubr.f32.mxu0 0.0
    %v4651 = vand.u32 %v4400, 4294901760
    %v4652 = vsub.f32 %v4400, %v4651
    %4653 = vmatmul.mubr.f32.gmra.mxu0 %v4652
    %v4654 = vpop.f32.mrf.mxu0
    %v4655 = vadd.f32 %v4573, %v4654
    %v4656 = vpop.f32.mrf.mxu0
    %4657 = vmatprep.mubr.f32.mxu0 0.0
    %v4658 = vand.u32 %v4402, 4294901760
    %v4659 = vsub.f32 %v4402, %v4658
    %4660 = vmatmul.mubr.f32.gmra.mxu0 %v4659
    %v4661 = vpop.f32.mrf.mxu0
    %v4662 = vadd.f32 %v4579, %v4661
    %v4663 = vpop.f32.mrf.mxu0
    %4664 = vdwg.mxu0
    %4665 = vmatprep.subr.mxu0 0.0
    %4666 = vmatpush1.xpose.msra.mxu0 0.0
    %4667 = vmatprep.subr.mxu0 0.0
    %4668 = vmatpush1.xpose.msra.mxu0 0.0
    %4669 = vmatprep.subr.mxu0 0.0
    %4670 = vmatpush1.xpose.msra.mxu0 0.0
    %4671 = vmatprep.subr.mxu0 0.0
    %4672 = vmatpush1.xpose.msra.mxu0 0.0
    %4673 = vmatprep.subr.mxu0 0.0
    %4674 = vmatpush1.xpose.msra.mxu0 0.0
    %4675 = vmatprep.subr.mxu0 0.0
    %4676 = vmatpush1.xpose.msra.mxu0 0.0
    %4677 = vmatprep.subr.mxu0 0.0
    %4678 = vmatpush1.xpose.msra.mxu0 0.0
    %4679 = vmatprep.subr.mxu0 0.0
    %4680 = vmatpush1.xpose.msra.mxu0 0.0
    %4681 = vmatprep.subr.mxu0 0.0
    %4682 = vmatpush1.xpose.msra.mxu0 0.0
    %4683 = vmatprep.subr.mxu0 0.0
    %4684 = vmatpush1.xpose.msra.mxu0 0.0
    %4685 = vmatprep.subr.mxu0 0.0
    %4686 = vmatpush1.xpose.msra.mxu0 0.0
    %4687 = vmatprep.subr.mxu0 0.0
    %4688 = vmatpush1.xpose.msra.mxu0 0.0
    %4689 = vmatprep.subr.mxu0 0.0
    %4690 = vmatpush1.xpose.msra.mxu0 0.0
    %4691 = vmatprep.subr.mxu0 0.0
    %4692 = vmatpush1.xpose.msra.mxu0 0.0
    %4693 = vmatprep.subr.mxu0 0.0
    %v4694 = vand.u32 %v4406, 4294901760
    %4695 = vmatpush1.xpose.msra.mxu0 %v4694
    %4696 = vmatprep.subr.mxu0 0.0
    %v4697 = vand.u32 %v4404, 4294901760
    %4698 = vmatpush1.xpose.msra.mxu0 %v4697
    %4699 = vmatprep.subr.mxu0 0.0
    %4700 = vmatpush2.xpose.msra.mxu0 0.0
    %4701 = vmatprep.subr.mxu0 0.0
    %4702 = vmatpush2.xpose.msra.mxu0 0.0
    %4703 = vmatprep.subr.mxu0 0.0
    %4704 = vmatpush2.xpose.msra.mxu0 0.0
    %4705 = vmatprep.subr.mxu0 0.0
    %4706 = vmatpush2.xpose.msra.mxu0 0.0
    %4707 = vmatprep.subr.mxu0 0.0
    %4708 = vmatpush2.xpose.msra.mxu0 0.0
    %4709 = vmatprep.subr.mxu0 0.0
    %4710 = vmatpush2.xpose.msra.mxu0 0.0
    %4711 = vmatprep.subr.mxu0 0.0
    %4712 = vmatpush2.xpose.msra.mxu0 0.0
    %4713 = vmatprep.subr.mxu0 0.0
    %4714 = vmatpush2.xpose.msra.mxu0 0.0
    %4715 = vmatprep.subr.mxu0 0.0
    %4716 = vmatpush2.xpose.msra.mxu0 0.0
    %4717 = vmatprep.subr.mxu0 0.0
    %4718 = vmatpush2.xpose.msra.mxu0 0.0
    %4719 = vmatprep.subr.mxu0 0.0
    %4720 = vmatpush2.xpose.msra.mxu0 0.0
    %4721 = vmatprep.subr.mxu0 0.0
    %4722 = vmatpush2.xpose.msra.mxu0 0.0
    %4723 = vmatprep.subr.mxu0 0.0
    %4724 = vmatpush2.xpose.msra.mxu0 0.0
    %4725 = vmatprep.subr.mxu0 0.0
    %4726 = vmatpush2.xpose.msra.mxu0 0.0
    %4727 = vmatprep.subr.mxu0 0.0
    %4728 = vmatpush2.xpose.msra.mxu0 0.0
    %4729 = vmatprep.subr.mxu0 0.0
    %4730 = vmatpush2.xpose.msra.mxu0 0.0
    %4731 = vmatprep.mubr.f32.mxu0 0.0
    %v4732 = vand.u32 %v4400, 4294901760
    %v4733 = vsub.f32 %v4400, %v4732
    %v4734 = vand.u32 %v4733, 4294901760
    %4735 = vmatmul.mubr.f32.gmra.mxu0 %v4734
    %v4736 = vpop.f32.mrf.mxu0
    %v4737 = vadd.f32 %v4655, %v4736
    %v4738 = vpop.f32.mrf.mxu0
    %4739 = vmatprep.mubr.f32.mxu0 0.0
    %v4740 = vand.u32 %v4402, 4294901760
    %v4741 = vsub.f32 %v4402, %v4740
    %v4742 = vand.u32 %v4741, 4294901760
    %4743 = vmatmul.mubr.f32.gmra.mxu0 %v4742
    %v4744 = vpop.f32.mrf.mxu0
    %v4745 = vadd.f32 %v4662, %v4744
    %v4746 = vpop.f32.mrf.mxu0
    %4747 = vdwg.mxu0
    %4748 = vmatprep.subr.mxu0 0.0
    %4749 = vmatpush1.xpose.msra.mxu0 0.0
    %4750 = vmatprep.subr.mxu0 0.0
    %4751 = vmatpush1.xpose.msra.mxu0 0.0
    %4752 = vmatprep.subr.mxu0 0.0
    %4753 = vmatpush1.xpose.msra.mxu0 0.0
    %4754 = vmatprep.subr.mxu0 0.0
    %4755 = vmatpush1.xpose.msra.mxu0 0.0
    %4756 = vmatprep.subr.mxu0 0.0
    %4757 = vmatpush1.xpose.msra.mxu0 0.0
    %4758 = vmatprep.subr.mxu0 0.0
    %4759 = vmatpush1.xpose.msra.mxu0 0.0
    %4760 = vmatprep.subr.mxu0 0.0
    %4761 = vmatpush1.xpose.msra.mxu0 0.0
    %4762 = vmatprep.subr.mxu0 0.0
    %4763 = vmatpush1.xpose.msra.mxu0 0.0
    %4764 = vmatprep.subr.mxu0 0.0
    %4765 = vmatpush1.xpose.msra.mxu0 0.0
    %4766 = vmatprep.subr.mxu0 0.0
    %4767 = vmatpush1.xpose.msra.mxu0 0.0
    %4768 = vmatprep.subr.mxu0 0.0
    %4769 = vmatpush1.xpose.msra.mxu0 0.0
    %4770 = vmatprep.subr.mxu0 0.0
    %4771 = vmatpush1.xpose.msra.mxu0 0.0
    %4772 = vmatprep.subr.mxu0 0.0
    %4773 = vmatpush1.xpose.msra.mxu0 0.0
    %4774 = vmatprep.subr.mxu0 0.0
    %4775 = vmatpush1.xpose.msra.mxu0 0.0
    %4776 = vmatprep.subr.mxu0 0.0
    %v4777 = vand.u32 %v4406, 4294901760
    %v4778 = vsub.f32 %v4406, %v4777
    %v4779 = vand.u32 %v4778, 4294901760
    %4780 = vmatpush1.xpose.msra.mxu0 %v4779
    %4781 = vmatprep.subr.mxu0 0.0
    %v4782 = vand.u32 %v4404, 4294901760
    %v4783 = vsub.f32 %v4404, %v4782
    %v4784 = vand.u32 %v4783, 4294901760
    %4785 = vmatpush1.xpose.msra.mxu0 %v4784
    %4786 = vmatprep.subr.mxu0 0.0
    %4787 = vmatpush2.xpose.msra.mxu0 0.0
    %4788 = vmatprep.subr.mxu0 0.0
    %4789 = vmatpush2.xpose.msra.mxu0 0.0
    %4790 = vmatprep.subr.mxu0 0.0
    %4791 = vmatpush2.xpose.msra.mxu0 0.0
    %4792 = vmatprep.subr.mxu0 0.0
    %4793 = vmatpush2.xpose.msra.mxu0 0.0
    %4794 = vmatprep.subr.mxu0 0.0
    %4795 = vmatpush2.xpose.msra.mxu0 0.0
    %4796 = vmatprep.subr.mxu0 0.0
    %4797 = vmatpush2.xpose.msra.mxu0 0.0
    %4798 = vmatprep.subr.mxu0 0.0
    %4799 = vmatpush2.xpose.msra.mxu0 0.0
    %4800 = vmatprep.subr.mxu0 0.0
    %4801 = vmatpush2.xpose.msra.mxu0 0.0
    %4802 = vmatprep.subr.mxu0 0.0
    %4803 = vmatpush2.xpose.msra.mxu0 0.0
    %4804 = vmatprep.subr.mxu0 0.0
    %4805 = vmatpush2.xpose.msra.mxu0 0.0
    %4806 = vmatprep.subr.mxu0 0.0
    %4807 = vmatpush2.xpose.msra.mxu0 0.0
    %4808 = vmatprep.subr.mxu0 0.0
    %4809 = vmatpush2.xpose.msra.mxu0 0.0
    %4810 = vmatprep.subr.mxu0 0.0
    %4811 = vmatpush2.xpose.msra.mxu0 0.0
    %4812 = vmatprep.subr.mxu0 0.0
    %4813 = vmatpush2.xpose.msra.mxu0 0.0
    %4814 = vmatprep.subr.mxu0 0.0
    %4815 = vmatpush2.xpose.msra.mxu0 0.0
    %4816 = vmatprep.subr.mxu0 0.0
    %4817 = vmatpush2.xpose.msra.mxu0 0.0
    %4818 = vmatprep.mubr.f32.mxu0 0.0
    %v4819 = vand.u32 %v4400, 4294901760
    %4820 = vmatmul.mubr.f32.gmra.mxu0 %v4819
    %v4821 = vpop.f32.mrf.mxu0
    %v4822 = vadd.f32 %v4737, %v4821
    %v4823 = vpop.f32.mrf.mxu0
    %4824 = vmatprep.mubr.f32.mxu0 0.0
    %v4825 = vand.u32 %v4402, 4294901760
    %4826 = vmatmul.mubr.f32.gmra.mxu0 %v4825
    %v4827 = vpop.f32.mrf.mxu0
    %v4828 = vadd.f32 %v4745, %v4827
    %v4829 = vpop.f32.mrf.mxu0
    %4830 = vdwg.mxu0
    %4831 = vmatprep.subr.mxu0 0.0
    %4832 = vmatpush1.xpose.msra.mxu0 0.0
    %4833 = vmatprep.subr.mxu0 0.0
    %4834 = vmatpush1.xpose.msra.mxu0 0.0
    %4835 = vmatprep.subr.mxu0 0.0
    %4836 = vmatpush1.xpose.msra.mxu0 0.0
    %4837 = vmatprep.subr.mxu0 0.0
    %4838 = vmatpush1.xpose.msra.mxu0 0.0
    %4839 = vmatprep.subr.mxu0 0.0
    %4840 = vmatpush1.xpose.msra.mxu0 0.0
    %4841 = vmatprep.subr.mxu0 0.0
    %4842 = vmatpush1.xpose.msra.mxu0 0.0
    %4843 = vmatprep.subr.mxu0 0.0
    %4844 = vmatpush1.xpose.msra.mxu0 0.0
    %4845 = vmatprep.subr.mxu0 0.0
    %4846 = vmatpush1.xpose.msra.mxu0 0.0
    %4847 = vmatprep.subr.mxu0 0.0
    %4848 = vmatpush1.xpose.msra.mxu0 0.0
    %4849 = vmatprep.subr.mxu0 0.0
    %4850 = vmatpush1.xpose.msra.mxu0 0.0
    %4851 = vmatprep.subr.mxu0 0.0
    %4852 = vmatpush1.xpose.msra.mxu0 0.0
    %4853 = vmatprep.subr.mxu0 0.0
    %4854 = vmatpush1.xpose.msra.mxu0 0.0
    %4855 = vmatprep.subr.mxu0 0.0
    %4856 = vmatpush1.xpose.msra.mxu0 0.0
    %4857 = vmatprep.subr.mxu0 0.0
    %4858 = vmatpush1.xpose.msra.mxu0 0.0
    %4859 = vmatprep.subr.mxu0 0.0
    %v4860 = vand.u32 %v4406, 4294901760
    %4861 = vmatpush1.xpose.msra.mxu0 %v4860
    %4862 = vmatprep.subr.mxu0 0.0
    %v4863 = vand.u32 %v4404, 4294901760
    %4864 = vmatpush1.xpose.msra.mxu0 %v4863
    %4865 = vmatprep.subr.mxu0 0.0
    %4866 = vmatpush2.xpose.msra.mxu0 0.0
    %4867 = vmatprep.subr.mxu0 0.0
    %4868 = vmatpush2.xpose.msra.mxu0 0.0
    %4869 = vmatprep.subr.mxu0 0.0
    %4870 = vmatpush2.xpose.msra.mxu0 0.0
    %4871 = vmatprep.subr.mxu0 0.0
    %4872 = vmatpush2.xpose.msra.mxu0 0.0
    %4873 = vmatprep.subr.mxu0 0.0
    %4874 = vmatpush2.xpose.msra.mxu0 0.0
    %4875 = vmatprep.subr.mxu0 0.0
    %4876 = vmatpush2.xpose.msra.mxu0 0.0
    %4877 = vmatprep.subr.mxu0 0.0
    %4878 = vmatpush2.xpose.msra.mxu0 0.0
    %4879 = vmatprep.subr.mxu0 0.0
    %4880 = vmatpush2.xpose.msra.mxu0 0.0
    %4881 = vmatprep.subr.mxu0 0.0
    %4882 = vmatpush2.xpose.msra.mxu0 0.0
    %4883 = vmatprep.subr.mxu0 0.0
    %4884 = vmatpush2.xpose.msra.mxu0 0.0
    %4885 = vmatprep.subr.mxu0 0.0
    %4886 = vmatpush2.xpose.msra.mxu0 0.0
    %4887 = vmatprep.subr.mxu0 0.0
    %4888 = vmatpush2.xpose.msra.mxu0 0.0
    %4889 = vmatprep.subr.mxu0 0.0
    %4890 = vmatpush2.xpose.msra.mxu0 0.0
    %4891 = vmatprep.subr.mxu0 0.0
    %4892 = vmatpush2.xpose.msra.mxu0 0.0
    %4893 = vmatprep.subr.mxu0 0.0
    %4894 = vmatpush2.xpose.msra.mxu0 0.0
    %4895 = vmatprep.subr.mxu0 0.0
    %4896 = vmatpush2.xpose.msra.mxu0 0.0
    %4897 = vmatprep.mubr.f32.mxu0 0.0
    %v4898 = vand.u32 %v4400, 4294901760
    %4899 = vmatmul.mubr.f32.gmra.mxu0 %v4898
    %v4900 = vpop.f32.mrf.mxu0
    %v4901 = vadd.f32 %v4822, %v4900
    %v4902 = vpop.f32.mrf.mxu0
    %4903 = vmatprep.mubr.f32.mxu0 0.0
    %v4904 = vand.u32 %v4402, 4294901760
    %4905 = vmatmul.mubr.f32.gmra.mxu0 %v4904
    %v4906 = vpop.f32.mrf.mxu0
    %v4907 = vadd.f32 %v4828, %v4906
    %v4908 = vpop.f32.mrf.mxu0
    %4909 = vdwg.mxu0
    %v4910 = vsel %vm1751, %v4901, -inf
    %4911 = vmax.xlane.f32.xlu0 %v4910
    %v4912 = vpop.xlane.xlu0 %4911
    %v4913 = vsel %vm1751, %v4907, -inf
    %4914 = vmax.xlane.f32.xlu0 %v4913
    %v4915 = vpop.xlane.xlu0 %4914
    %v4916 = vsub.f32 %v4901, %v4912
    %v4917 = vsub.f32 %v4907, %v4915
    %v4918 = vmul.f32 %v4916, 1.442695
    %v4919 = vpow.pop %v4918
    %v4920 = vmul.f32 %v4917, 1.442695
    %v4921 = vpow.pop %v4920
    %v4922 = vsel %vm1751, %v4919, 0.0
    %4923 = vadd.xlane.f32.xlu0 %v4922
    %v4924 = vpop.xlane.xlu0 %4923
    %v4925 = vsel %vm1751, %v4921, 0.0
    %4926 = vadd.xlane.f32.xlu0 %v4925
    %v4927 = vpop.xlane.xlu0 %4926
    %v4928 = vrcp.pop %v4924
    %v4929 = vrcp.pop %v4927
    %v4930 = vmul.f32 %v4919, %v4928
    %v4931 = vmul.f32 %v4921, %v4929
    %4932 = vrot.lane.b32.xlu0 %v1178, 104
    %v4933 = vpop.permute.xlu0 %4932
    %4934 = vrot.lane.b32.xlu0 %v1184, 104
    %v4935 = vpop.permute.xlu0 %4934
    %v4939 = vsel %vm1751, %v4930, 0
    %v4942 = vsel %vm1751, %v4931, 0
    %4944 = vmatprep.subr.mxu0 0.0
    %4945 = vmatpush1.msra.mxu0 0.0
    %4946 = vmatprep.subr.mxu0 0.0
    %4947 = vmatpush1.msra.mxu0 0.0
    %4948 = vmatprep.subr.mxu0 0.0
    %4949 = vmatpush1.msra.mxu0 0.0
    %4950 = vmatprep.subr.mxu0 0.0
    %4951 = vmatpush1.msra.mxu0 0.0
    %4952 = vmatprep.subr.mxu0 0.0
    %4953 = vmatpush1.msra.mxu0 0.0
    %4954 = vmatprep.subr.mxu0 0.0
    %4955 = vmatpush1.msra.mxu0 0.0
    %4956 = vmatprep.subr.mxu0 0.0
    %4957 = vmatpush1.msra.mxu0 0.0
    %4958 = vmatprep.subr.mxu0 0.0
    %4959 = vmatpush1.msra.mxu0 0.0
    %4960 = vmatprep.subr.mxu0 0.0
    %4961 = vmatpush1.msra.mxu0 0.0
    %4962 = vmatprep.subr.mxu0 0.0
    %4963 = vmatpush1.msra.mxu0 0.0
    %4964 = vmatprep.subr.mxu0 0.0
    %4965 = vmatpush1.msra.mxu0 0.0
    %4966 = vmatprep.subr.mxu0 0.0
    %4967 = vmatpush1.msra.mxu0 0.0
    %4968 = vmatprep.subr.mxu0 0.0
    %4969 = vmatpush1.msra.mxu0 0.0
    %4970 = vmatprep.subr.mxu0 0.0
    %4971 = vmatpush1.msra.mxu0 0.0
    %4972 = vmatprep.subr.mxu0 0.0
    %v4973 = vand.u32 %v4935, 4294901760
    %4974 = vmatpush1.msra.mxu0 %v4973
    %4975 = vmatprep.subr.mxu0 0.0
    %v4976 = vand.u32 %v4933, 4294901760
    %4977 = vmatpush1.msra.mxu0 %v4976
    %4978 = vmatprep.subr.mxu0 0.0
    %4979 = vmatpush2.msra.mxu0 0.0
    %4980 = vmatprep.subr.mxu0 0.0
    %4981 = vmatpush2.msra.mxu0 0.0
    %4982 = vmatprep.subr.mxu0 0.0
    %4983 = vmatpush2.msra.mxu0 0.0
    %4984 = vmatprep.subr.mxu0 0.0
    %4985 = vmatpush2.msra.mxu0 0.0
    %4986 = vmatprep.subr.mxu0 0.0
    %4987 = vmatpush2.msra.mxu0 0.0
    %4988 = vmatprep.subr.mxu0 0.0
    %4989 = vmatpush2.msra.mxu0 0.0
    %4990 = vmatprep.subr.mxu0 0.0
    %4991 = vmatpush2.msra.mxu0 0.0
    %4992 = vmatprep.subr.mxu0 0.0
    %4993 = vmatpush2.msra.mxu0 0.0
    %4994 = vmatprep.subr.mxu0 0.0
    %4995 = vmatpush2.msra.mxu0 0.0
    %4996 = vmatprep.subr.mxu0 0.0
    %4997 = vmatpush2.msra.mxu0 0.0
    %4998 = vmatprep.subr.mxu0 0.0
    %4999 = vmatpush2.msra.mxu0 0.0
    %5000 = vmatprep.subr.mxu0 0.0
    %5001 = vmatpush2.msra.mxu0 0.0
    %5002 = vmatprep.subr.mxu0 0.0
    %5003 = vmatpush2.msra.mxu0 0.0
    %5004 = vmatprep.subr.mxu0 0.0
    %5005 = vmatpush2.msra.mxu0 0.0
    %5006 = vmatprep.subr.mxu0 0.0
    %5007 = vmatpush2.msra.mxu0 0.0
    %5008 = vmatprep.subr.mxu0 0.0
    %5009 = vmatpush2.msra.mxu0 0.0
    %5010 = vmatprep.mubr.f32.mxu0 0.0
    %v5011 = vand.u32 %v4939, 4294901760
    %v5012 = vsub.f32 %v4939, %v5011
    %v5013 = vand.u32 %v5012, 4294901760
    %v5014 = vsub.f32 %v5012, %v5013
    %v5015 = vand.u32 %v5014, 4294901760
    %5016 = vmatmul.mubr.f32.gmra.mxu0 %v5015
    %v5017 = vpop.f32.mrf.mxu0
    %v5018 = vadd.f32 0.0, %v5017
    %v5019 = vpop.f32.mrf.mxu0
    %5020 = vmatprep.mubr.f32.mxu0 0.0
    %v5021 = vand.u32 %v4942, 4294901760
    %v5022 = vsub.f32 %v4942, %v5021
    %v5023 = vand.u32 %v5022, 4294901760
    %v5024 = vsub.f32 %v5022, %v5023
    %v5025 = vand.u32 %v5024, 4294901760
    %5026 = vmatmul.mubr.f32.gmra.mxu0 %v5025
    %v5027 = vpop.f32.mrf.mxu0
    %v5028 = vadd.f32 0.0, %v5027
    %v5029 = vpop.f32.mrf.mxu0
    %5030 = vdwg.mxu0
    %5031 = vmatprep.subr.mxu0 0.0
    %5032 = vmatpush1.msra.mxu0 0.0
    %5033 = vmatprep.subr.mxu0 0.0
    %5034 = vmatpush1.msra.mxu0 0.0
    %5035 = vmatprep.subr.mxu0 0.0
    %5036 = vmatpush1.msra.mxu0 0.0
    %5037 = vmatprep.subr.mxu0 0.0
    %5038 = vmatpush1.msra.mxu0 0.0
    %5039 = vmatprep.subr.mxu0 0.0
    %5040 = vmatpush1.msra.mxu0 0.0
    %5041 = vmatprep.subr.mxu0 0.0
    %5042 = vmatpush1.msra.mxu0 0.0
    %5043 = vmatprep.subr.mxu0 0.0
    %5044 = vmatpush1.msra.mxu0 0.0
    %5045 = vmatprep.subr.mxu0 0.0
    %5046 = vmatpush1.msra.mxu0 0.0
    %5047 = vmatprep.subr.mxu0 0.0
    %5048 = vmatpush1.msra.mxu0 0.0
    %5049 = vmatprep.subr.mxu0 0.0
    %5050 = vmatpush1.msra.mxu0 0.0
    %5051 = vmatprep.subr.mxu0 0.0
    %5052 = vmatpush1.msra.mxu0 0.0
    %5053 = vmatprep.subr.mxu0 0.0
    %5054 = vmatpush1.msra.mxu0 0.0
    %5055 = vmatprep.subr.mxu0 0.0
    %5056 = vmatpush1.msra.mxu0 0.0
    %5057 = vmatprep.subr.mxu0 0.0
    %5058 = vmatpush1.msra.mxu0 0.0
    %5059 = vmatprep.subr.mxu0 0.0
    %v5060 = vand.u32 %v4935, 4294901760
    %v5061 = vsub.f32 %v4935, %v5060
    %v5062 = vand.u32 %v5061, 4294901760
    %v5063 = vsub.f32 %v5061, %v5062
    %v5064 = vand.u32 %v5063, 4294901760
    %5065 = vmatpush1.msra.mxu0 %v5064
    %5066 = vmatprep.subr.mxu0 0.0
    %v5067 = vand.u32 %v4933, 4294901760
    %v5068 = vsub.f32 %v4933, %v5067
    %v5069 = vand.u32 %v5068, 4294901760
    %v5070 = vsub.f32 %v5068, %v5069
    %v5071 = vand.u32 %v5070, 4294901760
    %5072 = vmatpush1.msra.mxu0 %v5071
    %5073 = vmatprep.subr.mxu0 0.0
    %5074 = vmatpush2.msra.mxu0 0.0
    %5075 = vmatprep.subr.mxu0 0.0
    %5076 = vmatpush2.msra.mxu0 0.0
    %5077 = vmatprep.subr.mxu0 0.0
    %5078 = vmatpush2.msra.mxu0 0.0
    %5079 = vmatprep.subr.mxu0 0.0
    %5080 = vmatpush2.msra.mxu0 0.0
    %5081 = vmatprep.subr.mxu0 0.0
    %5082 = vmatpush2.msra.mxu0 0.0
    %5083 = vmatprep.subr.mxu0 0.0
    %5084 = vmatpush2.msra.mxu0 0.0
    %5085 = vmatprep.subr.mxu0 0.0
    %5086 = vmatpush2.msra.mxu0 0.0
    %5087 = vmatprep.subr.mxu0 0.0
    %5088 = vmatpush2.msra.mxu0 0.0
    %5089 = vmatprep.subr.mxu0 0.0
    %5090 = vmatpush2.msra.mxu0 0.0
    %5091 = vmatprep.subr.mxu0 0.0
    %5092 = vmatpush2.msra.mxu0 0.0
    %5093 = vmatprep.subr.mxu0 0.0
    %5094 = vmatpush2.msra.mxu0 0.0
    %5095 = vmatprep.subr.mxu0 0.0
    %5096 = vmatpush2.msra.mxu0 0.0
    %5097 = vmatprep.subr.mxu0 0.0
    %5098 = vmatpush2.msra.mxu0 0.0
    %5099 = vmatprep.subr.mxu0 0.0
    %5100 = vmatpush2.msra.mxu0 0.0
    %5101 = vmatprep.subr.mxu0 0.0
    %5102 = vmatpush2.msra.mxu0 0.0
    %5103 = vmatprep.subr.mxu0 0.0
    %5104 = vmatpush2.msra.mxu0 0.0
    %5105 = vmatprep.mubr.f32.mxu0 0.0
    %v5106 = vand.u32 %v4939, 4294901760
    %5107 = vmatmul.mubr.f32.gmra.mxu0 %v5106
    %v5108 = vpop.f32.mrf.mxu0
    %v5109 = vadd.f32 %v5018, %v5108
    %v5110 = vpop.f32.mrf.mxu0
    %5111 = vmatprep.mubr.f32.mxu0 0.0
    %v5112 = vand.u32 %v4942, 4294901760
    %5113 = vmatmul.mubr.f32.gmra.mxu0 %v5112
    %v5114 = vpop.f32.mrf.mxu0
    %v5115 = vadd.f32 %v5028, %v5114
    %v5116 = vpop.f32.mrf.mxu0
    %5117 = vdwg.mxu0
    %5118 = vmatprep.subr.mxu0 0.0
    %5119 = vmatpush1.msra.mxu0 0.0
    %5120 = vmatprep.subr.mxu0 0.0
    %5121 = vmatpush1.msra.mxu0 0.0
    %5122 = vmatprep.subr.mxu0 0.0
    %5123 = vmatpush1.msra.mxu0 0.0
    %5124 = vmatprep.subr.mxu0 0.0
    %5125 = vmatpush1.msra.mxu0 0.0
    %5126 = vmatprep.subr.mxu0 0.0
    %5127 = vmatpush1.msra.mxu0 0.0
    %5128 = vmatprep.subr.mxu0 0.0
    %5129 = vmatpush1.msra.mxu0 0.0
    %5130 = vmatprep.subr.mxu0 0.0
    %5131 = vmatpush1.msra.mxu0 0.0
    %5132 = vmatprep.subr.mxu0 0.0
    %5133 = vmatpush1.msra.mxu0 0.0
    %5134 = vmatprep.subr.mxu0 0.0
    %5135 = vmatpush1.msra.mxu0 0.0
    %5136 = vmatprep.subr.mxu0 0.0
    %5137 = vmatpush1.msra.mxu0 0.0
    %5138 = vmatprep.subr.mxu0 0.0
    %5139 = vmatpush1.msra.mxu0 0.0
    %5140 = vmatprep.subr.mxu0 0.0
    %5141 = vmatpush1.msra.mxu0 0.0
    %5142 = vmatprep.subr.mxu0 0.0
    %5143 = vmatpush1.msra.mxu0 0.0
    %5144 = vmatprep.subr.mxu0 0.0
    %5145 = vmatpush1.msra.mxu0 0.0
    %5146 = vmatprep.subr.mxu0 0.0
    %v5147 = vand.u32 %v4935, 4294901760
    %v5148 = vsub.f32 %v4935, %v5147
    %5149 = vmatpush1.msra.mxu0 %v5148
    %5150 = vmatprep.subr.mxu0 0.0
    %v5151 = vand.u32 %v4933, 4294901760
    %v5152 = vsub.f32 %v4933, %v5151
    %5153 = vmatpush1.msra.mxu0 %v5152
    %5154 = vmatprep.subr.mxu0 0.0
    %5155 = vmatpush2.msra.mxu0 0.0
    %5156 = vmatprep.subr.mxu0 0.0
    %5157 = vmatpush2.msra.mxu0 0.0
    %5158 = vmatprep.subr.mxu0 0.0
    %5159 = vmatpush2.msra.mxu0 0.0
    %5160 = vmatprep.subr.mxu0 0.0
    %5161 = vmatpush2.msra.mxu0 0.0
    %5162 = vmatprep.subr.mxu0 0.0
    %5163 = vmatpush2.msra.mxu0 0.0
    %5164 = vmatprep.subr.mxu0 0.0
    %5165 = vmatpush2.msra.mxu0 0.0
    %5166 = vmatprep.subr.mxu0 0.0
    %5167 = vmatpush2.msra.mxu0 0.0
    %5168 = vmatprep.subr.mxu0 0.0
    %5169 = vmatpush2.msra.mxu0 0.0
    %5170 = vmatprep.subr.mxu0 0.0
    %5171 = vmatpush2.msra.mxu0 0.0
    %5172 = vmatprep.subr.mxu0 0.0
    %5173 = vmatpush2.msra.mxu0 0.0
    %5174 = vmatprep.subr.mxu0 0.0
    %5175 = vmatpush2.msra.mxu0 0.0
    %5176 = vmatprep.subr.mxu0 0.0
    %5177 = vmatpush2.msra.mxu0 0.0
    %5178 = vmatprep.subr.mxu0 0.0
    %5179 = vmatpush2.msra.mxu0 0.0
    %5180 = vmatprep.subr.mxu0 0.0
    %5181 = vmatpush2.msra.mxu0 0.0
    %5182 = vmatprep.subr.mxu0 0.0
    %5183 = vmatpush2.msra.mxu0 0.0
    %5184 = vmatprep.subr.mxu0 0.0
    %5185 = vmatpush2.msra.mxu0 0.0
    %5186 = vmatprep.mubr.f32.mxu0 0.0
    %v5187 = vand.u32 %v4939, 4294901760
    %v5188 = vsub.f32 %v4939, %v5187
    %5189 = vmatmul.mubr.f32.gmra.mxu0 %v5188
    %v5190 = vpop.f32.mrf.mxu0
    %v5191 = vadd.f32 %v5109, %v5190
    %v5192 = vpop.f32.mrf.mxu0
    %5193 = vmatprep.mubr.f32.mxu0 0.0
    %v5194 = vand.u32 %v4942, 4294901760
    %v5195 = vsub.f32 %v4942, %v5194
    %5196 = vmatmul.mubr.f32.gmra.mxu0 %v5195
    %v5197 = vpop.f32.mrf.mxu0
    %v5198 = vadd.f32 %v5115, %v5197
    %v5199 = vpop.f32.mrf.mxu0
    %5200 = vdwg.mxu0
    %5201 = vmatprep.subr.mxu0 0.0
    %5202 = vmatpush1.msra.mxu0 0.0
    %5203 = vmatprep.subr.mxu0 0.0
    %5204 = vmatpush1.msra.mxu0 0.0
    %5205 = vmatprep.subr.mxu0 0.0
    %5206 = vmatpush1.msra.mxu0 0.0
    %5207 = vmatprep.subr.mxu0 0.0
    %5208 = vmatpush1.msra.mxu0 0.0
    %5209 = vmatprep.subr.mxu0 0.0
    %5210 = vmatpush1.msra.mxu0 0.0
    %5211 = vmatprep.subr.mxu0 0.0
    %5212 = vmatpush1.msra.mxu0 0.0
    %5213 = vmatprep.subr.mxu0 0.0
    %5214 = vmatpush1.msra.mxu0 0.0
    %5215 = vmatprep.subr.mxu0 0.0
    %5216 = vmatpush1.msra.mxu0 0.0
    %5217 = vmatprep.subr.mxu0 0.0
    %5218 = vmatpush1.msra.mxu0 0.0
    %5219 = vmatprep.subr.mxu0 0.0
    %5220 = vmatpush1.msra.mxu0 0.0
    %5221 = vmatprep.subr.mxu0 0.0
    %5222 = vmatpush1.msra.mxu0 0.0
    %5223 = vmatprep.subr.mxu0 0.0
    %5224 = vmatpush1.msra.mxu0 0.0
    %5225 = vmatprep.subr.mxu0 0.0
    %5226 = vmatpush1.msra.mxu0 0.0
    %5227 = vmatprep.subr.mxu0 0.0
    %5228 = vmatpush1.msra.mxu0 0.0
    %5229 = vmatprep.subr.mxu0 0.0
    %v5230 = vand.u32 %v4935, 4294901760
    %5231 = vmatpush1.msra.mxu0 %v5230
    %5232 = vmatprep.subr.mxu0 0.0
    %v5233 = vand.u32 %v4933, 4294901760
    %5234 = vmatpush1.msra.mxu0 %v5233
    %5235 = vmatprep.subr.mxu0 0.0
    %5236 = vmatpush2.msra.mxu0 0.0
    %5237 = vmatprep.subr.mxu0 0.0
    %5238 = vmatpush2.msra.mxu0 0.0
    %5239 = vmatprep.subr.mxu0 0.0
    %5240 = vmatpush2.msra.mxu0 0.0
    %5241 = vmatprep.subr.mxu0 0.0
    %5242 = vmatpush2.msra.mxu0 0.0
    %5243 = vmatprep.subr.mxu0 0.0
    %5244 = vmatpush2.msra.mxu0 0.0
    %5245 = vmatprep.subr.mxu0 0.0
    %5246 = vmatpush2.msra.mxu0 0.0
    %5247 = vmatprep.subr.mxu0 0.0
    %5248 = vmatpush2.msra.mxu0 0.0
    %5249 = vmatprep.subr.mxu0 0.0
    %5250 = vmatpush2.msra.mxu0 0.0
    %5251 = vmatprep.subr.mxu0 0.0
    %5252 = vmatpush2.msra.mxu0 0.0
    %5253 = vmatprep.subr.mxu0 0.0
    %5254 = vmatpush2.msra.mxu0 0.0
    %5255 = vmatprep.subr.mxu0 0.0
    %5256 = vmatpush2.msra.mxu0 0.0
    %5257 = vmatprep.subr.mxu0 0.0
    %5258 = vmatpush2.msra.mxu0 0.0
    %5259 = vmatprep.subr.mxu0 0.0
    %5260 = vmatpush2.msra.mxu0 0.0
    %5261 = vmatprep.subr.mxu0 0.0
    %5262 = vmatpush2.msra.mxu0 0.0
    %5263 = vmatprep.subr.mxu0 0.0
    %5264 = vmatpush2.msra.mxu0 0.0
    %5265 = vmatprep.subr.mxu0 0.0
    %5266 = vmatpush2.msra.mxu0 0.0
    %5267 = vmatprep.mubr.f32.mxu0 0.0
    %v5268 = vand.u32 %v4939, 4294901760
    %v5269 = vsub.f32 %v4939, %v5268
    %v5270 = vand.u32 %v5269, 4294901760
    %5271 = vmatmul.mubr.f32.gmra.mxu0 %v5270
    %v5272 = vpop.f32.mrf.mxu0
    %v5273 = vadd.f32 %v5191, %v5272
    %v5274 = vpop.f32.mrf.mxu0
    %5275 = vmatprep.mubr.f32.mxu0 0.0
    %v5276 = vand.u32 %v4942, 4294901760
    %v5277 = vsub.f32 %v4942, %v5276
    %v5278 = vand.u32 %v5277, 4294901760
    %5279 = vmatmul.mubr.f32.gmra.mxu0 %v5278
    %v5280 = vpop.f32.mrf.mxu0
    %v5281 = vadd.f32 %v5198, %v5280
    %v5282 = vpop.f32.mrf.mxu0
    %5283 = vdwg.mxu0
    %5284 = vmatprep.subr.mxu0 0.0
    %5285 = vmatpush1.msra.mxu0 0.0
    %5286 = vmatprep.subr.mxu0 0.0
    %5287 = vmatpush1.msra.mxu0 0.0
    %5288 = vmatprep.subr.mxu0 0.0
    %5289 = vmatpush1.msra.mxu0 0.0
    %5290 = vmatprep.subr.mxu0 0.0
    %5291 = vmatpush1.msra.mxu0 0.0
    %5292 = vmatprep.subr.mxu0 0.0
    %5293 = vmatpush1.msra.mxu0 0.0
    %5294 = vmatprep.subr.mxu0 0.0
    %5295 = vmatpush1.msra.mxu0 0.0
    %5296 = vmatprep.subr.mxu0 0.0
    %5297 = vmatpush1.msra.mxu0 0.0
    %5298 = vmatprep.subr.mxu0 0.0
    %5299 = vmatpush1.msra.mxu0 0.0
    %5300 = vmatprep.subr.mxu0 0.0
    %5301 = vmatpush1.msra.mxu0 0.0
    %5302 = vmatprep.subr.mxu0 0.0
    %5303 = vmatpush1.msra.mxu0 0.0
    %5304 = vmatprep.subr.mxu0 0.0
    %5305 = vmatpush1.msra.mxu0 0.0
    %5306 = vmatprep.subr.mxu0 0.0
    %5307 = vmatpush1.msra.mxu0 0.0
    %5308 = vmatprep.subr.mxu0 0.0
    %5309 = vmatpush1.msra.mxu0 0.0
    %5310 = vmatprep.subr.mxu0 0.0
    %5311 = vmatpush1.msra.mxu0 0.0
    %5312 = vmatprep.subr.mxu0 0.0
    %v5313 = vand.u32 %v4935, 4294901760
    %v5314 = vsub.f32 %v4935, %v5313
    %v5315 = vand.u32 %v5314, 4294901760
    %5316 = vmatpush1.msra.mxu0 %v5315
    %5317 = vmatprep.subr.mxu0 0.0
    %v5318 = vand.u32 %v4933, 4294901760
    %v5319 = vsub.f32 %v4933, %v5318
    %v5320 = vand.u32 %v5319, 4294901760
    %5321 = vmatpush1.msra.mxu0 %v5320
    %5322 = vmatprep.subr.mxu0 0.0
    %5323 = vmatpush2.msra.mxu0 0.0
    %5324 = vmatprep.subr.mxu0 0.0
    %5325 = vmatpush2.msra.mxu0 0.0
    %5326 = vmatprep.subr.mxu0 0.0
    %5327 = vmatpush2.msra.mxu0 0.0
    %5328 = vmatprep.subr.mxu0 0.0
    %5329 = vmatpush2.msra.mxu0 0.0
    %5330 = vmatprep.subr.mxu0 0.0
    %5331 = vmatpush2.msra.mxu0 0.0
    %5332 = vmatprep.subr.mxu0 0.0
    %5333 = vmatpush2.msra.mxu0 0.0
    %5334 = vmatprep.subr.mxu0 0.0
    %5335 = vmatpush2.msra.mxu0 0.0
    %5336 = vmatprep.subr.mxu0 0.0
    %5337 = vmatpush2.msra.mxu0 0.0
    %5338 = vmatprep.subr.mxu0 0.0
    %5339 = vmatpush2.msra.mxu0 0.0
    %5340 = vmatprep.subr.mxu0 0.0
    %5341 = vmatpush2.msra.mxu0 0.0
    %5342 = vmatprep.subr.mxu0 0.0
    %5343 = vmatpush2.msra.mxu0 0.0
    %5344 = vmatprep.subr.mxu0 0.0
    %5345 = vmatpush2.msra.mxu0 0.0
    %5346 = vmatprep.subr.mxu0 0.0
    %5347 = vmatpush2.msra.mxu0 0.0
    %5348 = vmatprep.subr.mxu0 0.0
    %5349 = vmatpush2.msra.mxu0 0.0
    %5350 = vmatprep.subr.mxu0 0.0
    %5351 = vmatpush2.msra.mxu0 0.0
    %5352 = vmatprep.subr.mxu0 0.0
    %5353 = vmatpush2.msra.mxu0 0.0
    %5354 = vmatprep.mubr.f32.mxu0 0.0
    %v5355 = vand.u32 %v4939, 4294901760
    %5356 = vmatmul.mubr.f32.gmra.mxu0 %v5355
    %v5357 = vpop.f32.mrf.mxu0
    %v5358 = vadd.f32 %v5273, %v5357
    %v5359 = vpop.f32.mrf.mxu0
    %5360 = vmatprep.mubr.f32.mxu0 0.0
    %v5361 = vand.u32 %v4942, 4294901760
    %5362 = vmatmul.mubr.f32.gmra.mxu0 %v5361
    %v5363 = vpop.f32.mrf.mxu0
    %v5364 = vadd.f32 %v5281, %v5363
    %v5365 = vpop.f32.mrf.mxu0
    %5366 = vdwg.mxu0
    %5367 = vmatprep.subr.mxu0 0.0
    %5368 = vmatpush1.msra.mxu0 0.0
    %5369 = vmatprep.subr.mxu0 0.0
    %5370 = vmatpush1.msra.mxu0 0.0
    %5371 = vmatprep.subr.mxu0 0.0
    %5372 = vmatpush1.msra.mxu0 0.0
    %5373 = vmatprep.subr.mxu0 0.0
    %5374 = vmatpush1.msra.mxu0 0.0
    %5375 = vmatprep.subr.mxu0 0.0
    %5376 = vmatpush1.msra.mxu0 0.0
    %5377 = vmatprep.subr.mxu0 0.0
    %5378 = vmatpush1.msra.mxu0 0.0
    %5379 = vmatprep.subr.mxu0 0.0
    %5380 = vmatpush1.msra.mxu0 0.0
    %5381 = vmatprep.subr.mxu0 0.0
    %5382 = vmatpush1.msra.mxu0 0.0
    %5383 = vmatprep.subr.mxu0 0.0
    %5384 = vmatpush1.msra.mxu0 0.0
    %5385 = vmatprep.subr.mxu0 0.0
    %5386 = vmatpush1.msra.mxu0 0.0
    %5387 = vmatprep.subr.mxu0 0.0
    %5388 = vmatpush1.msra.mxu0 0.0
    %5389 = vmatprep.subr.mxu0 0.0
    %5390 = vmatpush1.msra.mxu0 0.0
    %5391 = vmatprep.subr.mxu0 0.0
    %5392 = vmatpush1.msra.mxu0 0.0
    %5393 = vmatprep.subr.mxu0 0.0
    %5394 = vmatpush1.msra.mxu0 0.0
    %5395 = vmatprep.subr.mxu0 0.0
    %v5396 = vand.u32 %v4935, 4294901760
    %5397 = vmatpush1.msra.mxu0 %v5396
    %5398 = vmatprep.subr.mxu0 0.0
    %v5399 = vand.u32 %v4933, 4294901760
    %5400 = vmatpush1.msra.mxu0 %v5399
    %5401 = vmatprep.subr.mxu0 0.0
    %5402 = vmatpush2.msra.mxu0 0.0
    %5403 = vmatprep.subr.mxu0 0.0
    %5404 = vmatpush2.msra.mxu0 0.0
    %5405 = vmatprep.subr.mxu0 0.0
    %5406 = vmatpush2.msra.mxu0 0.0
    %5407 = vmatprep.subr.mxu0 0.0
    %5408 = vmatpush2.msra.mxu0 0.0
    %5409 = vmatprep.subr.mxu0 0.0
    %5410 = vmatpush2.msra.mxu0 0.0
    %5411 = vmatprep.subr.mxu0 0.0
    %5412 = vmatpush2.msra.mxu0 0.0
    %5413 = vmatprep.subr.mxu0 0.0
    %5414 = vmatpush2.msra.mxu0 0.0
    %5415 = vmatprep.subr.mxu0 0.0
    %5416 = vmatpush2.msra.mxu0 0.0
    %5417 = vmatprep.subr.mxu0 0.0
    %5418 = vmatpush2.msra.mxu0 0.0
    %5419 = vmatprep.subr.mxu0 0.0
    %5420 = vmatpush2.msra.mxu0 0.0
    %5421 = vmatprep.subr.mxu0 0.0
    %5422 = vmatpush2.msra.mxu0 0.0
    %5423 = vmatprep.subr.mxu0 0.0
    %5424 = vmatpush2.msra.mxu0 0.0
    %5425 = vmatprep.subr.mxu0 0.0
    %5426 = vmatpush2.msra.mxu0 0.0
    %5427 = vmatprep.subr.mxu0 0.0
    %5428 = vmatpush2.msra.mxu0 0.0
    %5429 = vmatprep.subr.mxu0 0.0
    %5430 = vmatpush2.msra.mxu0 0.0
    %5431 = vmatprep.subr.mxu0 0.0
    %5432 = vmatpush2.msra.mxu0 0.0
    %5433 = vmatprep.mubr.f32.mxu0 0.0
    %v5434 = vand.u32 %v4939, 4294901760
    %5435 = vmatmul.mubr.f32.gmra.mxu0 %v5434
    %v5436 = vpop.f32.mrf.mxu0
    %v5437 = vadd.f32 %v5358, %v5436
    %v5438 = vpop.f32.mrf.mxu0
    %5439 = vmatprep.mubr.f32.mxu0 0.0
    %v5440 = vand.u32 %v4942, 4294901760
    %5441 = vmatmul.mubr.f32.gmra.mxu0 %v5440
    %v5442 = vpop.f32.mrf.mxu0
    %v5443 = vadd.f32 %v5364, %v5442
    %v5444 = vpop.f32.mrf.mxu0
    %5445 = vdwg.mxu0
    %5448 = vrot.lane.b32.xlu0 %v3329, 8
    %v5449 = vpop.permute.xlu0 %5448
    %5450 = vrot.lane.b32.xlu0 %v3335, 8
    %v5451 = vpop.permute.xlu0 %5450
    %5456 = vrot.lane.b32.xlu0 %v4383, 16
    %v5457 = vpop.permute.xlu0 %5456
    %5458 = vrot.lane.b32.xlu0 %v4389, 16
    %v5459 = vpop.permute.xlu0 %5458
    %5464 = vrot.lane.b32.xlu0 %v5437, 24
    %v5465 = vpop.permute.xlu0 %5464
    %5466 = vrot.lane.b32.xlu0 %v5443, 24
    %v5467 = vpop.permute.xlu0 %5466
    %v5470 = vsel %vm1238, %v2273, %v5449
    %v5471 = vsel %vm1238, %v2279, %v5451
    %v5472 = vsel %vm1751, %v5470, %v5457
    %v5473 = vsel %vm1751, %v5471, %v5459
    %vm5474 = vcmask 195584
    %v5475 = vsel %vm5474, %v5472, %v5465
    %v5476 = vsel %vm5474, %v5473, %v5467
    %v5477 = vld [vmem:[%s4] sm:$0xff]
    %v5478 = vld [vmem:[%s4 + $0x8] sm:$0xff]
    %v5479 = vld [vmem:[%s4 + $0x10] sm:$0xff]
    %v5480 = vld [vmem:[%s4 + $0x18] sm:$0xff]
    %v5481 = vlaneseq
    %v5482 = vshrl.u32 %v5481, 7
    %v5483 = vsub.s32 0, %v5482
    %v5484 = vrot.slane %v94, %v5483
    %v5486 = vsel %vm108, %v5475, 0
    %v5489 = vsel %vm108, %v5476, 0
    %5491 = vmatprep.subr.mxu0 0.0
    %5492 = vmatpush1.msra.mxu0 0.0
    %5493 = vmatprep.subr.mxu0 0.0
    %5494 = vmatpush1.msra.mxu0 0.0
    %5495 = vmatprep.subr.mxu0 0.0
    %5496 = vmatpush1.msra.mxu0 0.0
    %5497 = vmatprep.subr.mxu0 0.0
    %5498 = vmatpush1.msra.mxu0 0.0
    %5499 = vmatprep.subr.mxu0 0.0
    %5500 = vmatpush1.msra.mxu0 0.0
    %5501 = vmatprep.subr.mxu0 0.0
    %5502 = vmatpush1.msra.mxu0 0.0
    %5503 = vmatprep.subr.mxu0 0.0
    %5504 = vmatpush1.msra.mxu0 0.0
    %5505 = vmatprep.subr.mxu0 0.0
    %5506 = vmatpush1.msra.mxu0 0.0
    %5507 = vmatprep.subr.mxu0 0.0
    %5508 = vmatpush1.msra.mxu0 0.0
    %5509 = vmatprep.subr.mxu0 0.0
    %5510 = vmatpush1.msra.mxu0 0.0
    %5511 = vmatprep.subr.mxu0 0.0
    %5512 = vmatpush1.msra.mxu0 0.0
    %5513 = vmatprep.subr.mxu0 0.0
    %5514 = vmatpush1.msra.mxu0 0.0
    %5515 = vmatprep.subr.mxu0 0.0
    %v5516 = vand.u32 %v5480, 4294901760
    %5517 = vmatpush1.msra.mxu0 %v5516
    %5518 = vmatprep.subr.mxu0 0.0
    %v5519 = vand.u32 %v5479, 4294901760
    %5520 = vmatpush1.msra.mxu0 %v5519
    %5521 = vmatprep.subr.mxu0 0.0
    %v5522 = vand.u32 %v5478, 4294901760
    %5523 = vmatpush1.msra.mxu0 %v5522
    %5524 = vmatprep.subr.mxu0 0.0
    %v5525 = vand.u32 %v5477, 4294901760
    %5526 = vmatpush1.msra.mxu0 %v5525
    %5527 = vmatprep.subr.mxu0 0.0
    %5528 = vmatpush2.msra.mxu0 0.0
    %5529 = vmatprep.subr.mxu0 0.0
    %5530 = vmatpush2.msra.mxu0 0.0
    %5531 = vmatprep.subr.mxu0 0.0
    %5532 = vmatpush2.msra.mxu0 0.0
    %5533 = vmatprep.subr.mxu0 0.0
    %5534 = vmatpush2.msra.mxu0 0.0
    %5535 = vmatprep.subr.mxu0 0.0
    %5536 = vmatpush2.msra.mxu0 0.0
    %5537 = vmatprep.subr.mxu0 0.0
    %5538 = vmatpush2.msra.mxu0 0.0
    %5539 = vmatprep.subr.mxu0 0.0
    %5540 = vmatpush2.msra.mxu0 0.0
    %5541 = vmatprep.subr.mxu0 0.0
    %5542 = vmatpush2.msra.mxu0 0.0
    %5543 = vmatprep.subr.mxu0 0.0
    %5544 = vmatpush2.msra.mxu0 0.0
    %5545 = vmatprep.subr.mxu0 0.0
    %5546 = vmatpush2.msra.mxu0 0.0
    %5547 = vmatprep.subr.mxu0 0.0
    %5548 = vmatpush2.msra.mxu0 0.0
    %5549 = vmatprep.subr.mxu0 0.0
    %5550 = vmatpush2.msra.mxu0 0.0
    %5551 = vmatprep.subr.mxu0 0.0
    %5552 = vmatpush2.msra.mxu0 0.0
    %5553 = vmatprep.subr.mxu0 0.0
    %5554 = vmatpush2.msra.mxu0 0.0
    %5555 = vmatprep.subr.mxu0 0.0
    %5556 = vmatpush2.msra.mxu0 0.0
    %5557 = vmatprep.subr.mxu0 0.0
    %5558 = vmatpush2.msra.mxu0 0.0
    %5559 = vmatprep.mubr.f32.mxu0 0.0
    %v5560 = vand.u32 %v5486, 4294901760
    %v5561 = vsub.f32 %v5486, %v5560
    %v5562 = vand.u32 %v5561, 4294901760
    %v5563 = vsub.f32 %v5561, %v5562
    %v5564 = vand.u32 %v5563, 4294901760
    %5565 = vmatmul.mubr.f32.gmra.mxu0 %v5564
    %v5566 = vpop.f32.mrf.mxu0
    %v5567 = vadd.f32 %v5484, %v5566
    %v5568 = vpop.f32.mrf.mxu0
    %5569 = vmatprep.mubr.f32.mxu0 0.0
    %v5570 = vand.u32 %v5489, 4294901760
    %v5571 = vsub.f32 %v5489, %v5570
    %v5572 = vand.u32 %v5571, 4294901760
    %v5573 = vsub.f32 %v5571, %v5572
    %v5574 = vand.u32 %v5573, 4294901760
    %5575 = vmatmul.mubr.f32.gmra.mxu0 %v5574
    %v5576 = vpop.f32.mrf.mxu0
    %v5577 = vadd.f32 %v5484, %v5576
    %v5578 = vpop.f32.mrf.mxu0
    %5579 = vdwg.mxu0
    %5580 = vmatprep.subr.mxu0 0.0
    %5581 = vmatpush1.msra.mxu0 0.0
    %5582 = vmatprep.subr.mxu0 0.0
    %5583 = vmatpush1.msra.mxu0 0.0
    %5584 = vmatprep.subr.mxu0 0.0
    %5585 = vmatpush1.msra.mxu0 0.0
    %5586 = vmatprep.subr.mxu0 0.0
    %5587 = vmatpush1.msra.mxu0 0.0
    %5588 = vmatprep.subr.mxu0 0.0
    %5589 = vmatpush1.msra.mxu0 0.0
    %5590 = vmatprep.subr.mxu0 0.0
    %5591 = vmatpush1.msra.mxu0 0.0
    %5592 = vmatprep.subr.mxu0 0.0
    %5593 = vmatpush1.msra.mxu0 0.0
    %5594 = vmatprep.subr.mxu0 0.0
    %5595 = vmatpush1.msra.mxu0 0.0
    %5596 = vmatprep.subr.mxu0 0.0
    %5597 = vmatpush1.msra.mxu0 0.0
    %5598 = vmatprep.subr.mxu0 0.0
    %5599 = vmatpush1.msra.mxu0 0.0
    %5600 = vmatprep.subr.mxu0 0.0
    %5601 = vmatpush1.msra.mxu0 0.0
    %5602 = vmatprep.subr.mxu0 0.0
    %5603 = vmatpush1.msra.mxu0 0.0
    %5604 = vmatprep.subr.mxu0 0.0
    %v5605 = vand.u32 %v5480, 4294901760
    %v5606 = vsub.f32 %v5480, %v5605
    %v5607 = vand.u32 %v5606, 4294901760
    %v5608 = vsub.f32 %v5606, %v5607
    %v5609 = vand.u32 %v5608, 4294901760
    %5610 = vmatpush1.msra.mxu0 %v5609
    %5611 = vmatprep.subr.mxu0 0.0
    %v5612 = vand.u32 %v5479, 4294901760
    %v5613 = vsub.f32 %v5479, %v5612
    %v5614 = vand.u32 %v5613, 4294901760
    %v5615 = vsub.f32 %v5613, %v5614
    %v5616 = vand.u32 %v5615, 4294901760
    %5617 = vmatpush1.msra.mxu0 %v5616
    %5618 = vmatprep.subr.mxu0 0.0
    %v5619 = vand.u32 %v5478, 4294901760
    %v5620 = vsub.f32 %v5478, %v5619
    %v5621 = vand.u32 %v5620, 4294901760
    %v5622 = vsub.f32 %v5620, %v5621
    %v5623 = vand.u32 %v5622, 4294901760
    %5624 = vmatpush1.msra.mxu0 %v5623
    %5625 = vmatprep.subr.mxu0 0.0
    %v5626 = vand.u32 %v5477, 4294901760
    %v5627 = vsub.f32 %v5477, %v5626
    %v5628 = vand.u32 %v5627, 4294901760
    %v5629 = vsub.f32 %v5627, %v5628
    %v5630 = vand.u32 %v5629, 4294901760
    %5631 = vmatpush1.msra.mxu0 %v5630
    %5632 = vmatprep.subr.mxu0 0.0
    %5633 = vmatpush2.msra.mxu0 0.0
    %5634 = vmatprep.subr.mxu0 0.0
    %5635 = vmatpush2.msra.mxu0 0.0
    %5636 = vmatprep.subr.mxu0 0.0
    %5637 = vmatpush2.msra.mxu0 0.0
    %5638 = vmatprep.subr.mxu0 0.0
    %5639 = vmatpush2.msra.mxu0 0.0
    %5640 = vmatprep.subr.mxu0 0.0
    %5641 = vmatpush2.msra.mxu0 0.0
    %5642 = vmatprep.subr.mxu0 0.0
    %5643 = vmatpush2.msra.mxu0 0.0
    %5644 = vmatprep.subr.mxu0 0.0
    %5645 = vmatpush2.msra.mxu0 0.0
    %5646 = vmatprep.subr.mxu0 0.0
    %5647 = vmatpush2.msra.mxu0 0.0
    %5648 = vmatprep.subr.mxu0 0.0
    %5649 = vmatpush2.msra.mxu0 0.0
    %5650 = vmatprep.subr.mxu0 0.0
    %5651 = vmatpush2.msra.mxu0 0.0
    %5652 = vmatprep.subr.mxu0 0.0
    %5653 = vmatpush2.msra.mxu0 0.0
    %5654 = vmatprep.subr.mxu0 0.0
    %5655 = vmatpush2.msra.mxu0 0.0
    %5656 = vmatprep.subr.mxu0 0.0
    %5657 = vmatpush2.msra.mxu0 0.0
    %5658 = vmatprep.subr.mxu0 0.0
    %5659 = vmatpush2.msra.mxu0 0.0
    %5660 = vmatprep.subr.mxu0 0.0
    %5661 = vmatpush2.msra.mxu0 0.0
    %5662 = vmatprep.subr.mxu0 0.0
    %5663 = vmatpush2.msra.mxu0 0.0
    %5664 = vmatprep.mubr.f32.mxu0 0.0
    %v5665 = vand.u32 %v5486, 4294901760
    %5666 = vmatmul.mubr.f32.gmra.mxu0 %v5665
    %v5667 = vpop.f32.mrf.mxu0
    %v5668 = vadd.f32 %v5567, %v5667
    %v5669 = vpop.f32.mrf.mxu0
    %5670 = vmatprep.mubr.f32.mxu0 0.0
    %v5671 = vand.u32 %v5489, 4294901760
    %5672 = vmatmul.mubr.f32.gmra.mxu0 %v5671
    %v5673 = vpop.f32.mrf.mxu0
    %v5674 = vadd.f32 %v5577, %v5673
    %v5675 = vpop.f32.mrf.mxu0
    %5676 = vdwg.mxu0
    %5677 = vmatprep.subr.mxu0 0.0
    %5678 = vmatpush1.msra.mxu0 0.0
    %5679 = vmatprep.subr.mxu0 0.0
    %5680 = vmatpush1.msra.mxu0 0.0
    %5681 = vmatprep.subr.mxu0 0.0
    %5682 = vmatpush1.msra.mxu0 0.0
    %5683 = vmatprep.subr.mxu0 0.0
    %5684 = vmatpush1.msra.mxu0 0.0
    %5685 = vmatprep.subr.mxu0 0.0
    %5686 = vmatpush1.msra.mxu0 0.0
    %5687 = vmatprep.subr.mxu0 0.0
    %5688 = vmatpush1.msra.mxu0 0.0
    %5689 = vmatprep.subr.mxu0 0.0
    %5690 = vmatpush1.msra.mxu0 0.0
    %5691 = vmatprep.subr.mxu0 0.0
    %5692 = vmatpush1.msra.mxu0 0.0
    %5693 = vmatprep.subr.mxu0 0.0
    %5694 = vmatpush1.msra.mxu0 0.0
    %5695 = vmatprep.subr.mxu0 0.0
    %5696 = vmatpush1.msra.mxu0 0.0
    %5697 = vmatprep.subr.mxu0 0.0
    %5698 = vmatpush1.msra.mxu0 0.0
    %5699 = vmatprep.subr.mxu0 0.0
    %5700 = vmatpush1.msra.mxu0 0.0
    %5701 = vmatprep.subr.mxu0 0.0
    %v5702 = vand.u32 %v5480, 4294901760
    %v5703 = vsub.f32 %v5480, %v5702
    %5704 = vmatpush1.msra.mxu0 %v5703
    %5705 = vmatprep.subr.mxu0 0.0
    %v5706 = vand.u32 %v5479, 4294901760
    %v5707 = vsub.f32 %v5479, %v5706
    %5708 = vmatpush1.msra.mxu0 %v5707
    %5709 = vmatprep.subr.mxu0 0.0
    %v5710 = vand.u32 %v5478, 4294901760
    %v5711 = vsub.f32 %v5478, %v5710
    %5712 = vmatpush1.msra.mxu0 %v5711
    %5713 = vmatprep.subr.mxu0 0.0
    %v5714 = vand.u32 %v5477, 4294901760
    %v5715 = vsub.f32 %v5477, %v5714
    %5716 = vmatpush1.msra.mxu0 %v5715
    %5717 = vmatprep.subr.mxu0 0.0
    %5718 = vmatpush2.msra.mxu0 0.0
    %5719 = vmatprep.subr.mxu0 0.0
    %5720 = vmatpush2.msra.mxu0 0.0
    %5721 = vmatprep.subr.mxu0 0.0
    %5722 = vmatpush2.msra.mxu0 0.0
    %5723 = vmatprep.subr.mxu0 0.0
    %5724 = vmatpush2.msra.mxu0 0.0
    %5725 = vmatprep.subr.mxu0 0.0
    %5726 = vmatpush2.msra.mxu0 0.0
    %5727 = vmatprep.subr.mxu0 0.0
    %5728 = vmatpush2.msra.mxu0 0.0
    %5729 = vmatprep.subr.mxu0 0.0
    %5730 = vmatpush2.msra.mxu0 0.0
    %5731 = vmatprep.subr.mxu0 0.0
    %5732 = vmatpush2.msra.mxu0 0.0
    %5733 = vmatprep.subr.mxu0 0.0
    %5734 = vmatpush2.msra.mxu0 0.0
    %5735 = vmatprep.subr.mxu0 0.0
    %5736 = vmatpush2.msra.mxu0 0.0
    %5737 = vmatprep.subr.mxu0 0.0
    %5738 = vmatpush2.msra.mxu0 0.0
    %5739 = vmatprep.subr.mxu0 0.0
    %5740 = vmatpush2.msra.mxu0 0.0
    %5741 = vmatprep.subr.mxu0 0.0
    %5742 = vmatpush2.msra.mxu0 0.0
    %5743 = vmatprep.subr.mxu0 0.0
    %5744 = vmatpush2.msra.mxu0 0.0
    %5745 = vmatprep.subr.mxu0 0.0
    %5746 = vmatpush2.msra.mxu0 0.0
    %5747 = vmatprep.subr.mxu0 0.0
    %5748 = vmatpush2.msra.mxu0 0.0
    %5749 = vmatprep.mubr.f32.mxu0 0.0
    %v5750 = vand.u32 %v5486, 4294901760
    %v5751 = vsub.f32 %v5486, %v5750
    %5752 = vmatmul.mubr.f32.gmra.mxu0 %v5751
    %v5753 = vpop.f32.mrf.mxu0
    %v5754 = vadd.f32 %v5668, %v5753
    %v5755 = vpop.f32.mrf.mxu0
    %5756 = vmatprep.mubr.f32.mxu0 0.0
    %v5757 = vand.u32 %v5489, 4294901760
    %v5758 = vsub.f32 %v5489, %v5757
    %5759 = vmatmul.mubr.f32.gmra.mxu0 %v5758
    %v5760 = vpop.f32.mrf.mxu0
    %v5761 = vadd.f32 %v5674, %v5760
    %v5762 = vpop.f32.mrf.mxu0
    %5763 = vdwg.mxu0
    %5764 = vmatprep.subr.mxu0 0.0
    %5765 = vmatpush1.msra.mxu0 0.0
    %5766 = vmatprep.subr.mxu0 0.0
    %5767 = vmatpush1.msra.mxu0 0.0
    %5768 = vmatprep.subr.mxu0 0.0
    %5769 = vmatpush1.msra.mxu0 0.0
    %5770 = vmatprep.subr.mxu0 0.0
    %5771 = vmatpush1.msra.mxu0 0.0
    %5772 = vmatprep.subr.mxu0 0.0
    %5773 = vmatpush1.msra.mxu0 0.0
    %5774 = vmatprep.subr.mxu0 0.0
    %5775 = vmatpush1.msra.mxu0 0.0
    %5776 = vmatprep.subr.mxu0 0.0
    %5777 = vmatpush1.msra.mxu0 0.0
    %5778 = vmatprep.subr.mxu0 0.0
    %5779 = vmatpush1.msra.mxu0 0.0
    %5780 = vmatprep.subr.mxu0 0.0
    %5781 = vmatpush1.msra.mxu0 0.0
    %5782 = vmatprep.subr.mxu0 0.0
    %5783 = vmatpush1.msra.mxu0 0.0
    %5784 = vmatprep.subr.mxu0 0.0
    %5785 = vmatpush1.msra.mxu0 0.0
    %5786 = vmatprep.subr.mxu0 0.0
    %5787 = vmatpush1.msra.mxu0 0.0
    %5788 = vmatprep.subr.mxu0 0.0
    %v5789 = vand.u32 %v5480, 4294901760
    %5790 = vmatpush1.msra.mxu0 %v5789
    %5791 = vmatprep.subr.mxu0 0.0
    %v5792 = vand.u32 %v5479, 4294901760
    %5793 = vmatpush1.msra.mxu0 %v5792
    %5794 = vmatprep.subr.mxu0 0.0
    %v5795 = vand.u32 %v5478, 4294901760
    %5796 = vmatpush1.msra.mxu0 %v5795
    %5797 = vmatprep.subr.mxu0 0.0
    %v5798 = vand.u32 %v5477, 4294901760
    %5799 = vmatpush1.msra.mxu0 %v5798
    %5800 = vmatprep.subr.mxu0 0.0
    %5801 = vmatpush2.msra.mxu0 0.0
    %5802 = vmatprep.subr.mxu0 0.0
    %5803 = vmatpush2.msra.mxu0 0.0
    %5804 = vmatprep.subr.mxu0 0.0
    %5805 = vmatpush2.msra.mxu0 0.0
    %5806 = vmatprep.subr.mxu0 0.0
    %5807 = vmatpush2.msra.mxu0 0.0
    %5808 = vmatprep.subr.mxu0 0.0
    %5809 = vmatpush2.msra.mxu0 0.0
    %5810 = vmatprep.subr.mxu0 0.0
    %5811 = vmatpush2.msra.mxu0 0.0
    %5812 = vmatprep.subr.mxu0 0.0
    %5813 = vmatpush2.msra.mxu0 0.0
    %5814 = vmatprep.subr.mxu0 0.0
    %5815 = vmatpush2.msra.mxu0 0.0
    %5816 = vmatprep.subr.mxu0 0.0
    %5817 = vmatpush2.msra.mxu0 0.0
    %5818 = vmatprep.subr.mxu0 0.0
    %5819 = vmatpush2.msra.mxu0 0.0
    %5820 = vmatprep.subr.mxu0 0.0
    %5821 = vmatpush2.msra.mxu0 0.0
    %5822 = vmatprep.subr.mxu0 0.0
    %5823 = vmatpush2.msra.mxu0 0.0
    %5824 = vmatprep.subr.mxu0 0.0
    %5825 = vmatpush2.msra.mxu0 0.0
    %5826 = vmatprep.subr.mxu0 0.0
    %5827 = vmatpush2.msra.mxu0 0.0
    %5828 = vmatprep.subr.mxu0 0.0
    %5829 = vmatpush2.msra.mxu0 0.0
    %5830 = vmatprep.subr.mxu0 0.0
    %5831 = vmatpush2.msra.mxu0 0.0
    %5832 = vmatprep.mubr.f32.mxu0 0.0
    %v5833 = vand.u32 %v5486, 4294901760
    %v5834 = vsub.f32 %v5486, %v5833
    %v5835 = vand.u32 %v5834, 4294901760
    %5836 = vmatmul.mubr.f32.gmra.mxu0 %v5835
    %v5837 = vpop.f32.mrf.mxu0
    %v5838 = vadd.f32 %v5754, %v5837
    %v5839 = vpop.f32.mrf.mxu0
    %5840 = vmatprep.mubr.f32.mxu0 0.0
    %v5841 = vand.u32 %v5489, 4294901760
    %v5842 = vsub.f32 %v5489, %v5841
    %v5843 = vand.u32 %v5842, 4294901760
    %5844 = vmatmul.mubr.f32.gmra.mxu0 %v5843
    %v5845 = vpop.f32.mrf.mxu0
    %v5846 = vadd.f32 %v5761, %v5845
    %v5847 = vpop.f32.mrf.mxu0
    %5848 = vdwg.mxu0
    %5849 = vmatprep.subr.mxu0 0.0
    %5850 = vmatpush1.msra.mxu0 0.0
    %5851 = vmatprep.subr.mxu0 0.0
    %5852 = vmatpush1.msra.mxu0 0.0
    %5853 = vmatprep.subr.mxu0 0.0
    %5854 = vmatpush1.msra.mxu0 0.0
    %5855 = vmatprep.subr.mxu0 0.0
    %5856 = vmatpush1.msra.mxu0 0.0
    %5857 = vmatprep.subr.mxu0 0.0
    %5858 = vmatpush1.msra.mxu0 0.0
    %5859 = vmatprep.subr.mxu0 0.0
    %5860 = vmatpush1.msra.mxu0 0.0
    %5861 = vmatprep.subr.mxu0 0.0
    %5862 = vmatpush1.msra.mxu0 0.0
    %5863 = vmatprep.subr.mxu0 0.0
    %5864 = vmatpush1.msra.mxu0 0.0
    %5865 = vmatprep.subr.mxu0 0.0
    %5866 = vmatpush1.msra.mxu0 0.0
    %5867 = vmatprep.subr.mxu0 0.0
    %5868 = vmatpush1.msra.mxu0 0.0
    %5869 = vmatprep.subr.mxu0 0.0
    %5870 = vmatpush1.msra.mxu0 0.0
    %5871 = vmatprep.subr.mxu0 0.0
    %5872 = vmatpush1.msra.mxu0 0.0
    %5873 = vmatprep.subr.mxu0 0.0
    %v5874 = vand.u32 %v5480, 4294901760
    %v5875 = vsub.f32 %v5480, %v5874
    %v5876 = vand.u32 %v5875, 4294901760
    %5877 = vmatpush1.msra.mxu0 %v5876
    %5878 = vmatprep.subr.mxu0 0.0
    %v5879 = vand.u32 %v5479, 4294901760
    %v5880 = vsub.f32 %v5479, %v5879
    %v5881 = vand.u32 %v5880, 4294901760
    %5882 = vmatpush1.msra.mxu0 %v5881
    %5883 = vmatprep.subr.mxu0 0.0
    %v5884 = vand.u32 %v5478, 4294901760
    %v5885 = vsub.f32 %v5478, %v5884
    %v5886 = vand.u32 %v5885, 4294901760
    %5887 = vmatpush1.msra.mxu0 %v5886
    %5888 = vmatprep.subr.mxu0 0.0
    %v5889 = vand.u32 %v5477, 4294901760
    %v5890 = vsub.f32 %v5477, %v5889
    %v5891 = vand.u32 %v5890, 4294901760
    %5892 = vmatpush1.msra.mxu0 %v5891
    %5893 = vmatprep.subr.mxu0 0.0
    %5894 = vmatpush2.msra.mxu0 0.0
    %5895 = vmatprep.subr.mxu0 0.0
    %5896 = vmatpush2.msra.mxu0 0.0
    %5897 = vmatprep.subr.mxu0 0.0
    %5898 = vmatpush2.msra.mxu0 0.0
    %5899 = vmatprep.subr.mxu0 0.0
    %5900 = vmatpush2.msra.mxu0 0.0
    %5901 = vmatprep.subr.mxu0 0.0
    %5902 = vmatpush2.msra.mxu0 0.0
    %5903 = vmatprep.subr.mxu0 0.0
    %5904 = vmatpush2.msra.mxu0 0.0
    %5905 = vmatprep.subr.mxu0 0.0
    %5906 = vmatpush2.msra.mxu0 0.0
    %5907 = vmatprep.subr.mxu0 0.0
    %5908 = vmatpush2.msra.mxu0 0.0
    %5909 = vmatprep.subr.mxu0 0.0
    %5910 = vmatpush2.msra.mxu0 0.0
    %5911 = vmatprep.subr.mxu0 0.0
    %5912 = vmatpush2.msra.mxu0 0.0
    %5913 = vmatprep.subr.mxu0 0.0
    %5914 = vmatpush2.msra.mxu0 0.0
    %5915 = vmatprep.subr.mxu0 0.0
    %5916 = vmatpush2.msra.mxu0 0.0
    %5917 = vmatprep.subr.mxu0 0.0
    %5918 = vmatpush2.msra.mxu0 0.0
    %5919 = vmatprep.subr.mxu0 0.0
    %5920 = vmatpush2.msra.mxu0 0.0
    %5921 = vmatprep.subr.mxu0 0.0
    %5922 = vmatpush2.msra.mxu0 0.0
    %5923 = vmatprep.subr.mxu0 0.0
    %5924 = vmatpush2.msra.mxu0 0.0
    %5925 = vmatprep.mubr.f32.mxu0 0.0
    %v5926 = vand.u32 %v5486, 4294901760
    %5927 = vmatmul.mubr.f32.gmra.mxu0 %v5926
    %v5928 = vpop.f32.mrf.mxu0
    %v5929 = vadd.f32 %v5838, %v5928
    %v5930 = vpop.f32.mrf.mxu0
    %5931 = vmatprep.mubr.f32.mxu0 0.0
    %v5932 = vand.u32 %v5489, 4294901760
    %5933 = vmatmul.mubr.f32.gmra.mxu0 %v5932
    %v5934 = vpop.f32.mrf.mxu0
    %v5935 = vadd.f32 %v5846, %v5934
    %v5936 = vpop.f32.mrf.mxu0
    %5937 = vdwg.mxu0
    %5938 = vmatprep.subr.mxu0 0.0
    %5939 = vmatpush1.msra.mxu0 0.0
    %5940 = vmatprep.subr.mxu0 0.0
    %5941 = vmatpush1.msra.mxu0 0.0
    %5942 = vmatprep.subr.mxu0 0.0
    %5943 = vmatpush1.msra.mxu0 0.0
    %5944 = vmatprep.subr.mxu0 0.0
    %5945 = vmatpush1.msra.mxu0 0.0
    %5946 = vmatprep.subr.mxu0 0.0
    %5947 = vmatpush1.msra.mxu0 0.0
    %5948 = vmatprep.subr.mxu0 0.0
    %5949 = vmatpush1.msra.mxu0 0.0
    %5950 = vmatprep.subr.mxu0 0.0
    %5951 = vmatpush1.msra.mxu0 0.0
    %5952 = vmatprep.subr.mxu0 0.0
    %5953 = vmatpush1.msra.mxu0 0.0
    %5954 = vmatprep.subr.mxu0 0.0
    %5955 = vmatpush1.msra.mxu0 0.0
    %5956 = vmatprep.subr.mxu0 0.0
    %5957 = vmatpush1.msra.mxu0 0.0
    %5958 = vmatprep.subr.mxu0 0.0
    %5959 = vmatpush1.msra.mxu0 0.0
    %5960 = vmatprep.subr.mxu0 0.0
    %5961 = vmatpush1.msra.mxu0 0.0
    %5962 = vmatprep.subr.mxu0 0.0
    %v5963 = vand.u32 %v5480, 4294901760
    %5964 = vmatpush1.msra.mxu0 %v5963
    %5965 = vmatprep.subr.mxu0 0.0
    %v5966 = vand.u32 %v5479, 4294901760
    %5967 = vmatpush1.msra.mxu0 %v5966
    %5968 = vmatprep.subr.mxu0 0.0
    %v5969 = vand.u32 %v5478, 4294901760
    %5970 = vmatpush1.msra.mxu0 %v5969
    %5971 = vmatprep.subr.mxu0 0.0
    %v5972 = vand.u32 %v5477, 4294901760
    %5973 = vmatpush1.msra.mxu0 %v5972
    %5974 = vmatprep.subr.mxu0 0.0
    %5975 = vmatpush2.msra.mxu0 0.0
    %5976 = vmatprep.subr.mxu0 0.0
    %5977 = vmatpush2.msra.mxu0 0.0
    %5978 = vmatprep.subr.mxu0 0.0
    %5979 = vmatpush2.msra.mxu0 0.0
    %5980 = vmatprep.subr.mxu0 0.0
    %5981 = vmatpush2.msra.mxu0 0.0
    %5982 = vmatprep.subr.mxu0 0.0
    %5983 = vmatpush2.msra.mxu0 0.0
    %5984 = vmatprep.subr.mxu0 0.0
    %5985 = vmatpush2.msra.mxu0 0.0
    %5986 = vmatprep.subr.mxu0 0.0
    %5987 = vmatpush2.msra.mxu0 0.0
    %5988 = vmatprep.subr.mxu0 0.0
    %5989 = vmatpush2.msra.mxu0 0.0
    %5990 = vmatprep.subr.mxu0 0.0
    %5991 = vmatpush2.msra.mxu0 0.0
    %5992 = vmatprep.subr.mxu0 0.0
    %5993 = vmatpush2.msra.mxu0 0.0
    %5994 = vmatprep.subr.mxu0 0.0
    %5995 = vmatpush2.msra.mxu0 0.0
    %5996 = vmatprep.subr.mxu0 0.0
    %5997 = vmatpush2.msra.mxu0 0.0
    %5998 = vmatprep.subr.mxu0 0.0
    %5999 = vmatpush2.msra.mxu0 0.0
    %6000 = vmatprep.subr.mxu0 0.0
    %6001 = vmatpush2.msra.mxu0 0.0
    %6002 = vmatprep.subr.mxu0 0.0
    %6003 = vmatpush2.msra.mxu0 0.0
    %6004 = vmatprep.subr.mxu0 0.0
    %6005 = vmatpush2.msra.mxu0 0.0
    %6006 = vmatprep.mubr.f32.mxu0 0.0
    %v6007 = vand.u32 %v5486, 4294901760
    %6008 = vmatmul.mubr.f32.gmra.mxu0 %v6007
    %v6009 = vpop.f32.mrf.mxu0
    %v6010 = vadd.f32 %v5929, %v6009
    %v6011 = vpop.f32.mrf.mxu0
    %6012 = vmatprep.mubr.f32.mxu0 0.0
    %v6013 = vand.u32 %v5489, 4294901760
    %6014 = vmatmul.mubr.f32.gmra.mxu0 %v6013
    %v6015 = vpop.f32.mrf.mxu0
    %v6016 = vadd.f32 %v5935, %v6015
    %v6017 = vpop.f32.mrf.mxu0
    %6018 = vdwg.mxu0
    %v6019 = vadd.f32 %v85, %v6010
    %v6020 = vadd.f32 %v86, %v6016
    %v6021 = vsel %vm108, %v6019, 0.0
    %6022 = vadd.xlane.f32.xlu0 %v6021
    %v6023 = vpop.xlane.xlu0 %6022
    %v6024 = vsel %vm108, %v6020, 0.0
    %6025 = vadd.xlane.f32.xlu0 %v6024
    %v6026 = vpop.xlane.xlu0 %6025
    %v6027 = vrcp.pop 32.0
    %v6028 = vmul.f32 %v6023, %v6027
    %v6029 = vmul.f32 %v6026, %v6027
    %v6030 = vsub.f32 %v6019, %v6028
    %v6031 = vsub.f32 %v6020, %v6029
    %v6032 = vmul.f32 %v6030, %v6030
    %v6033 = vmul.f32 %v6031, %v6031
    %v6034 = vsel %vm108, %v6032, 0.0
    %6035 = vadd.xlane.f32.xlu0 %v6034
    %v6036 = vpop.xlane.xlu0 %6035
    %v6037 = vsel %vm108, %v6033, 0.0
    %6038 = vadd.xlane.f32.xlu0 %v6037
    %v6039 = vpop.xlane.xlu0 %6038
    %v6040 = vmul.f32 %v6036, %v6027
    %v6041 = vmul.f32 %v6039, %v6027
    %v6042 = vadd.f32 %v6040, 1e-05
    %v6043 = vadd.f32 %v6041, 1e-05
    %v6044 = vrsqrt.pop %v6042
    %v6045 = vrsqrt.pop %v6043
    %v6046 = vmul.f32 %v6030, %v6044
    %v6047 = vmul.f32 %v6031, %v6045
    %v6048 = vlaneseq
    %v6049 = vshrl.u32 %v6048, 7
    %v6050 = vsub.s32 0, %v6049
    %v6051 = vrot.slane %v96, %v6050
    %v6052 = vmul.f32 %v6046, %v6051
    %v6053 = vmul.f32 %v6047, %v6051
    %v6054 = vlaneseq
    %v6055 = vshrl.u32 %v6054, 7
    %v6056 = vsub.s32 0, %v6055
    %v6057 = vrot.slane %v97, %v6056
    %v6058 = vadd.f32 %v6052, %v6057
    %v6059 = vadd.f32 %v6053, %v6057
    %v6060 = vld [vmem:[#allocation7] sm:$0xff]
    %v6061 = vld [vmem:[#allocation7 + $0x8] sm:$0xff]
    %v6062 = vld [vmem:[#allocation7 + $0x10] sm:$0xff]
    %v6063 = vld [vmem:[#allocation7 + $0x18] sm:$0xff]
    %v6064 = vlaneseq
    %v6065 = vshrl.u32 %v6064, 7
    %v6066 = vsub.s32 0, %v6065
    %v6067 = vrot.slane %v92, %v6066
    %v6069 = vsel %vm108, %v6058, 0
    %v6072 = vsel %vm108, %v6059, 0
    %6074 = vmatprep.subr.mxu0 0.0
    %6075 = vmatpush1.msra.mxu0 0.0
    %6076 = vmatprep.subr.mxu0 0.0
    %6077 = vmatpush1.msra.mxu0 0.0
    %6078 = vmatprep.subr.mxu0 0.0
    %6079 = vmatpush1.msra.mxu0 0.0
    %6080 = vmatprep.subr.mxu0 0.0
    %6081 = vmatpush1.msra.mxu0 0.0
    %6082 = vmatprep.subr.mxu0 0.0
    %6083 = vmatpush1.msra.mxu0 0.0
    %6084 = vmatprep.subr.mxu0 0.0
    %6085 = vmatpush1.msra.mxu0 0.0
    %6086 = vmatprep.subr.mxu0 0.0
    %6087 = vmatpush1.msra.mxu0 0.0
    %6088 = vmatprep.subr.mxu0 0.0
    %6089 = vmatpush1.msra.mxu0 0.0
    %6090 = vmatprep.subr.mxu0 0.0
    %6091 = vmatpush1.msra.mxu0 0.0
    %6092 = vmatprep.subr.mxu0 0.0
    %6093 = vmatpush1.msra.mxu0 0.0
    %6094 = vmatprep.subr.mxu0 0.0
    %6095 = vmatpush1.msra.mxu0 0.0
    %6096 = vmatprep.subr.mxu0 0.0
    %6097 = vmatpush1.msra.mxu0 0.0
    %6098 = vmatprep.subr.mxu0 0.0
    %v6099 = vand.u32 %v6063, 4294901760
    %6100 = vmatpush1.msra.mxu0 %v6099
    %6101 = vmatprep.subr.mxu0 0.0
    %v6102 = vand.u32 %v6062, 4294901760
    %6103 = vmatpush1.msra.mxu0 %v6102
    %6104 = vmatprep.subr.mxu0 0.0
    %v6105 = vand.u32 %v6061, 4294901760
    %6106 = vmatpush1.msra.mxu0 %v6105
    %6107 = vmatprep.subr.mxu0 0.0
    %v6108 = vand.u32 %v6060, 4294901760
    %6109 = vmatpush1.msra.mxu0 %v6108
    %6110 = vmatprep.subr.mxu0 0.0
    %6111 = vmatpush2.msra.mxu0 0.0
    %6112 = vmatprep.subr.mxu0 0.0
    %6113 = vmatpush2.msra.mxu0 0.0
    %6114 = vmatprep.subr.mxu0 0.0
    %6115 = vmatpush2.msra.mxu0 0.0
    %6116 = vmatprep.subr.mxu0 0.0
    %6117 = vmatpush2.msra.mxu0 0.0
    %6118 = vmatprep.subr.mxu0 0.0
    %6119 = vmatpush2.msra.mxu0 0.0
    %6120 = vmatprep.subr.mxu0 0.0
    %6121 = vmatpush2.msra.mxu0 0.0
    %6122 = vmatprep.subr.mxu0 0.0
    %6123 = vmatpush2.msra.mxu0 0.0
    %6124 = vmatprep.subr.mxu0 0.0
    %6125 = vmatpush2.msra.mxu0 0.0
    %6126 = vmatprep.subr.mxu0 0.0
    %6127 = vmatpush2.msra.mxu0 0.0
    %6128 = vmatprep.subr.mxu0 0.0
    %6129 = vmatpush2.msra.mxu0 0.0
    %6130 = vmatprep.subr.mxu0 0.0
    %6131 = vmatpush2.msra.mxu0 0.0
    %6132 = vmatprep.subr.mxu0 0.0
    %6133 = vmatpush2.msra.mxu0 0.0
    %6134 = vmatprep.subr.mxu0 0.0
    %6135 = vmatpush2.msra.mxu0 0.0
    %6136 = vmatprep.subr.mxu0 0.0
    %6137 = vmatpush2.msra.mxu0 0.0
    %6138 = vmatprep.subr.mxu0 0.0
    %6139 = vmatpush2.msra.mxu0 0.0
    %6140 = vmatprep.subr.mxu0 0.0
    %6141 = vmatpush2.msra.mxu0 0.0
    %6142 = vmatprep.mubr.f32.mxu0 0.0
    %v6143 = vand.u32 %v6069, 4294901760
    %v6144 = vsub.f32 %v6069, %v6143
    %v6145 = vand.u32 %v6144, 4294901760
    %v6146 = vsub.f32 %v6144, %v6145
    %v6147 = vand.u32 %v6146, 4294901760
    %6148 = vmatmul.mubr.f32.gmra.mxu0 %v6147
    %v6149 = vpop.f32.mrf.mxu0
    %v6150 = vadd.f32 %v6067, %v6149
    %v6151 = vpop.f32.mrf.mxu0
    %6152 = vmatprep.mubr.f32.mxu0 0.0
    %v6153 = vand.u32 %v6072, 4294901760
    %v6154 = vsub.f32 %v6072, %v6153
    %v6155 = vand.u32 %v6154, 4294901760
    %v6156 = vsub.f32 %v6154, %v6155
    %v6157 = vand.u32 %v6156, 4294901760
    %6158 = vmatmul.mubr.f32.gmra.mxu0 %v6157
    %v6159 = vpop.f32.mrf.mxu0
    %v6160 = vadd.f32 %v6067, %v6159
    %v6161 = vpop.f32.mrf.mxu0
    %6162 = vdwg.mxu0
    %6163 = vmatprep.subr.mxu0 0.0
    %6164 = vmatpush1.msra.mxu0 0.0
    %6165 = vmatprep.subr.mxu0 0.0
    %6166 = vmatpush1.msra.mxu0 0.0
    %6167 = vmatprep.subr.mxu0 0.0
    %6168 = vmatpush1.msra.mxu0 0.0
    %6169 = vmatprep.subr.mxu0 0.0
    %6170 = vmatpush1.msra.mxu0 0.0
    %6171 = vmatprep.subr.mxu0 0.0
    %6172 = vmatpush1.msra.mxu0 0.0
    %6173 = vmatprep.subr.mxu0 0.0
    %6174 = vmatpush1.msra.mxu0 0.0
    %6175 = vmatprep.subr.mxu0 0.0
    %6176 = vmatpush1.msra.mxu0 0.0
    %6177 = vmatprep.subr.mxu0 0.0
    %6178 = vmatpush1.msra.mxu0 0.0
    %6179 = vmatprep.subr.mxu0 0.0
    %6180 = vmatpush1.msra.mxu0 0.0
    %6181 = vmatprep.subr.mxu0 0.0
    %6182 = vmatpush1.msra.mxu0 0.0
    %6183 = vmatprep.subr.mxu0 0.0
    %6184 = vmatpush1.msra.mxu0 0.0
    %6185 = vmatprep.subr.mxu0 0.0
    %6186 = vmatpush1.msra.mxu0 0.0
    %6187 = vmatprep.subr.mxu0 0.0
    %v6188 = vand.u32 %v6063, 4294901760
    %v6189 = vsub.f32 %v6063, %v6188
    %v6190 = vand.u32 %v6189, 4294901760
    %v6191 = vsub.f32 %v6189, %v6190
    %v6192 = vand.u32 %v6191, 4294901760
    %6193 = vmatpush1.msra.mxu0 %v6192
    %6194 = vmatprep.subr.mxu0 0.0
    %v6195 = vand.u32 %v6062, 4294901760
    %v6196 = vsub.f32 %v6062, %v6195
    %v6197 = vand.u32 %v6196, 4294901760
    %v6198 = vsub.f32 %v6196, %v6197
    %v6199 = vand.u32 %v6198, 4294901760
    %6200 = vmatpush1.msra.mxu0 %v6199
    %6201 = vmatprep.subr.mxu0 0.0
    %v6202 = vand.u32 %v6061, 4294901760
    %v6203 = vsub.f32 %v6061, %v6202
    %v6204 = vand.u32 %v6203, 4294901760
    %v6205 = vsub.f32 %v6203, %v6204
    %v6206 = vand.u32 %v6205, 4294901760
    %6207 = vmatpush1.msra.mxu0 %v6206
    %6208 = vmatprep.subr.mxu0 0.0
    %v6209 = vand.u32 %v6060, 4294901760
    %v6210 = vsub.f32 %v6060, %v6209
    %v6211 = vand.u32 %v6210, 4294901760
    %v6212 = vsub.f32 %v6210, %v6211
    %v6213 = vand.u32 %v6212, 4294901760
    %6214 = vmatpush1.msra.mxu0 %v6213
    %6215 = vmatprep.subr.mxu0 0.0
    %6216 = vmatpush2.msra.mxu0 0.0
    %6217 = vmatprep.subr.mxu0 0.0
    %6218 = vmatpush2.msra.mxu0 0.0
    %6219 = vmatprep.subr.mxu0 0.0
    %6220 = vmatpush2.msra.mxu0 0.0
    %6221 = vmatprep.subr.mxu0 0.0
    %6222 = vmatpush2.msra.mxu0 0.0
    %6223 = vmatprep.subr.mxu0 0.0
    %6224 = vmatpush2.msra.mxu0 0.0
    %6225 = vmatprep.subr.mxu0 0.0
    %6226 = vmatpush2.msra.mxu0 0.0
    %6227 = vmatprep.subr.mxu0 0.0
    %6228 = vmatpush2.msra.mxu0 0.0
    %6229 = vmatprep.subr.mxu0 0.0
    %6230 = vmatpush2.msra.mxu0 0.0
    %6231 = vmatprep.subr.mxu0 0.0
    %6232 = vmatpush2.msra.mxu0 0.0
    %6233 = vmatprep.subr.mxu0 0.0
    %6234 = vmatpush2.msra.mxu0 0.0
    %6235 = vmatprep.subr.mxu0 0.0
    %6236 = vmatpush2.msra.mxu0 0.0
    %6237 = vmatprep.subr.mxu0 0.0
    %6238 = vmatpush2.msra.mxu0 0.0
    %6239 = vmatprep.subr.mxu0 0.0
    %6240 = vmatpush2.msra.mxu0 0.0
    %6241 = vmatprep.subr.mxu0 0.0
    %6242 = vmatpush2.msra.mxu0 0.0
    %6243 = vmatprep.subr.mxu0 0.0
    %6244 = vmatpush2.msra.mxu0 0.0
    %6245 = vmatprep.subr.mxu0 0.0
    %6246 = vmatpush2.msra.mxu0 0.0
    %6247 = vmatprep.mubr.f32.mxu0 0.0
    %v6248 = vand.u32 %v6069, 4294901760
    %6249 = vmatmul.mubr.f32.gmra.mxu0 %v6248
    %v6250 = vpop.f32.mrf.mxu0
    %v6251 = vadd.f32 %v6150, %v6250
    %v6252 = vpop.f32.mrf.mxu0
    %6253 = vmatprep.mubr.f32.mxu0 0.0
    %v6254 = vand.u32 %v6072, 4294901760
    %6255 = vmatmul.mubr.f32.gmra.mxu0 %v6254
    %v6256 = vpop.f32.mrf.mxu0
    %v6257 = vadd.f32 %v6160, %v6256
    %v6258 = vpop.f32.mrf.mxu0
    %6259 = vdwg.mxu0
    %6260 = vmatprep.subr.mxu0 0.0
    %6261 = vmatpush1.msra.mxu0 0.0
    %6262 = vmatprep.subr.mxu0 0.0
    %6263 = vmatpush1.msra.mxu0 0.0
    %6264 = vmatprep.subr.mxu0 0.0
    %6265 = vmatpush1.msra.mxu0 0.0
    %6266 = vmatprep.subr.mxu0 0.0
    %6267 = vmatpush1.msra.mxu0 0.0
    %6268 = vmatprep.subr.mxu0 0.0
    %6269 = vmatpush1.msra.mxu0 0.0
    %6270 = vmatprep.subr.mxu0 0.0
    %6271 = vmatpush1.msra.mxu0 0.0
    %6272 = vmatprep.subr.mxu0 0.0
    %6273 = vmatpush1.msra.mxu0 0.0
    %6274 = vmatprep.subr.mxu0 0.0
    %6275 = vmatpush1.msra.mxu0 0.0
    %6276 = vmatprep.subr.mxu0 0.0
    %6277 = vmatpush1.msra.mxu0 0.0
    %6278 = vmatprep.subr.mxu0 0.0
    %6279 = vmatpush1.msra.mxu0 0.0
    %6280 = vmatprep.subr.mxu0 0.0
    %6281 = vmatpush1.msra.mxu0 0.0
    %6282 = vmatprep.subr.mxu0 0.0
    %6283 = vmatpush1.msra.mxu0 0.0
    %6284 = vmatprep.subr.mxu0 0.0
    %v6285 = vand.u32 %v6063, 4294901760
    %v6286 = vsub.f32 %v6063, %v6285
    %6287 = vmatpush1.msra.mxu0 %v6286
    %6288 = vmatprep.subr.mxu0 0.0
    %v6289 = vand.u32 %v6062, 4294901760
    %v6290 = vsub.f32 %v6062, %v6289
    %6291 = vmatpush1.msra.mxu0 %v6290
    %6292 = vmatprep.subr.mxu0 0.0
    %v6293 = vand.u32 %v6061, 4294901760
    %v6294 = vsub.f32 %v6061, %v6293
    %6295 = vmatpush1.msra.mxu0 %v6294
    %6296 = vmatprep.subr.mxu0 0.0
    %v6297 = vand.u32 %v6060, 4294901760
    %v6298 = vsub.f32 %v6060, %v6297
    %6299 = vmatpush1.msra.mxu0 %v6298
    %6300 = vmatprep.subr.mxu0 0.0
    %6301 = vmatpush2.msra.mxu0 0.0
    %6302 = vmatprep.subr.mxu0 0.0
    %6303 = vmatpush2.msra.mxu0 0.0
    %6304 = vmatprep.subr.mxu0 0.0
    %6305 = vmatpush2.msra.mxu0 0.0
    %6306 = vmatprep.subr.mxu0 0.0
    %6307 = vmatpush2.msra.mxu0 0.0
    %6308 = vmatprep.subr.mxu0 0.0
    %6309 = vmatpush2.msra.mxu0 0.0
    %6310 = vmatprep.subr.mxu0 0.0
    %6311 = vmatpush2.msra.mxu0 0.0
    %6312 = vmatprep.subr.mxu0 0.0
    %6313 = vmatpush2.msra.mxu0 0.0
    %6314 = vmatprep.subr.mxu0 0.0
    %6315 = vmatpush2.msra.mxu0 0.0
    %6316 = vmatprep.subr.mxu0 0.0
    %6317 = vmatpush2.msra.mxu0 0.0
    %6318 = vmatprep.subr.mxu0 0.0
    %6319 = vmatpush2.msra.mxu0 0.0
    %6320 = vmatprep.subr.mxu0 0.0
    %6321 = vmatpush2.msra.mxu0 0.0
    %6322 = vmatprep.subr.mxu0 0.0
    %6323 = vmatpush2.msra.mxu0 0.0
    %6324 = vmatprep.subr.mxu0 0.0
    %6325 = vmatpush2.msra.mxu0 0.0
    %6326 = vmatprep.subr.mxu0 0.0
    %6327 = vmatpush2.msra.mxu0 0.0
    %6328 = vmatprep.subr.mxu0 0.0
    %6329 = vmatpush2.msra.mxu0 0.0
    %6330 = vmatprep.subr.mxu0 0.0
    %6331 = vmatpush2.msra.mxu0 0.0
    %6332 = vmatprep.mubr.f32.mxu0 0.0
    %v6333 = vand.u32 %v6069, 4294901760
    %v6334 = vsub.f32 %v6069, %v6333
    %6335 = vmatmul.mubr.f32.gmra.mxu0 %v6334
    %v6336 = vpop.f32.mrf.mxu0
    %v6337 = vadd.f32 %v6251, %v6336
    %v6338 = vpop.f32.mrf.mxu0
    %6339 = vmatprep.mubr.f32.mxu0 0.0
    %v6340 = vand.u32 %v6072, 4294901760
    %v6341 = vsub.f32 %v6072, %v6340
    %6342 = vmatmul.mubr.f32.gmra.mxu0 %v6341
    %v6343 = vpop.f32.mrf.mxu0
    %v6344 = vadd.f32 %v6257, %v6343
    %v6345 = vpop.f32.mrf.mxu0
    %6346 = vdwg.mxu0
    %6347 = vmatprep.subr.mxu0 0.0
    %6348 = vmatpush1.msra.mxu0 0.0
    %6349 = vmatprep.subr.mxu0 0.0
    %6350 = vmatpush1.msra.mxu0 0.0
    %6351 = vmatprep.subr.mxu0 0.0
    %6352 = vmatpush1.msra.mxu0 0.0
    %6353 = vmatprep.subr.mxu0 0.0
    %6354 = vmatpush1.msra.mxu0 0.0
    %6355 = vmatprep.subr.mxu0 0.0
    %6356 = vmatpush1.msra.mxu0 0.0
    %6357 = vmatprep.subr.mxu0 0.0
    %6358 = vmatpush1.msra.mxu0 0.0
    %6359 = vmatprep.subr.mxu0 0.0
    %6360 = vmatpush1.msra.mxu0 0.0
    %6361 = vmatprep.subr.mxu0 0.0
    %6362 = vmatpush1.msra.mxu0 0.0
    %6363 = vmatprep.subr.mxu0 0.0
    %6364 = vmatpush1.msra.mxu0 0.0
    %6365 = vmatprep.subr.mxu0 0.0
    %6366 = vmatpush1.msra.mxu0 0.0
    %6367 = vmatprep.subr.mxu0 0.0
    %6368 = vmatpush1.msra.mxu0 0.0
    %6369 = vmatprep.subr.mxu0 0.0
    %6370 = vmatpush1.msra.mxu0 0.0
    %6371 = vmatprep.subr.mxu0 0.0
    %v6372 = vand.u32 %v6063, 4294901760
    %6373 = vmatpush1.msra.mxu0 %v6372
    %6374 = vmatprep.subr.mxu0 0.0
    %v6375 = vand.u32 %v6062, 4294901760
    %6376 = vmatpush1.msra.mxu0 %v6375
    %6377 = vmatprep.subr.mxu0 0.0
    %v6378 = vand.u32 %v6061, 4294901760
    %6379 = vmatpush1.msra.mxu0 %v6378
    %6380 = vmatprep.subr.mxu0 0.0
    %v6381 = vand.u32 %v6060, 4294901760
    %6382 = vmatpush1.msra.mxu0 %v6381
    %6383 = vmatprep.subr.mxu0 0.0
    %6384 = vmatpush2.msra.mxu0 0.0
    %6385 = vmatprep.subr.mxu0 0.0
    %6386 = vmatpush2.msra.mxu0 0.0
    %6387 = vmatprep.subr.mxu0 0.0
    %6388 = vmatpush2.msra.mxu0 0.0
    %6389 = vmatprep.subr.mxu0 0.0
    %6390 = vmatpush2.msra.mxu0 0.0
    %6391 = vmatprep.subr.mxu0 0.0
    %6392 = vmatpush2.msra.mxu0 0.0
    %6393 = vmatprep.subr.mxu0 0.0
    %6394 = vmatpush2.msra.mxu0 0.0
    %6395 = vmatprep.subr.mxu0 0.0
    %6396 = vmatpush2.msra.mxu0 0.0
    %6397 = vmatprep.subr.mxu0 0.0
    %6398 = vmatpush2.msra.mxu0 0.0
    %6399 = vmatprep.subr.mxu0 0.0
    %6400 = vmatpush2.msra.mxu0 0.0
    %6401 = vmatprep.subr.mxu0 0.0
    %6402 = vmatpush2.msra.mxu0 0.0
    %6403 = vmatprep.subr.mxu0 0.0
    %6404 = vmatpush2.msra.mxu0 0.0
    %6405 = vmatprep.subr.mxu0 0.0
    %6406 = vmatpush2.msra.mxu0 0.0
    %6407 = vmatprep.subr.mxu0 0.0
    %6408 = vmatpush2.msra.mxu0 0.0
    %6409 = vmatprep.subr.mxu0 0.0
    %6410 = vmatpush2.msra.mxu0 0.0
    %6411 = vmatprep.subr.mxu0 0.0
    %6412 = vmatpush2.msra.mxu0 0.0
    %6413 = vmatprep.subr.mxu0 0.0
    %6414 = vmatpush2.msra.mxu0 0.0
    %6415 = vmatprep.mubr.f32.mxu0 0.0
    %v6416 = vand.u32 %v6069, 4294901760
    %v6417 = vsub.f32 %v6069, %v6416
    %v6418 = vand.u32 %v6417, 4294901760
    %6419 = vmatmul.mubr.f32.gmra.mxu0 %v6418
    %v6420 = vpop.f32.mrf.mxu0
    %v6421 = vadd.f32 %v6337, %v6420
    %v6422 = vpop.f32.mrf.mxu0
    %6423 = vmatprep.mubr.f32.mxu0 0.0
    %v6424 = vand.u32 %v6072, 4294901760
    %v6425 = vsub.f32 %v6072, %v6424
    %v6426 = vand.u32 %v6425, 4294901760
    %6427 = vmatmul.mubr.f32.gmra.mxu0 %v6426
    %v6428 = vpop.f32.mrf.mxu0
    %v6429 = vadd.f32 %v6344, %v6428
    %v6430 = vpop.f32.mrf.mxu0
    %6431 = vdwg.mxu0
    %6432 = vmatprep.subr.mxu0 0.0
    %6433 = vmatpush1.msra.mxu0 0.0
    %6434 = vmatprep.subr.mxu0 0.0
    %6435 = vmatpush1.msra.mxu0 0.0
    %6436 = vmatprep.subr.mxu0 0.0
    %6437 = vmatpush1.msra.mxu0 0.0
    %6438 = vmatprep.subr.mxu0 0.0
    %6439 = vmatpush1.msra.mxu0 0.0
    %6440 = vmatprep.subr.mxu0 0.0
    %6441 = vmatpush1.msra.mxu0 0.0
    %6442 = vmatprep.subr.mxu0 0.0
    %6443 = vmatpush1.msra.mxu0 0.0
    %6444 = vmatprep.subr.mxu0 0.0
    %6445 = vmatpush1.msra.mxu0 0.0
    %6446 = vmatprep.subr.mxu0 0.0
    %6447 = vmatpush1.msra.mxu0 0.0
    %6448 = vmatprep.subr.mxu0 0.0
    %6449 = vmatpush1.msra.mxu0 0.0
    %6450 = vmatprep.subr.mxu0 0.0
    %6451 = vmatpush1.msra.mxu0 0.0
    %6452 = vmatprep.subr.mxu0 0.0
    %6453 = vmatpush1.msra.mxu0 0.0
    %6454 = vmatprep.subr.mxu0 0.0
    %6455 = vmatpush1.msra.mxu0 0.0
    %6456 = vmatprep.subr.mxu0 0.0
    %v6457 = vand.u32 %v6063, 4294901760
    %v6458 = vsub.f32 %v6063, %v6457
    %v6459 = vand.u32 %v6458, 4294901760
    %6460 = vmatpush1.msra.mxu0 %v6459
    %6461 = vmatprep.subr.mxu0 0.0
    %v6462 = vand.u32 %v6062, 4294901760
    %v6463 = vsub.f32 %v6062, %v6462
    %v6464 = vand.u32 %v6463, 4294901760
    %6465 = vmatpush1.msra.mxu0 %v6464
    %6466 = vmatprep.subr.mxu0 0.0
    %v6467 = vand.u32 %v6061, 4294901760
    %v6468 = vsub.f32 %v6061, %v6467
    %v6469 = vand.u32 %v6468, 4294901760
    %6470 = vmatpush1.msra.mxu0 %v6469
    %6471 = vmatprep.subr.mxu0 0.0
    %v6472 = vand.u32 %v6060, 4294901760
    %v6473 = vsub.f32 %v6060, %v6472
    %v6474 = vand.u32 %v6473, 4294901760
    %6475 = vmatpush1.msra.mxu0 %v6474
    %6476 = vmatprep.subr.mxu0 0.0
    %6477 = vmatpush2.msra.mxu0 0.0
    %6478 = vmatprep.subr.mxu0 0.0
    %6479 = vmatpush2.msra.mxu0 0.0
    %6480 = vmatprep.subr.mxu0 0.0
    %6481 = vmatpush2.msra.mxu0 0.0
    %6482 = vmatprep.subr.mxu0 0.0
    %6483 = vmatpush2.msra.mxu0 0.0
    %6484 = vmatprep.subr.mxu0 0.0
    %6485 = vmatpush2.msra.mxu0 0.0
    %6486 = vmatprep.subr.mxu0 0.0
    %6487 = vmatpush2.msra.mxu0 0.0
    %6488 = vmatprep.subr.mxu0 0.0
    %6489 = vmatpush2.msra.mxu0 0.0
    %6490 = vmatprep.subr.mxu0 0.0
    %6491 = vmatpush2.msra.mxu0 0.0
    %6492 = vmatprep.subr.mxu0 0.0
    %6493 = vmatpush2.msra.mxu0 0.0
    %6494 = vmatprep.subr.mxu0 0.0
    %6495 = vmatpush2.msra.mxu0 0.0
    %6496 = vmatprep.subr.mxu0 0.0
    %6497 = vmatpush2.msra.mxu0 0.0
    %6498 = vmatprep.subr.mxu0 0.0
    %6499 = vmatpush2.msra.mxu0 0.0
    %6500 = vmatprep.subr.mxu0 0.0
    %6501 = vmatpush2.msra.mxu0 0.0
    %6502 = vmatprep.subr.mxu0 0.0
    %6503 = vmatpush2.msra.mxu0 0.0
    %6504 = vmatprep.subr.mxu0 0.0
    %6505 = vmatpush2.msra.mxu0 0.0
    %6506 = vmatprep.subr.mxu0 0.0
    %6507 = vmatpush2.msra.mxu0 0.0
    %6508 = vmatprep.mubr.f32.mxu0 0.0
    %v6509 = vand.u32 %v6069, 4294901760
    %6510 = vmatmul.mubr.f32.gmra.mxu0 %v6509
    %v6511 = vpop.f32.mrf.mxu0
    %v6512 = vadd.f32 %v6421, %v6511
    %v6513 = vpop.f32.mrf.mxu0
    %6514 = vmatprep.mubr.f32.mxu0 0.0
    %v6515 = vand.u32 %v6072, 4294901760
    %6516 = vmatmul.mubr.f32.gmra.mxu0 %v6515
    %v6517 = vpop.f32.mrf.mxu0
    %v6518 = vadd.f32 %v6429, %v6517
    %v6519 = vpop.f32.mrf.mxu0
    %6520 = vdwg.mxu0
    %6521 = vmatprep.subr.mxu0 0.0
    %6522 = vmatpush1.msra.mxu0 0.0
    %6523 = vmatprep.subr.mxu0 0.0
    %6524 = vmatpush1.msra.mxu0 0.0
    %6525 = vmatprep.subr.mxu0 0.0
    %6526 = vmatpush1.msra.mxu0 0.0
    %6527 = vmatprep.subr.mxu0 0.0
    %6528 = vmatpush1.msra.mxu0 0.0
    %6529 = vmatprep.subr.mxu0 0.0
    %6530 = vmatpush1.msra.mxu0 0.0
    %6531 = vmatprep.subr.mxu0 0.0
    %6532 = vmatpush1.msra.mxu0 0.0
    %6533 = vmatprep.subr.mxu0 0.0
    %6534 = vmatpush1.msra.mxu0 0.0
    %6535 = vmatprep.subr.mxu0 0.0
    %6536 = vmatpush1.msra.mxu0 0.0
    %6537 = vmatprep.subr.mxu0 0.0
    %6538 = vmatpush1.msra.mxu0 0.0
    %6539 = vmatprep.subr.mxu0 0.0
    %6540 = vmatpush1.msra.mxu0 0.0
    %6541 = vmatprep.subr.mxu0 0.0
    %6542 = vmatpush1.msra.mxu0 0.0
    %6543 = vmatprep.subr.mxu0 0.0
    %6544 = vmatpush1.msra.mxu0 0.0
    %6545 = vmatprep.subr.mxu0 0.0
    %v6546 = vand.u32 %v6063, 4294901760
    %6547 = vmatpush1.msra.mxu0 %v6546
    %6548 = vmatprep.subr.mxu0 0.0
    %v6549 = vand.u32 %v6062, 4294901760
    %6550 = vmatpush1.msra.mxu0 %v6549
    %6551 = vmatprep.subr.mxu0 0.0
    %v6552 = vand.u32 %v6061, 4294901760
    %6553 = vmatpush1.msra.mxu0 %v6552
    %6554 = vmatprep.subr.mxu0 0.0
    %v6555 = vand.u32 %v6060, 4294901760
    %6556 = vmatpush1.msra.mxu0 %v6555
    %6557 = vmatprep.subr.mxu0 0.0
    %6558 = vmatpush2.msra.mxu0 0.0
    %6559 = vmatprep.subr.mxu0 0.0
    %6560 = vmatpush2.msra.mxu0 0.0
    %6561 = vmatprep.subr.mxu0 0.0
    %6562 = vmatpush2.msra.mxu0 0.0
    %6563 = vmatprep.subr.mxu0 0.0
    %6564 = vmatpush2.msra.mxu0 0.0
    %6565 = vmatprep.subr.mxu0 0.0
    %6566 = vmatpush2.msra.mxu0 0.0
    %6567 = vmatprep.subr.mxu0 0.0
    %6568 = vmatpush2.msra.mxu0 0.0
    %6569 = vmatprep.subr.mxu0 0.0
    %6570 = vmatpush2.msra.mxu0 0.0
    %6571 = vmatprep.subr.mxu0 0.0
    %6572 = vmatpush2.msra.mxu0 0.0
    %6573 = vmatprep.subr.mxu0 0.0
    %6574 = vmatpush2.msra.mxu0 0.0
    %6575 = vmatprep.subr.mxu0 0.0
    %6576 = vmatpush2.msra.mxu0 0.0
    %6577 = vmatprep.subr.mxu0 0.0
    %6578 = vmatpush2.msra.mxu0 0.0
    %6579 = vmatprep.subr.mxu0 0.0
    %6580 = vmatpush2.msra.mxu0 0.0
    %6581 = vmatprep.subr.mxu0 0.0
    %6582 = vmatpush2.msra.mxu0 0.0
    %6583 = vmatprep.subr.mxu0 0.0
    %6584 = vmatpush2.msra.mxu0 0.0
    %6585 = vmatprep.subr.mxu0 0.0
    %6586 = vmatpush2.msra.mxu0 0.0
    %6587 = vmatprep.subr.mxu0 0.0
    %6588 = vmatpush2.msra.mxu0 0.0
    %6589 = vmatprep.mubr.f32.mxu0 0.0
    %v6590 = vand.u32 %v6069, 4294901760
    %6591 = vmatmul.mubr.f32.gmra.mxu0 %v6590
    %v6592 = vpop.f32.mrf.mxu0
    %v6593 = vadd.f32 %v6512, %v6592
    %v6594 = vpop.f32.mrf.mxu0
    %6595 = vmatprep.mubr.f32.mxu0 0.0
    %v6596 = vand.u32 %v6072, 4294901760
    %6597 = vmatmul.mubr.f32.gmra.mxu0 %v6596
    %v6598 = vpop.f32.mrf.mxu0
    %v6599 = vadd.f32 %v6518, %v6598
    %v6600 = vpop.f32.mrf.mxu0
    %6601 = vdwg.mxu0
    %v6602 = vmax.f32 %v6593, 0.0
    %v6603 = vmax.f32 %v6599, 0.0
    %v6604 = vld [vmem:[%s6] sm:$0xff]
    %v6605 = vld [vmem:[%s6 + $0x8] sm:$0xff]
    %v6606 = vld [vmem:[%s6 + $0x10] sm:$0xff]
    %v6607 = vld [vmem:[%s6 + $0x18] sm:$0xff]
    %v6608 = vld [vmem:[%s6 + $0x20] sm:$0xff]
    %v6609 = vld [vmem:[%s6 + $0x28] sm:$0xff]
    %v6610 = vld [vmem:[%s6 + $0x30] sm:$0xff]
    %v6611 = vld [vmem:[%s6 + $0x38] sm:$0xff]
    %v6612 = vlaneseq
    %v6613 = vshrl.u32 %v6612, 7
    %v6614 = vsub.s32 0, %v6613
    %v6615 = vrot.slane %v95, %v6614
    %vm6616 = vcmask 523264
    %v6618 = vsel %vm6616, %v6602, 0
    %v6621 = vsel %vm6616, %v6603, 0
    %6623 = vmatprep.subr.mxu0 0.0
    %6624 = vmatpush1.msra.mxu0 0.0
    %6625 = vmatprep.subr.mxu0 0.0
    %6626 = vmatpush1.msra.mxu0 0.0
    %6627 = vmatprep.subr.mxu0 0.0
    %6628 = vmatpush1.msra.mxu0 0.0
    %6629 = vmatprep.subr.mxu0 0.0
    %6630 = vmatpush1.msra.mxu0 0.0
    %6631 = vmatprep.subr.mxu0 0.0
    %6632 = vmatpush1.msra.mxu0 0.0
    %6633 = vmatprep.subr.mxu0 0.0
    %6634 = vmatpush1.msra.mxu0 0.0
    %6635 = vmatprep.subr.mxu0 0.0
    %6636 = vmatpush1.msra.mxu0 0.0
    %6637 = vmatprep.subr.mxu0 0.0
    %6638 = vmatpush1.msra.mxu0 0.0
    %6639 = vmatprep.subr.mxu0 0.0
    %v6640 = vand.u32 %v6611, 4294901760
    %6641 = vmatpush1.msra.mxu0 %v6640
    %6642 = vmatprep.subr.mxu0 0.0
    %v6643 = vand.u32 %v6610, 4294901760
    %6644 = vmatpush1.msra.mxu0 %v6643
    %6645 = vmatprep.subr.mxu0 0.0
    %v6646 = vand.u32 %v6609, 4294901760
    %6647 = vmatpush1.msra.mxu0 %v6646
    %6648 = vmatprep.subr.mxu0 0.0
    %v6649 = vand.u32 %v6608, 4294901760
    %6650 = vmatpush1.msra.mxu0 %v6649
    %6651 = vmatprep.subr.mxu0 0.0
    %v6652 = vand.u32 %v6607, 4294901760
    %6653 = vmatpush1.msra.mxu0 %v6652
    %6654 = vmatprep.subr.mxu0 0.0
    %v6655 = vand.u32 %v6606, 4294901760
    %6656 = vmatpush1.msra.mxu0 %v6655
    %6657 = vmatprep.subr.mxu0 0.0
    %v6658 = vand.u32 %v6605, 4294901760
    %6659 = vmatpush1.msra.mxu0 %v6658
    %6660 = vmatprep.subr.mxu0 0.0
    %v6661 = vand.u32 %v6604, 4294901760
    %6662 = vmatpush1.msra.mxu0 %v6661
    %6663 = vmatprep.subr.mxu0 0.0
    %6664 = vmatpush2.msra.mxu0 0.0
    %6665 = vmatprep.subr.mxu0 0.0
    %6666 = vmatpush2.msra.mxu0 0.0
    %6667 = vmatprep.subr.mxu0 0.0
    %6668 = vmatpush2.msra.mxu0 0.0
    %6669 = vmatprep.subr.mxu0 0.0
    %6670 = vmatpush2.msra.mxu0 0.0
    %6671 = vmatprep.subr.mxu0 0.0
    %6672 = vmatpush2.msra.mxu0 0.0
    %6673 = vmatprep.subr.mxu0 0.0
    %6674 = vmatpush2.msra.mxu0 0.0
    %6675 = vmatprep.subr.mxu0 0.0
    %6676 = vmatpush2.msra.mxu0 0.0
    %6677 = vmatprep.subr.mxu0 0.0
    %6678 = vmatpush2.msra.mxu0 0.0
    %6679 = vmatprep.subr.mxu0 0.0
    %6680 = vmatpush2.msra.mxu0 0.0
    %6681 = vmatprep.subr.mxu0 0.0
    %6682 = vmatpush2.msra.mxu0 0.0
    %6683 = vmatprep.subr.mxu0 0.0
    %6684 = vmatpush2.msra.mxu0 0.0
    %6685 = vmatprep.subr.mxu0 0.0
    %6686 = vmatpush2.msra.mxu0 0.0
    %6687 = vmatprep.subr.mxu0 0.0
    %6688 = vmatpush2.msra.mxu0 0.0
    %6689 = vmatprep.subr.mxu0 0.0
    %6690 = vmatpush2.msra.mxu0 0.0
    %6691 = vmatprep.subr.mxu0 0.0
    %6692 = vmatpush2.msra.mxu0 0.0
    %6693 = vmatprep.subr.mxu0 0.0
    %6694 = vmatpush2.msra.mxu0 0.0
    %6695 = vmatprep.mubr.f32.mxu0 0.0
    %v6696 = vand.u32 %v6618, 4294901760
    %v6697 = vsub.f32 %v6618, %v6696
    %v6698 = vand.u32 %v6697, 4294901760
    %v6699 = vsub.f32 %v6697, %v6698
    %v6700 = vand.u32 %v6699, 4294901760
    %6701 = vmatmul.mubr.f32.gmra.mxu0 %v6700
    %v6702 = vpop.f32.mrf.mxu0
    %v6703 = vadd.f32 %v6615, %v6702
    %v6704 = vpop.f32.mrf.mxu0
    %6705 = vmatprep.mubr.f32.mxu0 0.0
    %v6706 = vand.u32 %v6621, 4294901760
    %v6707 = vsub.f32 %v6621, %v6706
    %v6708 = vand.u32 %v6707, 4294901760
    %v6709 = vsub.f32 %v6707, %v6708
    %v6710 = vand.u32 %v6709, 4294901760
    %6711 = vmatmul.mubr.f32.gmra.mxu0 %v6710
    %v6712 = vpop.f32.mrf.mxu0
    %v6713 = vadd.f32 %v6615, %v6712
    %v6714 = vpop.f32.mrf.mxu0
    %6715 = vdwg.mxu0
    %6716 = vmatprep.subr.mxu0 0.0
    %6717 = vmatpush1.msra.mxu0 0.0
    %6718 = vmatprep.subr.mxu0 0.0
    %6719 = vmatpush1.msra.mxu0 0.0
    %6720 = vmatprep.subr.mxu0 0.0
    %6721 = vmatpush1.msra.mxu0 0.0
    %6722 = vmatprep.subr.mxu0 0.0
    %6723 = vmatpush1.msra.mxu0 0.0
    %6724 = vmatprep.subr.mxu0 0.0
    %6725 = vmatpush1.msra.mxu0 0.0
    %6726 = vmatprep.subr.mxu0 0.0
    %6727 = vmatpush1.msra.mxu0 0.0
    %6728 = vmatprep.subr.mxu0 0.0
    %6729 = vmatpush1.msra.mxu0 0.0
    %6730 = vmatprep.subr.mxu0 0.0
    %6731 = vmatpush1.msra.mxu0 0.0
    %6732 = vmatprep.subr.mxu0 0.0
    %v6733 = vand.u32 %v6611, 4294901760
    %v6734 = vsub.f32 %v6611, %v6733
    %v6735 = vand.u32 %v6734, 4294901760
    %v6736 = vsub.f32 %v6734, %v6735
    %v6737 = vand.u32 %v6736, 4294901760
    %6738 = vmatpush1.msra.mxu0 %v6737
    %6739 = vmatprep.subr.mxu0 0.0
    %v6740 = vand.u32 %v6610, 4294901760
    %v6741 = vsub.f32 %v6610, %v6740
    %v6742 = vand.u32 %v6741, 4294901760
    %v6743 = vsub.f32 %v6741, %v6742
    %v6744 = vand.u32 %v6743, 4294901760
    %6745 = vmatpush1.msra.mxu0 %v6744
    %6746 = vmatprep.subr.mxu0 0.0
    %v6747 = vand.u32 %v6609, 4294901760
    %v6748 = vsub.f32 %v6609, %v6747
    %v6749 = vand.u32 %v6748, 4294901760
    %v6750 = vsub.f32 %v6748, %v6749
    %v6751 = vand.u32 %v6750, 4294901760
    %6752 = vmatpush1.msra.mxu0 %v6751
    %6753 = vmatprep.subr.mxu0 0.0
    %v6754 = vand.u32 %v6608, 4294901760
    %v6755 = vsub.f32 %v6608, %v6754
    %v6756 = vand.u32 %v6755, 4294901760
    %v6757 = vsub.f32 %v6755, %v6756
    %v6758 = vand.u32 %v6757, 4294901760
    %6759 = vmatpush1.msra.mxu0 %v6758
    %6760 = vmatprep.subr.mxu0 0.0
    %v6761 = vand.u32 %v6607, 4294901760
    %v6762 = vsub.f32 %v6607, %v6761
    %v6763 = vand.u32 %v6762, 4294901760
    %v6764 = vsub.f32 %v6762, %v6763
    %v6765 = vand.u32 %v6764, 4294901760
    %6766 = vmatpush1.msra.mxu0 %v6765
    %6767 = vmatprep.subr.mxu0 0.0
    %v6768 = vand.u32 %v6606, 4294901760
    %v6769 = vsub.f32 %v6606, %v6768
    %v6770 = vand.u32 %v6769, 4294901760
    %v6771 = vsub.f32 %v6769, %v6770
    %v6772 = vand.u32 %v6771, 4294901760
    %6773 = vmatpush1.msra.mxu0 %v6772
    %6774 = vmatprep.subr.mxu0 0.0
    %v6775 = vand.u32 %v6605, 4294901760
    %v6776 = vsub.f32 %v6605, %v6775
    %v6777 = vand.u32 %v6776, 4294901760
    %v6778 = vsub.f32 %v6776, %v6777
    %v6779 = vand.u32 %v6778, 4294901760
    %6780 = vmatpush1.msra.mxu0 %v6779
    %6781 = vmatprep.subr.mxu0 0.0
    %v6782 = vand.u32 %v6604, 4294901760
    %v6783 = vsub.f32 %v6604, %v6782
    %v6784 = vand.u32 %v6783, 4294901760
    %v6785 = vsub.f32 %v6783, %v6784
    %v6786 = vand.u32 %v6785, 4294901760
    %6787 = vmatpush1.msra.mxu0 %v6786
    %6788 = vmatprep.subr.mxu0 0.0
    %6789 = vmatpush2.msra.mxu0 0.0
    %6790 = vmatprep.subr.mxu0 0.0
    %6791 = vmatpush2.msra.mxu0 0.0
    %6792 = vmatprep.subr.mxu0 0.0
    %6793 = vmatpush2.msra.mxu0 0.0
    %6794 = vmatprep.subr.mxu0 0.0
    %6795 = vmatpush2.msra.mxu0 0.0
    %6796 = vmatprep.subr.mxu0 0.0
    %6797 = vmatpush2.msra.mxu0 0.0
    %6798 = vmatprep.subr.mxu0 0.0
    %6799 = vmatpush2.msra.mxu0 0.0
    %6800 = vmatprep.subr.mxu0 0.0
    %6801 = vmatpush2.msra.mxu0 0.0
    %6802 = vmatprep.subr.mxu0 0.0
    %6803 = vmatpush2.msra.mxu0 0.0
    %6804 = vmatprep.subr.mxu0 0.0
    %6805 = vmatpush2.msra.mxu0 0.0
    %6806 = vmatprep.subr.mxu0 0.0
    %6807 = vmatpush2.msra.mxu0 0.0
    %6808 = vmatprep.subr.mxu0 0.0
    %6809 = vmatpush2.msra.mxu0 0.0
    %6810 = vmatprep.subr.mxu0 0.0
    %6811 = vmatpush2.msra.mxu0 0.0
    %6812 = vmatprep.subr.mxu0 0.0
    %6813 = vmatpush2.msra.mxu0 0.0
    %6814 = vmatprep.subr.mxu0 0.0
    %6815 = vmatpush2.msra.mxu0 0.0
    %6816 = vmatprep.subr.mxu0 0.0
    %6817 = vmatpush2.msra.mxu0 0.0
    %6818 = vmatprep.subr.mxu0 0.0
    %6819 = vmatpush2.msra.mxu0 0.0
    %6820 = vmatprep.mubr.f32.mxu0 0.0
    %v6821 = vand.u32 %v6618, 4294901760
    %6822 = vmatmul.mubr.f32.gmra.mxu0 %v6821
    %v6823 = vpop.f32.mrf.mxu0
    %v6824 = vadd.f32 %v6703, %v6823
    %v6825 = vpop.f32.mrf.mxu0
    %6826 = vmatprep.mubr.f32.mxu0 0.0
    %v6827 = vand.u32 %v6621, 4294901760
    %6828 = vmatmul.mubr.f32.gmra.mxu0 %v6827
    %v6829 = vpop.f32.mrf.mxu0
    %v6830 = vadd.f32 %v6713, %v6829
    %v6831 = vpop.f32.mrf.mxu0
    %6832 = vdwg.mxu0
    %6833 = vmatprep.subr.mxu0 0.0
    %6834 = vmatpush1.msra.mxu0 0.0
    %6835 = vmatprep.subr.mxu0 0.0
    %6836 = vmatpush1.msra.mxu0 0.0
    %6837 = vmatprep.subr.mxu0 0.0
    %6838 = vmatpush1.msra.mxu0 0.0
    %6839 = vmatprep.subr.mxu0 0.0
    %6840 = vmatpush1.msra.mxu0 0.0
    %6841 = vmatprep.subr.mxu0 0.0
    %6842 = vmatpush1.msra.mxu0 0.0
    %6843 = vmatprep.subr.mxu0 0.0
    %6844 = vmatpush1.msra.mxu0 0.0
    %6845 = vmatprep.subr.mxu0 0.0
    %6846 = vmatpush1.msra.mxu0 0.0
    %6847 = vmatprep.subr.mxu0 0.0
    %6848 = vmatpush1.msra.mxu0 0.0
    %6849 = vmatprep.subr.mxu0 0.0
    %v6850 = vand.u32 %v6611, 4294901760
    %v6851 = vsub.f32 %v6611, %v6850
    %6852 = vmatpush1.msra.mxu0 %v6851
    %6853 = vmatprep.subr.mxu0 0.0
    %v6854 = vand.u32 %v6610, 4294901760
    %v6855 = vsub.f32 %v6610, %v6854
    %6856 = vmatpush1.msra.mxu0 %v6855
    %6857 = vmatprep.subr.mxu0 0.0
    %v6858 = vand.u32 %v6609, 4294901760
    %v6859 = vsub.f32 %v6609, %v6858
    %6860 = vmatpush1.msra.mxu0 %v6859
    %6861 = vmatprep.subr.mxu0 0.0
    %v6862 = vand.u32 %v6608, 4294901760
    %v6863 = vsub.f32 %v6608, %v6862
    %6864 = vmatpush1.msra.mxu0 %v6863
    %6865 = vmatprep.subr.mxu0 0.0
    %v6866 = vand.u32 %v6607, 4294901760
    %v6867 = vsub.f32 %v6607, %v6866
    %6868 = vmatpush1.msra.mxu0 %v6867
    %6869 = vmatprep.subr.mxu0 0.0
    %v6870 = vand.u32 %v6606, 4294901760
    %v6871 = vsub.f32 %v6606, %v6870
    %6872 = vmatpush1.msra.mxu0 %v6871
    %6873 = vmatprep.subr.mxu0 0.0
    %v6874 = vand.u32 %v6605, 4294901760
    %v6875 = vsub.f32 %v6605, %v6874
    %6876 = vmatpush1.msra.mxu0 %v6875
    %6877 = vmatprep.subr.mxu0 0.0
    %v6878 = vand.u32 %v6604, 4294901760
    %v6879 = vsub.f32 %v6604, %v6878
    %6880 = vmatpush1.msra.mxu0 %v6879
    %6881 = vmatprep.subr.mxu0 0.0
    %6882 = vmatpush2.msra.mxu0 0.0
    %6883 = vmatprep.subr.mxu0 0.0
    %6884 = vmatpush2.msra.mxu0 0.0
    %6885 = vmatprep.subr.mxu0 0.0
    %6886 = vmatpush2.msra.mxu0 0.0
    %6887 = vmatprep.subr.mxu0 0.0
    %6888 = vmatpush2.msra.mxu0 0.0
    %6889 = vmatprep.subr.mxu0 0.0
    %6890 = vmatpush2.msra.mxu0 0.0
    %6891 = vmatprep.subr.mxu0 0.0
    %6892 = vmatpush2.msra.mxu0 0.0
    %6893 = vmatprep.subr.mxu0 0.0
    %6894 = vmatpush2.msra.mxu0 0.0
    %6895 = vmatprep.subr.mxu0 0.0
    %6896 = vmatpush2.msra.mxu0 0.0
    %6897 = vmatprep.subr.mxu0 0.0
    %6898 = vmatpush2.msra.mxu0 0.0
    %6899 = vmatprep.subr.mxu0 0.0
    %6900 = vmatpush2.msra.mxu0 0.0
    %6901 = vmatprep.subr.mxu0 0.0
    %6902 = vmatpush2.msra.mxu0 0.0
    %6903 = vmatprep.subr.mxu0 0.0
    %6904 = vmatpush2.msra.mxu0 0.0
    %6905 = vmatprep.subr.mxu0 0.0
    %6906 = vmatpush2.msra.mxu0 0.0
    %6907 = vmatprep.subr.mxu0 0.0
    %6908 = vmatpush2.msra.mxu0 0.0
    %6909 = vmatprep.subr.mxu0 0.0
    %6910 = vmatpush2.msra.mxu0 0.0
    %6911 = vmatprep.subr.mxu0 0.0
    %6912 = vmatpush2.msra.mxu0 0.0
    %6913 = vmatprep.mubr.f32.mxu0 0.0
    %v6914 = vand.u32 %v6618, 4294901760
    %v6915 = vsub.f32 %v6618, %v6914
    %6916 = vmatmul.mubr.f32.gmra.mxu0 %v6915
    %v6917 = vpop.f32.mrf.mxu0
    %v6918 = vadd.f32 %v6824, %v6917
    %v6919 = vpop.f32.mrf.mxu0
    %6920 = vmatprep.mubr.f32.mxu0 0.0
    %v6921 = vand.u32 %v6621, 4294901760
    %v6922 = vsub.f32 %v6621, %v6921
    %6923 = vmatmul.mubr.f32.gmra.mxu0 %v6922
    %v6924 = vpop.f32.mrf.mxu0
    %v6925 = vadd.f32 %v6830, %v6924
    %v6926 = vpop.f32.mrf.mxu0
    %6927 = vdwg.mxu0
    %6928 = vmatprep.subr.mxu0 0.0
    %6929 = vmatpush1.msra.mxu0 0.0
    %6930 = vmatprep.subr.mxu0 0.0
    %6931 = vmatpush1.msra.mxu0 0.0
    %6932 = vmatprep.subr.mxu0 0.0
    %6933 = vmatpush1.msra.mxu0 0.0
    %6934 = vmatprep.subr.mxu0 0.0
    %6935 = vmatpush1.msra.mxu0 0.0
    %6936 = vmatprep.subr.mxu0 0.0
    %6937 = vmatpush1.msra.mxu0 0.0
    %6938 = vmatprep.subr.mxu0 0.0
    %6939 = vmatpush1.msra.mxu0 0.0
    %6940 = vmatprep.subr.mxu0 0.0
    %6941 = vmatpush1.msra.mxu0 0.0
    %6942 = vmatprep.subr.mxu0 0.0
    %6943 = vmatpush1.msra.mxu0 0.0
    %6944 = vmatprep.subr.mxu0 0.0
    %v6945 = vand.u32 %v6611, 4294901760
    %6946 = vmatpush1.msra.mxu0 %v6945
    %6947 = vmatprep.subr.mxu0 0.0
    %v6948 = vand.u32 %v6610, 4294901760
    %6949 = vmatpush1.msra.mxu0 %v6948
    %6950 = vmatprep.subr.mxu0 0.0
    %v6951 = vand.u32 %v6609, 4294901760
    %6952 = vmatpush1.msra.mxu0 %v6951
    %6953 = vmatprep.subr.mxu0 0.0
    %v6954 = vand.u32 %v6608, 4294901760
    %6955 = vmatpush1.msra.mxu0 %v6954
    %6956 = vmatprep.subr.mxu0 0.0
    %v6957 = vand.u32 %v6607, 4294901760
    %6958 = vmatpush1.msra.mxu0 %v6957
    %6959 = vmatprep.subr.mxu0 0.0
    %v6960 = vand.u32 %v6606, 4294901760
    %6961 = vmatpush1.msra.mxu0 %v6960
    %6962 = vmatprep.subr.mxu0 0.0
    %v6963 = vand.u32 %v6605, 4294901760
    %6964 = vmatpush1.msra.mxu0 %v6963
    %6965 = vmatprep.subr.mxu0 0.0
    %v6966 = vand.u32 %v6604, 4294901760
    %6967 = vmatpush1.msra.mxu0 %v6966
    %6968 = vmatprep.subr.mxu0 0.0
    %6969 = vmatpush2.msra.mxu0 0.0
    %6970 = vmatprep.subr.mxu0 0.0
    %6971 = vmatpush2.msra.mxu0 0.0
    %6972 = vmatprep.subr.mxu0 0.0
    %6973 = vmatpush2.msra.mxu0 0.0
    %6974 = vmatprep.subr.mxu0 0.0
    %6975 = vmatpush2.msra.mxu0 0.0
    %6976 = vmatprep.subr.mxu0 0.0
    %6977 = vmatpush2.msra.mxu0 0.0
    %6978 = vmatprep.subr.mxu0 0.0
    %6979 = vmatpush2.msra.mxu0 0.0
    %6980 = vmatprep.subr.mxu0 0.0
    %6981 = vmatpush2.msra.mxu0 0.0
    %6982 = vmatprep.subr.mxu0 0.0
    %6983 = vmatpush2.msra.mxu0 0.0
    %6984 = vmatprep.subr.mxu0 0.0
    %6985 = vmatpush2.msra.mxu0 0.0
    %6986 = vmatprep.subr.mxu0 0.0
    %6987 = vmatpush2.msra.mxu0 0.0
    %6988 = vmatprep.subr.mxu0 0.0
    %6989 = vmatpush2.msra.mxu0 0.0
    %6990 = vmatprep.subr.mxu0 0.0
    %6991 = vmatpush2.msra.mxu0 0.0
    %6992 = vmatprep.subr.mxu0 0.0
    %6993 = vmatpush2.msra.mxu0 0.0
    %6994 = vmatprep.subr.mxu0 0.0
    %6995 = vmatpush2.msra.mxu0 0.0
    %6996 = vmatprep.subr.mxu0 0.0
    %6997 = vmatpush2.msra.mxu0 0.0
    %6998 = vmatprep.subr.mxu0 0.0
    %6999 = vmatpush2.msra.mxu0 0.0
    %7000 = vmatprep.mubr.f32.mxu0 0.0
    %v7001 = vand.u32 %v6618, 4294901760
    %v7002 = vsub.f32 %v6618, %v7001
    %v7003 = vand.u32 %v7002, 4294901760
    %7004 = vmatmul.mubr.f32.gmra.mxu0 %v7003
    %v7005 = vpop.f32.mrf.mxu0
    %v7006 = vadd.f32 %v6918, %v7005
    %v7007 = vpop.f32.mrf.mxu0
    %7008 = vmatprep.mubr.f32.mxu0 0.0
    %v7009 = vand.u32 %v6621, 4294901760
    %v7010 = vsub.f32 %v6621, %v7009
    %v7011 = vand.u32 %v7010, 4294901760
    %7012 = vmatmul.mubr.f32.gmra.mxu0 %v7011
    %v7013 = vpop.f32.mrf.mxu0
    %v7014 = vadd.f32 %v6925, %v7013
    %v7015 = vpop.f32.mrf.mxu0
    %7016 = vdwg.mxu0
    %7017 = vmatprep.subr.mxu0 0.0
    %7018 = vmatpush1.msra.mxu0 0.0
    %7019 = vmatprep.subr.mxu0 0.0
    %7020 = vmatpush1.msra.mxu0 0.0
    %7021 = vmatprep.subr.mxu0 0.0
    %7022 = vmatpush1.msra.mxu0 0.0
    %7023 = vmatprep.subr.mxu0 0.0
    %7024 = vmatpush1.msra.mxu0 0.0
    %7025 = vmatprep.subr.mxu0 0.0
    %7026 = vmatpush1.msra.mxu0 0.0
    %7027 = vmatprep.subr.mxu0 0.0
    %7028 = vmatpush1.msra.mxu0 0.0
    %7029 = vmatprep.subr.mxu0 0.0
    %7030 = vmatpush1.msra.mxu0 0.0
    %7031 = vmatprep.subr.mxu0 0.0
    %7032 = vmatpush1.msra.mxu0 0.0
    %7033 = vmatprep.subr.mxu0 0.0
    %v7034 = vand.u32 %v6611, 4294901760
    %v7035 = vsub.f32 %v6611, %v7034
    %v7036 = vand.u32 %v7035, 4294901760
    %7037 = vmatpush1.msra.mxu0 %v7036
    %7038 = vmatprep.subr.mxu0 0.0
    %v7039 = vand.u32 %v6610, 4294901760
    %v7040 = vsub.f32 %v6610, %v7039
    %v7041 = vand.u32 %v7040, 4294901760
    %7042 = vmatpush1.msra.mxu0 %v7041
    %7043 = vmatprep.subr.mxu0 0.0
    %v7044 = vand.u32 %v6609, 4294901760
    %v7045 = vsub.f32 %v6609, %v7044
    %v7046 = vand.u32 %v7045, 4294901760
    %7047 = vmatpush1.msra.mxu0 %v7046
    %7048 = vmatprep.subr.mxu0 0.0
    %v7049 = vand.u32 %v6608, 4294901760
    %v7050 = vsub.f32 %v6608, %v7049
    %v7051 = vand.u32 %v7050, 4294901760
    %7052 = vmatpush1.msra.mxu0 %v7051
    %7053 = vmatprep.subr.mxu0 0.0
    %v7054 = vand.u32 %v6607, 4294901760
    %v7055 = vsub.f32 %v6607, %v7054
    %v7056 = vand.u32 %v7055, 4294901760
    %7057 = vmatpush1.msra.mxu0 %v7056
    %7058 = vmatprep.subr.mxu0 0.0
    %v7059 = vand.u32 %v6606, 4294901760
    %v7060 = vsub.f32 %v6606, %v7059
    %v7061 = vand.u32 %v7060, 4294901760
    %7062 = vmatpush1.msra.mxu0 %v7061
    %7063 = vmatprep.subr.mxu0 0.0
    %v7064 = vand.u32 %v6605, 4294901760
    %v7065 = vsub.f32 %v6605, %v7064
    %v7066 = vand.u32 %v7065, 4294901760
    %7067 = vmatpush1.msra.mxu0 %v7066
    %7068 = vmatprep.subr.mxu0 0.0
    %v7069 = vand.u32 %v6604, 4294901760
    %v7070 = vsub.f32 %v6604, %v7069
    %v7071 = vand.u32 %v7070, 4294901760
    %7072 = vmatpush1.msra.mxu0 %v7071
    %7073 = vmatprep.subr.mxu0 0.0
    %7074 = vmatpush2.msra.mxu0 0.0
    %7075 = vmatprep.subr.mxu0 0.0
    %7076 = vmatpush2.msra.mxu0 0.0
    %7077 = vmatprep.subr.mxu0 0.0
    %7078 = vmatpush2.msra.mxu0 0.0
    %7079 = vmatprep.subr.mxu0 0.0
    %7080 = vmatpush2.msra.mxu0 0.0
    %7081 = vmatprep.subr.mxu0 0.0
    %7082 = vmatpush2.msra.mxu0 0.0
    %7083 = vmatprep.subr.mxu0 0.0
    %7084 = vmatpush2.msra.mxu0 0.0
    %7085 = vmatprep.subr.mxu0 0.0
    %7086 = vmatpush2.msra.mxu0 0.0
    %7087 = vmatprep.subr.mxu0 0.0
    %7088 = vmatpush2.msra.mxu0 0.0
    %7089 = vmatprep.subr.mxu0 0.0
    %7090 = vmatpush2.msra.mxu0 0.0
    %7091 = vmatprep.subr.mxu0 0.0
    %7092 = vmatpush2.msra.mxu0 0.0
    %7093 = vmatprep.subr.mxu0 0.0
    %7094 = vmatpush2.msra.mxu0 0.0
    %7095 = vmatprep.subr.mxu0 0.0
    %7096 = vmatpush2.msra.mxu0 0.0
    %7097 = vmatprep.subr.mxu0 0.0
    %7098 = vmatpush2.msra.mxu0 0.0
    %7099 = vmatprep.subr.mxu0 0.0
    %7100 = vmatpush2.msra.mxu0 0.0
    %7101 = vmatprep.subr.mxu0 0.0
    %7102 = vmatpush2.msra.mxu0 0.0
    %7103 = vmatprep.subr.mxu0 0.0
    %7104 = vmatpush2.msra.mxu0 0.0
    %7105 = vmatprep.mubr.f32.mxu0 0.0
    %v7106 = vand.u32 %v6618, 4294901760
    %7107 = vmatmul.mubr.f32.gmra.mxu0 %v7106
    %v7108 = vpop.f32.mrf.mxu0
    %v7109 = vadd.f32 %v7006, %v7108
    %v7110 = vpop.f32.mrf.mxu0
    %7111 = vmatprep.mubr.f32.mxu0 0.0
    %v7112 = vand.u32 %v6621, 4294901760
    %7113 = vmatmul.mubr.f32.gmra.mxu0 %v7112
    %v7114 = vpop.f32.mrf.mxu0
    %v7115 = vadd.f32 %v7014, %v7114
    %v7116 = vpop.f32.mrf.mxu0
    %7117 = vdwg.mxu0
    %7118 = vmatprep.subr.mxu0 0.0
    %7119 = vmatpush1.msra.mxu0 0.0
    %7120 = vmatprep.subr.mxu0 0.0
    %7121 = vmatpush1.msra.mxu0 0.0
    %7122 = vmatprep.subr.mxu0 0.0
    %7123 = vmatpush1.msra.mxu0 0.0
    %7124 = vmatprep.subr.mxu0 0.0
    %7125 = vmatpush1.msra.mxu0 0.0
    %7126 = vmatprep.subr.mxu0 0.0
    %7127 = vmatpush1.msra.mxu0 0.0
    %7128 = vmatprep.subr.mxu0 0.0
    %7129 = vmatpush1.msra.mxu0 0.0
    %7130 = vmatprep.subr.mxu0 0.0
    %7131 = vmatpush1.msra.mxu0 0.0
    %7132 = vmatprep.subr.mxu0 0.0
    %7133 = vmatpush1.msra.mxu0 0.0
    %7134 = vmatprep.subr.mxu0 0.0
    %v7135 = vand.u32 %v6611, 4294901760
    %7136 = vmatpush1.msra.mxu0 %v7135
    %7137 = vmatprep.subr.mxu0 0.0
    %v7138 = vand.u32 %v6610, 4294901760
    %7139 = vmatpush1.msra.mxu0 %v7138
    %7140 = vmatprep.subr.mxu0 0.0
    %v7141 = vand.u32 %v6609, 4294901760
    %7142 = vmatpush1.msra.mxu0 %v7141
    %7143 = vmatprep.subr.mxu0 0.0
    %v7144 = vand.u32 %v6608, 4294901760
    %7145 = vmatpush1.msra.mxu0 %v7144
    %7146 = vmatprep.subr.mxu0 0.0
    %v7147 = vand.u32 %v6607, 4294901760
    %7148 = vmatpush1.msra.mxu0 %v7147
    %7149 = vmatprep.subr.mxu0 0.0
    %v7150 = vand.u32 %v6606, 4294901760
    %7151 = vmatpush1.msra.mxu0 %v7150
    %7152 = vmatprep.subr.mxu0 0.0
    %v7153 = vand.u32 %v6605, 4294901760
    %7154 = vmatpush1.msra.mxu0 %v7153
    %7155 = vmatprep.subr.mxu0 0.0
    %v7156 = vand.u32 %v6604, 4294901760
    %7157 = vmatpush1.msra.mxu0 %v7156
    %7158 = vmatprep.subr.mxu0 0.0
    %7159 = vmatpush2.msra.mxu0 0.0
    %7160 = vmatprep.subr.mxu0 0.0
    %7161 = vmatpush2.msra.mxu0 0.0
    %7162 = vmatprep.subr.mxu0 0.0
    %7163 = vmatpush2.msra.mxu0 0.0
    %7164 = vmatprep.subr.mxu0 0.0
    %7165 = vmatpush2.msra.mxu0 0.0
    %7166 = vmatprep.subr.mxu0 0.0
    %7167 = vmatpush2.msra.mxu0 0.0
    %7168 = vmatprep.subr.mxu0 0.0
    %7169 = vmatpush2.msra.mxu0 0.0
    %7170 = vmatprep.subr.mxu0 0.0
    %7171 = vmatpush2.msra.mxu0 0.0
    %7172 = vmatprep.subr.mxu0 0.0
    %7173 = vmatpush2.msra.mxu0 0.0
    %7174 = vmatprep.subr.mxu0 0.0
    %7175 = vmatpush2.msra.mxu0 0.0
    %7176 = vmatprep.subr.mxu0 0.0
    %7177 = vmatpush2.msra.mxu0 0.0
    %7178 = vmatprep.subr.mxu0 0.0
    %7179 = vmatpush2.msra.mxu0 0.0
    %7180 = vmatprep.subr.mxu0 0.0
    %7181 = vmatpush2.msra.mxu0 0.0
    %7182 = vmatprep.subr.mxu0 0.0
    %7183 = vmatpush2.msra.mxu0 0.0
    %7184 = vmatprep.subr.mxu0 0.0
    %7185 = vmatpush2.msra.mxu0 0.0
    %7186 = vmatprep.subr.mxu0 0.0
    %7187 = vmatpush2.msra.mxu0 0.0
    %7188 = vmatprep.subr.mxu0 0.0
    %7189 = vmatpush2.msra.mxu0 0.0
    %7190 = vmatprep.mubr.f32.mxu0 0.0
    %v7191 = vand.u32 %v6618, 4294901760
    %7192 = vmatmul.mubr.f32.gmra.mxu0 %v7191
    %v7193 = vpop.f32.mrf.mxu0
    %v7194 = vadd.f32 %v7109, %v7193
    %v7195 = vpop.f32.mrf.mxu0
    %7196 = vmatprep.mubr.f32.mxu0 0.0
    %v7197 = vand.u32 %v6621, 4294901760
    %7198 = vmatmul.mubr.f32.gmra.mxu0 %v7197
    %v7199 = vpop.f32.mrf.mxu0
    %v7200 = vadd.f32 %v7115, %v7199
    %v7201 = vpop.f32.mrf.mxu0
    %7202 = vdwg.mxu0
    %v7203 = vadd.f32 %v6058, %v7194
    %v7204 = vadd.f32 %v6059, %v7200
    %v7205 = vsel %vm108, %v7203, 0.0
    %7206 = vadd.xlane.f32.xlu0 %v7205
    %v7207 = vpop.xlane.xlu0 %7206
    %v7208 = vsel %vm108, %v7204, 0.0
    %7209 = vadd.xlane.f32.xlu0 %v7208
    %v7210 = vpop.xlane.xlu0 %7209
    %v7211 = vmul.f32 %v7207, %v6027
    %v7212 = vmul.f32 %v7210, %v6027
    %v7213 = vsub.f32 %v7203, %v7211
    %v7214 = vsub.f32 %v7204, %v7212
    %v7215 = vmul.f32 %v7213, %v7213
    %v7216 = vmul.f32 %v7214, %v7214
    %v7217 = vsel %vm108, %v7215, 0.0
    %7218 = vadd.xlane.f32.xlu0 %v7217
    %v7219 = vpop.xlane.xlu0 %7218
    %v7220 = vsel %vm108, %v7216, 0.0
    %7221 = vadd.xlane.f32.xlu0 %v7220
    %v7222 = vpop.xlane.xlu0 %7221
    %v7223 = vmul.f32 %v7219, %v6027
    %v7224 = vmul.f32 %v7222, %v6027
    %v7225 = vadd.f32 %v7223, 1e-05
    %v7226 = vadd.f32 %v7224, 1e-05
    %v7227 = vrsqrt.pop %v7225
    %v7228 = vrsqrt.pop %v7226
    %v7229 = vmul.f32 %v7213, %v7227
    %v7230 = vmul.f32 %v7214, %v7228
    %v7231 = vlaneseq
    %v7232 = vshrl.u32 %v7231, 7
    %v7233 = vsub.s32 0, %v7232
    %v7234 = vrot.slane %v98, %v7233
    %v7235 = vmul.f32 %v7229, %v7234
    %v7236 = vmul.f32 %v7230, %v7234
    %v7237 = vlaneseq
    %v7238 = vshrl.u32 %v7237, 7
    %v7239 = vsub.s32 0, %v7238
    %v7240 = vrot.slane %v99, %v7239
    %v7241 = vadd.f32 %v7235, %v7240
    %v7242 = vadd.f32 %v7236, %v7240
    %7243 = vst.msk [vmem:[#allocation10] sm:$0xff] %vm108, %v7241
    %7244 = vst.msk [vmem:[#allocation10 + $0x8] sm:$0xff] %vm108, %v7242
    // Predicated region
    $region50: #{transformer_encoder_layer.1} parent=1 // pred_check
      _
    $region51: #{transformer_encoder_layer.1} parent=1 // pred_check_branch
      %7246 = sbr.rel (0) target = $region53
    $region52: #{transformer_encoder_layer.1} parent=1 // pred_region
      %s7248 = ssub.s32 256, 256
      %7249 = vsyncadd [#allocation4], %s7248
      %s7250 = sshll.u32 [#allocation10], 4
      %s7251 = int_to_ptr.vmem [resolvable:$true] %s7250
      %7256 = dma.vmem_to_hbm [thread:$0]  %s7251, 256, %s8, [#allocation4], 128, 128, 8
    $region53: #{transformer_encoder_layer.1} parent=1 // pred_fallthru
      _
    // Predicated region
    $region54: #{transformer_encoder_layer.1} parent=1 // pred_check
      _
    $region55: #{transformer_encoder_layer.1} parent=1 // pred_check_branch
      %7258 = sbr.rel (0) target = $region57
    $region56: #{transformer_encoder_layer.1} parent=1 // pred_region
      %7259 = dma.done [#allocation4], 256
    $region57: #{transformer_encoder_layer.1} parent=1 // pred_fallthru
      _
    %7260 = vsyncpa [#allocation3], 1
    %7261 = vsyncpa [#allocation6], 1
    %7262 = vsyncpa [#allocation9], 1
    %7263 = vsyncpa [#allocation4], 1

</llo_original>
